<compile_context>
chip_gen: v6e
topology: v6e:2x2x1
jax: 0.10.0
libtpu: 0.0.40
codegen_flags: <defaults>
</compile_context>

<pallas_src>
import functools

import jax
import jax.numpy as jnp
from jax.experimental import pallas as pl
from jax.experimental.pallas import tpu as pltpu

EPS = 1e-5
LANE = 128
VMEM_LIMIT_BYTES = 48 * 1024 * 1024   # raise above the 16/32 MiB scoped defaults


def _round_up(x, m):
    return (x + m - 1) // m * m


def _im2col_matmul(src_ref, w_ref, NB, Ho, Wo, Cp, stride, to_bf16=False):
    """3x3 conv as a single MXU matmul: 9 shifted taps concatenated along K (= 9*Cp).

    src_ref is a zero-padded (NB, H+2, W+2, Cp) ref (input tile or VMEM scratch);
    w_ref is the flattened (9*Cp, Cout_p) weight. Returns (NB*Ho*Wo, Cout_p) f32.
    """
    R = NB * Ho * Wo
    taps = []
    for kh in range(3):
        for kw in range(3):
            if stride == 1:
                t = src_ref[:, pl.ds(kh, Ho), pl.ds(kw, Wo), :]
            else:
                t = src_ref[:, pl.ds(kh, Ho, stride=stride),
                            pl.ds(kw, Wo, stride=stride), :]
            taps.append(t.reshape(R, Cp))
    patches = jnp.concatenate(taps, axis=1)            # (R, 9*Cp)
    if to_bf16:
        patches = patches.astype(jnp.bfloat16)
    return jnp.dot(patches, w_ref[...], preferred_element_type=jnp.float32)


def _partial_stats(acc):
    """Single-pass per-channel (sum, sum of squares) over the rows of this tile."""
    ssum = jnp.sum(acc, axis=0, keepdims=True)          # (1, C)
    ssq = jnp.sum(acc * acc, axis=0, keepdims=True)     # (1, C)
    return jnp.concatenate([ssum, ssq], axis=0)         # (2, C)


# ---------------------------------------------------------------------------------------
# Pass A: conv1 (+ optional 1x1 downsample conv), raw outputs + partial BN statistics
# ---------------------------------------------------------------------------------------
def _conv1_kernel(NB, Ho, Wo, Cp_in, Cp_out, stride, has_ds, *refs):
    if has_ds:
        x_ref, w1_ref, wd_ref, y1_ref, s1_ref, yd_ref, sd_ref = refs
    else:
        x_ref, w1_ref, y1_ref, s1_ref = refs

    R = NB * Ho * Wo

    acc1 = _im2col_matmul(x_ref, w1_ref, NB, Ho, Wo, Cp_in, stride)   # (R, Cp_out) f32
    y1_ref[...] = acc1.reshape(NB, Ho, Wo, Cp_out).astype(y1_ref.dtype)
    s1_ref[...] = _partial_stats(acc1).reshape(1, 2, Cp_out)

    if has_ds:
        # downsample branch reads the interior of the SAME padded input (no duplicate x)
        if stride == 1:
            xi = x_ref[:, pl.ds(1, Ho), pl.ds(1, Wo), :]
        else:
            xi = x_ref[:, pl.ds(1, Ho, stride=stride), pl.ds(1, Wo, stride=stride), :]
        accd = jnp.dot(xi.reshape(R, Cp_in), wd_ref[...],
                       preferred_element_type=jnp.float32)
        yd_ref[...] = accd.reshape(NB, Ho, Wo, Cp_out).astype(yd_ref.dtype)
        sd_ref[...] = _partial_stats(accd).reshape(1, 2, Cp_out)


# ---------------------------------------------------------------------------------------
# Pass B: bn1 (folded scale/shift) + relu, conv2, raw output + partial BN statistics
# ---------------------------------------------------------------------------------------
def _conv2_kernel(NB, Ho, Wo, Cp_out,
                  y1_ref, sc1_ref, sh1_ref, w2_ref, y2_ref, s2_ref, pad_scr):
    a = jnp.maximum(y1_ref[...].astype(jnp.float32) * sc1_ref[...] + sh1_ref[...], 0.0)

    # zero only the 1-element halo border (4 thin slabs); the interior is fully overwritten
    zrow = jnp.zeros((NB, 1, Wo + 2, Cp_out), jnp.float32)
    zcol = jnp.zeros((NB, Ho + 2, 1, Cp_out), jnp.float32)
    pad_scr[:, 0:1, :, :] = zrow
    pad_scr[:, Ho + 1:Ho + 2, :, :] = zrow
    pad_scr[:, :, 0:1, :] = zcol
    pad_scr[:, :, Wo + 1:Wo + 2, :] = zcol
    pad_scr[:, 1:Ho + 1, 1:Wo + 1, :] = a

    acc2 = _im2col_matmul(pad_scr, w2_ref, NB, Ho, Wo, Cp_out, 1, to_bf16=True)
    y2_ref[...] = acc2.reshape(NB, Ho, Wo, Cp_out).astype(y2_ref.dtype)
    s2_ref[...] = _partial_stats(acc2).reshape(1, 2, Cp_out)


# ---------------------------------------------------------------------------------------
# Pass C: bn2 + (bn_down | identity), residual add, relu
# ---------------------------------------------------------------------------------------
def _finalize_kernel(NB, Ho, Wo, Cp_out, has_ds, *refs):
    if has_ds:
        y2_ref, sc2_ref, sh2_ref, yd_ref, scd_ref, shd_ref, out_ref = refs
        branch = yd_ref[...].astype(jnp.float32) * scd_ref[...] + shd_ref[...]
    else:
        y2_ref, sc2_ref, sh2_ref, xp_ref, out_ref = refs
        # identity: interior of the padded input tile (stride==1, Cin==Cout here)
        branch = xp_ref[:, pl.ds(1, Ho), pl.ds(1, Wo), :].astype(jnp.float32)
    main = y2_ref[...].astype(jnp.float32) * sc2_ref[...] + sh2_ref[...]
    out_ref[...] = jnp.maximum(main + branch, 0.0).astype(out_ref.dtype)


# ---------------------------------------------------------------------------------------
# Wrapper
# ---------------------------------------------------------------------------------------
@functools.partial(jax.jit, static_argnames=("stride", "batch_tile"))
def block_forward(x_nchw, params, *, stride=1, batch_tile=1):
    """Pallas implementation. x_nchw: (N, Cin, H, W) float32. Returns (N, Cout, Ho, Wo)."""
    w1, w2, wd, g1, b1, g2, b2, gd, bd = params
    N, Cin, H, W = x_nchw.shape
    Cout = w1.shape[-1]
    has_ds = (stride != 1) or (Cin != Cout)
    Ho = (H - 1) // stride + 1
    Wo = (W - 1) // stride + 1
    Cp_in = _round_up(Cin, LANE)
    Cp_out = _round_up(Cout, LANE)
    NB = batch_tile
    assert N % NB == 0, (N, NB)
    G = N // NB
    R_total = N * Ho * Wo

    cparams = pltpu.CompilerParams(dimension_semantics=("parallel",),
                                   vmem_limit_bytes=VMEM_LIMIT_BYTES)

    # layout glue: NCHW -> NHWC, channel-pad to lane width, +1 spatial halo, bf16 for MXU
    x = jnp.transpose(x_nchw, (0, 2, 3, 1)).astype(jnp.float32)
    x_pad = jnp.pad(x, ((0, 0), (1, 1), (1, 1), (0, Cp_in - Cin))).astype(jnp.bfloat16)

    # conv weights: HWIO, channel-padded, flattened for the im2col matmul, bf16
    w1p = jnp.pad(w1, ((0, 0), (0, 0), (0, Cp_in - Cin), (0, Cp_out - Cout)))
    w1p = w1p.reshape(9 * Cp_in, Cp_out).astype(jnp.bfloat16)
    w2p = jnp.pad(w2, ((0, 0), (0, 0), (0, Cp_out - Cout), (0, Cp_out - Cout)))
    w2p = w2p.reshape(9 * Cp_out, Cp_out).astype(jnp.bfloat16)

    pad_c = lambda v: jnp.pad(v.astype(jnp.float32), (0, Cp_out - Cout))

    def fold_bn(stats, gamma, beta):
        """Partial (sum, sumsq) per tile -> per-channel BN scale/shift (training stats)."""
        s = jnp.sum(stats, axis=0)                  # (2, Cp_out)
        mean = s[0] / R_total
        var = s[1] / R_total - mean * mean          # biased variance, single-pass form
        scale = pad_c(gamma) * jax.lax.rsqrt(var + EPS)
        shift = pad_c(beta) - mean * scale
        return (scale.reshape(1, Cp_out).astype(jnp.float32),
                shift.reshape(1, Cp_out).astype(jnp.float32))

    # ------------------------------ pass A ------------------------------
    a_in = [x_pad, w1p]
    a_in_specs = [
        pl.BlockSpec((NB, H + 2, W + 2, Cp_in), lambda i: (i, 0, 0, 0)),
        pl.BlockSpec((9 * Cp_in, Cp_out), lambda i: (0, 0)),
    ]
    a_out_shape = [
        jax.ShapeDtypeStruct((N, Ho, Wo, Cp_out), jnp.bfloat16),   # raw conv1
        jax.ShapeDtypeStruct((G, 2, Cp_out), jnp.float32),          # bn1 partial stats
    ]
    a_out_specs = [
        pl.BlockSpec((NB, Ho, Wo, Cp_out), lambda i: (i, 0, 0, 0)),
        pl.BlockSpec((1, 2, Cp_out), lambda i: (i, 0, 0)),
    ]
    if has_ds:
        wdp = jnp.pad(wd, ((0, Cp_in - Cin), (0, Cp_out - Cout))).astype(jnp.bfloat16)
        a_in.append(wdp)
        a_in_specs.append(pl.BlockSpec((Cp_in, Cp_out), lambda i: (0, 0)))
        a_out_shape += [
            jax.ShapeDtypeStruct((N, Ho, Wo, Cp_out), jnp.bfloat16),   # raw downsample
            jax.ShapeDtypeStruct((G, 2, Cp_out), jnp.float32),          # bn_d partial stats
        ]
        a_out_specs += [
            pl.BlockSpec((NB, Ho, Wo, Cp_out), lambda i: (i, 0, 0, 0)),
            pl.BlockSpec((1, 2, Cp_out), lambda i: (i, 0, 0)),
        ]

    a_out = pl.pallas_call(
        functools.partial(_conv1_kernel, NB, Ho, Wo, Cp_in, Cp_out, stride, has_ds),
        grid=(G,),
        in_specs=a_in_specs,
        out_specs=a_out_specs,
        out_shape=a_out_shape,
        compiler_params=cparams,
    )(*a_in)
    if has_ds:
        y1, st1, yd, std_ = a_out
    else:
        y1, st1 = a_out

    # ------------------------------ pass B ------------------------------
    sc1, sh1 = fold_bn(st1, g1, b1)

    y2, st2 = pl.pallas_call(
        functools.partial(_conv2_kernel, NB, Ho, Wo, Cp_out),
        grid=(G,),
        in_specs=[
            pl.BlockSpec((NB, Ho, Wo, Cp_out), lambda i: (i, 0, 0, 0)),
            pl.BlockSpec((1, Cp_out), lambda i: (0, 0)),
            pl.BlockSpec((1, Cp_out), lambda i: (0, 0)),
            pl.BlockSpec((9 * Cp_out, Cp_out), lambda i: (0, 0)),
        ],
        out_specs=[
            pl.BlockSpec((NB, Ho, Wo, Cp_out), lambda i: (i, 0, 0, 0)),
            pl.BlockSpec((1, 2, Cp_out), lambda i: (i, 0, 0)),
        ],
        out_shape=[
            jax.ShapeDtypeStruct((N, Ho, Wo, Cp_out), jnp.bfloat16),   # raw conv2
            jax.ShapeDtypeStruct((G, 2, Cp_out), jnp.float32),          # bn2 partial stats
        ],
        scratch_shapes=[pltpu.VMEM((NB, Ho + 2, Wo + 2, Cp_out), jnp.float32)],
        compiler_params=cparams,
    )(y1, sc1, sh1, w2p)

    # ------------------------------ pass C ------------------------------
    sc2, sh2 = fold_bn(st2, g2, b2)

    c_in = [y2, sc2, sh2]
    c_in_specs = [
        pl.BlockSpec((NB, Ho, Wo, Cp_out), lambda i: (i, 0, 0, 0)),
        pl.BlockSpec((1, Cp_out), lambda i: (0, 0)),
        pl.BlockSpec((1, Cp_out), lambda i: (0, 0)),
    ]
    if has_ds:
        scd, shd = fold_bn(std_, gd, bd)
        c_in += [yd, scd, shd]
        c_in_specs += [
            pl.BlockSpec((NB, Ho, Wo, Cp_out), lambda i: (i, 0, 0, 0)),
            pl.BlockSpec((1, Cp_out), lambda i: (0, 0)),
            pl.BlockSpec((1, Cp_out), lambda i: (0, 0)),
        ]
    else:
        c_in.append(x_pad)
        c_in_specs.append(pl.BlockSpec((NB, H + 2, W + 2, Cp_in), lambda i: (i, 0, 0, 0)))

    out_nhwc = pl.pallas_call(
        functools.partial(_finalize_kernel, NB, Ho, Wo, Cp_out, has_ds),
        grid=(G,),
        in_specs=c_in_specs,
        out_specs=pl.BlockSpec((NB, Ho, Wo, Cp_out), lambda i: (i, 0, 0, 0)),
        out_shape=jax.ShapeDtypeStruct((N, Ho, Wo, Cp_out), jnp.float32),
        compiler_params=cparams,
    )(*c_in)

    # un-pad channels, back to NCHW
    return jnp.transpose(out_nhwc[..., :Cout], (0, 3, 1, 2))


# ---------------------------------------------------------------------------------------
# Pure-JAX reference (f32, XLA convs) and parameter construction
# ---------------------------------------------------------------------------------------
def block_reference(x_nchw, params, *, stride=1):
    w1, w2, wd, g1, b1, g2, b2, gd, bd = params
    N, Cin, H, W = x_nchw.shape
    Cout = w1.shape[-1]
    has_ds = (stride != 1) or (Cin != Cout)
    x = jnp.transpose(x_nchw, (0, 2, 3, 1)).astype(jnp.float32)

    def conv(y, w, s, pad):
        return jax.lax.conv_general_dilated(
            y, w, (s, s), pad, dimension_numbers=("NHWC", "HWIO", "NHWC"),
            precision=jax.lax.Precision.HIGHEST)

    def bn(y, g, b):
        mean = jnp.mean(y, axis=(0, 1, 2), keepdims=True)
        var = jnp.mean((y - mean) ** 2, axis=(0, 1, 2), keepdims=True)
        return (y - mean) * jax.lax.rsqrt(var + EPS) * g.reshape(1, 1, 1, -1) + b.reshape(1, 1, 1, -1)

    out = jnp.maximum(bn(conv(x, w1, stride, ((1, 1), (1, 1))), g1, b1), 0.0)
    out = bn(conv(out, w2, 1, ((1, 1), (1, 1))), g2, b2)
    if has_ds:
        idn = bn(conv(x, wd.reshape(1, 1, Cin, Cout), stride, "VALID"), gd, bd)
    else:
        idn = x
    out = jnp.maximum(out + idn, 0.0)
    return jnp.transpose(out, (0, 3, 1, 2))


def make_params(key, inplanes, planes):
    ks = jax.random.split(key, 9)
    w1 = 0.1 * jax.random.normal(ks[0], (3, 3, inplanes, planes), jnp.float32)
    w2 = 0.1 * jax.random.normal(ks[1], (3, 3, planes, planes), jnp.float32)
    wd = 0.1 * jax.random.normal(ks[2], (inplanes, planes), jnp.float32)   # 1x1 conv
    g1 = 1.0 + 0.1 * jax.random.normal(ks[3], (planes,), jnp.float32)
    b1 = 0.1 * jax.random.normal(ks[4], (planes,), jnp.float32)
    g2 = 1.0 + 0.1 * jax.random.normal(ks[5], (planes,), jnp.float32)
    b2 = 0.1 * jax.random.normal(ks[6], (planes,), jnp.float32)
    gd = 1.0 + 0.1 * jax.random.normal(ks[7], (planes,), jnp.float32)
    bd = 0.1 * jax.random.normal(ks[8], (planes,), jnp.float32)
    return (w1, w2, wd, g1, b1, g2, b2, gd, bd)


if __name__ == "__main__":
    key = jax.random.PRNGKey(0)
    kx1, kx2, kp1, kp2 = jax.random.split(key, 4)

    # Config 1: downsample branch active (inplanes != planes), stride=1
    N, H, W = 2, 16, 16
    inplanes, planes = 4, 8
    x1 = jax.random.normal(kx1, (N, inplanes, H, W), jnp.float32)   # NCHW like PyTorch
    p1 = make_params(kp1, inplanes, planes)
    out1 = jax.block_until_ready(block_forward(x1, p1, stride=1))
    ref1 = jax.block_until_ready(block_reference(x1, p1, stride=1))
    assert out1.shape == ref1.shape, (out1.shape, ref1.shape)
    err1 = float(jnp.max(jnp.abs(out1 - ref1)))
    # bf16 MXU inputs + bf16 intermediates vs f32/HIGHEST reference -> relaxed tolerance
    assert jnp.allclose(out1, ref1, atol=8e-2, rtol=8e-2), err1

    # Config 2: identity shortcut (inplanes == planes, stride=1)
    x2 = jax.random.normal(kx2, (N, planes, H, W), jnp.float32)
    p2 = make_params(kp2, planes, planes)
    out2 = jax.block_until_ready(block_forward(x2, p2, stride=1))
    ref2 = jax.block_until_ready(block_reference(x2, p2, stride=1))
    assert out2.shape == ref2.shape, (out2.shape, ref2.shape)
    err2 = float(jnp.max(jnp.abs(out2 - ref2)))
    assert jnp.allclose(out2, ref2, atol=8e-2, rtol=8e-2), err2

    print("KERNEL_OK")
</pallas_src>

<mosaic_0001>
module attributes {stable_mosaic.version = 11 : i64} {
  func.func @_conv1_kernel(%arg0: i32, %arg1: memref<1x18x18x128xbf16, #tpu.memory_space<vmem>>, %arg2: memref<1152x128xbf16, #tpu.memory_space<vmem>>, %arg3: memref<128x128xbf16, #tpu.memory_space<vmem>>, %arg4: memref<1x16x16x128xbf16, #tpu.memory_space<vmem>>, %arg5: memref<1x2x128xf32, #tpu.memory_space<vmem>>, %arg6: memref<1x16x16x128xbf16, #tpu.memory_space<vmem>>, %arg7: memref<1x2x128xf32, #tpu.memory_space<vmem>>) attributes {dimension_semantics = [#tpu.dimension_semantics<parallel>], iteration_bounds = array<i64: 2>, scalar_prefetch = 0 : i64, scratch_operands = 0 : i64, tpu.core_type = #tpu.core_type<tc>, window_params = [{transform_indices = @transform_0, window_bounds = array<i64: 1, 18, 18, 128>}, {pipeline_mode = #tpu.pipeline_mode<synchronous>, transform_indices = @transform_1, window_bounds = array<i64: 1152, 128>}, {pipeline_mode = #tpu.pipeline_mode<synchronous>, transform_indices = @transform_2, window_bounds = array<i64: 128, 128>}, {transform_indices = @transform_3, window_bounds = array<i64: 1, 16, 16, 128>}, {transform_indices = @transform_4, window_bounds = array<i64: 1, 2, 128>}, {transform_indices = @transform_5, window_bounds = array<i64: 1, 16, 16, 128>}, {transform_indices = @transform_6, window_bounds = array<i64: 1, 2, 128>}]} {
    %c0 = arith.constant 0 : index
    %c0_0 = arith.constant 0 : index
    %c0_1 = arith.constant 0 : index
    %c0_2 = arith.constant 0 : index
    %0 = vector.load %arg1[%c0, %c0_0, %c0_1, %c0_2] : memref<1x18x18x128xbf16, #tpu.memory_space<vmem>>, vector<1x16x16x128xbf16>
    %1 = vector.shape_cast %0 : vector<1x16x16x128xbf16> to vector<256x128xbf16>
    %c0_3 = arith.constant 0 : index
    %c0_4 = arith.constant 0 : index
    %c1 = arith.constant 1 : index
    %c0_5 = arith.constant 0 : index
    %2 = vector.load %arg1[%c0_3, %c0_4, %c1, %c0_5] : memref<1x18x18x128xbf16, #tpu.memory_space<vmem>>, vector<1x16x16x128xbf16>
    %3 = vector.shape_cast %2 : vector<1x16x16x128xbf16> to vector<256x128xbf16>
    %c0_6 = arith.constant 0 : index
    %c0_7 = arith.constant 0 : index
    %c2 = arith.constant 2 : index
    %c0_8 = arith.constant 0 : index
    %4 = vector.load %arg1[%c0_6, %c0_7, %c2, %c0_8] : memref<1x18x18x128xbf16, #tpu.memory_space<vmem>>, vector<1x16x16x128xbf16>
    %5 = vector.shape_cast %4 : vector<1x16x16x128xbf16> to vector<256x128xbf16>
    %c0_9 = arith.constant 0 : index
    %c1_10 = arith.constant 1 : index
    %c0_11 = arith.constant 0 : index
    %c0_12 = arith.constant 0 : index
    %6 = vector.load %arg1[%c0_9, %c1_10, %c0_11, %c0_12] : memref<1x18x18x128xbf16, #tpu.memory_space<vmem>>, vector<1x16x16x128xbf16>
    %7 = vector.shape_cast %6 : vector<1x16x16x128xbf16> to vector<256x128xbf16>
    %c0_13 = arith.constant 0 : index
    %c1_14 = arith.constant 1 : index
    %c1_15 = arith.constant 1 : index
    %c0_16 = arith.constant 0 : index
    %8 = vector.load %arg1[%c0_13, %c1_14, %c1_15, %c0_16] : memref<1x18x18x128xbf16, #tpu.memory_space<vmem>>, vector<1x16x16x128xbf16>
    %9 = vector.shape_cast %8 : vector<1x16x16x128xbf16> to vector<256x128xbf16>
    %c0_17 = arith.constant 0 : index
    %c1_18 = arith.constant 1 : index
    %c2_19 = arith.constant 2 : index
    %c0_20 = arith.constant 0 : index
    %10 = vector.load %arg1[%c0_17, %c1_18, %c2_19, %c0_20] : memref<1x18x18x128xbf16, #tpu.memory_space<vmem>>, vector<1x16x16x128xbf16>
    %11 = vector.shape_cast %10 : vector<1x16x16x128xbf16> to vector<256x128xbf16>
    %c0_21 = arith.constant 0 : index
    %c2_22 = arith.constant 2 : index
    %c0_23 = arith.constant 0 : index
    %c0_24 = arith.constant 0 : index
    %12 = vector.load %arg1[%c0_21, %c2_22, %c0_23, %c0_24] : memref<1x18x18x128xbf16, #tpu.memory_space<vmem>>, vector<1x16x16x128xbf16>
    %13 = vector.shape_cast %12 : vector<1x16x16x128xbf16> to vector<256x128xbf16>
    %c0_25 = arith.constant 0 : index
    %c2_26 = arith.constant 2 : index
    %c1_27 = arith.constant 1 : index
    %c0_28 = arith.constant 0 : index
    %14 = vector.load %arg1[%c0_25, %c2_26, %c1_27, %c0_28] : memref<1x18x18x128xbf16, #tpu.memory_space<vmem>>, vector<1x16x16x128xbf16>
    %15 = vector.shape_cast %14 : vector<1x16x16x128xbf16> to vector<256x128xbf16>
    %c0_29 = arith.constant 0 : index
    %c2_30 = arith.constant 2 : index
    %c2_31 = arith.constant 2 : index
    %c0_32 = arith.constant 0 : index
    %16 = vector.load %arg1[%c0_29, %c2_30, %c2_31, %c0_32] : memref<1x18x18x128xbf16, #tpu.memory_space<vmem>>, vector<1x16x16x128xbf16>
    %17 = vector.shape_cast %16 : vector<1x16x16x128xbf16> to vector<256x128xbf16>
    %18 = tpu.concatenate %1, %3, %5, %7, %9, %11, %13, %15, %17 in 1 : vector<256x128xbf16>, vector<256x128xbf16>, vector<256x128xbf16>, vector<256x128xbf16>, vector<256x128xbf16>, vector<256x128xbf16>, vector<256x128xbf16>, vector<256x128xbf16>, vector<256x128xbf16> -> vector<256x1152xbf16>
    %c0_33 = arith.constant 0 : index
    %c0_34 = arith.constant 0 : index
    %19 = vector.load %arg2[%c0_33, %c0_34] : memref<1152x128xbf16, #tpu.memory_space<vmem>>, vector<1152x128xbf16>
    %cst = arith.constant dense<0.000000e+00> : vector<256x128xf32>
    %20 = tpu.matmul %18, %19, %cst {dimension_numbers = #tpu.dot_dimension_numbers<[1], [0], [0], [1], [0, 0, 1, 1], [], []>} : vector<256x1152xbf16>, vector<1152x128xbf16>, vector<256x128xf32> -> vector<256x128xf32>
    %21 = vector.shape_cast %20 : vector<256x128xf32> to vector<1x16x16x128xf32>
    %22 = arith.truncf %21 : vector<1x16x16x128xf32> to vector<1x16x16x128xbf16>
    %c0_35 = arith.constant 0 : index
    %c0_36 = arith.constant 0 : index
    %c0_37 = arith.constant 0 : index
    %c0_38 = arith.constant 0 : index
    %23 = vector.load %arg4[%c0_35, %c0_36, %c0_37, %c0_38] : memref<1x16x16x128xbf16, #tpu.memory_space<vmem>>, vector<1x16x16x128xbf16>
    tpu.vector_store %arg4[%c0_35, %c0_36, %c0_37, %c0_38], %22 {strides = array<i32>} : memref<1x16x16x128xbf16, #tpu.memory_space<vmem>>, vector<1x16x16x128xbf16>,
    %cst_39 = arith.constant dense<0.000000e+00> : vector<128xf32>
    %24 = vector.multi_reduction <add>, %20, %cst_39 [0] : vector<256x128xf32> to vector<128xf32>
    %25 = vector.shape_cast %24 : vector<128xf32> to vector<1x128xf32>
    %26 = arith.mulf %20, %20 : vector<256x128xf32>
    %cst_40 = arith.constant dense<0.000000e+00> : vector<128xf32>
    %27 = vector.multi_reduction <add>, %26, %cst_40 [0] : vector<256x128xf32> to vector<128xf32>
    %28 = vector.shape_cast %27 : vector<128xf32> to vector<1x128xf32>
    %29 = tpu.concatenate %25, %28 in 0 : vector<1x128xf32>, vector<1x128xf32> -> vector<2x128xf32>
    %30 = vector.shape_cast %29 : vector<2x128xf32> to vector<1x2x128xf32>
    %c0_41 = arith.constant 0 : index
    %c0_42 = arith.constant 0 : index
    %c0_43 = arith.constant 0 : index
    %31 = vector.load %arg5[%c0_41, %c0_42, %c0_43] : memref<1x2x128xf32, #tpu.memory_space<vmem>>, vector<1x2x128xf32>
    tpu.vector_store %arg5[%c0_41, %c0_42, %c0_43], %30 {strides = array<i32>} : memref<1x2x128xf32, #tpu.memory_space<vmem>>, vector<1x2x128xf32>,
    %c0_44 = arith.constant 0 : index
    %c1_45 = arith.constant 1 : index
    %c1_46 = arith.constant 1 : index
    %c0_47 = arith.constant 0 : index
    %32 = vector.load %arg1[%c0_44, %c1_45, %c1_46, %c0_47] : memref<1x18x18x128xbf16, #tpu.memory_space<vmem>>, vector<1x16x16x128xbf16>
    %33 = vector.shape_cast %32 : vector<1x16x16x128xbf16> to vector<256x128xbf16>
    %c0_48 = arith.constant 0 : index
    %c0_49 = arith.constant 0 : index
    %34 = vector.load %arg3[%c0_48, %c0_49] : memref<128x128xbf16, #tpu.memory_space<vmem>>, vector<128x128xbf16>
    %cst_50 = arith.constant dense<0.000000e+00> : vector<256x128xf32>
    %35 = tpu.matmul %33, %34, %cst_50 {dimension_numbers = #tpu.dot_dimension_numbers<[1], [0], [0], [1], [0, 0, 1, 1], [], []>} : vector<256x128xbf16>, vector<128x128xbf16>, vector<256x128xf32> -> vector<256x128xf32>
    %36 = vector.shape_cast %35 : vector<256x128xf32> to vector<1x16x16x128xf32>
    %37 = arith.truncf %36 : vector<1x16x16x128xf32> to vector<1x16x16x128xbf16>
    %c0_51 = arith.constant 0 : index
    %c0_52 = arith.constant 0 : index
    %c0_53 = arith.constant 0 : index
    %c0_54 = arith.constant 0 : index
    %38 = vector.load %arg6[%c0_51, %c0_52, %c0_53, %c0_54] : memref<1x16x16x128xbf16, #tpu.memory_space<vmem>>, vector<1x16x16x128xbf16>
    tpu.vector_store %arg6[%c0_51, %c0_52, %c0_53, %c0_54], %37 {strides = array<i32>} : memref<1x16x16x128xbf16, #tpu.memory_space<vmem>>, vector<1x16x16x128xbf16>,
    %cst_55 = arith.constant dense<0.000000e+00> : vector<128xf32>
    %39 = vector.multi_reduction <add>, %35, %cst_55 [0] : vector<256x128xf32> to vector<128xf32>
    %40 = vector.shape_cast %39 : vector<128xf32> to vector<1x128xf32>
    %41 = arith.mulf %35, %35 : vector<256x128xf32>
    %cst_56 = arith.constant dense<0.000000e+00> : vector<128xf32>
    %42 = vector.multi_reduction <add>, %41, %cst_56 [0] : vector<256x128xf32> to vector<128xf32>
    %43 = vector.shape_cast %42 : vector<128xf32> to vector<1x128xf32>
    %44 = tpu.concatenate %40, %43 in 0 : vector<1x128xf32>, vector<1x128xf32> -> vector<2x128xf32>
    %45 = vector.shape_cast %44 : vector<2x128xf32> to vector<1x2x128xf32>
    %c0_57 = arith.constant 0 : index
    %c0_58 = arith.constant 0 : index
    %c0_59 = arith.constant 0 : index
    %46 = vector.load %arg7[%c0_57, %c0_58, %c0_59] : memref<1x2x128xf32, #tpu.memory_space<vmem>>, vector<1x2x128xf32>
    tpu.vector_store %arg7[%c0_57, %c0_58, %c0_59], %45 {strides = array<i32>} : memref<1x2x128xf32, #tpu.memory_space<vmem>>, vector<1x2x128xf32>,
    return
  }
  func.func @transform_0(%arg0: i32) -> (i32, i32, i32, i32) {
    %c0_i32 = arith.constant 0 : i32
    %c0_i32_0 = arith.constant 0 : i32
    %c0_i32_1 = arith.constant 0 : i32
    %c0_i32_2 = arith.constant 0 : i32
    return %arg0, %c0_i32, %c0_i32_0, %c0_i32_1 : i32, i32, i32, i32
  }
  func.func @transform_1(%arg0: i32) -> (i32, i32) {
    %c0_i32 = arith.constant 0 : i32
    %c0_i32_0 = arith.constant 0 : i32
    %c0_i32_1 = arith.constant 0 : i32
    return %c0_i32, %c0_i32_0 : i32, i32
  }
  func.func @transform_2(%arg0: i32) -> (i32, i32) {
    %c0_i32 = arith.constant 0 : i32
    %c0_i32_0 = arith.constant 0 : i32
    %c0_i32_1 = arith.constant 0 : i32
    return %c0_i32, %c0_i32_0 : i32, i32
  }
  func.func @transform_3(%arg0: i32) -> (i32, i32, i32, i32) {
    %c0_i32 = arith.constant 0 : i32
    %c0_i32_0 = arith.constant 0 : i32
    %c0_i32_1 = arith.constant 0 : i32
    %c0_i32_2 = arith.constant 0 : i32
    return %arg0, %c0_i32, %c0_i32_0, %c0_i32_1 : i32, i32, i32, i32
  }
  func.func @transform_4(%arg0: i32) -> (i32, i32, i32) {
    %c0_i32 = arith.constant 0 : i32
    %c0_i32_0 = arith.constant 0 : i32
    %c0_i32_1 = arith.constant 0 : i32
    return %arg0, %c0_i32, %c0_i32_0 : i32, i32, i32
  }
  func.func @transform_5(%arg0: i32) -> (i32, i32, i32, i32) {
    %c0_i32 = arith.constant 0 : i32
    %c0_i32_0 = arith.constant 0 : i32
    %c0_i32_1 = arith.constant 0 : i32
    %c0_i32_2 = arith.constant 0 : i32
    return %arg0, %c0_i32, %c0_i32_0, %c0_i32_1 : i32, i32, i32, i32
  }
  func.func @transform_6(%arg0: i32) -> (i32, i32, i32) {
    %c0_i32 = arith.constant 0 : i32
    %c0_i32_0 = arith.constant 0 : i32
    %c0_i32_1 = arith.constant 0 : i32
    return %arg0, %c0_i32, %c0_i32_0 : i32, i32, i32
  }
}

module attributes {stable_mosaic.version = 11 : i64} {
  func.func @_finalize_kernel(%arg0: i32, %arg1: memref<1x16x16x128xbf16, #tpu.memory_space<vmem>>, %arg2: memref<1x128xf32, #tpu.memory_space<vmem>>, %arg3: memref<1x128xf32, #tpu.memory_space<vmem>>, %arg4: memref<1x16x16x128xbf16, #tpu.memory_space<vmem>>, %arg5: memref<1x128xf32, #tpu.memory_space<vmem>>, %arg6: memref<1x128xf32, #tpu.memory_space<vmem>>, %arg7: memref<1x16x16x128xf32, #tpu.memory_space<vmem>>) attributes {dimension_semantics = [#tpu.dimension_semantics<parallel>], iteration_bounds = array<i64: 2>, scalar_prefetch = 0 : i64, scratch_operands = 0 : i64, tpu.core_type = #tpu.core_type<tc>, window_params = [{transform_indices = @transform_0, window_bounds = array<i64: 1, 16, 16, 128>}, {pipeline_mode = #tpu.pipeline_mode<synchronous>, transform_indices = @transform_1, window_bounds = array<i64: 1, 128>}, {pipeline_mode = #tpu.pipeline_mode<synchronous>, transform_indices = @transform_2, window_bounds = array<i64: 1, 128>}, {transform_indices = @transform_3, window_bounds = array<i64: 1, 16, 16, 128>}, {pipeline_mode = #tpu.pipeline_mode<synchronous>, transform_indices = @transform_4, window_bounds = array<i64: 1, 128>}, {pipeline_mode = #tpu.pipeline_mode<synchronous>, transform_indices = @transform_5, window_bounds = array<i64: 1, 128>}, {transform_indices = @transform_6, window_bounds = array<i64: 1, 16, 16, 128>}]} {
    %c0 = arith.constant 0 : index
    %c0_0 = arith.constant 0 : index
    %c0_1 = arith.constant 0 : index
    %c0_2 = arith.constant 0 : index
    %0 = vector.load %arg4[%c0, %c0_0, %c0_1, %c0_2] : memref<1x16x16x128xbf16, #tpu.memory_space<vmem>>, vector<1x16x16x128xbf16>
    %1 = arith.extf %0 : vector<1x16x16x128xbf16> to vector<1x16x16x128xf32>
    %c0_3 = arith.constant 0 : index
    %c0_4 = arith.constant 0 : index
    %2 = vector.load %arg5[%c0_3, %c0_4] : memref<1x128xf32, #tpu.memory_space<vmem>>, vector<1x128xf32>
    %3 = vector.shape_cast %2 : vector<1x128xf32> to vector<1x1x1x128xf32>
    %4 = vector.broadcast %3 : vector<1x1x1x128xf32> to vector<1x16x16x128xf32>
    %5 = arith.mulf %1, %4 : vector<1x16x16x128xf32>
    %c0_5 = arith.constant 0 : index
    %c0_6 = arith.constant 0 : index
    %6 = vector.load %arg6[%c0_5, %c0_6] : memref<1x128xf32, #tpu.memory_space<vmem>>, vector<1x128xf32>
    %7 = vector.shape_cast %6 : vector<1x128xf32> to vector<1x1x1x128xf32>
    %8 = vector.broadcast %7 : vector<1x1x1x128xf32> to vector<1x16x16x128xf32>
    %9 = arith.addf %5, %8 : vector<1x16x16x128xf32>
    %c0_7 = arith.constant 0 : index
    %c0_8 = arith.constant 0 : index
    %c0_9 = arith.constant 0 : index
    %c0_10 = arith.constant 0 : index
    %10 = vector.load %arg1[%c0_7, %c0_8, %c0_9, %c0_10] : memref<1x16x16x128xbf16, #tpu.memory_space<vmem>>, vector<1x16x16x128xbf16>
    %11 = arith.extf %10 : vector<1x16x16x128xbf16> to vector<1x16x16x128xf32>
    %c0_11 = arith.constant 0 : index
    %c0_12 = arith.constant 0 : index
    %12 = vector.load %arg2[%c0_11, %c0_12] : memref<1x128xf32, #tpu.memory_space<vmem>>, vector<1x128xf32>
    %13 = vector.shape_cast %12 : vector<1x128xf32> to vector<1x1x1x128xf32>
    %14 = vector.broadcast %13 : vector<1x1x1x128xf32> to vector<1x16x16x128xf32>
    %15 = arith.mulf %11, %14 : vector<1x16x16x128xf32>
    %c0_13 = arith.constant 0 : index
    %c0_14 = arith.constant 0 : index
    %16 = vector.load %arg3[%c0_13, %c0_14] : memref<1x128xf32, #tpu.memory_space<vmem>>, vector<1x128xf32>
    %17 = vector.shape_cast %16 : vector<1x128xf32> to vector<1x1x1x128xf32>
    %18 = vector.broadcast %17 : vector<1x1x1x128xf32> to vector<1x16x16x128xf32>
    %19 = arith.addf %15, %18 : vector<1x16x16x128xf32>
    %20 = arith.addf %19, %9 : vector<1x16x16x128xf32>
    %cst = arith.constant 0.000000e+00 : f32
    %21 = vector.broadcast %cst : f32 to vector<1x16x16x128xf32>
    %22 = arith.maximumf %20, %21 : vector<1x16x16x128xf32>
    %c0_15 = arith.constant 0 : index
    %c0_16 = arith.constant 0 : index
    %c0_17 = arith.constant 0 : index
    %c0_18 = arith.constant 0 : index
    %23 = vector.load %arg7[%c0_15, %c0_16, %c0_17, %c0_18] : memref<1x16x16x128xf32, #tpu.memory_space<vmem>>, vector<1x16x16x128xf32>
    tpu.vector_store %arg7[%c0_15, %c0_16, %c0_17, %c0_18], %22 {strides = array<i32>} : memref<1x16x16x128xf32, #tpu.memory_space<vmem>>, vector<1x16x16x128xf32>,
    return
  }
  func.func @transform_0(%arg0: i32) -> (i32, i32, i32, i32) {
    %c0_i32 = arith.constant 0 : i32
    %c0_i32_0 = arith.constant 0 : i32
    %c0_i32_1 = arith.constant 0 : i32
    %c0_i32_2 = arith.constant 0 : i32
    return %arg0, %c0_i32, %c0_i32_0, %c0_i32_1 : i32, i32, i32, i32
  }
  func.func @transform_1(%arg0: i32) -> (i32, i32) {
    %c0_i32 = arith.constant 0 : i32
    %c0_i32_0 = arith.constant 0 : i32
    %c0_i32_1 = arith.constant 0 : i32
    return %c0_i32, %c0_i32_0 : i32, i32
  }
  func.func @transform_2(%arg0: i32) -> (i32, i32) {
    %c0_i32 = arith.constant 0 : i32
    %c0_i32_0 = arith.constant 0 : i32
    %c0_i32_1 = arith.constant 0 : i32
    return %c0_i32, %c0_i32_0 : i32, i32
  }
  func.func @transform_3(%arg0: i32) -> (i32, i32, i32, i32) {
    %c0_i32 = arith.constant 0 : i32
    %c0_i32_0 = arith.constant 0 : i32
    %c0_i32_1 = arith.constant 0 : i32
    %c0_i32_2 = arith.constant 0 : i32
    return %arg0, %c0_i32, %c0_i32_0, %c0_i32_1 : i32, i32, i32, i32
  }
  func.func @transform_4(%arg0: i32) -> (i32, i32) {
    %c0_i32 = arith.constant 0 : i32
    %c0_i32_0 = arith.constant 0 : i32
    %c0_i32_1 = arith.constant 0 : i32
    return %c0_i32, %c0_i32_0 : i32, i32
  }
  func.func @transform_5(%arg0: i32) -> (i32, i32) {
    %c0_i32 = arith.constant 0 : i32
    %c0_i32_0 = arith.constant 0 : i32
    %c0_i32_1 = arith.constant 0 : i32
    return %c0_i32, %c0_i32_0 : i32, i32
  }
  func.func @transform_6(%arg0: i32) -> (i32, i32, i32, i32) {
    %c0_i32 = arith.constant 0 : i32
    %c0_i32_0 = arith.constant 0 : i32
    %c0_i32_1 = arith.constant 0 : i32
    %c0_i32_2 = arith.constant 0 : i32
    return %arg0, %c0_i32, %c0_i32_0, %c0_i32_1 : i32, i32, i32, i32
  }
}

module attributes {stable_mosaic.version = 11 : i64} {
  func.func @_conv2_kernel(%arg0: i32, %arg1: memref<1x16x16x128xbf16, #tpu.memory_space<vmem>>, %arg2: memref<1x128xf32, #tpu.memory_space<vmem>>, %arg3: memref<1x128xf32, #tpu.memory_space<vmem>>, %arg4: memref<1152x128xbf16, #tpu.memory_space<vmem>>, %arg5: memref<1x16x16x128xbf16, #tpu.memory_space<vmem>>, %arg6: memref<1x2x128xf32, #tpu.memory_space<vmem>>, %arg7: memref<1x18x18x128xf32, #tpu.memory_space<vmem>>) attributes {dimension_semantics = [#tpu.dimension_semantics<parallel>], iteration_bounds = array<i64: 2>, scalar_prefetch = 0 : i64, scratch_operands = 1 : i64, tpu.core_type = #tpu.core_type<tc>, window_params = [{transform_indices = @transform_0, window_bounds = array<i64: 1, 16, 16, 128>}, {pipeline_mode = #tpu.pipeline_mode<synchronous>, transform_indices = @transform_1, window_bounds = array<i64: 1, 128>}, {pipeline_mode = #tpu.pipeline_mode<synchronous>, transform_indices = @transform_2, window_bounds = array<i64: 1, 128>}, {pipeline_mode = #tpu.pipeline_mode<synchronous>, transform_indices = @transform_3, window_bounds = array<i64: 1152, 128>}, {transform_indices = @transform_4, window_bounds = array<i64: 1, 16, 16, 128>}, {transform_indices = @transform_5, window_bounds = array<i64: 1, 2, 128>}]} {
    %c0 = arith.constant 0 : index
    %c0_0 = arith.constant 0 : index
    %c0_1 = arith.constant 0 : index
    %c0_2 = arith.constant 0 : index
    %0 = vector.load %arg1[%c0, %c0_0, %c0_1, %c0_2] : memref<1x16x16x128xbf16, #tpu.memory_space<vmem>>, vector<1x16x16x128xbf16>
    %1 = arith.extf %0 : vector<1x16x16x128xbf16> to vector<1x16x16x128xf32>
    %c0_3 = arith.constant 0 : index
    %c0_4 = arith.constant 0 : index
    %2 = vector.load %arg2[%c0_3, %c0_4] : memref<1x128xf32, #tpu.memory_space<vmem>>, vector<1x128xf32>
    %3 = vector.shape_cast %2 : vector<1x128xf32> to vector<1x1x1x128xf32>
    %4 = vector.broadcast %3 : vector<1x1x1x128xf32> to vector<1x16x16x128xf32>
    %5 = arith.mulf %1, %4 : vector<1x16x16x128xf32>
    %c0_5 = arith.constant 0 : index
    %c0_6 = arith.constant 0 : index
    %6 = vector.load %arg3[%c0_5, %c0_6] : memref<1x128xf32, #tpu.memory_space<vmem>>, vector<1x128xf32>
    %7 = vector.shape_cast %6 : vector<1x128xf32> to vector<1x1x1x128xf32>
    %8 = vector.broadcast %7 : vector<1x1x1x128xf32> to vector<1x16x16x128xf32>
    %9 = arith.addf %5, %8 : vector<1x16x16x128xf32>
    %cst = arith.constant 0.000000e+00 : f32
    %10 = vector.broadcast %cst : f32 to vector<1x16x16x128xf32>
    %11 = arith.maximumf %9, %10 : vector<1x16x16x128xf32>
    %cst_7 = arith.constant 0.000000e+00 : f32
    %12 = vector.broadcast %cst_7 : f32 to vector<1x1x18x128xf32>
    %cst_8 = arith.constant 0.000000e+00 : f32
    %13 = vector.broadcast %cst_8 : f32 to vector<1x18x1x128xf32>
    %c0_9 = arith.constant 0 : index
    %c0_10 = arith.constant 0 : index
    %c0_11 = arith.constant 0 : index
    %c0_12 = arith.constant 0 : index
    %14 = vector.load %arg7[%c0_9, %c0_10, %c0_11, %c0_12] : memref<1x18x18x128xf32, #tpu.memory_space<vmem>>, vector<1x1x18x128xf32>
    tpu.vector_store %arg7[%c0_9, %c0_10, %c0_11, %c0_12], %12 {strides = array<i32>} : memref<1x18x18x128xf32, #tpu.memory_space<vmem>>, vector<1x1x18x128xf32>,
    %c0_13 = arith.constant 0 : index
    %c17 = arith.constant 17 : index
    %c0_14 = arith.constant 0 : index
    %c0_15 = arith.constant 0 : index
    %15 = vector.load %arg7[%c0_13, %c17, %c0_14, %c0_15] : memref<1x18x18x128xf32, #tpu.memory_space<vmem>>, vector<1x1x18x128xf32>
    tpu.vector_store %arg7[%c0_13, %c17, %c0_14, %c0_15], %12 {strides = array<i32>} : memref<1x18x18x128xf32, #tpu.memory_space<vmem>>, vector<1x1x18x128xf32>,
    %c0_16 = arith.constant 0 : index
    %c0_17 = arith.constant 0 : index
    %c0_18 = arith.constant 0 : index
    %c0_19 = arith.constant 0 : index
    %16 = vector.load %arg7[%c0_16, %c0_17, %c0_18, %c0_19] : memref<1x18x18x128xf32, #tpu.memory_space<vmem>>, vector<1x18x1x128xf32>
    tpu.vector_store %arg7[%c0_16, %c0_17, %c0_18, %c0_19], %13 {strides = array<i32>} : memref<1x18x18x128xf32, #tpu.memory_space<vmem>>, vector<1x18x1x128xf32>,
    %c0_20 = arith.constant 0 : index
    %c0_21 = arith.constant 0 : index
    %c17_22 = arith.constant 17 : index
    %c0_23 = arith.constant 0 : index
    %17 = vector.load %arg7[%c0_20, %c0_21, %c17_22, %c0_23] : memref<1x18x18x128xf32, #tpu.memory_space<vmem>>, vector<1x18x1x128xf32>
    tpu.vector_store %arg7[%c0_20, %c0_21, %c17_22, %c0_23], %13 {strides = array<i32>} : memref<1x18x18x128xf32, #tpu.memory_space<vmem>>, vector<1x18x1x128xf32>,
    %c0_24 = arith.constant 0 : index
    %c1 = arith.constant 1 : index
    %c1_25 = arith.constant 1 : index
    %c0_26 = arith.constant 0 : index
    %18 = vector.load %arg7[%c0_24, %c1, %c1_25, %c0_26] : memref<1x18x18x128xf32, #tpu.memory_space<vmem>>, vector<1x16x16x128xf32>
    tpu.vector_store %arg7[%c0_24, %c1, %c1_25, %c0_26], %11 {strides = array<i32>} : memref<1x18x18x128xf32, #tpu.memory_space<vmem>>, vector<1x16x16x128xf32>,
    %c0_27 = arith.constant 0 : index
    %c0_28 = arith.constant 0 : index
    %c0_29 = arith.constant 0 : index
    %c0_30 = arith.constant 0 : index
    %19 = vector.load %arg7[%c0_27, %c0_28, %c0_29, %c0_30] : memref<1x18x18x128xf32, #tpu.memory_space<vmem>>, vector<1x16x16x128xf32>
    %20 = vector.shape_cast %19 : vector<1x16x16x128xf32> to vector<256x128xf32>
    %c0_31 = arith.constant 0 : index
    %c0_32 = arith.constant 0 : index
    %c1_33 = arith.constant 1 : index
    %c0_34 = arith.constant 0 : index
    %21 = vector.load %arg7[%c0_31, %c0_32, %c1_33, %c0_34] : memref<1x18x18x128xf32, #tpu.memory_space<vmem>>, vector<1x16x16x128xf32>
    %22 = vector.shape_cast %21 : vector<1x16x16x128xf32> to vector<256x128xf32>
    %c0_35 = arith.constant 0 : index
    %c0_36 = arith.constant 0 : index
    %c2 = arith.constant 2 : index
    %c0_37 = arith.constant 0 : index
    %23 = vector.load %arg7[%c0_35, %c0_36, %c2, %c0_37] : memref<1x18x18x128xf32, #tpu.memory_space<vmem>>, vector<1x16x16x128xf32>
    %24 = vector.shape_cast %23 : vector<1x16x16x128xf32> to vector<256x128xf32>
    %c0_38 = arith.constant 0 : index
    %c1_39 = arith.constant 1 : index
    %c0_40 = arith.constant 0 : index
    %c0_41 = arith.constant 0 : index
    %25 = vector.load %arg7[%c0_38, %c1_39, %c0_40, %c0_41] : memref<1x18x18x128xf32, #tpu.memory_space<vmem>>, vector<1x16x16x128xf32>
    %26 = vector.shape_cast %25 : vector<1x16x16x128xf32> to vector<256x128xf32>
    %c0_42 = arith.constant 0 : index
    %c1_43 = arith.constant 1 : index
    %c1_44 = arith.constant 1 : index
    %c0_45 = arith.constant 0 : index
    %27 = vector.load %arg7[%c0_42, %c1_43, %c1_44, %c0_45] : memref<1x18x18x128xf32, #tpu.memory_space<vmem>>, vector<1x16x16x128xf32>
    %28 = vector.shape_cast %27 : vector<1x16x16x128xf32> to vector<256x128xf32>
    %c0_46 = arith.constant 0 : index
    %c1_47 = arith.constant 1 : index
    %c2_48 = arith.constant 2 : index
    %c0_49 = arith.constant 0 : index
    %29 = vector.load %arg7[%c0_46, %c1_47, %c2_48, %c0_49] : memref<1x18x18x128xf32, #tpu.memory_space<vmem>>, vector<1x16x16x128xf32>
    %30 = vector.shape_cast %29 : vector<1x16x16x128xf32> to vector<256x128xf32>
    %c0_50 = arith.constant 0 : index
    %c2_51 = arith.constant 2 : index
    %c0_52 = arith.constant 0 : index
    %c0_53 = arith.constant 0 : index
    %31 = vector.load %arg7[%c0_50, %c2_51, %c0_52, %c0_53] : memref<1x18x18x128xf32, #tpu.memory_space<vmem>>, vector<1x16x16x128xf32>
    %32 = vector.shape_cast %31 : vector<1x16x16x128xf32> to vector<256x128xf32>
    %c0_54 = arith.constant 0 : index
    %c2_55 = arith.constant 2 : index
    %c1_56 = arith.constant 1 : index
    %c0_57 = arith.constant 0 : index
    %33 = vector.load %arg7[%c0_54, %c2_55, %c1_56, %c0_57] : memref<1x18x18x128xf32, #tpu.memory_space<vmem>>, vector<1x16x16x128xf32>
    %34 = vector.shape_cast %33 : vector<1x16x16x128xf32> to vector<256x128xf32>
    %c0_58 = arith.constant 0 : index
    %c2_59 = arith.constant 2 : index
    %c2_60 = arith.constant 2 : index
    %c0_61 = arith.constant 0 : index
    %35 = vector.load %arg7[%c0_58, %c2_59, %c2_60, %c0_61] : memref<1x18x18x128xf32, #tpu.memory_space<vmem>>, vector<1x16x16x128xf32>
    %36 = vector.shape_cast %35 : vector<1x16x16x128xf32> to vector<256x128xf32>
    %37 = tpu.concatenate %20, %22, %24, %26, %28, %30, %32, %34, %36 in 1 : vector<256x128xf32>, vector<256x128xf32>, vector<256x128xf32>, vector<256x128xf32>, vector<256x128xf32>, vector<256x128xf32>, vector<256x128xf32>, vector<256x128xf32>, vector<256x128xf32> -> vector<256x1152xf32>
    %38 = arith.truncf %37 : vector<256x1152xf32> to vector<256x1152xbf16>
    %c0_62 = arith.constant 0 : index
    %c0_63 = arith.constant 0 : index
    %39 = vector.load %arg4[%c0_62, %c0_63] : memref<1152x128xbf16, #tpu.memory_space<vmem>>, vector<1152x128xbf16>
    %cst_64 = arith.constant dense<0.000000e+00> : vector<256x128xf32>
    %40 = tpu.matmul %38, %39, %cst_64 {dimension_numbers = #tpu.dot_dimension_numbers<[1], [0], [0], [1], [0, 0, 1, 1], [], []>} : vector<256x1152xbf16>, vector<1152x128xbf16>, vector<256x128xf32> -> vector<256x128xf32>
    %41 = vector.shape_cast %40 : vector<256x128xf32> to vector<1x16x16x128xf32>
    %42 = arith.truncf %41 : vector<1x16x16x128xf32> to vector<1x16x16x128xbf16>
    %c0_65 = arith.constant 0 : index
    %c0_66 = arith.constant 0 : index
    %c0_67 = arith.constant 0 : index
    %c0_68 = arith.constant 0 : index
    %43 = vector.load %arg5[%c0_65, %c0_66, %c0_67, %c0_68] : memref<1x16x16x128xbf16, #tpu.memory_space<vmem>>, vector<1x16x16x128xbf16>
    tpu.vector_store %arg5[%c0_65, %c0_66, %c0_67, %c0_68], %42 {strides = array<i32>} : memref<1x16x16x128xbf16, #tpu.memory_space<vmem>>, vector<1x16x16x128xbf16>,
    %cst_69 = arith.constant dense<0.000000e+00> : vector<128xf32>
    %44 = vector.multi_reduction <add>, %40, %cst_69 [0] : vector<256x128xf32> to vector<128xf32>
    %45 = vector.shape_cast %44 : vector<128xf32> to vector<1x128xf32>
    %46 = arith.mulf %40, %40 : vector<256x128xf32>
    %cst_70 = arith.constant dense<0.000000e+00> : vector<128xf32>
    %47 = vector.multi_reduction <add>, %46, %cst_70 [0] : vector<256x128xf32> to vector<128xf32>
    %48 = vector.shape_cast %47 : vector<128xf32> to vector<1x128xf32>
    %49 = tpu.concatenate %45, %48 in 0 : vector<1x128xf32>, vector<1x128xf32> -> vector<2x128xf32>
    %50 = vector.shape_cast %49 : vector<2x128xf32> to vector<1x2x128xf32>
    %c0_71 = arith.constant 0 : index
    %c0_72 = arith.constant 0 : index
    %c0_73 = arith.constant 0 : index
    %51 = vector.load %arg6[%c0_71, %c0_72, %c0_73] : memref<1x2x128xf32, #tpu.memory_space<vmem>>, vector<1x2x128xf32>
    tpu.vector_store %arg6[%c0_71, %c0_72, %c0_73], %50 {strides = array<i32>} : memref<1x2x128xf32, #tpu.memory_space<vmem>>, vector<1x2x128xf32>,
    return
  }
  func.func @transform_0(%arg0: i32) -> (i32, i32, i32, i32) {
    %c0_i32 = arith.constant 0 : i32
    %c0_i32_0 = arith.constant 0 : i32
    %c0_i32_1 = arith.constant 0 : i32
    %c0_i32_2 = arith.constant 0 : i32
    return %arg0, %c0_i32, %c0_i32_0, %c0_i32_1 : i32, i32, i32, i32
  }
  func.func @transform_1(%arg0: i32) -> (i32, i32) {
    %c0_i32 = arith.constant 0 : i32
    %c0_i32_0 = arith.constant 0 : i32
    %c0_i32_1 = arith.constant 0 : i32
    return %c0_i32, %c0_i32_0 : i32, i32
  }
  func.func @transform_2(%arg0: i32) -> (i32, i32) {
    %c0_i32 = arith.constant 0 : i32
    %c0_i32_0 = arith.constant 0 : i32
    %c0_i32_1 = arith.constant 0 : i32
    return %c0_i32, %c0_i32_0 : i32, i32
  }
  func.func @transform_3(%arg0: i32) -> (i32, i32) {
    %c0_i32 = arith.constant 0 : i32
    %c0_i32_0 = arith.constant 0 : i32
    %c0_i32_1 = arith.constant 0 : i32
    return %c0_i32, %c0_i32_0 : i32, i32
  }
  func.func @transform_4(%arg0: i32) -> (i32, i32, i32, i32) {
    %c0_i32 = arith.constant 0 : i32
    %c0_i32_0 = arith.constant 0 : i32
    %c0_i32_1 = arith.constant 0 : i32
    %c0_i32_2 = arith.constant 0 : i32
    return %arg0, %c0_i32, %c0_i32_0, %c0_i32_1 : i32, i32, i32, i32
  }
  func.func @transform_5(%arg0: i32) -> (i32, i32, i32) {
    %c0_i32 = arith.constant 0 : i32
    %c0_i32_0 = arith.constant 0 : i32
    %c0_i32_1 = arith.constant 0 : i32
    return %arg0, %c0_i32, %c0_i32_0 : i32, i32, i32
  }
}

</mosaic_0001>

<llo_original>
// kernel: block_forward.5
$region0: #{block_forward.5}
  #allocation0 [shape = 'u32[]', space=smem, size = 0x4, offset = 0x4, fixed_abs, tag = 'smem constant byte address 0x4 - core index']
  #allocation1 [shape = 'u32[144,128]{1,0:T(1,128)}', space=vmem, size = 0x12000, scoped, tag = 'internal scratch']
  %s0 = inlined_call_operand.vmem [shape: bf16[2,16,16,128], index: 0, kind: input, shape index: {}]
  %s1 = inlined_call_operand.vmem [shape: f32[1,128], index: 1, kind: input, shape index: {}]
  %s2 = inlined_call_operand.vmem [shape: f32[1,128], index: 2, kind: input, shape index: {}]
  %s3 = inlined_call_operand.vmem [shape: bf16[2,16,16,128], index: 3, kind: input, shape index: {}]
  %s4 = inlined_call_operand.vmem [shape: f32[1,128], index: 4, kind: input, shape index: {}]
  %s5 = inlined_call_operand.vmem [shape: f32[1,128], index: 5, kind: input, shape index: {}]
  %s6 = inlined_call_operand.vmem [shape: f32[2,16,16,128], index: 6, kind: output, shape index: {}]
  %s7 = sld [smem:[#allocation0]]
  $region57: #{block_forward.5} parent=0
    _
  %s9 = ssub.s32 1, %s7
  %s10 = scalar_select 0, %s9, %s7
  loop: start=0, step=1, limit=4
  $region2: #{block_forward.5} parent=0 // loop_pre_header
    _
  $region3: #{block_forward.5} parent=0 // loop_header
    %s12 = sphi 0, %s16
    %p13 = scmp.ge.s32.totalorder %s12, 4
    %s22 = sphi 0, %s24
    %s25 = sphi 0, %s22
    %s26 = sphi 0, %s25
    %s42 = sphi 0, %s26
    %s46 = sphi 0, %s46
    %s48 = sphi 0, %s46
    %s49 = sphi 0, %s48
    %s63 = sphi 0, %s49
    %s67 = sphi 0, %s67
    %s69 = sphi 0, %s67
    %s70 = sphi 0, %s69
    %s84 = sphi 0, %s70
    %s90 = sphi 0, %s92
    %s93 = sphi 0, %s90
    %s94 = sphi 0, %s93
    %s110 = sphi 0, %s94
    %s114 = sphi 0, %s114
    %s116 = sphi 0, %s114
    %s117 = sphi 0, %s116
    %s131 = sphi 0, %s117
    %s135 = sphi 0, %s135
    %s137 = sphi 0, %s135
    %s138 = sphi 0, %s137
    %s152 = sphi 0, %s138
    %s158 = sphi 0, %s160
    %s161 = sphi 0, %s158
    %s162 = sphi 0, %s161
    %s178 = sphi 0, %s162
  $region4: #{block_forward.5} parent=0 // loop_header_branch
    %15 = sbr.rel (%p13) target = $region8
  $region5: #{block_forward.5} parent=0 // loop_body
    %s17 = ssub.s32 %s12, 1
    %s18 = ssub.s32 %s12, 2
    %s19 = sadd.s32 %s12, 1
    %s20 = ssub.s32 %s12, %s19
    %p21 = scmp.eq.s32.totalorder %s20, 0
    %s23 = sadd.s32 %s22, 1
    %s24 = scalar_select %p21, %s22, %s23
    %p27 = pneg %p21
    %p28 = scmp.eq.s32.totalorder %s12, 1
    %p29 = por %p27, %p28
    %p30 = scmp.ne.s32.totalorder %s22, %s25
    %p31 = scmp.eq.s32.totalorder %s12, 0
    %p32 = por %p30, %p31
    %p33 = scmp.ne.s32.totalorder %s22, %s25
    %p34 = scmp.eq.s32.totalorder %s17, 1
    %p35 = por %p33, %p34
    %p36 = scmp.ne.s32.totalorder %s25, %s26
    %p37 = scmp.eq.s32.totalorder %s17, 0
    %p38 = por %p36, %p37
    %p39 = scmp.ne.s32.totalorder %s25, %s26
    %p40 = scmp.eq.s32.totalorder %s18, 1
    %p41 = por %p39, %p40
    %p43 = scmp.ne.s32.totalorder %s26, %s42
    %p44 = scmp.eq.s32.totalorder %s18, 0
    %p45 = por %p43, %p44
    %s47 = sadd.s32 %s46, 1
    %p50 = scmp.eq.s32.totalorder %s12, 1
    %p51 = scmp.ne.s32.totalorder %s46, %s48
    %p52 = scmp.eq.s32.totalorder %s12, 0
    %p53 = por %p51, %p52
    %p54 = scmp.ne.s32.totalorder %s46, %s48
    %p55 = scmp.eq.s32.totalorder %s17, 1
    %p56 = por %p54, %p55
    %p57 = scmp.ne.s32.totalorder %s48, %s49
    %p58 = scmp.eq.s32.totalorder %s17, 0
    %p59 = por %p57, %p58
    %p60 = scmp.ne.s32.totalorder %s48, %s49
    %p61 = scmp.eq.s32.totalorder %s18, 1
    %p62 = por %p60, %p61
    %p64 = scmp.ne.s32.totalorder %s49, %s63
    %p65 = scmp.eq.s32.totalorder %s18, 0
    %p66 = por %p64, %p65
    %s68 = sadd.s32 %s67, 1
    %p71 = scmp.eq.s32.totalorder %s12, 1
    %p72 = scmp.ne.s32.totalorder %s67, %s69
    %p73 = scmp.eq.s32.totalorder %s12, 0
    %p74 = por %p72, %p73
    %p75 = scmp.ne.s32.totalorder %s67, %s69
    %p76 = scmp.eq.s32.totalorder %s17, 1
    %p77 = por %p75, %p76
    %p78 = scmp.ne.s32.totalorder %s69, %s70
    %p79 = scmp.eq.s32.totalorder %s17, 0
    %p80 = por %p78, %p79
    %p81 = scmp.ne.s32.totalorder %s69, %s70
    %p82 = scmp.eq.s32.totalorder %s18, 1
    %p83 = por %p81, %p82
    %p85 = scmp.ne.s32.totalorder %s70, %s84
    %p86 = scmp.eq.s32.totalorder %s18, 0
    %p87 = por %p85, %p86
    %s88 = ssub.s32 %s12, %s19
    %p89 = scmp.eq.s32.totalorder %s88, 0
    %s91 = sadd.s32 %s90, 1
    %s92 = scalar_select %p89, %s90, %s91
    %p95 = pneg %p89
    %p96 = scmp.eq.s32.totalorder %s12, 1
    %p97 = por %p95, %p96
    %p98 = scmp.ne.s32.totalorder %s90, %s93
    %p99 = scmp.eq.s32.totalorder %s12, 0
    %p100 = por %p98, %p99
    %p101 = scmp.ne.s32.totalorder %s90, %s93
    %p102 = scmp.eq.s32.totalorder %s17, 1
    %p103 = por %p101, %p102
    %p104 = scmp.ne.s32.totalorder %s93, %s94
    %p105 = scmp.eq.s32.totalorder %s17, 0
    %p106 = por %p104, %p105
    %p107 = scmp.ne.s32.totalorder %s93, %s94
    %p108 = scmp.eq.s32.totalorder %s18, 1
    %p109 = por %p107, %p108
    %p111 = scmp.ne.s32.totalorder %s94, %s110
    %p112 = scmp.eq.s32.totalorder %s18, 0
    %p113 = por %p111, %p112
    %s115 = sadd.s32 %s114, 1
    %p118 = scmp.eq.s32.totalorder %s12, 1
    %p119 = scmp.ne.s32.totalorder %s114, %s116
    %p120 = scmp.eq.s32.totalorder %s12, 0
    %p121 = por %p119, %p120
    %p122 = scmp.ne.s32.totalorder %s114, %s116
    %p123 = scmp.eq.s32.totalorder %s17, 1
    %p124 = por %p122, %p123
    %p125 = scmp.ne.s32.totalorder %s116, %s117
    %p126 = scmp.eq.s32.totalorder %s17, 0
    %p127 = por %p125, %p126
    %p128 = scmp.ne.s32.totalorder %s116, %s117
    %p129 = scmp.eq.s32.totalorder %s18, 1
    %p130 = por %p128, %p129
    %p132 = scmp.ne.s32.totalorder %s117, %s131
    %p133 = scmp.eq.s32.totalorder %s18, 0
    %p134 = por %p132, %p133
    %s136 = sadd.s32 %s135, 1
    %p139 = scmp.eq.s32.totalorder %s12, 1
    %p140 = scmp.ne.s32.totalorder %s135, %s137
    %p141 = scmp.eq.s32.totalorder %s12, 0
    %p142 = por %p140, %p141
    %p143 = scmp.ne.s32.totalorder %s135, %s137
    %p144 = scmp.eq.s32.totalorder %s17, 1
    %p145 = por %p143, %p144
    %p146 = scmp.ne.s32.totalorder %s137, %s138
    %p147 = scmp.eq.s32.totalorder %s17, 0
    %p148 = por %p146, %p147
    %p149 = scmp.ne.s32.totalorder %s137, %s138
    %p150 = scmp.eq.s32.totalorder %s18, 1
    %p151 = por %p149, %p150
    %p153 = scmp.ne.s32.totalorder %s138, %s152
    %p154 = scmp.eq.s32.totalorder %s18, 0
    %p155 = por %p153, %p154
    %s156 = ssub.s32 %s12, %s19
    %p157 = scmp.eq.s32.totalorder %s156, 0
    %s159 = sadd.s32 %s158, 1
    %s160 = scalar_select %p157, %s158, %s159
    %p163 = pneg %p157
    %p164 = scmp.eq.s32.totalorder %s12, 1
    %p165 = por %p163, %p164
    %p166 = scmp.ne.s32.totalorder %s158, %s161
    %p167 = scmp.eq.s32.totalorder %s12, 0
    %p168 = por %p166, %p167
    %p169 = scmp.ne.s32.totalorder %s158, %s161
    %p170 = scmp.eq.s32.totalorder %s17, 1
    %p171 = por %p169, %p170
    %p172 = scmp.ne.s32.totalorder %s161, %s162
    %p173 = scmp.eq.s32.totalorder %s17, 0
    %p174 = por %p172, %p173
    %p175 = scmp.ne.s32.totalorder %s161, %s162
    %p176 = scmp.eq.s32.totalorder %s18, 1
    %p177 = por %p175, %p176
    %p179 = scmp.ne.s32.totalorder %s162, %s178
    %p180 = scmp.eq.s32.totalorder %s18, 0
    %p181 = por %p179, %p180
    %p182 = scmp.le.s32.totalorder 1, %s12
    %p183 = scmp.lt.s32.totalorder %s12, 3
    %p184 = pnand %p182, %p183
    %p185 = pneg %p184
    // Predicated region
    $region9: #{block_forward.5} parent=5 // pred_check
      _
    $region10: #{block_forward.5} parent=5 // pred_check_branch
      %187 = sbr.rel (%p184) target = $region12
    $region11: #{block_forward.5} parent=5 // pred_region
      %s188 = ssub.s32 %s12, 1
      // Predicated region
      $region13: #{block_forward.5} parent=11 // pred_check
        %p189 = pneg %p59
      $region14: #{block_forward.5} parent=11 // pred_check_branch
        %191 = sbr.rel (%p189) target = $region16
      $region15: #{block_forward.5} parent=11 // pred_region
        _
      $region16: #{block_forward.5} parent=11 // pred_fallthru
        _
      // Predicated region
      $region17: #{block_forward.5} parent=11 // pred_check
        %p192 = pneg %p80
      $region18: #{block_forward.5} parent=11 // pred_check_branch
        %194 = sbr.rel (%p192) target = $region20
      $region19: #{block_forward.5} parent=11 // pred_region
        _
      $region20: #{block_forward.5} parent=11 // pred_fallthru
        _
      // Predicated region
      $region21: #{block_forward.5} parent=11 // pred_check
        %p195 = pneg %p127
      $region22: #{block_forward.5} parent=11 // pred_check_branch
        %197 = sbr.rel (%p195) target = $region24
      $region23: #{block_forward.5} parent=11 // pred_region
        _
      $region24: #{block_forward.5} parent=11 // pred_fallthru
        _
      // Predicated region
      $region25: #{block_forward.5} parent=11 // pred_check
        %p198 = pneg %p148
      $region26: #{block_forward.5} parent=11 // pred_check_branch
        %200 = sbr.rel (%p198) target = $region28
      $region27: #{block_forward.5} parent=11 // pred_region
        _
      $region28: #{block_forward.5} parent=11 // pred_fallthru
        _
    $region12: #{block_forward.5} parent=5 // pred_fallthru
      _
    %p201 = scmp.lt.s32.totalorder %s12, 2
    // Predicated region
    $region29: #{block_forward.5} parent=5 // pred_check
      %p202 = pneg %p201
    $region30: #{block_forward.5} parent=5 // pred_check_branch
      %204 = sbr.rel (%p202) target = $region32
    $region31: #{block_forward.5} parent=5 // pred_region
      // Predicated region
      $region33: #{block_forward.5} parent=31 // pred_check
        %p205 = pneg %p32
      $region34: #{block_forward.5} parent=31 // pred_check_branch
        %207 = sbr.rel (%p205) target = $region36
      $region35: #{block_forward.5} parent=31 // pred_region
        %p208 = scmp.lt.s32.totalorder %s12, 1
        %s209 = scalar_select %p208, %s12, 1
        %s210 = smul.addr %s209, 32
        %s211 = smul.addr %s210, 4
        %s212 = scalar_lea.vmem %s0, %s211
      $region36: #{block_forward.5} parent=31 // pred_fallthru
        _
      // Predicated region
      $region37: #{block_forward.5} parent=31 // pred_check
        %p213 = pneg %p100
      $region38: #{block_forward.5} parent=31 // pred_check_branch
        %215 = sbr.rel (%p213) target = $region40
      $region39: #{block_forward.5} parent=31 // pred_region
        %p216 = scmp.lt.s32.totalorder %s12, 1
        %s217 = scalar_select %p216, %s12, 1
        %s218 = smul.addr %s217, 32
        %s219 = smul.addr %s218, 4
        %s220 = scalar_lea.vmem %s3, %s219
      $region40: #{block_forward.5} parent=31 // pred_fallthru
        _
    $region32: #{block_forward.5} parent=5 // pred_fallthru
      _
    %p221 = scmp.le.s32.totalorder 1, %s12
    %p222 = scmp.lt.s32.totalorder %s12, 3
    %p223 = pnand %p221, %p222
    %p224 = pneg %p223
    // Predicated region
    $region41: #{block_forward.5} parent=5 // pred_check
      _
    $region42: #{block_forward.5} parent=5 // pred_check_branch
      %226 = sbr.rel (%p223) target = $region44
    $region43: #{block_forward.5} parent=5 // pred_region
      %s227 = ssub.s32 %s12, 1
      %p228 = scmp.lt.s32.totalorder %s17, 1
      %s229 = scalar_select %p228, %s17, 1
      %s230 = smul.addr %s229, 32
      %s231 = smul.addr %s230, 4
      %s232 = scalar_lea.vmem %s0, %s231
      %p233 = pneg %p38
      %p234 = pneg %p35
      %p235 = pneg %p59
      %p236 = pneg %p56
      %p237 = pneg %p80
      %p238 = pneg %p77
      %p239 = scmp.lt.s32.totalorder %s17, 1
      %s240 = scalar_select %p239, %s17, 1
      %s241 = smul.addr %s240, 32
      %s242 = smul.addr %s241, 4
      %s243 = scalar_lea.vmem %s3, %s242
      %p244 = pneg %p106
      %p245 = pneg %p103
      %p246 = pneg %p127
      %p247 = pneg %p124
      %p248 = pneg %p148
      %p249 = pneg %p145
      %p250 = pneg %p174
      %p251 = pneg %p171
      %p252 = scmp.lt.s32.totalorder %s17, 1
      %s253 = scalar_select %p252, %s17, 1
      %s254 = smul.addr %s253, 32
      %s255 = smul.addr %s254, 8
      %s256 = scalar_lea.vmem %s6, %s255
      %p257 = scmp.lt.s32.totalorder %s17, 1
      %s258 = scalar_select %p257, %s17, 1
      %s259 = smul.addr %s258, 32
      %s260 = smul.addr %s259, 4
      %s261 = scalar_lea.vmem %s0, %s260
      %p262 = scmp.lt.s32.totalorder %s17, 1
      %s263 = scalar_select %p262, %s17, 1
      %s264 = smul.addr %s263, 32
      %s265 = smul.addr %s264, 4
      %s266 = scalar_lea.vmem %s3, %s265
      %p267 = scmp.lt.s32.totalorder %s17, 1
      %s268 = scalar_select %p267, %s17, 1
      %s269 = smul.addr %s268, 32
      %s270 = smul.addr %s269, 8
      %s271 = scalar_lea.vmem %s6, %s270
      %v272 = vld [vmem:[%s266] sm:$0xf]
      %v273 = vld [vmem:[%s266 + $0x4] sm:$0xf]
      %v274 = vld [vmem:[%s266 + $0x8] sm:$0xf]
      %v275 = vld [vmem:[%s266 + $0xc] sm:$0xf]
      %v276 = vld [vmem:[%s266 + $0x10] sm:$0xf]
      %v277 = vld [vmem:[%s266 + $0x14] sm:$0xf]
      %v278 = vld [vmem:[%s266 + $0x18] sm:$0xf]
      %v279 = vld [vmem:[%s266 + $0x1c] sm:$0xf]
      %v280 = vld [vmem:[%s266 + $0x20] sm:$0xf]
      %v281 = vld [vmem:[%s266 + $0x24] sm:$0xf]
      %v282 = vld [vmem:[%s266 + $0x28] sm:$0xf]
      %v283 = vld [vmem:[%s266 + $0x2c] sm:$0xf]
      %v284 = vld [vmem:[%s266 + $0x30] sm:$0xf]
      %v285 = vld [vmem:[%s266 + $0x34] sm:$0xf]
      %v286 = vld [vmem:[%s266 + $0x38] sm:$0xf]
      %v287 = vld [vmem:[%s266 + $0x3c] sm:$0xf]
      %v288 = vld [vmem:[%s266 + $0x40] sm:$0xf]
      %v289 = vld [vmem:[%s266 + $0x44] sm:$0xf]
      %v290 = vld [vmem:[%s266 + $0x48] sm:$0xf]
      %v291 = vld [vmem:[%s266 + $0x4c] sm:$0xf]
      %v292 = vld [vmem:[%s266 + $0x50] sm:$0xf]
      %v293 = vld [vmem:[%s266 + $0x54] sm:$0xf]
      %v294 = vld [vmem:[%s266 + $0x58] sm:$0xf]
      %v295 = vld [vmem:[%s266 + $0x5c] sm:$0xf]
      %v296 = vld [vmem:[%s266 + $0x60] sm:$0xf]
      %v297 = vld [vmem:[%s266 + $0x64] sm:$0xf]
      %v298 = vld [vmem:[%s266 + $0x68] sm:$0xf]
      %v299 = vld [vmem:[%s266 + $0x6c] sm:$0xf]
      %v300 = vld [vmem:[%s266 + $0x70] sm:$0xf]
      %v301 = vld [vmem:[%s266 + $0x74] sm:$0xf]
      %v302 = vld [vmem:[%s266 + $0x78] sm:$0xf]
      %v303 = vld [vmem:[%s266 + $0x7c] sm:$0xf]
      %v304 = vunpack.c.l.bf16 %v272
      %v305 = vunpack.c.l.bf16 %v273
      %v306 = vunpack.c.l.bf16 %v274
      %v307 = vunpack.c.l.bf16 %v275
      %v308 = vunpack.c.l.bf16 %v276
      %v309 = vunpack.c.l.bf16 %v277
      %v310 = vunpack.c.l.bf16 %v278
      %v311 = vunpack.c.l.bf16 %v279
      %v312 = vunpack.c.l.bf16 %v280
      %v313 = vunpack.c.l.bf16 %v281
      %v314 = vunpack.c.l.bf16 %v282
      %v315 = vunpack.c.l.bf16 %v283
      %v316 = vunpack.c.l.bf16 %v284
      %v317 = vunpack.c.l.bf16 %v285
      %v318 = vunpack.c.l.bf16 %v286
      %v319 = vunpack.c.l.bf16 %v287
      %v320 = vunpack.c.l.bf16 %v288
      %v321 = vunpack.c.l.bf16 %v289
      %v322 = vunpack.c.l.bf16 %v290
      %v323 = vunpack.c.l.bf16 %v291
      %v324 = vunpack.c.l.bf16 %v292
      %v325 = vunpack.c.l.bf16 %v293
      %v326 = vunpack.c.l.bf16 %v294
      %v327 = vunpack.c.l.bf16 %v295
      %v328 = vunpack.c.l.bf16 %v296
      %v329 = vunpack.c.l.bf16 %v297
      %v330 = vunpack.c.l.bf16 %v298
      %v331 = vunpack.c.l.bf16 %v299
      %v332 = vunpack.c.l.bf16 %v300
      %v333 = vunpack.c.l.bf16 %v301
      %v334 = vunpack.c.l.bf16 %v302
      %v335 = vunpack.c.l.bf16 %v303
      %v336 = vld [vmem:[%s4] sm:$0x1]
      %v338 = vlaneseq
      %v339 = vshrl.u32 %v338, 7
      %v340 = vsub.s32 0, %v339
      %v341 = vrot.slane %v336, %v340
      %v343 = vmul.f32 %v304, %v341
      %v344 = vmul.f32 %v305, %v341
      %v345 = vmul.f32 %v306, %v341
      %v346 = vmul.f32 %v307, %v341
      %v347 = vmul.f32 %v308, %v341
      %v348 = vmul.f32 %v309, %v341
      %v349 = vmul.f32 %v310, %v341
      %v350 = vmul.f32 %v311, %v341
      %v351 = vmul.f32 %v312, %v341
      %v352 = vmul.f32 %v313, %v341
      %v353 = vmul.f32 %v314, %v341
      %v354 = vmul.f32 %v315, %v341
      %v355 = vmul.f32 %v316, %v341
      %v356 = vmul.f32 %v317, %v341
      %v357 = vmul.f32 %v318, %v341
      %v358 = vmul.f32 %v319, %v341
      %v359 = vmul.f32 %v320, %v341
      %v360 = vmul.f32 %v321, %v341
      %v361 = vmul.f32 %v322, %v341
      %v362 = vmul.f32 %v323, %v341
      %v363 = vmul.f32 %v324, %v341
      %v364 = vmul.f32 %v325, %v341
      %v365 = vmul.f32 %v326, %v341
      %v366 = vmul.f32 %v327, %v341
      %v367 = vmul.f32 %v328, %v341
      %v368 = vmul.f32 %v329, %v341
      %v369 = vmul.f32 %v330, %v341
      %v370 = vmul.f32 %v331, %v341
      %v371 = vmul.f32 %v332, %v341
      %v372 = vmul.f32 %v333, %v341
      %v373 = vmul.f32 %v334, %v341
      %v374 = vmul.f32 %v335, %v341
      %v375 = vld [vmem:[%s5] sm:$0x1]
      %v377 = vlaneseq
      %v378 = vshrl.u32 %v377, 7
      %v379 = vsub.s32 0, %v378
      %v380 = vrot.slane %v375, %v379
      %v382 = vadd.f32 %v343, %v380
      %v383 = vadd.f32 %v344, %v380
      %v384 = vadd.f32 %v345, %v380
      %v385 = vadd.f32 %v346, %v380
      %v386 = vadd.f32 %v347, %v380
      %v387 = vadd.f32 %v348, %v380
      %v388 = vadd.f32 %v349, %v380
      %v389 = vadd.f32 %v350, %v380
      %v390 = vadd.f32 %v351, %v380
      %v391 = vadd.f32 %v352, %v380
      %v392 = vadd.f32 %v353, %v380
      %v393 = vadd.f32 %v354, %v380
      %v394 = vadd.f32 %v355, %v380
      %v395 = vadd.f32 %v356, %v380
      %v396 = vadd.f32 %v357, %v380
      %v397 = vadd.f32 %v358, %v380
      %v398 = vadd.f32 %v359, %v380
      %v399 = vadd.f32 %v360, %v380
      %v400 = vadd.f32 %v361, %v380
      %v401 = vadd.f32 %v362, %v380
      %v402 = vadd.f32 %v363, %v380
      %v403 = vadd.f32 %v364, %v380
      %v404 = vadd.f32 %v365, %v380
      %v405 = vadd.f32 %v366, %v380
      %v406 = vadd.f32 %v367, %v380
      %v407 = vadd.f32 %v368, %v380
      %v408 = vadd.f32 %v369, %v380
      %v409 = vadd.f32 %v370, %v380
      %v410 = vadd.f32 %v371, %v380
      %v411 = vadd.f32 %v372, %v380
      %v412 = vadd.f32 %v373, %v380
      %v413 = vadd.f32 %v374, %v380
      %v414 = vld [vmem:[%s261] sm:$0xf]
      %v415 = vld [vmem:[%s261 + $0x4] sm:$0xf]
      %v416 = vld [vmem:[%s261 + $0x8] sm:$0xf]
      %v417 = vld [vmem:[%s261 + $0xc] sm:$0xf]
      %v418 = vld [vmem:[%s261 + $0x10] sm:$0xf]
      %v419 = vld [vmem:[%s261 + $0x14] sm:$0xf]
      %v420 = vld [vmem:[%s261 + $0x18] sm:$0xf]
      %v421 = vld [vmem:[%s261 + $0x1c] sm:$0xf]
      %v422 = vld [vmem:[%s261 + $0x20] sm:$0xf]
      %v423 = vld [vmem:[%s261 + $0x24] sm:$0xf]
      %v424 = vld [vmem:[%s261 + $0x28] sm:$0xf]
      %v425 = vld [vmem:[%s261 + $0x2c] sm:$0xf]
      %v426 = vld [vmem:[%s261 + $0x30] sm:$0xf]
      %v427 = vld [vmem:[%s261 + $0x34] sm:$0xf]
      %v428 = vld [vmem:[%s261 + $0x38] sm:$0xf]
      %v429 = vld [vmem:[%s261 + $0x3c] sm:$0xf]
      %v430 = vld [vmem:[%s261 + $0x40] sm:$0xf]
      %v431 = vld [vmem:[%s261 + $0x44] sm:$0xf]
      %v432 = vld [vmem:[%s261 + $0x48] sm:$0xf]
      %v433 = vld [vmem:[%s261 + $0x4c] sm:$0xf]
      %v434 = vld [vmem:[%s261 + $0x50] sm:$0xf]
      %v435 = vld [vmem:[%s261 + $0x54] sm:$0xf]
      %v436 = vld [vmem:[%s261 + $0x58] sm:$0xf]
      %v437 = vld [vmem:[%s261 + $0x5c] sm:$0xf]
      %v438 = vld [vmem:[%s261 + $0x60] sm:$0xf]
      %v439 = vld [vmem:[%s261 + $0x64] sm:$0xf]
      %v440 = vld [vmem:[%s261 + $0x68] sm:$0xf]
      %v441 = vld [vmem:[%s261 + $0x6c] sm:$0xf]
      %v442 = vld [vmem:[%s261 + $0x70] sm:$0xf]
      %v443 = vld [vmem:[%s261 + $0x74] sm:$0xf]
      %v444 = vld [vmem:[%s261 + $0x78] sm:$0xf]
      %v445 = vld [vmem:[%s261 + $0x7c] sm:$0xf]
      %v446 = vunpack.c.l.bf16 %v414
      %v447 = vunpack.c.l.bf16 %v415
      %v448 = vunpack.c.l.bf16 %v416
      %v449 = vunpack.c.l.bf16 %v417
      %v450 = vunpack.c.l.bf16 %v418
      %v451 = vunpack.c.l.bf16 %v419
      %v452 = vunpack.c.l.bf16 %v420
      %v453 = vunpack.c.l.bf16 %v421
      %v454 = vunpack.c.l.bf16 %v422
      %v455 = vunpack.c.l.bf16 %v423
      %v456 = vunpack.c.l.bf16 %v424
      %v457 = vunpack.c.l.bf16 %v425
      %v458 = vunpack.c.l.bf16 %v426
      %v459 = vunpack.c.l.bf16 %v427
      %v460 = vunpack.c.l.bf16 %v428
      %v461 = vunpack.c.l.bf16 %v429
      %v462 = vunpack.c.l.bf16 %v430
      %v463 = vunpack.c.l.bf16 %v431
      %v464 = vunpack.c.l.bf16 %v432
      %v465 = vunpack.c.l.bf16 %v433
      %v466 = vunpack.c.l.bf16 %v434
      %v467 = vunpack.c.l.bf16 %v435
      %v468 = vunpack.c.l.bf16 %v436
      %v469 = vunpack.c.l.bf16 %v437
      %v470 = vunpack.c.l.bf16 %v438
      %v471 = vunpack.c.l.bf16 %v439
      %v472 = vunpack.c.l.bf16 %v440
      %v473 = vunpack.c.l.bf16 %v441
      %v474 = vunpack.c.l.bf16 %v442
      %v475 = vunpack.c.l.bf16 %v443
      %v476 = vunpack.c.l.bf16 %v444
      %v477 = vunpack.c.l.bf16 %v445
      %v478 = vld [vmem:[%s1] sm:$0x1]
      %v480 = vlaneseq
      %v481 = vshrl.u32 %v480, 7
      %v482 = vsub.s32 0, %v481
      %v483 = vrot.slane %v478, %v482
      %v485 = vmul.f32 %v446, %v483
      %v486 = vmul.f32 %v447, %v483
      %v487 = vmul.f32 %v448, %v483
      %v488 = vmul.f32 %v449, %v483
      %v489 = vmul.f32 %v450, %v483
      %v490 = vmul.f32 %v451, %v483
      %v491 = vmul.f32 %v452, %v483
      %v492 = vmul.f32 %v453, %v483
      %v493 = vmul.f32 %v454, %v483
      %v494 = vmul.f32 %v455, %v483
      %v495 = vmul.f32 %v456, %v483
      %v496 = vmul.f32 %v457, %v483
      %v497 = vmul.f32 %v458, %v483
      %v498 = vmul.f32 %v459, %v483
      %v499 = vmul.f32 %v460, %v483
      %v500 = vmul.f32 %v461, %v483
      %v501 = vmul.f32 %v462, %v483
      %v502 = vmul.f32 %v463, %v483
      %v503 = vmul.f32 %v464, %v483
      %v504 = vmul.f32 %v465, %v483
      %v505 = vmul.f32 %v466, %v483
      %v506 = vmul.f32 %v467, %v483
      %v507 = vmul.f32 %v468, %v483
      %v508 = vmul.f32 %v469, %v483
      %v509 = vmul.f32 %v470, %v483
      %v510 = vmul.f32 %v471, %v483
      %v511 = vmul.f32 %v472, %v483
      %v512 = vmul.f32 %v473, %v483
      %v513 = vmul.f32 %v474, %v483
      %v514 = vmul.f32 %v475, %v483
      %v515 = vmul.f32 %v476, %v483
      %v516 = vmul.f32 %v477, %v483
      %v517 = vld [vmem:[%s2] sm:$0x1]
      %v519 = vlaneseq
      %v520 = vshrl.u32 %v519, 7
      %v521 = vsub.s32 0, %v520
      %v522 = vrot.slane %v517, %v521
      %v524 = vadd.f32 %v485, %v522
      %v525 = vadd.f32 %v486, %v522
      %v526 = vadd.f32 %v487, %v522
      %v527 = vadd.f32 %v488, %v522
      %v528 = vadd.f32 %v489, %v522
      %v529 = vadd.f32 %v490, %v522
      %v530 = vadd.f32 %v491, %v522
      %v531 = vadd.f32 %v492, %v522
      %v532 = vadd.f32 %v493, %v522
      %v533 = vadd.f32 %v494, %v522
      %v534 = vadd.f32 %v495, %v522
      %v535 = vadd.f32 %v496, %v522
      %v536 = vadd.f32 %v497, %v522
      %v537 = vadd.f32 %v498, %v522
      %v538 = vadd.f32 %v499, %v522
      %v539 = vadd.f32 %v500, %v522
      %v540 = vadd.f32 %v501, %v522
      %v541 = vadd.f32 %v502, %v522
      %v542 = vadd.f32 %v503, %v522
      %v543 = vadd.f32 %v504, %v522
      %v544 = vadd.f32 %v505, %v522
      %v545 = vadd.f32 %v506, %v522
      %v546 = vadd.f32 %v507, %v522
      %v547 = vadd.f32 %v508, %v522
      %v548 = vadd.f32 %v509, %v522
      %v549 = vadd.f32 %v510, %v522
      %v550 = vadd.f32 %v511, %v522
      %v551 = vadd.f32 %v512, %v522
      %v552 = vadd.f32 %v513, %v522
      %v553 = vadd.f32 %v514, %v522
      %v554 = vadd.f32 %v515, %v522
      %v555 = vadd.f32 %v516, %v522
      %v556 = vadd.f32 %v524, %v382
      %v557 = vadd.f32 %v525, %v383
      %v558 = vadd.f32 %v526, %v384
      %v559 = vadd.f32 %v527, %v385
      %v560 = vadd.f32 %v528, %v386
      %v561 = vadd.f32 %v529, %v387
      %v562 = vadd.f32 %v530, %v388
      %v563 = vadd.f32 %v531, %v389
      %v564 = vadd.f32 %v532, %v390
      %v565 = vadd.f32 %v533, %v391
      %v566 = vadd.f32 %v534, %v392
      %v567 = vadd.f32 %v535, %v393
      %v568 = vadd.f32 %v536, %v394
      %v569 = vadd.f32 %v537, %v395
      %v570 = vadd.f32 %v538, %v396
      %v571 = vadd.f32 %v539, %v397
      %v572 = vadd.f32 %v540, %v398
      %v573 = vadd.f32 %v541, %v399
      %v574 = vadd.f32 %v542, %v400
      %v575 = vadd.f32 %v543, %v401
      %v576 = vadd.f32 %v544, %v402
      %v577 = vadd.f32 %v545, %v403
      %v578 = vadd.f32 %v546, %v404
      %v579 = vadd.f32 %v547, %v405
      %v580 = vadd.f32 %v548, %v406
      %v581 = vadd.f32 %v549, %v407
      %v582 = vadd.f32 %v550, %v408
      %v583 = vadd.f32 %v551, %v409
      %v584 = vadd.f32 %v552, %v410
      %v585 = vadd.f32 %v553, %v411
      %v586 = vadd.f32 %v554, %v412
      %v587 = vadd.f32 %v555, %v413
      %v588 = vmax.f32 %v556, 0.0
      %v589 = vmax.f32 %v557, 0.0
      %v590 = vmax.f32 %v558, 0.0
      %v591 = vmax.f32 %v559, 0.0
      %v592 = vmax.f32 %v560, 0.0
      %v593 = vmax.f32 %v561, 0.0
      %v594 = vmax.f32 %v562, 0.0
      %v595 = vmax.f32 %v563, 0.0
      %v596 = vmax.f32 %v564, 0.0
      %v597 = vmax.f32 %v565, 0.0
      %v598 = vmax.f32 %v566, 0.0
      %v599 = vmax.f32 %v567, 0.0
      %v600 = vmax.f32 %v568, 0.0
      %v601 = vmax.f32 %v569, 0.0
      %v602 = vmax.f32 %v570, 0.0
      %v603 = vmax.f32 %v571, 0.0
      %v604 = vmax.f32 %v572, 0.0
      %v605 = vmax.f32 %v573, 0.0
      %v606 = vmax.f32 %v574, 0.0
      %v607 = vmax.f32 %v575, 0.0
      %v608 = vmax.f32 %v576, 0.0
      %v609 = vmax.f32 %v577, 0.0
      %v610 = vmax.f32 %v578, 0.0
      %v611 = vmax.f32 %v579, 0.0
      %v612 = vmax.f32 %v580, 0.0
      %v613 = vmax.f32 %v581, 0.0
      %v614 = vmax.f32 %v582, 0.0
      %v615 = vmax.f32 %v583, 0.0
      %v616 = vmax.f32 %v584, 0.0
      %v617 = vmax.f32 %v585, 0.0
      %v618 = vmax.f32 %v586, 0.0
      %v619 = vmax.f32 %v587, 0.0
      %620 = vst [vmem:[%s271] sm:$0xff] %v588
      %621 = vst [vmem:[%s271 + $0x8] sm:$0xff] %v589
      %622 = vst [vmem:[%s271 + $0x10] sm:$0xff] %v590
      %623 = vst [vmem:[%s271 + $0x18] sm:$0xff] %v591
      %624 = vst [vmem:[%s271 + $0x20] sm:$0xff] %v592
      %625 = vst [vmem:[%s271 + $0x28] sm:$0xff] %v593
      %626 = vst [vmem:[%s271 + $0x30] sm:$0xff] %v594
      %627 = vst [vmem:[%s271 + $0x38] sm:$0xff] %v595
      %628 = vst [vmem:[%s271 + $0x40] sm:$0xff] %v596
      %629 = vst [vmem:[%s271 + $0x48] sm:$0xff] %v597
      %630 = vst [vmem:[%s271 + $0x50] sm:$0xff] %v598
      %631 = vst [vmem:[%s271 + $0x58] sm:$0xff] %v599
      %632 = vst [vmem:[%s271 + $0x60] sm:$0xff] %v600
      %633 = vst [vmem:[%s271 + $0x68] sm:$0xff] %v601
      %634 = vst [vmem:[%s271 + $0x70] sm:$0xff] %v602
      %635 = vst [vmem:[%s271 + $0x78] sm:$0xff] %v603
      %636 = vst [vmem:[%s271 + $0x80] sm:$0xff] %v604
      %637 = vst [vmem:[%s271 + $0x88] sm:$0xff] %v605
      %638 = vst [vmem:[%s271 + $0x90] sm:$0xff] %v606
      %639 = vst [vmem:[%s271 + $0x98] sm:$0xff] %v607
      %640 = vst [vmem:[%s271 + $0xa0] sm:$0xff] %v608
      %641 = vst [vmem:[%s271 + $0xa8] sm:$0xff] %v609
      %642 = vst [vmem:[%s271 + $0xb0] sm:$0xff] %v610
      %643 = vst [vmem:[%s271 + $0xb8] sm:$0xff] %v611
      %644 = vst [vmem:[%s271 + $0xc0] sm:$0xff] %v612
      %645 = vst [vmem:[%s271 + $0xc8] sm:$0xff] %v613
      %646 = vst [vmem:[%s271 + $0xd0] sm:$0xff] %v614
      %647 = vst [vmem:[%s271 + $0xd8] sm:$0xff] %v615
      %648 = vst [vmem:[%s271 + $0xe0] sm:$0xff] %v616
      %649 = vst [vmem:[%s271 + $0xe8] sm:$0xff] %v617
      %650 = vst [vmem:[%s271 + $0xf0] sm:$0xff] %v618
      %651 = vst [vmem:[%s271 + $0xf8] sm:$0xff] %v619
      %p652 = scmp.lt.s32.totalorder %s17, 1
      %s653 = scalar_select %p652, %s17, 1
      %s654 = smul.addr %s653, 32
      %s655 = smul.addr %s654, 8
      %s656 = scalar_lea.vmem %s6, %s655
      // Predicated region
      $region45: #{block_forward.5} parent=43 // pred_check
        %p657 = pneg %p171
      $region46: #{block_forward.5} parent=43 // pred_check_branch
        %659 = sbr.rel (%p657) target = $region48
      $region47: #{block_forward.5} parent=43 // pred_region
        _
      $region48: #{block_forward.5} parent=43 // pred_fallthru
        _
    $region44: #{block_forward.5} parent=5 // pred_fallthru
      _
    %p660 = scmp.le.s32.totalorder 2, %s12
    // Predicated region
    $region49: #{block_forward.5} parent=5 // pred_check
      %p661 = pneg %p660
    $region50: #{block_forward.5} parent=5 // pred_check_branch
      %663 = sbr.rel (%p661) target = $region52
    $region51: #{block_forward.5} parent=5 // pred_region
      %s664 = ssub.s32 %s12, 2
      // Predicated region
      $region53: #{block_forward.5} parent=51 // pred_check
        %p665 = pneg %p177
      $region54: #{block_forward.5} parent=51 // pred_check_branch
        %667 = sbr.rel (%p665) target = $region56
      $region55: #{block_forward.5} parent=51 // pred_region
        %p668 = scmp.lt.s32.totalorder %s18, 1
        %s669 = scalar_select %p668, %s18, 1
        %s670 = smul.addr %s669, 32
        %s671 = smul.addr %s670, 8
        %s672 = scalar_lea.vmem %s6, %s671
      $region56: #{block_forward.5} parent=51 // pred_fallthru
        _
    $region52: #{block_forward.5} parent=5 // pred_fallthru
      _
  $region6: #{block_forward.5} parent=0 // loop_footer
    %s16 = sadd.s32 1, %s12
  $region7: #{block_forward.5} parent=0 // loop_footer_branch
    %11 = sbr.rel target = $region3
  $region8: #{block_forward.5} parent=0 // loop_exit
    _

// kernel: block_forward.4
$region0: #{block_forward.4}
  #allocation0 [shape = 'u32[]', space=smem, size = 0x4, offset = 0x4, fixed_abs, tag = 'smem constant byte address 0x4 - core index']
  #allocation1 [shape = 'u32[144,128]{1,0:T(1,128)}', space=vmem, size = 0x12000, scoped, tag = 'internal scratch']
  #allocation2 [shape = 'f32[1,18,18,128]{3,2,1,0:T(8,128)}', space=vmem, size = 0x36000, scoped, tag = 'scratch operand']
  %s0 = inlined_call_operand.vmem [shape: bf16[2,16,16,128], index: 0, kind: input, shape index: {}]
  %s1 = inlined_call_operand.vmem [shape: f32[1,128], index: 1, kind: input, shape index: {}]
  %s2 = inlined_call_operand.vmem [shape: f32[1,128], index: 2, kind: input, shape index: {}]
  %s3 = inlined_call_operand.vmem [shape: bf16[1152,128], index: 3, kind: input, shape index: {}]
  %s4 = inlined_call_operand.vmem [shape: bf16[2,16,16,128], index: 4, kind: output, shape index: {0}]
  %s5 = inlined_call_operand.vmem [shape: f32[2,2,128], index: 5, kind: output, shape index: {1}]
  %6 = xla_tuple %s4, %s5
  %s7 = sld [smem:[#allocation0]]
  $region57: #{block_forward.4} parent=0
    _
  %s9 = ssub.s32 1, %s7
  %s10 = scalar_select 0, %s9, %s7
  loop: start=0, step=1, limit=4
  $region2: #{block_forward.4} parent=0 // loop_pre_header
    _
  $region3: #{block_forward.4} parent=0 // loop_header
    %s12 = sphi 0, %s16
    %p13 = scmp.ge.s32.totalorder %s12, 4
    %s22 = sphi 0, %s24
    %s25 = sphi 0, %s22
    %s26 = sphi 0, %s25
    %s42 = sphi 0, %s26
    %s46 = sphi 0, %s46
    %s48 = sphi 0, %s46
    %s49 = sphi 0, %s48
    %s63 = sphi 0, %s49
    %s67 = sphi 0, %s67
    %s69 = sphi 0, %s67
    %s70 = sphi 0, %s69
    %s84 = sphi 0, %s70
    %s88 = sphi 0, %s88
    %s90 = sphi 0, %s88
    %s91 = sphi 0, %s90
    %s105 = sphi 0, %s91
    %s111 = sphi 0, %s113
    %s114 = sphi 0, %s111
    %s115 = sphi 0, %s114
    %s131 = sphi 0, %s115
    %s137 = sphi 0, %s139
    %s140 = sphi 0, %s137
    %s141 = sphi 0, %s140
    %s157 = sphi 0, %s141
  $region4: #{block_forward.4} parent=0 // loop_header_branch
    %15 = sbr.rel (%p13) target = $region8
  $region5: #{block_forward.4} parent=0 // loop_body
    %s17 = ssub.s32 %s12, 1
    %s18 = ssub.s32 %s12, 2
    %s19 = sadd.s32 %s12, 1
    %s20 = ssub.s32 %s12, %s19
    %p21 = scmp.eq.s32.totalorder %s20, 0
    %s23 = sadd.s32 %s22, 1
    %s24 = scalar_select %p21, %s22, %s23
    %p27 = pneg %p21
    %p28 = scmp.eq.s32.totalorder %s12, 1
    %p29 = por %p27, %p28
    %p30 = scmp.ne.s32.totalorder %s22, %s25
    %p31 = scmp.eq.s32.totalorder %s12, 0
    %p32 = por %p30, %p31
    %p33 = scmp.ne.s32.totalorder %s22, %s25
    %p34 = scmp.eq.s32.totalorder %s17, 1
    %p35 = por %p33, %p34
    %p36 = scmp.ne.s32.totalorder %s25, %s26
    %p37 = scmp.eq.s32.totalorder %s17, 0
    %p38 = por %p36, %p37
    %p39 = scmp.ne.s32.totalorder %s25, %s26
    %p40 = scmp.eq.s32.totalorder %s18, 1
    %p41 = por %p39, %p40
    %p43 = scmp.ne.s32.totalorder %s26, %s42
    %p44 = scmp.eq.s32.totalorder %s18, 0
    %p45 = por %p43, %p44
    %s47 = sadd.s32 %s46, 1
    %p50 = scmp.eq.s32.totalorder %s12, 1
    %p51 = scmp.ne.s32.totalorder %s46, %s48
    %p52 = scmp.eq.s32.totalorder %s12, 0
    %p53 = por %p51, %p52
    %p54 = scmp.ne.s32.totalorder %s46, %s48
    %p55 = scmp.eq.s32.totalorder %s17, 1
    %p56 = por %p54, %p55
    %p57 = scmp.ne.s32.totalorder %s48, %s49
    %p58 = scmp.eq.s32.totalorder %s17, 0
    %p59 = por %p57, %p58
    %p60 = scmp.ne.s32.totalorder %s48, %s49
    %p61 = scmp.eq.s32.totalorder %s18, 1
    %p62 = por %p60, %p61
    %p64 = scmp.ne.s32.totalorder %s49, %s63
    %p65 = scmp.eq.s32.totalorder %s18, 0
    %p66 = por %p64, %p65
    %s68 = sadd.s32 %s67, 1
    %p71 = scmp.eq.s32.totalorder %s12, 1
    %p72 = scmp.ne.s32.totalorder %s67, %s69
    %p73 = scmp.eq.s32.totalorder %s12, 0
    %p74 = por %p72, %p73
    %p75 = scmp.ne.s32.totalorder %s67, %s69
    %p76 = scmp.eq.s32.totalorder %s17, 1
    %p77 = por %p75, %p76
    %p78 = scmp.ne.s32.totalorder %s69, %s70
    %p79 = scmp.eq.s32.totalorder %s17, 0
    %p80 = por %p78, %p79
    %p81 = scmp.ne.s32.totalorder %s69, %s70
    %p82 = scmp.eq.s32.totalorder %s18, 1
    %p83 = por %p81, %p82
    %p85 = scmp.ne.s32.totalorder %s70, %s84
    %p86 = scmp.eq.s32.totalorder %s18, 0
    %p87 = por %p85, %p86
    %s89 = sadd.s32 %s88, 1
    %p92 = scmp.eq.s32.totalorder %s12, 1
    %p93 = scmp.ne.s32.totalorder %s88, %s90
    %p94 = scmp.eq.s32.totalorder %s12, 0
    %p95 = por %p93, %p94
    %p96 = scmp.ne.s32.totalorder %s88, %s90
    %p97 = scmp.eq.s32.totalorder %s17, 1
    %p98 = por %p96, %p97
    %p99 = scmp.ne.s32.totalorder %s90, %s91
    %p100 = scmp.eq.s32.totalorder %s17, 0
    %p101 = por %p99, %p100
    %p102 = scmp.ne.s32.totalorder %s90, %s91
    %p103 = scmp.eq.s32.totalorder %s18, 1
    %p104 = por %p102, %p103
    %p106 = scmp.ne.s32.totalorder %s91, %s105
    %p107 = scmp.eq.s32.totalorder %s18, 0
    %p108 = por %p106, %p107
    %s109 = ssub.s32 %s12, %s19
    %p110 = scmp.eq.s32.totalorder %s109, 0
    %s112 = sadd.s32 %s111, 1
    %s113 = scalar_select %p110, %s111, %s112
    %p116 = pneg %p110
    %p117 = scmp.eq.s32.totalorder %s12, 1
    %p118 = por %p116, %p117
    %p119 = scmp.ne.s32.totalorder %s111, %s114
    %p120 = scmp.eq.s32.totalorder %s12, 0
    %p121 = por %p119, %p120
    %p122 = scmp.ne.s32.totalorder %s111, %s114
    %p123 = scmp.eq.s32.totalorder %s17, 1
    %p124 = por %p122, %p123
    %p125 = scmp.ne.s32.totalorder %s114, %s115
    %p126 = scmp.eq.s32.totalorder %s17, 0
    %p127 = por %p125, %p126
    %p128 = scmp.ne.s32.totalorder %s114, %s115
    %p129 = scmp.eq.s32.totalorder %s18, 1
    %p130 = por %p128, %p129
    %p132 = scmp.ne.s32.totalorder %s115, %s131
    %p133 = scmp.eq.s32.totalorder %s18, 0
    %p134 = por %p132, %p133
    %s135 = ssub.s32 %s12, %s19
    %p136 = scmp.eq.s32.totalorder %s135, 0
    %s138 = sadd.s32 %s137, 1
    %s139 = scalar_select %p136, %s137, %s138
    %p142 = pneg %p136
    %p143 = scmp.eq.s32.totalorder %s12, 1
    %p144 = por %p142, %p143
    %p145 = scmp.ne.s32.totalorder %s137, %s140
    %p146 = scmp.eq.s32.totalorder %s12, 0
    %p147 = por %p145, %p146
    %p148 = scmp.ne.s32.totalorder %s137, %s140
    %p149 = scmp.eq.s32.totalorder %s17, 1
    %p150 = por %p148, %p149
    %p151 = scmp.ne.s32.totalorder %s140, %s141
    %p152 = scmp.eq.s32.totalorder %s17, 0
    %p153 = por %p151, %p152
    %p154 = scmp.ne.s32.totalorder %s140, %s141
    %p155 = scmp.eq.s32.totalorder %s18, 1
    %p156 = por %p154, %p155
    %p158 = scmp.ne.s32.totalorder %s141, %s157
    %p159 = scmp.eq.s32.totalorder %s18, 0
    %p160 = por %p158, %p159
    %p161 = scmp.le.s32.totalorder 1, %s12
    %p162 = scmp.lt.s32.totalorder %s12, 3
    %p163 = pnand %p161, %p162
    %p164 = pneg %p163
    // Predicated region
    $region9: #{block_forward.4} parent=5 // pred_check
      _
    $region10: #{block_forward.4} parent=5 // pred_check_branch
      %166 = sbr.rel (%p163) target = $region12
    $region11: #{block_forward.4} parent=5 // pred_region
      %s167 = ssub.s32 %s12, 1
      // Predicated region
      $region13: #{block_forward.4} parent=11 // pred_check
        %p168 = pneg %p59
      $region14: #{block_forward.4} parent=11 // pred_check_branch
        %170 = sbr.rel (%p168) target = $region16
      $region15: #{block_forward.4} parent=11 // pred_region
        _
      $region16: #{block_forward.4} parent=11 // pred_fallthru
        _
      // Predicated region
      $region17: #{block_forward.4} parent=11 // pred_check
        %p171 = pneg %p80
      $region18: #{block_forward.4} parent=11 // pred_check_branch
        %173 = sbr.rel (%p171) target = $region20
      $region19: #{block_forward.4} parent=11 // pred_region
        _
      $region20: #{block_forward.4} parent=11 // pred_fallthru
        _
      // Predicated region
      $region21: #{block_forward.4} parent=11 // pred_check
        %p174 = pneg %p101
      $region22: #{block_forward.4} parent=11 // pred_check_branch
        %176 = sbr.rel (%p174) target = $region24
      $region23: #{block_forward.4} parent=11 // pred_region
        _
      $region24: #{block_forward.4} parent=11 // pred_fallthru
        _
    $region12: #{block_forward.4} parent=5 // pred_fallthru
      _
    %p177 = scmp.lt.s32.totalorder %s12, 2
    // Predicated region
    $region25: #{block_forward.4} parent=5 // pred_check
      %p178 = pneg %p177
    $region26: #{block_forward.4} parent=5 // pred_check_branch
      %180 = sbr.rel (%p178) target = $region28
    $region27: #{block_forward.4} parent=5 // pred_region
      // Predicated region
      $region29: #{block_forward.4} parent=27 // pred_check
        %p181 = pneg %p32
      $region30: #{block_forward.4} parent=27 // pred_check_branch
        %183 = sbr.rel (%p181) target = $region32
      $region31: #{block_forward.4} parent=27 // pred_region
        %p184 = scmp.lt.s32.totalorder %s12, 1
        %s185 = scalar_select %p184, %s12, 1
        %s186 = smul.addr %s185, 32
        %s187 = smul.addr %s186, 4
        %s188 = scalar_lea.vmem %s0, %s187
      $region32: #{block_forward.4} parent=27 // pred_fallthru
        _
    $region28: #{block_forward.4} parent=5 // pred_fallthru
      _
    %p189 = scmp.le.s32.totalorder 1, %s12
    %p190 = scmp.lt.s32.totalorder %s12, 3
    %p191 = pnand %p189, %p190
    %p192 = pneg %p191
    // Predicated region
    $region33: #{block_forward.4} parent=5 // pred_check
      _
    $region34: #{block_forward.4} parent=5 // pred_check_branch
      %194 = sbr.rel (%p191) target = $region36
    $region35: #{block_forward.4} parent=5 // pred_region
      %s195 = ssub.s32 %s12, 1
      %p196 = scmp.lt.s32.totalorder %s17, 1
      %s197 = scalar_select %p196, %s17, 1
      %s198 = smul.addr %s197, 32
      %s199 = smul.addr %s198, 4
      %s200 = scalar_lea.vmem %s0, %s199
      %p201 = pneg %p38
      %p202 = pneg %p35
      %p203 = pneg %p59
      %p204 = pneg %p56
      %p205 = pneg %p80
      %p206 = pneg %p77
      %p207 = pneg %p101
      %p208 = pneg %p98
      %p209 = pneg %p127
      %p210 = pneg %p124
      %p211 = scmp.lt.s32.totalorder %s17, 1
      %s212 = scalar_select %p211, %s17, 1
      %s213 = smul.addr %s212, 32
      %s214 = smul.addr %s213, 4
      %s215 = scalar_lea.vmem %s4, %s214
      %p216 = pneg %p153
      %p217 = pneg %p150
      %p218 = scmp.lt.s32.totalorder %s17, 1
      %s219 = scalar_select %p218, %s17, 1
      %s220 = smul.addr %s219, 2
      %s221 = scalar_lea.vmem %s5, %s220
      %p222 = scmp.lt.s32.totalorder %s17, 1
      %s223 = scalar_select %p222, %s17, 1
      %s224 = smul.addr %s223, 32
      %s225 = smul.addr %s224, 4
      %s226 = scalar_lea.vmem %s0, %s225
      %p227 = scmp.lt.s32.totalorder %s17, 1
      %s228 = scalar_select %p227, %s17, 1
      %s229 = smul.addr %s228, 32
      %s230 = smul.addr %s229, 4
      %s231 = scalar_lea.vmem %s4, %s230
      %p232 = scmp.lt.s32.totalorder %s17, 1
      %s233 = scalar_select %p232, %s17, 1
      %s234 = smul.addr %s233, 2
      %s235 = scalar_lea.vmem %s5, %s234
      %v237 = vld [vmem:[%s226] sm:$0xf]
      %v238 = vld [vmem:[%s226 + $0x4] sm:$0xf]
      %v239 = vld [vmem:[%s226 + $0x8] sm:$0xf]
      %v240 = vld [vmem:[%s226 + $0xc] sm:$0xf]
      %v241 = vld [vmem:[%s226 + $0x10] sm:$0xf]
      %v242 = vld [vmem:[%s226 + $0x14] sm:$0xf]
      %v243 = vld [vmem:[%s226 + $0x18] sm:$0xf]
      %v244 = vld [vmem:[%s226 + $0x1c] sm:$0xf]
      %v245 = vld [vmem:[%s226 + $0x20] sm:$0xf]
      %v246 = vld [vmem:[%s226 + $0x24] sm:$0xf]
      %v247 = vld [vmem:[%s226 + $0x28] sm:$0xf]
      %v248 = vld [vmem:[%s226 + $0x2c] sm:$0xf]
      %v249 = vld [vmem:[%s226 + $0x30] sm:$0xf]
      %v250 = vld [vmem:[%s226 + $0x34] sm:$0xf]
      %v251 = vld [vmem:[%s226 + $0x38] sm:$0xf]
      %v252 = vld [vmem:[%s226 + $0x3c] sm:$0xf]
      %v253 = vld [vmem:[%s226 + $0x40] sm:$0xf]
      %v254 = vld [vmem:[%s226 + $0x44] sm:$0xf]
      %v255 = vld [vmem:[%s226 + $0x48] sm:$0xf]
      %v256 = vld [vmem:[%s226 + $0x4c] sm:$0xf]
      %v257 = vld [vmem:[%s226 + $0x50] sm:$0xf]
      %v258 = vld [vmem:[%s226 + $0x54] sm:$0xf]
      %v259 = vld [vmem:[%s226 + $0x58] sm:$0xf]
      %v260 = vld [vmem:[%s226 + $0x5c] sm:$0xf]
      %v261 = vld [vmem:[%s226 + $0x60] sm:$0xf]
      %v262 = vld [vmem:[%s226 + $0x64] sm:$0xf]
      %v263 = vld [vmem:[%s226 + $0x68] sm:$0xf]
      %v264 = vld [vmem:[%s226 + $0x6c] sm:$0xf]
      %v265 = vld [vmem:[%s226 + $0x70] sm:$0xf]
      %v266 = vld [vmem:[%s226 + $0x74] sm:$0xf]
      %v267 = vld [vmem:[%s226 + $0x78] sm:$0xf]
      %v268 = vld [vmem:[%s226 + $0x7c] sm:$0xf]
      %v269 = vunpack.c.l.bf16 %v237
      %v270 = vunpack.c.l.bf16 %v238
      %v271 = vunpack.c.l.bf16 %v239
      %v272 = vunpack.c.l.bf16 %v240
      %v273 = vunpack.c.l.bf16 %v241
      %v274 = vunpack.c.l.bf16 %v242
      %v275 = vunpack.c.l.bf16 %v243
      %v276 = vunpack.c.l.bf16 %v244
      %v277 = vunpack.c.l.bf16 %v245
      %v278 = vunpack.c.l.bf16 %v246
      %v279 = vunpack.c.l.bf16 %v247
      %v280 = vunpack.c.l.bf16 %v248
      %v281 = vunpack.c.l.bf16 %v249
      %v282 = vunpack.c.l.bf16 %v250
      %v283 = vunpack.c.l.bf16 %v251
      %v284 = vunpack.c.l.bf16 %v252
      %v285 = vunpack.c.l.bf16 %v253
      %v286 = vunpack.c.l.bf16 %v254
      %v287 = vunpack.c.l.bf16 %v255
      %v288 = vunpack.c.l.bf16 %v256
      %v289 = vunpack.c.l.bf16 %v257
      %v290 = vunpack.c.l.bf16 %v258
      %v291 = vunpack.c.l.bf16 %v259
      %v292 = vunpack.c.l.bf16 %v260
      %v293 = vunpack.c.l.bf16 %v261
      %v294 = vunpack.c.l.bf16 %v262
      %v295 = vunpack.c.l.bf16 %v263
      %v296 = vunpack.c.l.bf16 %v264
      %v297 = vunpack.c.l.bf16 %v265
      %v298 = vunpack.c.l.bf16 %v266
      %v299 = vunpack.c.l.bf16 %v267
      %v300 = vunpack.c.l.bf16 %v268
      %v301 = vld [vmem:[%s1] sm:$0x1]
      %v303 = vlaneseq
      %v304 = vshrl.u32 %v303, 7
      %v305 = vsub.s32 0, %v304
      %v306 = vrot.slane %v301, %v305
      %v308 = vmul.f32 %v269, %v306
      %v309 = vmul.f32 %v270, %v306
      %v310 = vmul.f32 %v271, %v306
      %v311 = vmul.f32 %v272, %v306
      %v312 = vmul.f32 %v273, %v306
      %v313 = vmul.f32 %v274, %v306
      %v314 = vmul.f32 %v275, %v306
      %v315 = vmul.f32 %v276, %v306
      %v316 = vmul.f32 %v277, %v306
      %v317 = vmul.f32 %v278, %v306
      %v318 = vmul.f32 %v279, %v306
      %v319 = vmul.f32 %v280, %v306
      %v320 = vmul.f32 %v281, %v306
      %v321 = vmul.f32 %v282, %v306
      %v322 = vmul.f32 %v283, %v306
      %v323 = vmul.f32 %v284, %v306
      %v324 = vmul.f32 %v285, %v306
      %v325 = vmul.f32 %v286, %v306
      %v326 = vmul.f32 %v287, %v306
      %v327 = vmul.f32 %v288, %v306
      %v328 = vmul.f32 %v289, %v306
      %v329 = vmul.f32 %v290, %v306
      %v330 = vmul.f32 %v291, %v306
      %v331 = vmul.f32 %v292, %v306
      %v332 = vmul.f32 %v293, %v306
      %v333 = vmul.f32 %v294, %v306
      %v334 = vmul.f32 %v295, %v306
      %v335 = vmul.f32 %v296, %v306
      %v336 = vmul.f32 %v297, %v306
      %v337 = vmul.f32 %v298, %v306
      %v338 = vmul.f32 %v299, %v306
      %v339 = vmul.f32 %v300, %v306
      %v340 = vld [vmem:[%s2] sm:$0x1]
      %v342 = vlaneseq
      %v343 = vshrl.u32 %v342, 7
      %v344 = vsub.s32 0, %v343
      %v345 = vrot.slane %v340, %v344
      %v347 = vadd.f32 %v308, %v345
      %v348 = vadd.f32 %v309, %v345
      %v349 = vadd.f32 %v310, %v345
      %v350 = vadd.f32 %v311, %v345
      %v351 = vadd.f32 %v312, %v345
      %v352 = vadd.f32 %v313, %v345
      %v353 = vadd.f32 %v314, %v345
      %v354 = vadd.f32 %v315, %v345
      %v355 = vadd.f32 %v316, %v345
      %v356 = vadd.f32 %v317, %v345
      %v357 = vadd.f32 %v318, %v345
      %v358 = vadd.f32 %v319, %v345
      %v359 = vadd.f32 %v320, %v345
      %v360 = vadd.f32 %v321, %v345
      %v361 = vadd.f32 %v322, %v345
      %v362 = vadd.f32 %v323, %v345
      %v363 = vadd.f32 %v324, %v345
      %v364 = vadd.f32 %v325, %v345
      %v365 = vadd.f32 %v326, %v345
      %v366 = vadd.f32 %v327, %v345
      %v367 = vadd.f32 %v328, %v345
      %v368 = vadd.f32 %v329, %v345
      %v369 = vadd.f32 %v330, %v345
      %v370 = vadd.f32 %v331, %v345
      %v371 = vadd.f32 %v332, %v345
      %v372 = vadd.f32 %v333, %v345
      %v373 = vadd.f32 %v334, %v345
      %v374 = vadd.f32 %v335, %v345
      %v375 = vadd.f32 %v336, %v345
      %v376 = vadd.f32 %v337, %v345
      %v377 = vadd.f32 %v338, %v345
      %v378 = vadd.f32 %v339, %v345
      %v379 = vmax.f32 %v347, 0.0
      %v380 = vmax.f32 %v348, 0.0
      %v381 = vmax.f32 %v349, 0.0
      %v382 = vmax.f32 %v350, 0.0
      %v383 = vmax.f32 %v351, 0.0
      %v384 = vmax.f32 %v352, 0.0
      %v385 = vmax.f32 %v353, 0.0
      %v386 = vmax.f32 %v354, 0.0
      %v387 = vmax.f32 %v355, 0.0
      %v388 = vmax.f32 %v356, 0.0
      %v389 = vmax.f32 %v357, 0.0
      %v390 = vmax.f32 %v358, 0.0
      %v391 = vmax.f32 %v359, 0.0
      %v392 = vmax.f32 %v360, 0.0
      %v393 = vmax.f32 %v361, 0.0
      %v394 = vmax.f32 %v362, 0.0
      %v395 = vmax.f32 %v363, 0.0
      %v396 = vmax.f32 %v364, 0.0
      %v397 = vmax.f32 %v365, 0.0
      %v398 = vmax.f32 %v366, 0.0
      %v399 = vmax.f32 %v367, 0.0
      %v400 = vmax.f32 %v368, 0.0
      %v401 = vmax.f32 %v369, 0.0
      %v402 = vmax.f32 %v370, 0.0
      %v403 = vmax.f32 %v371, 0.0
      %v404 = vmax.f32 %v372, 0.0
      %v405 = vmax.f32 %v373, 0.0
      %v406 = vmax.f32 %v374, 0.0
      %v407 = vmax.f32 %v375, 0.0
      %v408 = vmax.f32 %v376, 0.0
      %v409 = vmax.f32 %v377, 0.0
      %v410 = vmax.f32 %v378, 0.0
      %411 = vst [vmem:[#allocation2] sm:$0xff] 0.0
      %412 = vst [vmem:[#allocation2 + $0x8] sm:$0xff] 0.0
      %413 = vst [vmem:[#allocation2 + $0x10] sm:$0x3] 0.0
      %s414 = scalar_lea.vmem [#allocation2], 408
      %415 = vst [vmem:[%s414] sm:$0xff] 0.0
      %416 = vst [vmem:[%s414 + $0x8] sm:$0xff] 0.0
      %417 = vst [vmem:[%s414 + $0x10] sm:$0x3] 0.0
      %418 = vst [vmem:[#allocation2] sm:$0x1] 0.0
      %419 = vst [vmem:[#allocation2 + $0x18] sm:$0x1] 0.0
      %420 = vst [vmem:[#allocation2 + $0x30] sm:$0x1] 0.0
      %421 = vst [vmem:[#allocation2 + $0x48] sm:$0x1] 0.0
      %422 = vst [vmem:[#allocation2 + $0x60] sm:$0x1] 0.0
      %423 = vst [vmem:[#allocation2 + $0x78] sm:$0x1] 0.0
      %424 = vst [vmem:[#allocation2 + $0x90] sm:$0x1] 0.0
      %425 = vst [vmem:[#allocation2 + $0xa8] sm:$0x1] 0.0
      %426 = vst [vmem:[#allocation2 + $0xc0] sm:$0x1] 0.0
      %427 = vst [vmem:[#allocation2 + $0xd8] sm:$0x1] 0.0
      %428 = vst [vmem:[#allocation2 + $0xf0] sm:$0x1] 0.0
      %429 = vst [vmem:[#allocation2 + $0x108] sm:$0x1] 0.0
      %430 = vst [vmem:[#allocation2 + $0x120] sm:$0x1] 0.0
      %431 = vst [vmem:[#allocation2 + $0x138] sm:$0x1] 0.0
      %432 = vst [vmem:[#allocation2 + $0x150] sm:$0x1] 0.0
      %433 = vst [vmem:[#allocation2 + $0x168] sm:$0x1] 0.0
      %434 = vst [vmem:[#allocation2 + $0x180] sm:$0x1] 0.0
      %435 = vst [vmem:[#allocation2 + $0x198] sm:$0x1] 0.0
      %436 = vst [vmem:[#allocation2 + $0x11] sm:$0x1] 0.0
      %437 = vst [vmem:[#allocation2 + $0x29] sm:$0x1] 0.0
      %438 = vst [vmem:[#allocation2 + $0x41] sm:$0x1] 0.0
      %439 = vst [vmem:[#allocation2 + $0x59] sm:$0x1] 0.0
      %440 = vst [vmem:[#allocation2 + $0x71] sm:$0x1] 0.0
      %441 = vst [vmem:[#allocation2 + $0x89] sm:$0x1] 0.0
      %442 = vst [vmem:[#allocation2 + $0xa1] sm:$0x1] 0.0
      %443 = vst [vmem:[#allocation2 + $0xb9] sm:$0x1] 0.0
      %444 = vst [vmem:[#allocation2 + $0xd1] sm:$0x1] 0.0
      %445 = vst [vmem:[#allocation2 + $0xe9] sm:$0x1] 0.0
      %446 = vst [vmem:[#allocation2 + $0x101] sm:$0x1] 0.0
      %447 = vst [vmem:[#allocation2 + $0x119] sm:$0x1] 0.0
      %448 = vst [vmem:[#allocation2 + $0x131] sm:$0x1] 0.0
      %449 = vst [vmem:[#allocation2 + $0x149] sm:$0x1] 0.0
      %450 = vst [vmem:[#allocation2 + $0x161] sm:$0x1] 0.0
      %451 = vst [vmem:[#allocation2 + $0x179] sm:$0x1] 0.0
      %452 = vst [vmem:[#allocation2 + $0x191] sm:$0x1] 0.0
      %453 = vst [vmem:[#allocation2 + $0x1a9] sm:$0x1] 0.0
      %s454 = scalar_lea.vmem [#allocation2], 24
      %455 = vst [vmem:[%s454 + $0x1] sm:$0xff] %v379
      %456 = vst [vmem:[%s454 + $0x9] sm:$0xff] %v380
      %457 = vst [vmem:[%s454 + $0x19] sm:$0xff] %v381
      %458 = vst [vmem:[%s454 + $0x21] sm:$0xff] %v382
      %459 = vst [vmem:[%s454 + $0x31] sm:$0xff] %v383
      %460 = vst [vmem:[%s454 + $0x39] sm:$0xff] %v384
      %461 = vst [vmem:[%s454 + $0x49] sm:$0xff] %v385
      %462 = vst [vmem:[%s454 + $0x51] sm:$0xff] %v386
      %463 = vst [vmem:[%s454 + $0x61] sm:$0xff] %v387
      %464 = vst [vmem:[%s454 + $0x69] sm:$0xff] %v388
      %465 = vst [vmem:[%s454 + $0x79] sm:$0xff] %v389
      %466 = vst [vmem:[%s454 + $0x81] sm:$0xff] %v390
      %467 = vst [vmem:[%s454 + $0x91] sm:$0xff] %v391
      %468 = vst [vmem:[%s454 + $0x99] sm:$0xff] %v392
      %469 = vst [vmem:[%s454 + $0xa9] sm:$0xff] %v393
      %470 = vst [vmem:[%s454 + $0xb1] sm:$0xff] %v394
      %471 = vst [vmem:[%s454 + $0xc1] sm:$0xff] %v395
      %472 = vst [vmem:[%s454 + $0xc9] sm:$0xff] %v396
      %473 = vst [vmem:[%s454 + $0xd9] sm:$0xff] %v397
      %474 = vst [vmem:[%s454 + $0xe1] sm:$0xff] %v398
      %475 = vst [vmem:[%s454 + $0xf1] sm:$0xff] %v399
      %476 = vst [vmem:[%s454 + $0xf9] sm:$0xff] %v400
      %477 = vst [vmem:[%s454 + $0x109] sm:$0xff] %v401
      %478 = vst [vmem:[%s454 + $0x111] sm:$0xff] %v402
      %479 = vst [vmem:[%s454 + $0x121] sm:$0xff] %v403
      %480 = vst [vmem:[%s454 + $0x129] sm:$0xff] %v404
      %481 = vst [vmem:[%s454 + $0x139] sm:$0xff] %v405
      %482 = vst [vmem:[%s454 + $0x141] sm:$0xff] %v406
      %483 = vst [vmem:[%s454 + $0x151] sm:$0xff] %v407
      %484 = vst [vmem:[%s454 + $0x159] sm:$0xff] %v408
      %485 = vst [vmem:[%s454 + $0x169] sm:$0xff] %v409
      %486 = vst [vmem:[%s454 + $0x171] sm:$0xff] %v410
      %v487 = vld [vmem:[#allocation2] sm:$0xff]
      %v488 = vld [vmem:[#allocation2 + $0x8] sm:$0xff]
      %v489 = vld [vmem:[#allocation2 + $0x18] sm:$0xff]
      %v490 = vld [vmem:[#allocation2 + $0x20] sm:$0xff]
      %v491 = vld [vmem:[#allocation2 + $0x30] sm:$0xff]
      %v492 = vld [vmem:[#allocation2 + $0x38] sm:$0xff]
      %v493 = vld [vmem:[#allocation2 + $0x48] sm:$0xff]
      %v494 = vld [vmem:[#allocation2 + $0x50] sm:$0xff]
      %v495 = vld [vmem:[#allocation2 + $0x60] sm:$0xff]
      %v496 = vld [vmem:[#allocation2 + $0x68] sm:$0xff]
      %v497 = vld [vmem:[#allocation2 + $0x78] sm:$0xff]
      %v498 = vld [vmem:[#allocation2 + $0x80] sm:$0xff]
      %v499 = vld [vmem:[#allocation2 + $0x90] sm:$0xff]
      %v500 = vld [vmem:[#allocation2 + $0x98] sm:$0xff]
      %v501 = vld [vmem:[#allocation2 + $0xa8] sm:$0xff]
      %v502 = vld [vmem:[#allocation2 + $0xb0] sm:$0xff]
      %v503 = vld [vmem:[#allocation2 + $0xc0] sm:$0xff]
      %v504 = vld [vmem:[#allocation2 + $0xc8] sm:$0xff]
      %v505 = vld [vmem:[#allocation2 + $0xd8] sm:$0xff]
      %v506 = vld [vmem:[#allocation2 + $0xe0] sm:$0xff]
      %v507 = vld [vmem:[#allocation2 + $0xf0] sm:$0xff]
      %v508 = vld [vmem:[#allocation2 + $0xf8] sm:$0xff]
      %v509 = vld [vmem:[#allocation2 + $0x108] sm:$0xff]
      %v510 = vld [vmem:[#allocation2 + $0x110] sm:$0xff]
      %v511 = vld [vmem:[#allocation2 + $0x120] sm:$0xff]
      %v512 = vld [vmem:[#allocation2 + $0x128] sm:$0xff]
      %v513 = vld [vmem:[#allocation2 + $0x138] sm:$0xff]
      %v514 = vld [vmem:[#allocation2 + $0x140] sm:$0xff]
      %v515 = vld [vmem:[#allocation2 + $0x150] sm:$0xff]
      %v516 = vld [vmem:[#allocation2 + $0x158] sm:$0xff]
      %v517 = vld [vmem:[#allocation2 + $0x168] sm:$0xff]
      %v518 = vld [vmem:[#allocation2 + $0x170] sm:$0xff]
      %v519 = vld [vmem:[#allocation2 + $0x1] sm:$0xff]
      %v520 = vld [vmem:[#allocation2 + $0x9] sm:$0xff]
      %v521 = vld [vmem:[#allocation2 + $0x19] sm:$0xff]
      %v522 = vld [vmem:[#allocation2 + $0x21] sm:$0xff]
      %v523 = vld [vmem:[#allocation2 + $0x31] sm:$0xff]
      %v524 = vld [vmem:[#allocation2 + $0x39] sm:$0xff]
      %v525 = vld [vmem:[#allocation2 + $0x49] sm:$0xff]
      %v526 = vld [vmem:[#allocation2 + $0x51] sm:$0xff]
      %v527 = vld [vmem:[#allocation2 + $0x61] sm:$0xff]
      %v528 = vld [vmem:[#allocation2 + $0x69] sm:$0xff]
      %v529 = vld [vmem:[#allocation2 + $0x79] sm:$0xff]
      %v530 = vld [vmem:[#allocation2 + $0x81] sm:$0xff]
      %v531 = vld [vmem:[#allocation2 + $0x91] sm:$0xff]
      %v532 = vld [vmem:[#allocation2 + $0x99] sm:$0xff]
      %v533 = vld [vmem:[#allocation2 + $0xa9] sm:$0xff]
      %v534 = vld [vmem:[#allocation2 + $0xb1] sm:$0xff]
      %v535 = vld [vmem:[#allocation2 + $0xc1] sm:$0xff]
      %v536 = vld [vmem:[#allocation2 + $0xc9] sm:$0xff]
      %v537 = vld [vmem:[#allocation2 + $0xd9] sm:$0xff]
      %v538 = vld [vmem:[#allocation2 + $0xe1] sm:$0xff]
      %v539 = vld [vmem:[#allocation2 + $0xf1] sm:$0xff]
      %v540 = vld [vmem:[#allocation2 + $0xf9] sm:$0xff]
      %v541 = vld [vmem:[#allocation2 + $0x109] sm:$0xff]
      %v542 = vld [vmem:[#allocation2 + $0x111] sm:$0xff]
      %v543 = vld [vmem:[#allocation2 + $0x121] sm:$0xff]
      %v544 = vld [vmem:[#allocation2 + $0x129] sm:$0xff]
      %v545 = vld [vmem:[#allocation2 + $0x139] sm:$0xff]
      %v546 = vld [vmem:[#allocation2 + $0x141] sm:$0xff]
      %v547 = vld [vmem:[#allocation2 + $0x151] sm:$0xff]
      %v548 = vld [vmem:[#allocation2 + $0x159] sm:$0xff]
      %v549 = vld [vmem:[#allocation2 + $0x169] sm:$0xff]
      %v550 = vld [vmem:[#allocation2 + $0x171] sm:$0xff]
      %v551 = vld [vmem:[#allocation2 + $0x2] sm:$0xff]
      %v552 = vld [vmem:[#allocation2 + $0xa] sm:$0xff]
      %v553 = vld [vmem:[#allocation2 + $0x1a] sm:$0xff]
      %v554 = vld [vmem:[#allocation2 + $0x22] sm:$0xff]
      %v555 = vld [vmem:[#allocation2 + $0x32] sm:$0xff]
      %v556 = vld [vmem:[#allocation2 + $0x3a] sm:$0xff]
      %v557 = vld [vmem:[#allocation2 + $0x4a] sm:$0xff]
      %v558 = vld [vmem:[#allocation2 + $0x52] sm:$0xff]
      %v559 = vld [vmem:[#allocation2 + $0x62] sm:$0xff]
      %v560 = vld [vmem:[#allocation2 + $0x6a] sm:$0xff]
      %v561 = vld [vmem:[#allocation2 + $0x7a] sm:$0xff]
      %v562 = vld [vmem:[#allocation2 + $0x82] sm:$0xff]
      %v563 = vld [vmem:[#allocation2 + $0x92] sm:$0xff]
      %v564 = vld [vmem:[#allocation2 + $0x9a] sm:$0xff]
      %v565 = vld [vmem:[#allocation2 + $0xaa] sm:$0xff]
      %v566 = vld [vmem:[#allocation2 + $0xb2] sm:$0xff]
      %v567 = vld [vmem:[#allocation2 + $0xc2] sm:$0xff]
      %v568 = vld [vmem:[#allocation2 + $0xca] sm:$0xff]
      %v569 = vld [vmem:[#allocation2 + $0xda] sm:$0xff]
      %v570 = vld [vmem:[#allocation2 + $0xe2] sm:$0xff]
      %v571 = vld [vmem:[#allocation2 + $0xf2] sm:$0xff]
      %v572 = vld [vmem:[#allocation2 + $0xfa] sm:$0xff]
      %v573 = vld [vmem:[#allocation2 + $0x10a] sm:$0xff]
      %v574 = vld [vmem:[#allocation2 + $0x112] sm:$0xff]
      %v575 = vld [vmem:[#allocation2 + $0x122] sm:$0xff]
      %v576 = vld [vmem:[#allocation2 + $0x12a] sm:$0xff]
      %v577 = vld [vmem:[#allocation2 + $0x13a] sm:$0xff]
      %v578 = vld [vmem:[#allocation2 + $0x142] sm:$0xff]
      %v579 = vld [vmem:[#allocation2 + $0x152] sm:$0xff]
      %v580 = vld [vmem:[#allocation2 + $0x15a] sm:$0xff]
      %v581 = vld [vmem:[#allocation2 + $0x16a] sm:$0xff]
      %v582 = vld [vmem:[#allocation2 + $0x172] sm:$0xff]
      %v583 = vld [vmem:[%s454] sm:$0xff]
      %v584 = vld [vmem:[%s454 + $0x8] sm:$0xff]
      %v585 = vld [vmem:[%s454 + $0x18] sm:$0xff]
      %v586 = vld [vmem:[%s454 + $0x20] sm:$0xff]
      %v587 = vld [vmem:[%s454 + $0x30] sm:$0xff]
      %v588 = vld [vmem:[%s454 + $0x38] sm:$0xff]
      %v589 = vld [vmem:[%s454 + $0x48] sm:$0xff]
      %v590 = vld [vmem:[%s454 + $0x50] sm:$0xff]
      %v591 = vld [vmem:[%s454 + $0x60] sm:$0xff]
      %v592 = vld [vmem:[%s454 + $0x68] sm:$0xff]
      %v593 = vld [vmem:[%s454 + $0x78] sm:$0xff]
      %v594 = vld [vmem:[%s454 + $0x80] sm:$0xff]
      %v595 = vld [vmem:[%s454 + $0x90] sm:$0xff]
      %v596 = vld [vmem:[%s454 + $0x98] sm:$0xff]
      %v597 = vld [vmem:[%s454 + $0xa8] sm:$0xff]
      %v598 = vld [vmem:[%s454 + $0xb0] sm:$0xff]
      %v599 = vld [vmem:[%s454 + $0xc0] sm:$0xff]
      %v600 = vld [vmem:[%s454 + $0xc8] sm:$0xff]
      %v601 = vld [vmem:[%s454 + $0xd8] sm:$0xff]
      %v602 = vld [vmem:[%s454 + $0xe0] sm:$0xff]
      %v603 = vld [vmem:[%s454 + $0xf0] sm:$0xff]
      %v604 = vld [vmem:[%s454 + $0xf8] sm:$0xff]
      %v605 = vld [vmem:[%s454 + $0x108] sm:$0xff]
      %v606 = vld [vmem:[%s454 + $0x110] sm:$0xff]
      %v607 = vld [vmem:[%s454 + $0x120] sm:$0xff]
      %v608 = vld [vmem:[%s454 + $0x128] sm:$0xff]
      %v609 = vld [vmem:[%s454 + $0x138] sm:$0xff]
      %v610 = vld [vmem:[%s454 + $0x140] sm:$0xff]
      %v611 = vld [vmem:[%s454 + $0x150] sm:$0xff]
      %v612 = vld [vmem:[%s454 + $0x158] sm:$0xff]
      %v613 = vld [vmem:[%s454 + $0x168] sm:$0xff]
      %v614 = vld [vmem:[%s454 + $0x170] sm:$0xff]
      %v615 = vld [vmem:[%s454 + $0x1] sm:$0xff]
      %v616 = vld [vmem:[%s454 + $0x9] sm:$0xff]
      %v617 = vld [vmem:[%s454 + $0x19] sm:$0xff]
      %v618 = vld [vmem:[%s454 + $0x21] sm:$0xff]
      %v619 = vld [vmem:[%s454 + $0x31] sm:$0xff]
      %v620 = vld [vmem:[%s454 + $0x39] sm:$0xff]
      %v621 = vld [vmem:[%s454 + $0x49] sm:$0xff]
      %v622 = vld [vmem:[%s454 + $0x51] sm:$0xff]
      %v623 = vld [vmem:[%s454 + $0x61] sm:$0xff]
      %v624 = vld [vmem:[%s454 + $0x69] sm:$0xff]
      %v625 = vld [vmem:[%s454 + $0x79] sm:$0xff]
      %v626 = vld [vmem:[%s454 + $0x81] sm:$0xff]
      %v627 = vld [vmem:[%s454 + $0x91] sm:$0xff]
      %v628 = vld [vmem:[%s454 + $0x99] sm:$0xff]
      %v629 = vld [vmem:[%s454 + $0xa9] sm:$0xff]
      %v630 = vld [vmem:[%s454 + $0xb1] sm:$0xff]
      %v631 = vld [vmem:[%s454 + $0xc1] sm:$0xff]
      %v632 = vld [vmem:[%s454 + $0xc9] sm:$0xff]
      %v633 = vld [vmem:[%s454 + $0xd9] sm:$0xff]
      %v634 = vld [vmem:[%s454 + $0xe1] sm:$0xff]
      %v635 = vld [vmem:[%s454 + $0xf1] sm:$0xff]
      %v636 = vld [vmem:[%s454 + $0xf9] sm:$0xff]
      %v637 = vld [vmem:[%s454 + $0x109] sm:$0xff]
      %v638 = vld [vmem:[%s454 + $0x111] sm:$0xff]
      %v639 = vld [vmem:[%s454 + $0x121] sm:$0xff]
      %v640 = vld [vmem:[%s454 + $0x129] sm:$0xff]
      %v641 = vld [vmem:[%s454 + $0x139] sm:$0xff]
      %v642 = vld [vmem:[%s454 + $0x141] sm:$0xff]
      %v643 = vld [vmem:[%s454 + $0x151] sm:$0xff]
      %v644 = vld [vmem:[%s454 + $0x159] sm:$0xff]
      %v645 = vld [vmem:[%s454 + $0x169] sm:$0xff]
      %v646 = vld [vmem:[%s454 + $0x171] sm:$0xff]
      %v647 = vld [vmem:[%s454 + $0x2] sm:$0xff]
      %v648 = vld [vmem:[%s454 + $0xa] sm:$0xff]
      %v649 = vld [vmem:[%s454 + $0x1a] sm:$0xff]
      %v650 = vld [vmem:[%s454 + $0x22] sm:$0xff]
      %v651 = vld [vmem:[%s454 + $0x32] sm:$0xff]
      %v652 = vld [vmem:[%s454 + $0x3a] sm:$0xff]
      %v653 = vld [vmem:[%s454 + $0x4a] sm:$0xff]
      %v654 = vld [vmem:[%s454 + $0x52] sm:$0xff]
      %v655 = vld [vmem:[%s454 + $0x62] sm:$0xff]
      %v656 = vld [vmem:[%s454 + $0x6a] sm:$0xff]
      %v657 = vld [vmem:[%s454 + $0x7a] sm:$0xff]
      %v658 = vld [vmem:[%s454 + $0x82] sm:$0xff]
      %v659 = vld [vmem:[%s454 + $0x92] sm:$0xff]
      %v660 = vld [vmem:[%s454 + $0x9a] sm:$0xff]
      %v661 = vld [vmem:[%s454 + $0xaa] sm:$0xff]
      %v662 = vld [vmem:[%s454 + $0xb2] sm:$0xff]
      %v663 = vld [vmem:[%s454 + $0xc2] sm:$0xff]
      %v664 = vld [vmem:[%s454 + $0xca] sm:$0xff]
      %v665 = vld [vmem:[%s454 + $0xda] sm:$0xff]
      %v666 = vld [vmem:[%s454 + $0xe2] sm:$0xff]
      %v667 = vld [vmem:[%s454 + $0xf2] sm:$0xff]
      %v668 = vld [vmem:[%s454 + $0xfa] sm:$0xff]
      %v669 = vld [vmem:[%s454 + $0x10a] sm:$0xff]
      %v670 = vld [vmem:[%s454 + $0x112] sm:$0xff]
      %v671 = vld [vmem:[%s454 + $0x122] sm:$0xff]
      %v672 = vld [vmem:[%s454 + $0x12a] sm:$0xff]
      %v673 = vld [vmem:[%s454 + $0x13a] sm:$0xff]
      %v674 = vld [vmem:[%s454 + $0x142] sm:$0xff]
      %v675 = vld [vmem:[%s454 + $0x152] sm:$0xff]
      %v676 = vld [vmem:[%s454 + $0x15a] sm:$0xff]
      %v677 = vld [vmem:[%s454 + $0x16a] sm:$0xff]
      %v678 = vld [vmem:[%s454 + $0x172] sm:$0xff]
      %s679 = scalar_lea.vmem [#allocation2], 48
      %v680 = vld [vmem:[%s679] sm:$0xff]
      %v681 = vld [vmem:[%s679 + $0x8] sm:$0xff]
      %v682 = vld [vmem:[%s679 + $0x18] sm:$0xff]
      %v683 = vld [vmem:[%s679 + $0x20] sm:$0xff]
      %v684 = vld [vmem:[%s679 + $0x30] sm:$0xff]
      %v685 = vld [vmem:[%s679 + $0x38] sm:$0xff]
      %v686 = vld [vmem:[%s679 + $0x48] sm:$0xff]
      %v687 = vld [vmem:[%s679 + $0x50] sm:$0xff]
      %v688 = vld [vmem:[%s679 + $0x60] sm:$0xff]
      %v689 = vld [vmem:[%s679 + $0x68] sm:$0xff]
      %v690 = vld [vmem:[%s679 + $0x78] sm:$0xff]
      %v691 = vld [vmem:[%s679 + $0x80] sm:$0xff]
      %v692 = vld [vmem:[%s679 + $0x90] sm:$0xff]
      %v693 = vld [vmem:[%s679 + $0x98] sm:$0xff]
      %v694 = vld [vmem:[%s679 + $0xa8] sm:$0xff]
      %v695 = vld [vmem:[%s679 + $0xb0] sm:$0xff]
      %v696 = vld [vmem:[%s679 + $0xc0] sm:$0xff]
      %v697 = vld [vmem:[%s679 + $0xc8] sm:$0xff]
      %v698 = vld [vmem:[%s679 + $0xd8] sm:$0xff]
      %v699 = vld [vmem:[%s679 + $0xe0] sm:$0xff]
      %v700 = vld [vmem:[%s679 + $0xf0] sm:$0xff]
      %v701 = vld [vmem:[%s679 + $0xf8] sm:$0xff]
      %v702 = vld [vmem:[%s679 + $0x108] sm:$0xff]
      %v703 = vld [vmem:[%s679 + $0x110] sm:$0xff]
      %v704 = vld [vmem:[%s679 + $0x120] sm:$0xff]
      %v705 = vld [vmem:[%s679 + $0x128] sm:$0xff]
      %v706 = vld [vmem:[%s679 + $0x138] sm:$0xff]
      %v707 = vld [vmem:[%s679 + $0x140] sm:$0xff]
      %v708 = vld [vmem:[%s679 + $0x150] sm:$0xff]
      %v709 = vld [vmem:[%s679 + $0x158] sm:$0xff]
      %v710 = vld [vmem:[%s679 + $0x168] sm:$0xff]
      %v711 = vld [vmem:[%s679 + $0x170] sm:$0xff]
      %v712 = vld [vmem:[%s679 + $0x1] sm:$0xff]
      %v713 = vld [vmem:[%s679 + $0x9] sm:$0xff]
      %v714 = vld [vmem:[%s679 + $0x19] sm:$0xff]
      %v715 = vld [vmem:[%s679 + $0x21] sm:$0xff]
      %v716 = vld [vmem:[%s679 + $0x31] sm:$0xff]
      %v717 = vld [vmem:[%s679 + $0x39] sm:$0xff]
      %v718 = vld [vmem:[%s679 + $0x49] sm:$0xff]
      %v719 = vld [vmem:[%s679 + $0x51] sm:$0xff]
      %v720 = vld [vmem:[%s679 + $0x61] sm:$0xff]
      %v721 = vld [vmem:[%s679 + $0x69] sm:$0xff]
      %v722 = vld [vmem:[%s679 + $0x79] sm:$0xff]
      %v723 = vld [vmem:[%s679 + $0x81] sm:$0xff]
      %v724 = vld [vmem:[%s679 + $0x91] sm:$0xff]
      %v725 = vld [vmem:[%s679 + $0x99] sm:$0xff]
      %v726 = vld [vmem:[%s679 + $0xa9] sm:$0xff]
      %v727 = vld [vmem:[%s679 + $0xb1] sm:$0xff]
      %v728 = vld [vmem:[%s679 + $0xc1] sm:$0xff]
      %v729 = vld [vmem:[%s679 + $0xc9] sm:$0xff]
      %v730 = vld [vmem:[%s679 + $0xd9] sm:$0xff]
      %v731 = vld [vmem:[%s679 + $0xe1] sm:$0xff]
      %v732 = vld [vmem:[%s679 + $0xf1] sm:$0xff]
      %v733 = vld [vmem:[%s679 + $0xf9] sm:$0xff]
      %v734 = vld [vmem:[%s679 + $0x109] sm:$0xff]
      %v735 = vld [vmem:[%s679 + $0x111] sm:$0xff]
      %v736 = vld [vmem:[%s679 + $0x121] sm:$0xff]
      %v737 = vld [vmem:[%s679 + $0x129] sm:$0xff]
      %v738 = vld [vmem:[%s679 + $0x139] sm:$0xff]
      %v739 = vld [vmem:[%s679 + $0x141] sm:$0xff]
      %v740 = vld [vmem:[%s679 + $0x151] sm:$0xff]
      %v741 = vld [vmem:[%s679 + $0x159] sm:$0xff]
      %v742 = vld [vmem:[%s679 + $0x169] sm:$0xff]
      %v743 = vld [vmem:[%s679 + $0x171] sm:$0xff]
      %v744 = vld [vmem:[%s679 + $0x2] sm:$0xff]
      %v745 = vld [vmem:[%s679 + $0xa] sm:$0xff]
      %v746 = vld [vmem:[%s679 + $0x1a] sm:$0xff]
      %v747 = vld [vmem:[%s679 + $0x22] sm:$0xff]
      %v748 = vld [vmem:[%s679 + $0x32] sm:$0xff]
      %v749 = vld [vmem:[%s679 + $0x3a] sm:$0xff]
      %v750 = vld [vmem:[%s679 + $0x4a] sm:$0xff]
      %v751 = vld [vmem:[%s679 + $0x52] sm:$0xff]
      %v752 = vld [vmem:[%s679 + $0x62] sm:$0xff]
      %v753 = vld [vmem:[%s679 + $0x6a] sm:$0xff]
      %v754 = vld [vmem:[%s679 + $0x7a] sm:$0xff]
      %v755 = vld [vmem:[%s679 + $0x82] sm:$0xff]
      %v756 = vld [vmem:[%s679 + $0x92] sm:$0xff]
      %v757 = vld [vmem:[%s679 + $0x9a] sm:$0xff]
      %v758 = vld [vmem:[%s679 + $0xaa] sm:$0xff]
      %v759 = vld [vmem:[%s679 + $0xb2] sm:$0xff]
      %v760 = vld [vmem:[%s679 + $0xc2] sm:$0xff]
      %v761 = vld [vmem:[%s679 + $0xca] sm:$0xff]
      %v762 = vld [vmem:[%s679 + $0xda] sm:$0xff]
      %v763 = vld [vmem:[%s679 + $0xe2] sm:$0xff]
      %v764 = vld [vmem:[%s679 + $0xf2] sm:$0xff]
      %v765 = vld [vmem:[%s679 + $0xfa] sm:$0xff]
      %v766 = vld [vmem:[%s679 + $0x10a] sm:$0xff]
      %v767 = vld [vmem:[%s679 + $0x112] sm:$0xff]
      %v768 = vld [vmem:[%s679 + $0x122] sm:$0xff]
      %v769 = vld [vmem:[%s679 + $0x12a] sm:$0xff]
      %v770 = vld [vmem:[%s679 + $0x13a] sm:$0xff]
      %v771 = vld [vmem:[%s679 + $0x142] sm:$0xff]
      %v772 = vld [vmem:[%s679 + $0x152] sm:$0xff]
      %v773 = vld [vmem:[%s679 + $0x15a] sm:$0xff]
      %v774 = vld [vmem:[%s679 + $0x16a] sm:$0xff]
      %v775 = vld [vmem:[%s679 + $0x172] sm:$0xff]
      %v776 = vpack.c.bf16 %v488, %v487
      %v777 = vpack.c.bf16 %v520, %v519
      %v778 = vpack.c.bf16 %v552, %v551
      %v779 = vpack.c.bf16 %v584, %v583
      %v780 = vpack.c.bf16 %v616, %v615
      %v781 = vpack.c.bf16 %v648, %v647
      %v782 = vpack.c.bf16 %v681, %v680
      %v783 = vpack.c.bf16 %v713, %v712
      %v784 = vpack.c.bf16 %v745, %v744
      %v785 = vpack.c.bf16 %v490, %v489
      %v786 = vpack.c.bf16 %v522, %v521
      %v787 = vpack.c.bf16 %v554, %v553
      %v788 = vpack.c.bf16 %v586, %v585
      %v789 = vpack.c.bf16 %v618, %v617
      %v790 = vpack.c.bf16 %v650, %v649
      %v791 = vpack.c.bf16 %v683, %v682
      %v792 = vpack.c.bf16 %v715, %v714
      %v793 = vpack.c.bf16 %v747, %v746
      %v794 = vpack.c.bf16 %v492, %v491
      %v795 = vpack.c.bf16 %v524, %v523
      %v796 = vpack.c.bf16 %v556, %v555
      %v797 = vpack.c.bf16 %v588, %v587
      %v798 = vpack.c.bf16 %v620, %v619
      %v799 = vpack.c.bf16 %v652, %v651
      %v800 = vpack.c.bf16 %v685, %v684
      %v801 = vpack.c.bf16 %v717, %v716
      %v802 = vpack.c.bf16 %v749, %v748
      %v803 = vpack.c.bf16 %v494, %v493
      %v804 = vpack.c.bf16 %v526, %v525
      %v805 = vpack.c.bf16 %v558, %v557
      %v806 = vpack.c.bf16 %v590, %v589
      %v807 = vpack.c.bf16 %v622, %v621
      %v808 = vpack.c.bf16 %v654, %v653
      %v809 = vpack.c.bf16 %v687, %v686
      %v810 = vpack.c.bf16 %v719, %v718
      %v811 = vpack.c.bf16 %v751, %v750
      %v812 = vpack.c.bf16 %v496, %v495
      %v813 = vpack.c.bf16 %v528, %v527
      %v814 = vpack.c.bf16 %v560, %v559
      %v815 = vpack.c.bf16 %v592, %v591
      %v816 = vpack.c.bf16 %v624, %v623
      %v817 = vpack.c.bf16 %v656, %v655
      %v818 = vpack.c.bf16 %v689, %v688
      %v819 = vpack.c.bf16 %v721, %v720
      %v820 = vpack.c.bf16 %v753, %v752
      %v821 = vpack.c.bf16 %v498, %v497
      %v822 = vpack.c.bf16 %v530, %v529
      %v823 = vpack.c.bf16 %v562, %v561
      %v824 = vpack.c.bf16 %v594, %v593
      %v825 = vpack.c.bf16 %v626, %v625
      %v826 = vpack.c.bf16 %v658, %v657
      %v827 = vpack.c.bf16 %v691, %v690
      %v828 = vpack.c.bf16 %v723, %v722
      %v829 = vpack.c.bf16 %v755, %v754
      %v830 = vpack.c.bf16 %v500, %v499
      %v831 = vpack.c.bf16 %v532, %v531
      %v832 = vpack.c.bf16 %v564, %v563
      %v833 = vpack.c.bf16 %v596, %v595
      %v834 = vpack.c.bf16 %v628, %v627
      %v835 = vpack.c.bf16 %v660, %v659
      %v836 = vpack.c.bf16 %v693, %v692
      %v837 = vpack.c.bf16 %v725, %v724
      %v838 = vpack.c.bf16 %v757, %v756
      %v839 = vpack.c.bf16 %v502, %v501
      %v840 = vpack.c.bf16 %v534, %v533
      %v841 = vpack.c.bf16 %v566, %v565
      %v842 = vpack.c.bf16 %v598, %v597
      %v843 = vpack.c.bf16 %v630, %v629
      %v844 = vpack.c.bf16 %v662, %v661
      %v845 = vpack.c.bf16 %v695, %v694
      %v846 = vpack.c.bf16 %v727, %v726
      %v847 = vpack.c.bf16 %v759, %v758
      %v848 = vpack.c.bf16 %v504, %v503
      %v849 = vpack.c.bf16 %v536, %v535
      %v850 = vpack.c.bf16 %v568, %v567
      %v851 = vpack.c.bf16 %v600, %v599
      %v852 = vpack.c.bf16 %v632, %v631
      %v853 = vpack.c.bf16 %v664, %v663
      %v854 = vpack.c.bf16 %v697, %v696
      %v855 = vpack.c.bf16 %v729, %v728
      %v856 = vpack.c.bf16 %v761, %v760
      %v857 = vpack.c.bf16 %v506, %v505
      %v858 = vpack.c.bf16 %v538, %v537
      %v859 = vpack.c.bf16 %v570, %v569
      %v860 = vpack.c.bf16 %v602, %v601
      %v861 = vpack.c.bf16 %v634, %v633
      %v862 = vpack.c.bf16 %v666, %v665
      %v863 = vpack.c.bf16 %v699, %v698
      %v864 = vpack.c.bf16 %v731, %v730
      %v865 = vpack.c.bf16 %v763, %v762
      %v866 = vpack.c.bf16 %v508, %v507
      %v867 = vpack.c.bf16 %v540, %v539
      %v868 = vpack.c.bf16 %v572, %v571
      %v869 = vpack.c.bf16 %v604, %v603
      %v870 = vpack.c.bf16 %v636, %v635
      %v871 = vpack.c.bf16 %v668, %v667
      %v872 = vpack.c.bf16 %v701, %v700
      %v873 = vpack.c.bf16 %v733, %v732
      %v874 = vpack.c.bf16 %v765, %v764
      %v875 = vpack.c.bf16 %v510, %v509
      %v876 = vpack.c.bf16 %v542, %v541
      %v877 = vpack.c.bf16 %v574, %v573
      %v878 = vpack.c.bf16 %v606, %v605
      %v879 = vpack.c.bf16 %v638, %v637
      %v880 = vpack.c.bf16 %v670, %v669
      %v881 = vpack.c.bf16 %v703, %v702
      %v882 = vpack.c.bf16 %v735, %v734
      %v883 = vpack.c.bf16 %v767, %v766
      %v884 = vpack.c.bf16 %v512, %v511
      %v885 = vpack.c.bf16 %v544, %v543
      %v886 = vpack.c.bf16 %v576, %v575
      %v887 = vpack.c.bf16 %v608, %v607
      %v888 = vpack.c.bf16 %v640, %v639
      %v889 = vpack.c.bf16 %v672, %v671
      %v890 = vpack.c.bf16 %v705, %v704
      %v891 = vpack.c.bf16 %v737, %v736
      %v892 = vpack.c.bf16 %v769, %v768
      %v893 = vpack.c.bf16 %v514, %v513
      %v894 = vpack.c.bf16 %v546, %v545
      %v895 = vpack.c.bf16 %v578, %v577
      %v896 = vpack.c.bf16 %v610, %v609
      %v897 = vpack.c.bf16 %v642, %v641
      %v898 = vpack.c.bf16 %v674, %v673
      %v899 = vpack.c.bf16 %v707, %v706
      %v900 = vpack.c.bf16 %v739, %v738
      %v901 = vpack.c.bf16 %v771, %v770
      %v902 = vpack.c.bf16 %v516, %v515
      %v903 = vpack.c.bf16 %v548, %v547
      %v904 = vpack.c.bf16 %v580, %v579
      %v905 = vpack.c.bf16 %v612, %v611
      %v906 = vpack.c.bf16 %v644, %v643
      %v907 = vpack.c.bf16 %v676, %v675
      %v908 = vpack.c.bf16 %v709, %v708
      %v909 = vpack.c.bf16 %v741, %v740
      %v910 = vpack.c.bf16 %v773, %v772
      %v911 = vpack.c.bf16 %v518, %v517
      %v912 = vpack.c.bf16 %v550, %v549
      %v913 = vpack.c.bf16 %v582, %v581
      %v914 = vpack.c.bf16 %v614, %v613
      %v915 = vpack.c.bf16 %v646, %v645
      %v916 = vpack.c.bf16 %v678, %v677
      %v917 = vpack.c.bf16 %v711, %v710
      %v918 = vpack.c.bf16 %v743, %v742
      %v919 = vpack.c.bf16 %v775, %v774
      %v920 = vld [vmem:[%s3] sm:$0xf]
      %v921 = vld [vmem:[%s3 + $0x4] sm:$0xf]
      %v922 = vld [vmem:[%s3 + $0x8] sm:$0xf]
      %v923 = vld [vmem:[%s3 + $0xc] sm:$0xf]
      %v924 = vld [vmem:[%s3 + $0x10] sm:$0xf]
      %v925 = vld [vmem:[%s3 + $0x14] sm:$0xf]
      %v926 = vld [vmem:[%s3 + $0x18] sm:$0xf]
      %v927 = vld [vmem:[%s3 + $0x1c] sm:$0xf]
      %v928 = vld [vmem:[%s3 + $0x20] sm:$0xf]
      %v929 = vld [vmem:[%s3 + $0x24] sm:$0xf]
      %v930 = vld [vmem:[%s3 + $0x28] sm:$0xf]
      %v931 = vld [vmem:[%s3 + $0x2c] sm:$0xf]
      %v932 = vld [vmem:[%s3 + $0x30] sm:$0xf]
      %v933 = vld [vmem:[%s3 + $0x34] sm:$0xf]
      %v934 = vld [vmem:[%s3 + $0x38] sm:$0xf]
      %v935 = vld [vmem:[%s3 + $0x3c] sm:$0xf]
      %v936 = vld [vmem:[%s3 + $0x40] sm:$0xf]
      %v937 = vld [vmem:[%s3 + $0x44] sm:$0xf]
      %v938 = vld [vmem:[%s3 + $0x48] sm:$0xf]
      %v939 = vld [vmem:[%s3 + $0x4c] sm:$0xf]
      %v940 = vld [vmem:[%s3 + $0x50] sm:$0xf]
      %v941 = vld [vmem:[%s3 + $0x54] sm:$0xf]
      %v942 = vld [vmem:[%s3 + $0x58] sm:$0xf]
      %v943 = vld [vmem:[%s3 + $0x5c] sm:$0xf]
      %v944 = vld [vmem:[%s3 + $0x60] sm:$0xf]
      %v945 = vld [vmem:[%s3 + $0x64] sm:$0xf]
      %v946 = vld [vmem:[%s3 + $0x68] sm:$0xf]
      %v947 = vld [vmem:[%s3 + $0x6c] sm:$0xf]
      %v948 = vld [vmem:[%s3 + $0x70] sm:$0xf]
      %v949 = vld [vmem:[%s3 + $0x74] sm:$0xf]
      %v950 = vld [vmem:[%s3 + $0x78] sm:$0xf]
      %v951 = vld [vmem:[%s3 + $0x7c] sm:$0xf]
      %v952 = vld [vmem:[%s3 + $0x80] sm:$0xf]
      %v953 = vld [vmem:[%s3 + $0x84] sm:$0xf]
      %v954 = vld [vmem:[%s3 + $0x88] sm:$0xf]
      %v955 = vld [vmem:[%s3 + $0x8c] sm:$0xf]
      %v956 = vld [vmem:[%s3 + $0x90] sm:$0xf]
      %v957 = vld [vmem:[%s3 + $0x94] sm:$0xf]
      %v958 = vld [vmem:[%s3 + $0x98] sm:$0xf]
      %v959 = vld [vmem:[%s3 + $0x9c] sm:$0xf]
      %v960 = vld [vmem:[%s3 + $0xa0] sm:$0xf]
      %v961 = vld [vmem:[%s3 + $0xa4] sm:$0xf]
      %v962 = vld [vmem:[%s3 + $0xa8] sm:$0xf]
      %v963 = vld [vmem:[%s3 + $0xac] sm:$0xf]
      %v964 = vld [vmem:[%s3 + $0xb0] sm:$0xf]
      %v965 = vld [vmem:[%s3 + $0xb4] sm:$0xf]
      %v966 = vld [vmem:[%s3 + $0xb8] sm:$0xf]
      %v967 = vld [vmem:[%s3 + $0xbc] sm:$0xf]
      %v968 = vld [vmem:[%s3 + $0xc0] sm:$0xf]
      %v969 = vld [vmem:[%s3 + $0xc4] sm:$0xf]
      %v970 = vld [vmem:[%s3 + $0xc8] sm:$0xf]
      %v971 = vld [vmem:[%s3 + $0xcc] sm:$0xf]
      %v972 = vld [vmem:[%s3 + $0xd0] sm:$0xf]
      %v973 = vld [vmem:[%s3 + $0xd4] sm:$0xf]
      %v974 = vld [vmem:[%s3 + $0xd8] sm:$0xf]
      %v975 = vld [vmem:[%s3 + $0xdc] sm:$0xf]
      %v976 = vld [vmem:[%s3 + $0xe0] sm:$0xf]
      %v977 = vld [vmem:[%s3 + $0xe4] sm:$0xf]
      %v978 = vld [vmem:[%s3 + $0xe8] sm:$0xf]
      %v979 = vld [vmem:[%s3 + $0xec] sm:$0xf]
      %v980 = vld [vmem:[%s3 + $0xf0] sm:$0xf]
      %v981 = vld [vmem:[%s3 + $0xf4] sm:$0xf]
      %v982 = vld [vmem:[%s3 + $0xf8] sm:$0xf]
      %v983 = vld [vmem:[%s3 + $0xfc] sm:$0xf]
      %v984 = vld [vmem:[%s3 + $0x100] sm:$0xf]
      %v985 = vld [vmem:[%s3 + $0x104] sm:$0xf]
      %v986 = vld [vmem:[%s3 + $0x108] sm:$0xf]
      %v987 = vld [vmem:[%s3 + $0x10c] sm:$0xf]
      %v988 = vld [vmem:[%s3 + $0x110] sm:$0xf]
      %v989 = vld [vmem:[%s3 + $0x114] sm:$0xf]
      %v990 = vld [vmem:[%s3 + $0x118] sm:$0xf]
      %v991 = vld [vmem:[%s3 + $0x11c] sm:$0xf]
      %v992 = vld [vmem:[%s3 + $0x120] sm:$0xf]
      %v993 = vld [vmem:[%s3 + $0x124] sm:$0xf]
      %v994 = vld [vmem:[%s3 + $0x128] sm:$0xf]
      %v995 = vld [vmem:[%s3 + $0x12c] sm:$0xf]
      %v996 = vld [vmem:[%s3 + $0x130] sm:$0xf]
      %v997 = vld [vmem:[%s3 + $0x134] sm:$0xf]
      %v998 = vld [vmem:[%s3 + $0x138] sm:$0xf]
      %v999 = vld [vmem:[%s3 + $0x13c] sm:$0xf]
      %v1000 = vld [vmem:[%s3 + $0x140] sm:$0xf]
      %v1001 = vld [vmem:[%s3 + $0x144] sm:$0xf]
      %v1002 = vld [vmem:[%s3 + $0x148] sm:$0xf]
      %v1003 = vld [vmem:[%s3 + $0x14c] sm:$0xf]
      %v1004 = vld [vmem:[%s3 + $0x150] sm:$0xf]
      %v1005 = vld [vmem:[%s3 + $0x154] sm:$0xf]
      %v1006 = vld [vmem:[%s3 + $0x158] sm:$0xf]
      %v1007 = vld [vmem:[%s3 + $0x15c] sm:$0xf]
      %v1008 = vld [vmem:[%s3 + $0x160] sm:$0xf]
      %v1009 = vld [vmem:[%s3 + $0x164] sm:$0xf]
      %v1010 = vld [vmem:[%s3 + $0x168] sm:$0xf]
      %v1011 = vld [vmem:[%s3 + $0x16c] sm:$0xf]
      %v1012 = vld [vmem:[%s3 + $0x170] sm:$0xf]
      %v1013 = vld [vmem:[%s3 + $0x174] sm:$0xf]
      %v1014 = vld [vmem:[%s3 + $0x178] sm:$0xf]
      %v1015 = vld [vmem:[%s3 + $0x17c] sm:$0xf]
      %v1016 = vld [vmem:[%s3 + $0x180] sm:$0xf]
      %v1017 = vld [vmem:[%s3 + $0x184] sm:$0xf]
      %v1018 = vld [vmem:[%s3 + $0x188] sm:$0xf]
      %v1019 = vld [vmem:[%s3 + $0x18c] sm:$0xf]
      %v1020 = vld [vmem:[%s3 + $0x190] sm:$0xf]
      %v1021 = vld [vmem:[%s3 + $0x194] sm:$0xf]
      %v1022 = vld [vmem:[%s3 + $0x198] sm:$0xf]
      %v1023 = vld [vmem:[%s3 + $0x19c] sm:$0xf]
      %v1024 = vld [vmem:[%s3 + $0x1a0] sm:$0xf]
      %v1025 = vld [vmem:[%s3 + $0x1a4] sm:$0xf]
      %v1026 = vld [vmem:[%s3 + $0x1a8] sm:$0xf]
      %v1027 = vld [vmem:[%s3 + $0x1ac] sm:$0xf]
      %v1028 = vld [vmem:[%s3 + $0x1b0] sm:$0xf]
      %v1029 = vld [vmem:[%s3 + $0x1b4] sm:$0xf]
      %v1030 = vld [vmem:[%s3 + $0x1b8] sm:$0xf]
      %v1031 = vld [vmem:[%s3 + $0x1bc] sm:$0xf]
      %v1032 = vld [vmem:[%s3 + $0x1c0] sm:$0xf]
      %v1033 = vld [vmem:[%s3 + $0x1c4] sm:$0xf]
      %v1034 = vld [vmem:[%s3 + $0x1c8] sm:$0xf]
      %v1035 = vld [vmem:[%s3 + $0x1cc] sm:$0xf]
      %v1036 = vld [vmem:[%s3 + $0x1d0] sm:$0xf]
      %v1037 = vld [vmem:[%s3 + $0x1d4] sm:$0xf]
      %v1038 = vld [vmem:[%s3 + $0x1d8] sm:$0xf]
      %v1039 = vld [vmem:[%s3 + $0x1dc] sm:$0xf]
      %v1040 = vld [vmem:[%s3 + $0x1e0] sm:$0xf]
      %v1041 = vld [vmem:[%s3 + $0x1e4] sm:$0xf]
      %v1042 = vld [vmem:[%s3 + $0x1e8] sm:$0xf]
      %v1043 = vld [vmem:[%s3 + $0x1ec] sm:$0xf]
      %v1044 = vld [vmem:[%s3 + $0x1f0] sm:$0xf]
      %v1045 = vld [vmem:[%s3 + $0x1f4] sm:$0xf]
      %v1046 = vld [vmem:[%s3 + $0x1f8] sm:$0xf]
      %v1047 = vld [vmem:[%s3 + $0x1fc] sm:$0xf]
      %v1048 = vld [vmem:[%s3 + $0x200] sm:$0xf]
      %v1049 = vld [vmem:[%s3 + $0x204] sm:$0xf]
      %v1050 = vld [vmem:[%s3 + $0x208] sm:$0xf]
      %v1051 = vld [vmem:[%s3 + $0x20c] sm:$0xf]
      %v1052 = vld [vmem:[%s3 + $0x210] sm:$0xf]
      %v1053 = vld [vmem:[%s3 + $0x214] sm:$0xf]
      %v1054 = vld [vmem:[%s3 + $0x218] sm:$0xf]
      %v1055 = vld [vmem:[%s3 + $0x21c] sm:$0xf]
      %v1056 = vld [vmem:[%s3 + $0x220] sm:$0xf]
      %v1057 = vld [vmem:[%s3 + $0x224] sm:$0xf]
      %v1058 = vld [vmem:[%s3 + $0x228] sm:$0xf]
      %v1059 = vld [vmem:[%s3 + $0x22c] sm:$0xf]
      %v1060 = vld [vmem:[%s3 + $0x230] sm:$0xf]
      %v1061 = vld [vmem:[%s3 + $0x234] sm:$0xf]
      %v1062 = vld [vmem:[%s3 + $0x238] sm:$0xf]
      %v1063 = vld [vmem:[%s3 + $0x23c] sm:$0xf]
      %v1208 = vunpack.c.l.b16 %v920
      %v1209 = vunpack.c.l.b16 %v921
      %v1210 = vunpack.c.l.b16 %v922
      %v1211 = vunpack.c.l.b16 %v923
      %v1212 = vunpack.c.l.b16 %v924
      %v1213 = vunpack.c.l.b16 %v925
      %v1214 = vunpack.c.l.b16 %v926
      %v1215 = vunpack.c.l.b16 %v927
      %v1216 = vunpack.c.l.b16 %v928
      %v1217 = vunpack.c.l.b16 %v929
      %v1218 = vunpack.c.l.b16 %v930
      %v1219 = vunpack.c.l.b16 %v931
      %v1220 = vunpack.c.l.b16 %v932
      %v1221 = vunpack.c.l.b16 %v933
      %v1222 = vunpack.c.l.b16 %v934
      %v1223 = vunpack.c.l.b16 %v935
      %v1224 = vunpack.c.l.b16 %v936
      %v1225 = vunpack.c.l.b16 %v937
      %v1226 = vunpack.c.l.b16 %v938
      %v1227 = vunpack.c.l.b16 %v939
      %v1228 = vunpack.c.l.b16 %v940
      %v1229 = vunpack.c.l.b16 %v941
      %v1230 = vunpack.c.l.b16 %v942
      %v1231 = vunpack.c.l.b16 %v943
      %v1232 = vunpack.c.l.b16 %v944
      %v1233 = vunpack.c.l.b16 %v945
      %v1234 = vunpack.c.l.b16 %v946
      %v1235 = vunpack.c.l.b16 %v947
      %v1236 = vunpack.c.l.b16 %v948
      %v1237 = vunpack.c.l.b16 %v949
      %v1238 = vunpack.c.l.b16 %v950
      %v1239 = vunpack.c.l.b16 %v951
      %v1240 = vunpack.c.l.b16 %v952
      %v1241 = vunpack.c.l.b16 %v953
      %v1242 = vunpack.c.l.b16 %v954
      %v1243 = vunpack.c.l.b16 %v955
      %v1244 = vunpack.c.l.b16 %v956
      %v1245 = vunpack.c.l.b16 %v957
      %v1246 = vunpack.c.l.b16 %v958
      %v1247 = vunpack.c.l.b16 %v959
      %v1248 = vunpack.c.l.b16 %v960
      %v1249 = vunpack.c.l.b16 %v961
      %v1250 = vunpack.c.l.b16 %v962
      %v1251 = vunpack.c.l.b16 %v963
      %v1252 = vunpack.c.l.b16 %v964
      %v1253 = vunpack.c.l.b16 %v965
      %v1254 = vunpack.c.l.b16 %v966
      %v1255 = vunpack.c.l.b16 %v967
      %v1256 = vunpack.c.l.b16 %v968
      %v1257 = vunpack.c.l.b16 %v969
      %v1258 = vunpack.c.l.b16 %v970
      %v1259 = vunpack.c.l.b16 %v971
      %v1260 = vunpack.c.l.b16 %v972
      %v1261 = vunpack.c.l.b16 %v973
      %v1262 = vunpack.c.l.b16 %v974
      %v1263 = vunpack.c.l.b16 %v975
      %v1264 = vunpack.c.l.b16 %v976
      %v1265 = vunpack.c.l.b16 %v977
      %v1266 = vunpack.c.l.b16 %v978
      %v1267 = vunpack.c.l.b16 %v979
      %v1268 = vunpack.c.l.b16 %v980
      %v1269 = vunpack.c.l.b16 %v981
      %v1270 = vunpack.c.l.b16 %v982
      %v1271 = vunpack.c.l.b16 %v983
      %v1272 = vunpack.c.l.b16 %v984
      %v1273 = vunpack.c.l.b16 %v985
      %v1274 = vunpack.c.l.b16 %v986
      %v1275 = vunpack.c.l.b16 %v987
      %v1276 = vunpack.c.l.b16 %v988
      %v1277 = vunpack.c.l.b16 %v989
      %v1278 = vunpack.c.l.b16 %v990
      %v1279 = vunpack.c.l.b16 %v991
      %v1280 = vunpack.c.l.b16 %v992
      %v1281 = vunpack.c.l.b16 %v993
      %v1282 = vunpack.c.l.b16 %v994
      %v1283 = vunpack.c.l.b16 %v995
      %v1284 = vunpack.c.l.b16 %v996
      %v1285 = vunpack.c.l.b16 %v997
      %v1286 = vunpack.c.l.b16 %v998
      %v1287 = vunpack.c.l.b16 %v999
      %v1288 = vunpack.c.l.b16 %v1000
      %v1289 = vunpack.c.l.b16 %v1001
      %v1290 = vunpack.c.l.b16 %v1002
      %v1291 = vunpack.c.l.b16 %v1003
      %v1292 = vunpack.c.l.b16 %v1004
      %v1293 = vunpack.c.l.b16 %v1005
      %v1294 = vunpack.c.l.b16 %v1006
      %v1295 = vunpack.c.l.b16 %v1007
      %v1296 = vunpack.c.l.b16 %v1008
      %v1297 = vunpack.c.l.b16 %v1009
      %v1298 = vunpack.c.l.b16 %v1010
      %v1299 = vunpack.c.l.b16 %v1011
      %v1300 = vunpack.c.l.b16 %v1012
      %v1301 = vunpack.c.l.b16 %v1013
      %v1302 = vunpack.c.l.b16 %v1014
      %v1303 = vunpack.c.l.b16 %v1015
      %v1304 = vunpack.c.l.b16 %v1016
      %v1305 = vunpack.c.l.b16 %v1017
      %v1306 = vunpack.c.l.b16 %v1018
      %v1307 = vunpack.c.l.b16 %v1019
      %v1308 = vunpack.c.l.b16 %v1020
      %v1309 = vunpack.c.l.b16 %v1021
      %v1310 = vunpack.c.l.b16 %v1022
      %v1311 = vunpack.c.l.b16 %v1023
      %v1312 = vunpack.c.l.b16 %v1024
      %v1313 = vunpack.c.l.b16 %v1025
      %v1314 = vunpack.c.l.b16 %v1026
      %v1315 = vunpack.c.l.b16 %v1027
      %v1316 = vunpack.c.l.b16 %v1028
      %v1317 = vunpack.c.l.b16 %v1029
      %v1318 = vunpack.c.l.b16 %v1030
      %v1319 = vunpack.c.l.b16 %v1031
      %v1320 = vunpack.c.l.b16 %v1032
      %v1321 = vunpack.c.l.b16 %v1033
      %v1322 = vunpack.c.l.b16 %v1034
      %v1323 = vunpack.c.l.b16 %v1035
      %v1324 = vunpack.c.l.b16 %v1036
      %v1325 = vunpack.c.l.b16 %v1037
      %v1326 = vunpack.c.l.b16 %v1038
      %v1327 = vunpack.c.l.b16 %v1039
      %v1328 = vunpack.c.l.b16 %v1040
      %v1329 = vunpack.c.l.b16 %v1041
      %v1330 = vunpack.c.l.b16 %v1042
      %v1331 = vunpack.c.l.b16 %v1043
      %v1332 = vunpack.c.l.b16 %v1044
      %v1333 = vunpack.c.l.b16 %v1045
      %v1334 = vunpack.c.l.b16 %v1046
      %v1335 = vunpack.c.l.b16 %v1047
      %v1336 = vunpack.c.l.b16 %v1048
      %v1337 = vunpack.c.l.b16 %v1049
      %v1338 = vunpack.c.l.b16 %v1050
      %v1339 = vunpack.c.l.b16 %v1051
      %v1340 = vunpack.c.l.b16 %v1052
      %v1341 = vunpack.c.l.b16 %v1053
      %v1342 = vunpack.c.l.b16 %v1054
      %v1343 = vunpack.c.l.b16 %v1055
      %v1344 = vunpack.c.l.b16 %v1056
      %v1345 = vunpack.c.l.b16 %v1057
      %v1346 = vunpack.c.l.b16 %v1058
      %v1347 = vunpack.c.l.b16 %v1059
      %v1348 = vunpack.c.l.b16 %v1060
      %v1349 = vunpack.c.l.b16 %v1061
      %v1350 = vunpack.c.l.b16 %v1062
      %v1351 = vunpack.c.l.b16 %v1063
      %v1352 = vpack.c.b16 %v1209, %v1208
      %v1353 = vpack.c.b16 %v1211, %v1210
      %v1354 = vpack.c.b16 %v1213, %v1212
      %v1355 = vpack.c.b16 %v1215, %v1214
      %v1356 = vpack.c.b16 %v1217, %v1216
      %v1357 = vpack.c.b16 %v1219, %v1218
      %v1358 = vpack.c.b16 %v1221, %v1220
      %v1359 = vpack.c.b16 %v1223, %v1222
      %v1360 = vpack.c.b16 %v1225, %v1224
      %v1361 = vpack.c.b16 %v1227, %v1226
      %v1362 = vpack.c.b16 %v1229, %v1228
      %v1363 = vpack.c.b16 %v1231, %v1230
      %v1364 = vpack.c.b16 %v1233, %v1232
      %v1365 = vpack.c.b16 %v1235, %v1234
      %v1366 = vpack.c.b16 %v1237, %v1236
      %v1367 = vpack.c.b16 %v1239, %v1238
      %v1368 = vpack.c.b16 %v1241, %v1240
      %v1369 = vpack.c.b16 %v1243, %v1242
      %v1370 = vpack.c.b16 %v1245, %v1244
      %v1371 = vpack.c.b16 %v1247, %v1246
      %v1372 = vpack.c.b16 %v1249, %v1248
      %v1373 = vpack.c.b16 %v1251, %v1250
      %v1374 = vpack.c.b16 %v1253, %v1252
      %v1375 = vpack.c.b16 %v1255, %v1254
      %v1376 = vpack.c.b16 %v1257, %v1256
      %v1377 = vpack.c.b16 %v1259, %v1258
      %v1378 = vpack.c.b16 %v1261, %v1260
      %v1379 = vpack.c.b16 %v1263, %v1262
      %v1380 = vpack.c.b16 %v1265, %v1264
      %v1381 = vpack.c.b16 %v1267, %v1266
      %v1382 = vpack.c.b16 %v1269, %v1268
      %v1383 = vpack.c.b16 %v1271, %v1270
      %v1384 = vpack.c.b16 %v1273, %v1272
      %v1385 = vpack.c.b16 %v1275, %v1274
      %v1386 = vpack.c.b16 %v1277, %v1276
      %v1387 = vpack.c.b16 %v1279, %v1278
      %v1388 = vpack.c.b16 %v1281, %v1280
      %v1389 = vpack.c.b16 %v1283, %v1282
      %v1390 = vpack.c.b16 %v1285, %v1284
      %v1391 = vpack.c.b16 %v1287, %v1286
      %v1392 = vpack.c.b16 %v1289, %v1288
      %v1393 = vpack.c.b16 %v1291, %v1290
      %v1394 = vpack.c.b16 %v1293, %v1292
      %v1395 = vpack.c.b16 %v1295, %v1294
      %v1396 = vpack.c.b16 %v1297, %v1296
      %v1397 = vpack.c.b16 %v1299, %v1298
      %v1398 = vpack.c.b16 %v1301, %v1300
      %v1399 = vpack.c.b16 %v1303, %v1302
      %v1400 = vpack.c.b16 %v1305, %v1304
      %v1401 = vpack.c.b16 %v1307, %v1306
      %v1402 = vpack.c.b16 %v1309, %v1308
      %v1403 = vpack.c.b16 %v1311, %v1310
      %v1404 = vpack.c.b16 %v1313, %v1312
      %v1405 = vpack.c.b16 %v1315, %v1314
      %v1406 = vpack.c.b16 %v1317, %v1316
      %v1407 = vpack.c.b16 %v1319, %v1318
      %v1408 = vpack.c.b16 %v1321, %v1320
      %v1409 = vpack.c.b16 %v1323, %v1322
      %v1410 = vpack.c.b16 %v1325, %v1324
      %v1411 = vpack.c.b16 %v1327, %v1326
      %v1412 = vpack.c.b16 %v1329, %v1328
      %v1413 = vpack.c.b16 %v1331, %v1330
      %v1414 = vpack.c.b16 %v1333, %v1332
      %v1415 = vpack.c.b16 %v1335, %v1334
      %v1416 = vpack.c.b16 %v1337, %v1336
      %v1417 = vpack.c.b16 %v1339, %v1338
      %v1418 = vpack.c.b16 %v1341, %v1340
      %v1419 = vpack.c.b16 %v1343, %v1342
      %v1420 = vpack.c.b16 %v1345, %v1344
      %v1421 = vpack.c.b16 %v1347, %v1346
      %v1422 = vpack.c.b16 %v1349, %v1348
      %v1423 = vpack.c.b16 %v1351, %v1350
      %1496 = vmatprep.subr.bf16.mxu0 0
      %1497 = vmatpush1.bf16.msra.mxu0 %v1359
      %1498 = vmatprep.subr.bf16.mxu0 0
      %1499 = vmatpush1.bf16.msra.mxu0 %v1358
      %1500 = vmatprep.subr.bf16.mxu0 0
      %1501 = vmatpush1.bf16.msra.mxu0 %v1357
      %1502 = vmatprep.subr.bf16.mxu0 0
      %1503 = vmatpush1.bf16.msra.mxu0 %v1356
      %1504 = vmatprep.subr.bf16.mxu0 0
      %1505 = vmatpush1.bf16.msra.mxu0 %v1355
      %1506 = vmatprep.subr.bf16.mxu0 0
      %1507 = vmatpush1.bf16.msra.mxu0 %v1354
      %1508 = vmatprep.subr.bf16.mxu0 0
      %1509 = vmatpush1.bf16.msra.mxu0 %v1353
      %1510 = vmatprep.subr.bf16.mxu0 0
      %1511 = vmatpush1.bf16.msra.mxu0 %v1352
      %1512 = vmatprep.subr.bf16.mxu0 0
      %1513 = vmatpush2.bf16.msra.mxu0 %v1367
      %1514 = vmatprep.subr.bf16.mxu0 0
      %1515 = vmatpush2.bf16.msra.mxu0 %v1366
      %1516 = vmatprep.subr.bf16.mxu0 0
      %1517 = vmatpush2.bf16.msra.mxu0 %v1365
      %1518 = vmatprep.subr.bf16.mxu0 0
      %1519 = vmatpush2.bf16.msra.mxu0 %v1364
      %1520 = vmatprep.subr.bf16.mxu0 0
      %1521 = vmatpush2.bf16.msra.mxu0 %v1363
      %1522 = vmatprep.subr.bf16.mxu0 0
      %1523 = vmatpush2.bf16.msra.mxu0 %v1362
      %1524 = vmatprep.subr.bf16.mxu0 0
      %1525 = vmatpush2.bf16.msra.mxu0 %v1361
      %1526 = vmatprep.subr.bf16.mxu0 0
      %1527 = vmatpush2.bf16.msra.mxu0 %v1360
      %1528 = vmatprep.mubr.bf16.mxu0 %v777
      %1529 = vmatmul.mubr.bf16.gmra.mxu0 %v776
      %v1530 = vpop.f32.mrf.mxu0
      %v1531 = vadd.f32 0.0, %v1530
      %v1532 = vpop.f32.mrf.mxu0
      %v1533 = vpop.f32.mrf.mxu0
      %v1534 = vadd.f32 0.0, %v1533
      %v1535 = vpop.f32.mrf.mxu0
      %1536 = vmatprep.mubr.bf16.mxu0 %v786
      %1537 = vmatmul.mubr.bf16.gmra.mxu0 %v785
      %v1538 = vpop.f32.mrf.mxu0
      %v1539 = vadd.f32 0.0, %v1538
      %v1540 = vpop.f32.mrf.mxu0
      %v1541 = vpop.f32.mrf.mxu0
      %v1542 = vadd.f32 0.0, %v1541
      %v1543 = vpop.f32.mrf.mxu0
      %1544 = vmatprep.mubr.bf16.mxu0 %v795
      %1545 = vmatmul.mubr.bf16.gmra.mxu0 %v794
      %v1546 = vpop.f32.mrf.mxu0
      %v1547 = vadd.f32 0.0, %v1546
      %v1548 = vpop.f32.mrf.mxu0
      %v1549 = vpop.f32.mrf.mxu0
      %v1550 = vadd.f32 0.0, %v1549
      %v1551 = vpop.f32.mrf.mxu0
      %1552 = vmatprep.mubr.bf16.mxu0 %v804
      %1553 = vmatmul.mubr.bf16.gmra.mxu0 %v803
      %v1554 = vpop.f32.mrf.mxu0
      %v1555 = vadd.f32 0.0, %v1554
      %v1556 = vpop.f32.mrf.mxu0
      %v1557 = vpop.f32.mrf.mxu0
      %v1558 = vadd.f32 0.0, %v1557
      %v1559 = vpop.f32.mrf.mxu0
      %1560 = vmatprep.mubr.bf16.mxu0 %v813
      %1561 = vmatmul.mubr.bf16.gmra.mxu0 %v812
      %v1562 = vpop.f32.mrf.mxu0
      %v1563 = vadd.f32 0.0, %v1562
      %v1564 = vpop.f32.mrf.mxu0
      %v1565 = vpop.f32.mrf.mxu0
      %v1566 = vadd.f32 0.0, %v1565
      %v1567 = vpop.f32.mrf.mxu0
      %1568 = vmatprep.mubr.bf16.mxu0 %v822
      %1569 = vmatmul.mubr.bf16.gmra.mxu0 %v821
      %v1570 = vpop.f32.mrf.mxu0
      %v1571 = vadd.f32 0.0, %v1570
      %v1572 = vpop.f32.mrf.mxu0
      %v1573 = vpop.f32.mrf.mxu0
      %v1574 = vadd.f32 0.0, %v1573
      %v1575 = vpop.f32.mrf.mxu0
      %1576 = vmatprep.mubr.bf16.mxu0 %v831
      %1577 = vmatmul.mubr.bf16.gmra.mxu0 %v830
      %v1578 = vpop.f32.mrf.mxu0
      %v1579 = vadd.f32 0.0, %v1578
      %v1580 = vpop.f32.mrf.mxu0
      %v1581 = vpop.f32.mrf.mxu0
      %v1582 = vadd.f32 0.0, %v1581
      %v1583 = vpop.f32.mrf.mxu0
      %1584 = vmatprep.mubr.bf16.mxu0 %v840
      %1585 = vmatmul.mubr.bf16.gmra.mxu0 %v839
      %v1586 = vpop.f32.mrf.mxu0
      %v1587 = vadd.f32 0.0, %v1586
      %v1588 = vpop.f32.mrf.mxu0
      %v1589 = vpop.f32.mrf.mxu0
      %v1590 = vadd.f32 0.0, %v1589
      %v1591 = vpop.f32.mrf.mxu0
      %1592 = vmatprep.mubr.bf16.mxu0 %v849
      %1593 = vmatmul.mubr.bf16.gmra.mxu0 %v848
      %v1594 = vpop.f32.mrf.mxu0
      %v1595 = vadd.f32 0.0, %v1594
      %v1596 = vpop.f32.mrf.mxu0
      %v1597 = vpop.f32.mrf.mxu0
      %v1598 = vadd.f32 0.0, %v1597
      %v1599 = vpop.f32.mrf.mxu0
      %1600 = vmatprep.mubr.bf16.mxu0 %v858
      %1601 = vmatmul.mubr.bf16.gmra.mxu0 %v857
      %v1602 = vpop.f32.mrf.mxu0
      %v1603 = vadd.f32 0.0, %v1602
      %v1604 = vpop.f32.mrf.mxu0
      %v1605 = vpop.f32.mrf.mxu0
      %v1606 = vadd.f32 0.0, %v1605
      %v1607 = vpop.f32.mrf.mxu0
      %1608 = vmatprep.mubr.bf16.mxu0 %v867
      %1609 = vmatmul.mubr.bf16.gmra.mxu0 %v866
      %v1610 = vpop.f32.mrf.mxu0
      %v1611 = vadd.f32 0.0, %v1610
      %v1612 = vpop.f32.mrf.mxu0
      %v1613 = vpop.f32.mrf.mxu0
      %v1614 = vadd.f32 0.0, %v1613
      %v1615 = vpop.f32.mrf.mxu0
      %1616 = vmatprep.mubr.bf16.mxu0 %v876
      %1617 = vmatmul.mubr.bf16.gmra.mxu0 %v875
      %v1618 = vpop.f32.mrf.mxu0
      %v1619 = vadd.f32 0.0, %v1618
      %v1620 = vpop.f32.mrf.mxu0
      %v1621 = vpop.f32.mrf.mxu0
      %v1622 = vadd.f32 0.0, %v1621
      %v1623 = vpop.f32.mrf.mxu0
      %1624 = vmatprep.mubr.bf16.mxu0 %v885
      %1625 = vmatmul.mubr.bf16.gmra.mxu0 %v884
      %v1626 = vpop.f32.mrf.mxu0
      %v1627 = vadd.f32 0.0, %v1626
      %v1628 = vpop.f32.mrf.mxu0
      %v1629 = vpop.f32.mrf.mxu0
      %v1630 = vadd.f32 0.0, %v1629
      %v1631 = vpop.f32.mrf.mxu0
      %1632 = vmatprep.mubr.bf16.mxu0 %v894
      %1633 = vmatmul.mubr.bf16.gmra.mxu0 %v893
      %v1634 = vpop.f32.mrf.mxu0
      %v1635 = vadd.f32 0.0, %v1634
      %v1636 = vpop.f32.mrf.mxu0
      %v1637 = vpop.f32.mrf.mxu0
      %v1638 = vadd.f32 0.0, %v1637
      %v1639 = vpop.f32.mrf.mxu0
      %1640 = vmatprep.mubr.bf16.mxu0 %v903
      %1641 = vmatmul.mubr.bf16.gmra.mxu0 %v902
      %v1642 = vpop.f32.mrf.mxu0
      %v1643 = vadd.f32 0.0, %v1642
      %v1644 = vpop.f32.mrf.mxu0
      %v1645 = vpop.f32.mrf.mxu0
      %v1646 = vadd.f32 0.0, %v1645
      %v1647 = vpop.f32.mrf.mxu0
      %1648 = vmatprep.mubr.bf16.mxu0 %v912
      %1649 = vmatmul.mubr.bf16.gmra.mxu0 %v911
      %v1650 = vpop.f32.mrf.mxu0
      %v1651 = vadd.f32 0.0, %v1650
      %v1652 = vpop.f32.mrf.mxu0
      %v1653 = vpop.f32.mrf.mxu0
      %v1654 = vadd.f32 0.0, %v1653
      %v1655 = vpop.f32.mrf.mxu0
      %1656 = vdwg.mxu0
      %1657 = vmatprep.subr.bf16.mxu0 0
      %1658 = vmatpush1.bf16.msra.mxu0 %v1375
      %1659 = vmatprep.subr.bf16.mxu0 0
      %1660 = vmatpush1.bf16.msra.mxu0 %v1374
      %1661 = vmatprep.subr.bf16.mxu0 0
      %1662 = vmatpush1.bf16.msra.mxu0 %v1373
      %1663 = vmatprep.subr.bf16.mxu0 0
      %1664 = vmatpush1.bf16.msra.mxu0 %v1372
      %1665 = vmatprep.subr.bf16.mxu0 0
      %1666 = vmatpush1.bf16.msra.mxu0 %v1371
      %1667 = vmatprep.subr.bf16.mxu0 0
      %1668 = vmatpush1.bf16.msra.mxu0 %v1370
      %1669 = vmatprep.subr.bf16.mxu0 0
      %1670 = vmatpush1.bf16.msra.mxu0 %v1369
      %1671 = vmatprep.subr.bf16.mxu0 0
      %1672 = vmatpush1.bf16.msra.mxu0 %v1368
      %1673 = vmatprep.subr.bf16.mxu0 0
      %1674 = vmatpush2.bf16.msra.mxu0 %v1383
      %1675 = vmatprep.subr.bf16.mxu0 0
      %1676 = vmatpush2.bf16.msra.mxu0 %v1382
      %1677 = vmatprep.subr.bf16.mxu0 0
      %1678 = vmatpush2.bf16.msra.mxu0 %v1381
      %1679 = vmatprep.subr.bf16.mxu0 0
      %1680 = vmatpush2.bf16.msra.mxu0 %v1380
      %1681 = vmatprep.subr.bf16.mxu0 0
      %1682 = vmatpush2.bf16.msra.mxu0 %v1379
      %1683 = vmatprep.subr.bf16.mxu0 0
      %1684 = vmatpush2.bf16.msra.mxu0 %v1378
      %1685 = vmatprep.subr.bf16.mxu0 0
      %1686 = vmatpush2.bf16.msra.mxu0 %v1377
      %1687 = vmatprep.subr.bf16.mxu0 0
      %1688 = vmatpush2.bf16.msra.mxu0 %v1376
      %1689 = vmatprep.mubr.bf16.mxu0 %v779
      %1690 = vmatmul.mubr.bf16.gmra.mxu0 %v778
      %v1691 = vpop.f32.mrf.mxu0
      %v1692 = vadd.f32 %v1531, %v1691
      %v1693 = vpop.f32.mrf.mxu0
      %v1694 = vpop.f32.mrf.mxu0
      %v1695 = vadd.f32 %v1534, %v1694
      %v1696 = vpop.f32.mrf.mxu0
      %1697 = vmatprep.mubr.bf16.mxu0 %v788
      %1698 = vmatmul.mubr.bf16.gmra.mxu0 %v787
      %v1699 = vpop.f32.mrf.mxu0
      %v1700 = vadd.f32 %v1539, %v1699
      %v1701 = vpop.f32.mrf.mxu0
      %v1702 = vpop.f32.mrf.mxu0
      %v1703 = vadd.f32 %v1542, %v1702
      %v1704 = vpop.f32.mrf.mxu0
      %1705 = vmatprep.mubr.bf16.mxu0 %v797
      %1706 = vmatmul.mubr.bf16.gmra.mxu0 %v796
      %v1707 = vpop.f32.mrf.mxu0
      %v1708 = vadd.f32 %v1547, %v1707
      %v1709 = vpop.f32.mrf.mxu0
      %v1710 = vpop.f32.mrf.mxu0
      %v1711 = vadd.f32 %v1550, %v1710
      %v1712 = vpop.f32.mrf.mxu0
      %1713 = vmatprep.mubr.bf16.mxu0 %v806
      %1714 = vmatmul.mubr.bf16.gmra.mxu0 %v805
      %v1715 = vpop.f32.mrf.mxu0
      %v1716 = vadd.f32 %v1555, %v1715
      %v1717 = vpop.f32.mrf.mxu0
      %v1718 = vpop.f32.mrf.mxu0
      %v1719 = vadd.f32 %v1558, %v1718
      %v1720 = vpop.f32.mrf.mxu0
      %1721 = vmatprep.mubr.bf16.mxu0 %v815
      %1722 = vmatmul.mubr.bf16.gmra.mxu0 %v814
      %v1723 = vpop.f32.mrf.mxu0
      %v1724 = vadd.f32 %v1563, %v1723
      %v1725 = vpop.f32.mrf.mxu0
      %v1726 = vpop.f32.mrf.mxu0
      %v1727 = vadd.f32 %v1566, %v1726
      %v1728 = vpop.f32.mrf.mxu0
      %1729 = vmatprep.mubr.bf16.mxu0 %v824
      %1730 = vmatmul.mubr.bf16.gmra.mxu0 %v823
      %v1731 = vpop.f32.mrf.mxu0
      %v1732 = vadd.f32 %v1571, %v1731
      %v1733 = vpop.f32.mrf.mxu0
      %v1734 = vpop.f32.mrf.mxu0
      %v1735 = vadd.f32 %v1574, %v1734
      %v1736 = vpop.f32.mrf.mxu0
      %1737 = vmatprep.mubr.bf16.mxu0 %v833
      %1738 = vmatmul.mubr.bf16.gmra.mxu0 %v832
      %v1739 = vpop.f32.mrf.mxu0
      %v1740 = vadd.f32 %v1579, %v1739
      %v1741 = vpop.f32.mrf.mxu0
      %v1742 = vpop.f32.mrf.mxu0
      %v1743 = vadd.f32 %v1582, %v1742
      %v1744 = vpop.f32.mrf.mxu0
      %1745 = vmatprep.mubr.bf16.mxu0 %v842
      %1746 = vmatmul.mubr.bf16.gmra.mxu0 %v841
      %v1747 = vpop.f32.mrf.mxu0
      %v1748 = vadd.f32 %v1587, %v1747
      %v1749 = vpop.f32.mrf.mxu0
      %v1750 = vpop.f32.mrf.mxu0
      %v1751 = vadd.f32 %v1590, %v1750
      %v1752 = vpop.f32.mrf.mxu0
      %1753 = vmatprep.mubr.bf16.mxu0 %v851
      %1754 = vmatmul.mubr.bf16.gmra.mxu0 %v850
      %v1755 = vpop.f32.mrf.mxu0
      %v1756 = vadd.f32 %v1595, %v1755
      %v1757 = vpop.f32.mrf.mxu0
      %v1758 = vpop.f32.mrf.mxu0
      %v1759 = vadd.f32 %v1598, %v1758
      %v1760 = vpop.f32.mrf.mxu0
      %1761 = vmatprep.mubr.bf16.mxu0 %v860
      %1762 = vmatmul.mubr.bf16.gmra.mxu0 %v859
      %v1763 = vpop.f32.mrf.mxu0
      %v1764 = vadd.f32 %v1603, %v1763
      %v1765 = vpop.f32.mrf.mxu0
      %v1766 = vpop.f32.mrf.mxu0
      %v1767 = vadd.f32 %v1606, %v1766
      %v1768 = vpop.f32.mrf.mxu0
      %1769 = vmatprep.mubr.bf16.mxu0 %v869
      %1770 = vmatmul.mubr.bf16.gmra.mxu0 %v868
      %v1771 = vpop.f32.mrf.mxu0
      %v1772 = vadd.f32 %v1611, %v1771
      %v1773 = vpop.f32.mrf.mxu0
      %v1774 = vpop.f32.mrf.mxu0
      %v1775 = vadd.f32 %v1614, %v1774
      %v1776 = vpop.f32.mrf.mxu0
      %1777 = vmatprep.mubr.bf16.mxu0 %v878
      %1778 = vmatmul.mubr.bf16.gmra.mxu0 %v877
      %v1779 = vpop.f32.mrf.mxu0
      %v1780 = vadd.f32 %v1619, %v1779
      %v1781 = vpop.f32.mrf.mxu0
      %v1782 = vpop.f32.mrf.mxu0
      %v1783 = vadd.f32 %v1622, %v1782
      %v1784 = vpop.f32.mrf.mxu0
      %1785 = vmatprep.mubr.bf16.mxu0 %v887
      %1786 = vmatmul.mubr.bf16.gmra.mxu0 %v886
      %v1787 = vpop.f32.mrf.mxu0
      %v1788 = vadd.f32 %v1627, %v1787
      %v1789 = vpop.f32.mrf.mxu0
      %v1790 = vpop.f32.mrf.mxu0
      %v1791 = vadd.f32 %v1630, %v1790
      %v1792 = vpop.f32.mrf.mxu0
      %1793 = vmatprep.mubr.bf16.mxu0 %v896
      %1794 = vmatmul.mubr.bf16.gmra.mxu0 %v895
      %v1795 = vpop.f32.mrf.mxu0
      %v1796 = vadd.f32 %v1635, %v1795
      %v1797 = vpop.f32.mrf.mxu0
      %v1798 = vpop.f32.mrf.mxu0
      %v1799 = vadd.f32 %v1638, %v1798
      %v1800 = vpop.f32.mrf.mxu0
      %1801 = vmatprep.mubr.bf16.mxu0 %v905
      %1802 = vmatmul.mubr.bf16.gmra.mxu0 %v904
      %v1803 = vpop.f32.mrf.mxu0
      %v1804 = vadd.f32 %v1643, %v1803
      %v1805 = vpop.f32.mrf.mxu0
      %v1806 = vpop.f32.mrf.mxu0
      %v1807 = vadd.f32 %v1646, %v1806
      %v1808 = vpop.f32.mrf.mxu0
      %1809 = vmatprep.mubr.bf16.mxu0 %v914
      %1810 = vmatmul.mubr.bf16.gmra.mxu0 %v913
      %v1811 = vpop.f32.mrf.mxu0
      %v1812 = vadd.f32 %v1651, %v1811
      %v1813 = vpop.f32.mrf.mxu0
      %v1814 = vpop.f32.mrf.mxu0
      %v1815 = vadd.f32 %v1654, %v1814
      %v1816 = vpop.f32.mrf.mxu0
      %1817 = vdwg.mxu0
      %1818 = vmatprep.subr.bf16.mxu0 0
      %1819 = vmatpush1.bf16.msra.mxu0 %v1391
      %1820 = vmatprep.subr.bf16.mxu0 0
      %1821 = vmatpush1.bf16.msra.mxu0 %v1390
      %1822 = vmatprep.subr.bf16.mxu0 0
      %1823 = vmatpush1.bf16.msra.mxu0 %v1389
      %1824 = vmatprep.subr.bf16.mxu0 0
      %1825 = vmatpush1.bf16.msra.mxu0 %v1388
      %1826 = vmatprep.subr.bf16.mxu0 0
      %1827 = vmatpush1.bf16.msra.mxu0 %v1387
      %1828 = vmatprep.subr.bf16.mxu0 0
      %1829 = vmatpush1.bf16.msra.mxu0 %v1386
      %1830 = vmatprep.subr.bf16.mxu0 0
      %1831 = vmatpush1.bf16.msra.mxu0 %v1385
      %1832 = vmatprep.subr.bf16.mxu0 0
      %1833 = vmatpush1.bf16.msra.mxu0 %v1384
      %1834 = vmatprep.subr.bf16.mxu0 0
      %1835 = vmatpush2.bf16.msra.mxu0 %v1399
      %1836 = vmatprep.subr.bf16.mxu0 0
      %1837 = vmatpush2.bf16.msra.mxu0 %v1398
      %1838 = vmatprep.subr.bf16.mxu0 0
      %1839 = vmatpush2.bf16.msra.mxu0 %v1397
      %1840 = vmatprep.subr.bf16.mxu0 0
      %1841 = vmatpush2.bf16.msra.mxu0 %v1396
      %1842 = vmatprep.subr.bf16.mxu0 0
      %1843 = vmatpush2.bf16.msra.mxu0 %v1395
      %1844 = vmatprep.subr.bf16.mxu0 0
      %1845 = vmatpush2.bf16.msra.mxu0 %v1394
      %1846 = vmatprep.subr.bf16.mxu0 0
      %1847 = vmatpush2.bf16.msra.mxu0 %v1393
      %1848 = vmatprep.subr.bf16.mxu0 0
      %1849 = vmatpush2.bf16.msra.mxu0 %v1392
      %1850 = vmatprep.mubr.bf16.mxu0 %v781
      %1851 = vmatmul.mubr.bf16.gmra.mxu0 %v780
      %v1852 = vpop.f32.mrf.mxu0
      %v1853 = vadd.f32 %v1692, %v1852
      %v1854 = vpop.f32.mrf.mxu0
      %v1855 = vpop.f32.mrf.mxu0
      %v1856 = vadd.f32 %v1695, %v1855
      %v1857 = vpop.f32.mrf.mxu0
      %1858 = vmatprep.mubr.bf16.mxu0 %v790
      %1859 = vmatmul.mubr.bf16.gmra.mxu0 %v789
      %v1860 = vpop.f32.mrf.mxu0
      %v1861 = vadd.f32 %v1700, %v1860
      %v1862 = vpop.f32.mrf.mxu0
      %v1863 = vpop.f32.mrf.mxu0
      %v1864 = vadd.f32 %v1703, %v1863
      %v1865 = vpop.f32.mrf.mxu0
      %1866 = vmatprep.mubr.bf16.mxu0 %v799
      %1867 = vmatmul.mubr.bf16.gmra.mxu0 %v798
      %v1868 = vpop.f32.mrf.mxu0
      %v1869 = vadd.f32 %v1708, %v1868
      %v1870 = vpop.f32.mrf.mxu0
      %v1871 = vpop.f32.mrf.mxu0
      %v1872 = vadd.f32 %v1711, %v1871
      %v1873 = vpop.f32.mrf.mxu0
      %1874 = vmatprep.mubr.bf16.mxu0 %v808
      %1875 = vmatmul.mubr.bf16.gmra.mxu0 %v807
      %v1876 = vpop.f32.mrf.mxu0
      %v1877 = vadd.f32 %v1716, %v1876
      %v1878 = vpop.f32.mrf.mxu0
      %v1879 = vpop.f32.mrf.mxu0
      %v1880 = vadd.f32 %v1719, %v1879
      %v1881 = vpop.f32.mrf.mxu0
      %1882 = vmatprep.mubr.bf16.mxu0 %v817
      %1883 = vmatmul.mubr.bf16.gmra.mxu0 %v816
      %v1884 = vpop.f32.mrf.mxu0
      %v1885 = vadd.f32 %v1724, %v1884
      %v1886 = vpop.f32.mrf.mxu0
      %v1887 = vpop.f32.mrf.mxu0
      %v1888 = vadd.f32 %v1727, %v1887
      %v1889 = vpop.f32.mrf.mxu0
      %1890 = vmatprep.mubr.bf16.mxu0 %v826
      %1891 = vmatmul.mubr.bf16.gmra.mxu0 %v825
      %v1892 = vpop.f32.mrf.mxu0
      %v1893 = vadd.f32 %v1732, %v1892
      %v1894 = vpop.f32.mrf.mxu0
      %v1895 = vpop.f32.mrf.mxu0
      %v1896 = vadd.f32 %v1735, %v1895
      %v1897 = vpop.f32.mrf.mxu0
      %1898 = vmatprep.mubr.bf16.mxu0 %v835
      %1899 = vmatmul.mubr.bf16.gmra.mxu0 %v834
      %v1900 = vpop.f32.mrf.mxu0
      %v1901 = vadd.f32 %v1740, %v1900
      %v1902 = vpop.f32.mrf.mxu0
      %v1903 = vpop.f32.mrf.mxu0
      %v1904 = vadd.f32 %v1743, %v1903
      %v1905 = vpop.f32.mrf.mxu0
      %1906 = vmatprep.mubr.bf16.mxu0 %v844
      %1907 = vmatmul.mubr.bf16.gmra.mxu0 %v843
      %v1908 = vpop.f32.mrf.mxu0
      %v1909 = vadd.f32 %v1748, %v1908
      %v1910 = vpop.f32.mrf.mxu0
      %v1911 = vpop.f32.mrf.mxu0
      %v1912 = vadd.f32 %v1751, %v1911
      %v1913 = vpop.f32.mrf.mxu0
      %1914 = vmatprep.mubr.bf16.mxu0 %v853
      %1915 = vmatmul.mubr.bf16.gmra.mxu0 %v852
      %v1916 = vpop.f32.mrf.mxu0
      %v1917 = vadd.f32 %v1756, %v1916
      %v1918 = vpop.f32.mrf.mxu0
      %v1919 = vpop.f32.mrf.mxu0
      %v1920 = vadd.f32 %v1759, %v1919
      %v1921 = vpop.f32.mrf.mxu0
      %1922 = vmatprep.mubr.bf16.mxu0 %v862
      %1923 = vmatmul.mubr.bf16.gmra.mxu0 %v861
      %v1924 = vpop.f32.mrf.mxu0
      %v1925 = vadd.f32 %v1764, %v1924
      %v1926 = vpop.f32.mrf.mxu0
      %v1927 = vpop.f32.mrf.mxu0
      %v1928 = vadd.f32 %v1767, %v1927
      %v1929 = vpop.f32.mrf.mxu0
      %1930 = vmatprep.mubr.bf16.mxu0 %v871
      %1931 = vmatmul.mubr.bf16.gmra.mxu0 %v870
      %v1932 = vpop.f32.mrf.mxu0
      %v1933 = vadd.f32 %v1772, %v1932
      %v1934 = vpop.f32.mrf.mxu0
      %v1935 = vpop.f32.mrf.mxu0
      %v1936 = vadd.f32 %v1775, %v1935
      %v1937 = vpop.f32.mrf.mxu0
      %1938 = vmatprep.mubr.bf16.mxu0 %v880
      %1939 = vmatmul.mubr.bf16.gmra.mxu0 %v879
      %v1940 = vpop.f32.mrf.mxu0
      %v1941 = vadd.f32 %v1780, %v1940
      %v1942 = vpop.f32.mrf.mxu0
      %v1943 = vpop.f32.mrf.mxu0
      %v1944 = vadd.f32 %v1783, %v1943
      %v1945 = vpop.f32.mrf.mxu0
      %1946 = vmatprep.mubr.bf16.mxu0 %v889
      %1947 = vmatmul.mubr.bf16.gmra.mxu0 %v888
      %v1948 = vpop.f32.mrf.mxu0
      %v1949 = vadd.f32 %v1788, %v1948
      %v1950 = vpop.f32.mrf.mxu0
      %v1951 = vpop.f32.mrf.mxu0
      %v1952 = vadd.f32 %v1791, %v1951
      %v1953 = vpop.f32.mrf.mxu0
      %1954 = vmatprep.mubr.bf16.mxu0 %v898
      %1955 = vmatmul.mubr.bf16.gmra.mxu0 %v897
      %v1956 = vpop.f32.mrf.mxu0
      %v1957 = vadd.f32 %v1796, %v1956
      %v1958 = vpop.f32.mrf.mxu0
      %v1959 = vpop.f32.mrf.mxu0
      %v1960 = vadd.f32 %v1799, %v1959
      %v1961 = vpop.f32.mrf.mxu0
      %1962 = vmatprep.mubr.bf16.mxu0 %v907
      %1963 = vmatmul.mubr.bf16.gmra.mxu0 %v906
      %v1964 = vpop.f32.mrf.mxu0
      %v1965 = vadd.f32 %v1804, %v1964
      %v1966 = vpop.f32.mrf.mxu0
      %v1967 = vpop.f32.mrf.mxu0
      %v1968 = vadd.f32 %v1807, %v1967
      %v1969 = vpop.f32.mrf.mxu0
      %1970 = vmatprep.mubr.bf16.mxu0 %v916
      %1971 = vmatmul.mubr.bf16.gmra.mxu0 %v915
      %v1972 = vpop.f32.mrf.mxu0
      %v1973 = vadd.f32 %v1812, %v1972
      %v1974 = vpop.f32.mrf.mxu0
      %v1975 = vpop.f32.mrf.mxu0
      %v1976 = vadd.f32 %v1815, %v1975
      %v1977 = vpop.f32.mrf.mxu0
      %1978 = vdwg.mxu0
      %1979 = vmatprep.subr.bf16.mxu0 0
      %1980 = vmatpush1.bf16.msra.mxu0 %v1407
      %1981 = vmatprep.subr.bf16.mxu0 0
      %1982 = vmatpush1.bf16.msra.mxu0 %v1406
      %1983 = vmatprep.subr.bf16.mxu0 0
      %1984 = vmatpush1.bf16.msra.mxu0 %v1405
      %1985 = vmatprep.subr.bf16.mxu0 0
      %1986 = vmatpush1.bf16.msra.mxu0 %v1404
      %1987 = vmatprep.subr.bf16.mxu0 0
      %1988 = vmatpush1.bf16.msra.mxu0 %v1403
      %1989 = vmatprep.subr.bf16.mxu0 0
      %1990 = vmatpush1.bf16.msra.mxu0 %v1402
      %1991 = vmatprep.subr.bf16.mxu0 0
      %1992 = vmatpush1.bf16.msra.mxu0 %v1401
      %1993 = vmatprep.subr.bf16.mxu0 0
      %1994 = vmatpush1.bf16.msra.mxu0 %v1400
      %1995 = vmatprep.subr.bf16.mxu0 0
      %1996 = vmatpush2.bf16.msra.mxu0 %v1415
      %1997 = vmatprep.subr.bf16.mxu0 0
      %1998 = vmatpush2.bf16.msra.mxu0 %v1414
      %1999 = vmatprep.subr.bf16.mxu0 0
      %2000 = vmatpush2.bf16.msra.mxu0 %v1413
      %2001 = vmatprep.subr.bf16.mxu0 0
      %2002 = vmatpush2.bf16.msra.mxu0 %v1412
      %2003 = vmatprep.subr.bf16.mxu0 0
      %2004 = vmatpush2.bf16.msra.mxu0 %v1411
      %2005 = vmatprep.subr.bf16.mxu0 0
      %2006 = vmatpush2.bf16.msra.mxu0 %v1410
      %2007 = vmatprep.subr.bf16.mxu0 0
      %2008 = vmatpush2.bf16.msra.mxu0 %v1409
      %2009 = vmatprep.subr.bf16.mxu0 0
      %2010 = vmatpush2.bf16.msra.mxu0 %v1408
      %2011 = vmatprep.mubr.bf16.mxu0 %v783
      %2012 = vmatmul.mubr.bf16.gmra.mxu0 %v782
      %v2013 = vpop.f32.mrf.mxu0
      %v2014 = vadd.f32 %v1853, %v2013
      %v2015 = vpop.f32.mrf.mxu0
      %v2016 = vpop.f32.mrf.mxu0
      %v2017 = vadd.f32 %v1856, %v2016
      %v2018 = vpop.f32.mrf.mxu0
      %2019 = vmatprep.mubr.bf16.mxu0 %v792
      %2020 = vmatmul.mubr.bf16.gmra.mxu0 %v791
      %v2021 = vpop.f32.mrf.mxu0
      %v2022 = vadd.f32 %v1861, %v2021
      %v2023 = vpop.f32.mrf.mxu0
      %v2024 = vpop.f32.mrf.mxu0
      %v2025 = vadd.f32 %v1864, %v2024
      %v2026 = vpop.f32.mrf.mxu0
      %2027 = vmatprep.mubr.bf16.mxu0 %v801
      %2028 = vmatmul.mubr.bf16.gmra.mxu0 %v800
      %v2029 = vpop.f32.mrf.mxu0
      %v2030 = vadd.f32 %v1869, %v2029
      %v2031 = vpop.f32.mrf.mxu0
      %v2032 = vpop.f32.mrf.mxu0
      %v2033 = vadd.f32 %v1872, %v2032
      %v2034 = vpop.f32.mrf.mxu0
      %2035 = vmatprep.mubr.bf16.mxu0 %v810
      %2036 = vmatmul.mubr.bf16.gmra.mxu0 %v809
      %v2037 = vpop.f32.mrf.mxu0
      %v2038 = vadd.f32 %v1877, %v2037
      %v2039 = vpop.f32.mrf.mxu0
      %v2040 = vpop.f32.mrf.mxu0
      %v2041 = vadd.f32 %v1880, %v2040
      %v2042 = vpop.f32.mrf.mxu0
      %2043 = vmatprep.mubr.bf16.mxu0 %v819
      %2044 = vmatmul.mubr.bf16.gmra.mxu0 %v818
      %v2045 = vpop.f32.mrf.mxu0
      %v2046 = vadd.f32 %v1885, %v2045
      %v2047 = vpop.f32.mrf.mxu0
      %v2048 = vpop.f32.mrf.mxu0
      %v2049 = vadd.f32 %v1888, %v2048
      %v2050 = vpop.f32.mrf.mxu0
      %2051 = vmatprep.mubr.bf16.mxu0 %v828
      %2052 = vmatmul.mubr.bf16.gmra.mxu0 %v827
      %v2053 = vpop.f32.mrf.mxu0
      %v2054 = vadd.f32 %v1893, %v2053
      %v2055 = vpop.f32.mrf.mxu0
      %v2056 = vpop.f32.mrf.mxu0
      %v2057 = vadd.f32 %v1896, %v2056
      %v2058 = vpop.f32.mrf.mxu0
      %2059 = vmatprep.mubr.bf16.mxu0 %v837
      %2060 = vmatmul.mubr.bf16.gmra.mxu0 %v836
      %v2061 = vpop.f32.mrf.mxu0
      %v2062 = vadd.f32 %v1901, %v2061
      %v2063 = vpop.f32.mrf.mxu0
      %v2064 = vpop.f32.mrf.mxu0
      %v2065 = vadd.f32 %v1904, %v2064
      %v2066 = vpop.f32.mrf.mxu0
      %2067 = vmatprep.mubr.bf16.mxu0 %v846
      %2068 = vmatmul.mubr.bf16.gmra.mxu0 %v845
      %v2069 = vpop.f32.mrf.mxu0
      %v2070 = vadd.f32 %v1909, %v2069
      %v2071 = vpop.f32.mrf.mxu0
      %v2072 = vpop.f32.mrf.mxu0
      %v2073 = vadd.f32 %v1912, %v2072
      %v2074 = vpop.f32.mrf.mxu0
      %2075 = vmatprep.mubr.bf16.mxu0 %v855
      %2076 = vmatmul.mubr.bf16.gmra.mxu0 %v854
      %v2077 = vpop.f32.mrf.mxu0
      %v2078 = vadd.f32 %v1917, %v2077
      %v2079 = vpop.f32.mrf.mxu0
      %v2080 = vpop.f32.mrf.mxu0
      %v2081 = vadd.f32 %v1920, %v2080
      %v2082 = vpop.f32.mrf.mxu0
      %2083 = vmatprep.mubr.bf16.mxu0 %v864
      %2084 = vmatmul.mubr.bf16.gmra.mxu0 %v863
      %v2085 = vpop.f32.mrf.mxu0
      %v2086 = vadd.f32 %v1925, %v2085
      %v2087 = vpop.f32.mrf.mxu0
      %v2088 = vpop.f32.mrf.mxu0
      %v2089 = vadd.f32 %v1928, %v2088
      %v2090 = vpop.f32.mrf.mxu0
      %2091 = vmatprep.mubr.bf16.mxu0 %v873
      %2092 = vmatmul.mubr.bf16.gmra.mxu0 %v872
      %v2093 = vpop.f32.mrf.mxu0
      %v2094 = vadd.f32 %v1933, %v2093
      %v2095 = vpop.f32.mrf.mxu0
      %v2096 = vpop.f32.mrf.mxu0
      %v2097 = vadd.f32 %v1936, %v2096
      %v2098 = vpop.f32.mrf.mxu0
      %2099 = vmatprep.mubr.bf16.mxu0 %v882
      %2100 = vmatmul.mubr.bf16.gmra.mxu0 %v881
      %v2101 = vpop.f32.mrf.mxu0
      %v2102 = vadd.f32 %v1941, %v2101
      %v2103 = vpop.f32.mrf.mxu0
      %v2104 = vpop.f32.mrf.mxu0
      %v2105 = vadd.f32 %v1944, %v2104
      %v2106 = vpop.f32.mrf.mxu0
      %2107 = vmatprep.mubr.bf16.mxu0 %v891
      %2108 = vmatmul.mubr.bf16.gmra.mxu0 %v890
      %v2109 = vpop.f32.mrf.mxu0
      %v2110 = vadd.f32 %v1949, %v2109
      %v2111 = vpop.f32.mrf.mxu0
      %v2112 = vpop.f32.mrf.mxu0
      %v2113 = vadd.f32 %v1952, %v2112
      %v2114 = vpop.f32.mrf.mxu0
      %2115 = vmatprep.mubr.bf16.mxu0 %v900
      %2116 = vmatmul.mubr.bf16.gmra.mxu0 %v899
      %v2117 = vpop.f32.mrf.mxu0
      %v2118 = vadd.f32 %v1957, %v2117
      %v2119 = vpop.f32.mrf.mxu0
      %v2120 = vpop.f32.mrf.mxu0
      %v2121 = vadd.f32 %v1960, %v2120
      %v2122 = vpop.f32.mrf.mxu0
      %2123 = vmatprep.mubr.bf16.mxu0 %v909
      %2124 = vmatmul.mubr.bf16.gmra.mxu0 %v908
      %v2125 = vpop.f32.mrf.mxu0
      %v2126 = vadd.f32 %v1965, %v2125
      %v2127 = vpop.f32.mrf.mxu0
      %v2128 = vpop.f32.mrf.mxu0
      %v2129 = vadd.f32 %v1968, %v2128
      %v2130 = vpop.f32.mrf.mxu0
      %2131 = vmatprep.mubr.bf16.mxu0 %v918
      %2132 = vmatmul.mubr.bf16.gmra.mxu0 %v917
      %v2133 = vpop.f32.mrf.mxu0
      %v2134 = vadd.f32 %v1973, %v2133
      %v2135 = vpop.f32.mrf.mxu0
      %v2136 = vpop.f32.mrf.mxu0
      %v2137 = vadd.f32 %v1976, %v2136
      %v2138 = vpop.f32.mrf.mxu0
      %2139 = vdwg.mxu0
      %2140 = vmatprep.subr.bf16.mxu0 0
      %2141 = vmatpush1.bf16.msra.mxu0 %v1423
      %2142 = vmatprep.subr.bf16.mxu0 0
      %2143 = vmatpush1.bf16.msra.mxu0 %v1422
      %2144 = vmatprep.subr.bf16.mxu0 0
      %2145 = vmatpush1.bf16.msra.mxu0 %v1421
      %2146 = vmatprep.subr.bf16.mxu0 0
      %2147 = vmatpush1.bf16.msra.mxu0 %v1420
      %2148 = vmatprep.subr.bf16.mxu0 0
      %2149 = vmatpush1.bf16.msra.mxu0 %v1419
      %2150 = vmatprep.subr.bf16.mxu0 0
      %2151 = vmatpush1.bf16.msra.mxu0 %v1418
      %2152 = vmatprep.subr.bf16.mxu0 0
      %2153 = vmatpush1.bf16.msra.mxu0 %v1417
      %2154 = vmatprep.subr.bf16.mxu0 0
      %2155 = vmatpush1.bf16.msra.mxu0 %v1416
      %2156 = vmatprep.subr.bf16.mxu0 0
      %2157 = vmatpush2.bf16.msra.mxu0 0
      %2158 = vmatprep.subr.bf16.mxu0 0
      %2159 = vmatpush2.bf16.msra.mxu0 0
      %2160 = vmatprep.subr.bf16.mxu0 0
      %2161 = vmatpush2.bf16.msra.mxu0 0
      %2162 = vmatprep.subr.bf16.mxu0 0
      %2163 = vmatpush2.bf16.msra.mxu0 0
      %2164 = vmatprep.subr.bf16.mxu0 0
      %2165 = vmatpush2.bf16.msra.mxu0 0
      %2166 = vmatprep.subr.bf16.mxu0 0
      %2167 = vmatpush2.bf16.msra.mxu0 0
      %2168 = vmatprep.subr.bf16.mxu0 0
      %2169 = vmatpush2.bf16.msra.mxu0 0
      %2170 = vmatprep.subr.bf16.mxu0 0
      %2171 = vmatpush2.bf16.msra.mxu0 0
      %2172 = vmatprep.mubr.bf16.mxu0 0
      %2173 = vmatmul.mubr.bf16.gmra.mxu0 %v784
      %v2174 = vpop.f32.mrf.mxu0
      %v2175 = vadd.f32 %v2014, %v2174
      %v2176 = vpop.f32.mrf.mxu0
      %v2177 = vpop.f32.mrf.mxu0
      %v2178 = vadd.f32 %v2017, %v2177
      %v2179 = vpop.f32.mrf.mxu0
      %2180 = vmatprep.mubr.bf16.mxu0 0
      %2181 = vmatmul.mubr.bf16.gmra.mxu0 %v793
      %v2182 = vpop.f32.mrf.mxu0
      %v2183 = vadd.f32 %v2022, %v2182
      %v2184 = vpop.f32.mrf.mxu0
      %v2185 = vpop.f32.mrf.mxu0
      %v2186 = vadd.f32 %v2025, %v2185
      %v2187 = vpop.f32.mrf.mxu0
      %2188 = vmatprep.mubr.bf16.mxu0 0
      %2189 = vmatmul.mubr.bf16.gmra.mxu0 %v802
      %v2190 = vpop.f32.mrf.mxu0
      %v2191 = vadd.f32 %v2030, %v2190
      %v2192 = vpop.f32.mrf.mxu0
      %v2193 = vpop.f32.mrf.mxu0
      %v2194 = vadd.f32 %v2033, %v2193
      %v2195 = vpop.f32.mrf.mxu0
      %2196 = vmatprep.mubr.bf16.mxu0 0
      %2197 = vmatmul.mubr.bf16.gmra.mxu0 %v811
      %v2198 = vpop.f32.mrf.mxu0
      %v2199 = vadd.f32 %v2038, %v2198
      %v2200 = vpop.f32.mrf.mxu0
      %v2201 = vpop.f32.mrf.mxu0
      %v2202 = vadd.f32 %v2041, %v2201
      %v2203 = vpop.f32.mrf.mxu0
      %2204 = vmatprep.mubr.bf16.mxu0 0
      %2205 = vmatmul.mubr.bf16.gmra.mxu0 %v820
      %v2206 = vpop.f32.mrf.mxu0
      %v2207 = vadd.f32 %v2046, %v2206
      %v2208 = vpop.f32.mrf.mxu0
      %v2209 = vpop.f32.mrf.mxu0
      %v2210 = vadd.f32 %v2049, %v2209
      %v2211 = vpop.f32.mrf.mxu0
      %2212 = vmatprep.mubr.bf16.mxu0 0
      %2213 = vmatmul.mubr.bf16.gmra.mxu0 %v829
      %v2214 = vpop.f32.mrf.mxu0
      %v2215 = vadd.f32 %v2054, %v2214
      %v2216 = vpop.f32.mrf.mxu0
      %v2217 = vpop.f32.mrf.mxu0
      %v2218 = vadd.f32 %v2057, %v2217
      %v2219 = vpop.f32.mrf.mxu0
      %2220 = vmatprep.mubr.bf16.mxu0 0
      %2221 = vmatmul.mubr.bf16.gmra.mxu0 %v838
      %v2222 = vpop.f32.mrf.mxu0
      %v2223 = vadd.f32 %v2062, %v2222
      %v2224 = vpop.f32.mrf.mxu0
      %v2225 = vpop.f32.mrf.mxu0
      %v2226 = vadd.f32 %v2065, %v2225
      %v2227 = vpop.f32.mrf.mxu0
      %2228 = vmatprep.mubr.bf16.mxu0 0
      %2229 = vmatmul.mubr.bf16.gmra.mxu0 %v847
      %v2230 = vpop.f32.mrf.mxu0
      %v2231 = vadd.f32 %v2070, %v2230
      %v2232 = vpop.f32.mrf.mxu0
      %v2233 = vpop.f32.mrf.mxu0
      %v2234 = vadd.f32 %v2073, %v2233
      %v2235 = vpop.f32.mrf.mxu0
      %2236 = vmatprep.mubr.bf16.mxu0 0
      %2237 = vmatmul.mubr.bf16.gmra.mxu0 %v856
      %v2238 = vpop.f32.mrf.mxu0
      %v2239 = vadd.f32 %v2078, %v2238
      %v2240 = vpop.f32.mrf.mxu0
      %v2241 = vpop.f32.mrf.mxu0
      %v2242 = vadd.f32 %v2081, %v2241
      %v2243 = vpop.f32.mrf.mxu0
      %2244 = vmatprep.mubr.bf16.mxu0 0
      %2245 = vmatmul.mubr.bf16.gmra.mxu0 %v865
      %v2246 = vpop.f32.mrf.mxu0
      %v2247 = vadd.f32 %v2086, %v2246
      %v2248 = vpop.f32.mrf.mxu0
      %v2249 = vpop.f32.mrf.mxu0
      %v2250 = vadd.f32 %v2089, %v2249
      %v2251 = vpop.f32.mrf.mxu0
      %2252 = vmatprep.mubr.bf16.mxu0 0
      %2253 = vmatmul.mubr.bf16.gmra.mxu0 %v874
      %v2254 = vpop.f32.mrf.mxu0
      %v2255 = vadd.f32 %v2094, %v2254
      %v2256 = vpop.f32.mrf.mxu0
      %v2257 = vpop.f32.mrf.mxu0
      %v2258 = vadd.f32 %v2097, %v2257
      %v2259 = vpop.f32.mrf.mxu0
      %2260 = vmatprep.mubr.bf16.mxu0 0
      %2261 = vmatmul.mubr.bf16.gmra.mxu0 %v883
      %v2262 = vpop.f32.mrf.mxu0
      %v2263 = vadd.f32 %v2102, %v2262
      %v2264 = vpop.f32.mrf.mxu0
      %v2265 = vpop.f32.mrf.mxu0
      %v2266 = vadd.f32 %v2105, %v2265
      %v2267 = vpop.f32.mrf.mxu0
      %2268 = vmatprep.mubr.bf16.mxu0 0
      %2269 = vmatmul.mubr.bf16.gmra.mxu0 %v892
      %v2270 = vpop.f32.mrf.mxu0
      %v2271 = vadd.f32 %v2110, %v2270
      %v2272 = vpop.f32.mrf.mxu0
      %v2273 = vpop.f32.mrf.mxu0
      %v2274 = vadd.f32 %v2113, %v2273
      %v2275 = vpop.f32.mrf.mxu0
      %2276 = vmatprep.mubr.bf16.mxu0 0
      %2277 = vmatmul.mubr.bf16.gmra.mxu0 %v901
      %v2278 = vpop.f32.mrf.mxu0
      %v2279 = vadd.f32 %v2118, %v2278
      %v2280 = vpop.f32.mrf.mxu0
      %v2281 = vpop.f32.mrf.mxu0
      %v2282 = vadd.f32 %v2121, %v2281
      %v2283 = vpop.f32.mrf.mxu0
      %2284 = vmatprep.mubr.bf16.mxu0 0
      %2285 = vmatmul.mubr.bf16.gmra.mxu0 %v910
      %v2286 = vpop.f32.mrf.mxu0
      %v2287 = vadd.f32 %v2126, %v2286
      %v2288 = vpop.f32.mrf.mxu0
      %v2289 = vpop.f32.mrf.mxu0
      %v2290 = vadd.f32 %v2129, %v2289
      %v2291 = vpop.f32.mrf.mxu0
      %2292 = vmatprep.mubr.bf16.mxu0 0
      %2293 = vmatmul.mubr.bf16.gmra.mxu0 %v919
      %v2294 = vpop.f32.mrf.mxu0
      %v2295 = vadd.f32 %v2134, %v2294
      %v2296 = vpop.f32.mrf.mxu0
      %v2297 = vpop.f32.mrf.mxu0
      %v2298 = vadd.f32 %v2137, %v2297
      %v2299 = vpop.f32.mrf.mxu0
      %2300 = vdwg.mxu0
      %v2301 = vpack.c.bf16 %v2178, %v2175
      %v2302 = vpack.c.bf16 %v2186, %v2183
      %v2303 = vpack.c.bf16 %v2194, %v2191
      %v2304 = vpack.c.bf16 %v2202, %v2199
      %v2305 = vpack.c.bf16 %v2210, %v2207
      %v2306 = vpack.c.bf16 %v2218, %v2215
      %v2307 = vpack.c.bf16 %v2226, %v2223
      %v2308 = vpack.c.bf16 %v2234, %v2231
      %v2309 = vpack.c.bf16 %v2242, %v2239
      %v2310 = vpack.c.bf16 %v2250, %v2247
      %v2311 = vpack.c.bf16 %v2258, %v2255
      %v2312 = vpack.c.bf16 %v2266, %v2263
      %v2313 = vpack.c.bf16 %v2274, %v2271
      %v2314 = vpack.c.bf16 %v2282, %v2279
      %v2315 = vpack.c.bf16 %v2290, %v2287
      %v2316 = vpack.c.bf16 %v2298, %v2295
      %v2333 = vunpack.c.l.b16 %v2301
      %v2334 = vunpack.c.h.b16 %v2301
      %v2335 = vunpack.c.l.b16 %v2302
      %v2336 = vunpack.c.h.b16 %v2302
      %v2337 = vunpack.c.l.b16 %v2303
      %v2338 = vunpack.c.h.b16 %v2303
      %v2339 = vunpack.c.l.b16 %v2304
      %v2340 = vunpack.c.h.b16 %v2304
      %v2341 = vunpack.c.l.b16 %v2305
      %v2342 = vunpack.c.h.b16 %v2305
      %v2343 = vunpack.c.l.b16 %v2306
      %v2344 = vunpack.c.h.b16 %v2306
      %v2345 = vunpack.c.l.b16 %v2307
      %v2346 = vunpack.c.h.b16 %v2307
      %v2347 = vunpack.c.l.b16 %v2308
      %v2348 = vunpack.c.h.b16 %v2308
      %v2349 = vunpack.c.l.b16 %v2309
      %v2350 = vunpack.c.h.b16 %v2309
      %v2351 = vunpack.c.l.b16 %v2310
      %v2352 = vunpack.c.h.b16 %v2310
      %v2353 = vunpack.c.l.b16 %v2311
      %v2354 = vunpack.c.h.b16 %v2311
      %v2355 = vunpack.c.l.b16 %v2312
      %v2356 = vunpack.c.h.b16 %v2312
      %v2357 = vunpack.c.l.b16 %v2313
      %v2358 = vunpack.c.h.b16 %v2313
      %v2359 = vunpack.c.l.b16 %v2314
      %v2360 = vunpack.c.h.b16 %v2314
      %v2361 = vunpack.c.l.b16 %v2315
      %v2362 = vunpack.c.h.b16 %v2315
      %v2363 = vunpack.c.l.b16 %v2316
      %v2364 = vunpack.c.h.b16 %v2316
      %v2365 = vpack.c.b16 %v2333, %v2333
      %v2366 = vpack.c.b16 %v2334, %v2334
      %v2367 = vpack.c.b16 %v2335, %v2335
      %v2368 = vpack.c.b16 %v2336, %v2336
      %v2369 = vpack.c.b16 %v2337, %v2337
      %v2370 = vpack.c.b16 %v2338, %v2338
      %v2371 = vpack.c.b16 %v2339, %v2339
      %v2372 = vpack.c.b16 %v2340, %v2340
      %v2373 = vpack.c.b16 %v2341, %v2341
      %v2374 = vpack.c.b16 %v2342, %v2342
      %v2375 = vpack.c.b16 %v2343, %v2343
      %v2376 = vpack.c.b16 %v2344, %v2344
      %v2377 = vpack.c.b16 %v2345, %v2345
      %v2378 = vpack.c.b16 %v2346, %v2346
      %v2379 = vpack.c.b16 %v2347, %v2347
      %v2380 = vpack.c.b16 %v2348, %v2348
      %v2381 = vpack.c.b16 %v2349, %v2349
      %v2382 = vpack.c.b16 %v2350, %v2350
      %v2383 = vpack.c.b16 %v2351, %v2351
      %v2384 = vpack.c.b16 %v2352, %v2352
      %v2385 = vpack.c.b16 %v2353, %v2353
      %v2386 = vpack.c.b16 %v2354, %v2354
      %v2387 = vpack.c.b16 %v2355, %v2355
      %v2388 = vpack.c.b16 %v2356, %v2356
      %v2389 = vpack.c.b16 %v2357, %v2357
      %v2390 = vpack.c.b16 %v2358, %v2358
      %v2391 = vpack.c.b16 %v2359, %v2359
      %v2392 = vpack.c.b16 %v2360, %v2360
      %v2393 = vpack.c.b16 %v2361, %v2361
      %v2394 = vpack.c.b16 %v2362, %v2362
      %v2395 = vpack.c.b16 %v2363, %v2363
      %v2396 = vpack.c.b16 %v2364, %v2364
      %2429 = vst [vmem:[%s231] sm:$0xf] %v2365
      %2430 = vst [vmem:[%s231 + $0x4] sm:$0xf] %v2366
      %2431 = vst [vmem:[%s231 + $0x8] sm:$0xf] %v2367
      %2432 = vst [vmem:[%s231 + $0xc] sm:$0xf] %v2368
      %2433 = vst [vmem:[%s231 + $0x10] sm:$0xf] %v2369
      %2434 = vst [vmem:[%s231 + $0x14] sm:$0xf] %v2370
      %2435 = vst [vmem:[%s231 + $0x18] sm:$0xf] %v2371
      %2436 = vst [vmem:[%s231 + $0x1c] sm:$0xf] %v2372
      %2437 = vst [vmem:[%s231 + $0x20] sm:$0xf] %v2373
      %2438 = vst [vmem:[%s231 + $0x24] sm:$0xf] %v2374
      %2439 = vst [vmem:[%s231 + $0x28] sm:$0xf] %v2375
      %2440 = vst [vmem:[%s231 + $0x2c] sm:$0xf] %v2376
      %2441 = vst [vmem:[%s231 + $0x30] sm:$0xf] %v2377
      %2442 = vst [vmem:[%s231 + $0x34] sm:$0xf] %v2378
      %2443 = vst [vmem:[%s231 + $0x38] sm:$0xf] %v2379
      %2444 = vst [vmem:[%s231 + $0x3c] sm:$0xf] %v2380
      %2445 = vst [vmem:[%s231 + $0x40] sm:$0xf] %v2381
      %2446 = vst [vmem:[%s231 + $0x44] sm:$0xf] %v2382
      %2447 = vst [vmem:[%s231 + $0x48] sm:$0xf] %v2383
      %2448 = vst [vmem:[%s231 + $0x4c] sm:$0xf] %v2384
      %2449 = vst [vmem:[%s231 + $0x50] sm:$0xf] %v2385
      %2450 = vst [vmem:[%s231 + $0x54] sm:$0xf] %v2386
      %2451 = vst [vmem:[%s231 + $0x58] sm:$0xf] %v2387
      %2452 = vst [vmem:[%s231 + $0x5c] sm:$0xf] %v2388
      %2453 = vst [vmem:[%s231 + $0x60] sm:$0xf] %v2389
      %2454 = vst [vmem:[%s231 + $0x64] sm:$0xf] %v2390
      %2455 = vst [vmem:[%s231 + $0x68] sm:$0xf] %v2391
      %2456 = vst [vmem:[%s231 + $0x6c] sm:$0xf] %v2392
      %2457 = vst [vmem:[%s231 + $0x70] sm:$0xf] %v2393
      %2458 = vst [vmem:[%s231 + $0x74] sm:$0xf] %v2394
      %2459 = vst [vmem:[%s231 + $0x78] sm:$0xf] %v2395
      %2460 = vst [vmem:[%s231 + $0x7c] sm:$0xf] %v2396
      %v2461 = vadd.f32 %v2175, %v2178
      %v2462 = vadd.f32 %v2461, %v2183
      %v2463 = vadd.f32 %v2462, %v2186
      %v2464 = vadd.f32 %v2463, %v2191
      %v2465 = vadd.f32 %v2464, %v2194
      %v2466 = vadd.f32 %v2465, %v2199
      %v2467 = vadd.f32 %v2466, %v2202
      %v2468 = vadd.f32 %v2467, %v2207
      %v2469 = vadd.f32 %v2468, %v2210
      %v2470 = vadd.f32 %v2469, %v2215
      %v2471 = vadd.f32 %v2470, %v2218
      %v2472 = vadd.f32 %v2471, %v2223
      %v2473 = vadd.f32 %v2472, %v2226
      %v2474 = vadd.f32 %v2473, %v2231
      %v2475 = vadd.f32 %v2474, %v2234
      %v2476 = vadd.f32 %v2475, %v2239
      %v2477 = vadd.f32 %v2476, %v2242
      %v2478 = vadd.f32 %v2477, %v2247
      %v2479 = vadd.f32 %v2478, %v2250
      %v2480 = vadd.f32 %v2479, %v2255
      %v2481 = vadd.f32 %v2480, %v2258
      %v2482 = vadd.f32 %v2481, %v2263
      %v2483 = vadd.f32 %v2482, %v2266
      %v2484 = vadd.f32 %v2483, %v2271
      %v2485 = vadd.f32 %v2484, %v2274
      %v2486 = vadd.f32 %v2485, %v2279
      %v2487 = vadd.f32 %v2486, %v2282
      %v2488 = vadd.f32 %v2487, %v2287
      %v2489 = vadd.f32 %v2488, %v2290
      %v2490 = vadd.f32 %v2489, %v2295
      %v2491 = vadd.f32 %v2490, %v2298
      %v2492 = vrot.slane %v2491, 4
      %v2493 = vadd.f32 %v2491, %v2492
      %v2494 = vrot.slane %v2493, 2
      %v2495 = vadd.f32 %v2493, %v2494
      %v2496 = vrot.slane %v2495, 1
      %v2497 = vadd.f32 %v2495, %v2496
      %v2498 = vmul.f32 %v2175, %v2175
      %v2499 = vmul.f32 %v2178, %v2178
      %v2500 = vmul.f32 %v2183, %v2183
      %v2501 = vmul.f32 %v2186, %v2186
      %v2502 = vmul.f32 %v2191, %v2191
      %v2503 = vmul.f32 %v2194, %v2194
      %v2504 = vmul.f32 %v2199, %v2199
      %v2505 = vmul.f32 %v2202, %v2202
      %v2506 = vmul.f32 %v2207, %v2207
      %v2507 = vmul.f32 %v2210, %v2210
      %v2508 = vmul.f32 %v2215, %v2215
      %v2509 = vmul.f32 %v2218, %v2218
      %v2510 = vmul.f32 %v2223, %v2223
      %v2511 = vmul.f32 %v2226, %v2226
      %v2512 = vmul.f32 %v2231, %v2231
      %v2513 = vmul.f32 %v2234, %v2234
      %v2514 = vmul.f32 %v2239, %v2239
      %v2515 = vmul.f32 %v2242, %v2242
      %v2516 = vmul.f32 %v2247, %v2247
      %v2517 = vmul.f32 %v2250, %v2250
      %v2518 = vmul.f32 %v2255, %v2255
      %v2519 = vmul.f32 %v2258, %v2258
      %v2520 = vmul.f32 %v2263, %v2263
      %v2521 = vmul.f32 %v2266, %v2266
      %v2522 = vmul.f32 %v2271, %v2271
      %v2523 = vmul.f32 %v2274, %v2274
      %v2524 = vmul.f32 %v2279, %v2279
      %v2525 = vmul.f32 %v2282, %v2282
      %v2526 = vmul.f32 %v2287, %v2287
      %v2527 = vmul.f32 %v2290, %v2290
      %v2528 = vmul.f32 %v2295, %v2295
      %v2529 = vmul.f32 %v2298, %v2298
      %v2530 = vadd.f32 %v2498, %v2499
      %v2531 = vadd.f32 %v2530, %v2500
      %v2532 = vadd.f32 %v2531, %v2501
      %v2533 = vadd.f32 %v2532, %v2502
      %v2534 = vadd.f32 %v2533, %v2503
      %v2535 = vadd.f32 %v2534, %v2504
      %v2536 = vadd.f32 %v2535, %v2505
      %v2537 = vadd.f32 %v2536, %v2506
      %v2538 = vadd.f32 %v2537, %v2507
      %v2539 = vadd.f32 %v2538, %v2508
      %v2540 = vadd.f32 %v2539, %v2509
      %v2541 = vadd.f32 %v2540, %v2510
      %v2542 = vadd.f32 %v2541, %v2511
      %v2543 = vadd.f32 %v2542, %v2512
      %v2544 = vadd.f32 %v2543, %v2513
      %v2545 = vadd.f32 %v2544, %v2514
      %v2546 = vadd.f32 %v2545, %v2515
      %v2547 = vadd.f32 %v2546, %v2516
      %v2548 = vadd.f32 %v2547, %v2517
      %v2549 = vadd.f32 %v2548, %v2518
      %v2550 = vadd.f32 %v2549, %v2519
      %v2551 = vadd.f32 %v2550, %v2520
      %v2552 = vadd.f32 %v2551, %v2521
      %v2553 = vadd.f32 %v2552, %v2522
      %v2554 = vadd.f32 %v2553, %v2523
      %v2555 = vadd.f32 %v2554, %v2524
      %v2556 = vadd.f32 %v2555, %v2525
      %v2557 = vadd.f32 %v2556, %v2526
      %v2558 = vadd.f32 %v2557, %v2527
      %v2559 = vadd.f32 %v2558, %v2528
      %v2560 = vadd.f32 %v2559, %v2529
      %v2561 = vrot.slane %v2560, 4
      %v2562 = vadd.f32 %v2560, %v2561
      %v2563 = vrot.slane %v2562, 2
      %v2564 = vadd.f32 %v2562, %v2563
      %v2565 = vrot.slane %v2564, 1
      %v2566 = vadd.f32 %v2564, %v2565
      %vm2567 = vcmask 1040384
      %v2568 = vsel %vm2567, %v2497, %v2566
      %2569 = vst [vmem:[%s235] sm:$0x3] %v2568
      %p2570 = scmp.lt.s32.totalorder %s17, 1
      %s2571 = scalar_select %p2570, %s17, 1
      %s2572 = smul.addr %s2571, 32
      %s2573 = smul.addr %s2572, 4
      %s2574 = scalar_lea.vmem %s4, %s2573
      %p2575 = scmp.lt.s32.totalorder %s17, 1
      %s2576 = scalar_select %p2575, %s17, 1
      %s2577 = smul.addr %s2576, 2
      %s2578 = scalar_lea.vmem %s5, %s2577
      // Predicated region
      $region37: #{block_forward.4} parent=35 // pred_check
        %p2579 = pneg %p124
      $region38: #{block_forward.4} parent=35 // pred_check_branch
        %2581 = sbr.rel (%p2579) target = $region40
      $region39: #{block_forward.4} parent=35 // pred_region
        _
      $region40: #{block_forward.4} parent=35 // pred_fallthru
        _
      // Predicated region
      $region41: #{block_forward.4} parent=35 // pred_check
        %p2582 = pneg %p150
      $region42: #{block_forward.4} parent=35 // pred_check_branch
        %2584 = sbr.rel (%p2582) target = $region44
      $region43: #{block_forward.4} parent=35 // pred_region
        _
      $region44: #{block_forward.4} parent=35 // pred_fallthru
        _
    $region36: #{block_forward.4} parent=5 // pred_fallthru
      _
    %p2585 = scmp.le.s32.totalorder 2, %s12
    // Predicated region
    $region45: #{block_forward.4} parent=5 // pred_check
      %p2586 = pneg %p2585
    $region46: #{block_forward.4} parent=5 // pred_check_branch
      %2588 = sbr.rel (%p2586) target = $region48
    $region47: #{block_forward.4} parent=5 // pred_region
      %s2589 = ssub.s32 %s12, 2
      // Predicated region
      $region49: #{block_forward.4} parent=47 // pred_check
        %p2590 = pneg %p130
      $region50: #{block_forward.4} parent=47 // pred_check_branch
        %2592 = sbr.rel (%p2590) target = $region52
      $region51: #{block_forward.4} parent=47 // pred_region
        %p2593 = scmp.lt.s32.totalorder %s18, 1
        %s2594 = scalar_select %p2593, %s18, 1
        %s2595 = smul.addr %s2594, 32
        %s2596 = smul.addr %s2595, 4
        %s2597 = scalar_lea.vmem %s4, %s2596
      $region52: #{block_forward.4} parent=47 // pred_fallthru
        _
      // Predicated region
      $region53: #{block_forward.4} parent=47 // pred_check
        %p2598 = pneg %p156
      $region54: #{block_forward.4} parent=47 // pred_check_branch
        %2600 = sbr.rel (%p2598) target = $region56
      $region55: #{block_forward.4} parent=47 // pred_region
        %p2601 = scmp.lt.s32.totalorder %s18, 1
        %s2602 = scalar_select %p2601, %s18, 1
        %s2603 = smul.addr %s2602, 2
        %s2604 = scalar_lea.vmem %s5, %s2603
      $region56: #{block_forward.4} parent=47 // pred_fallthru
        _
    $region48: #{block_forward.4} parent=5 // pred_fallthru
      _
  $region6: #{block_forward.4} parent=0 // loop_footer
    %s16 = sadd.s32 1, %s12
  $region7: #{block_forward.4} parent=0 // loop_footer_branch
    %11 = sbr.rel target = $region3
  $region8: #{block_forward.4} parent=0 // loop_exit
    _

// kernel: block_forward.3
$region0: #{block_forward.3}
  #allocation0 [shape = 'u32[]', space=smem, size = 0x4, offset = 0x4, fixed_abs, tag = 'smem constant byte address 0x4 - core index']
  #allocation1 [shape = 'u32[144,128]{1,0:T(1,128)}', space=vmem, size = 0x12000, scoped, tag = 'internal scratch']
  %s0 = inlined_call_operand.vmem [shape: bf16[2,18,18,128], index: 0, kind: input, shape index: {}]
  %s1 = inlined_call_operand.vmem [shape: bf16[1152,128], index: 1, kind: input, shape index: {}]
  %s2 = inlined_call_operand.vmem [shape: bf16[128,128], index: 2, kind: input, shape index: {}]
  %s3 = inlined_call_operand.vmem [shape: bf16[2,16,16,128], index: 3, kind: output, shape index: {0}]
  %s4 = inlined_call_operand.vmem [shape: f32[2,2,128], index: 4, kind: output, shape index: {1}]
  %s5 = inlined_call_operand.vmem [shape: bf16[2,16,16,128], index: 5, kind: output, shape index: {2}]
  %s6 = inlined_call_operand.vmem [shape: f32[2,2,128], index: 6, kind: output, shape index: {3}]
  %7 = xla_tuple %s3, %s4, %s5, %s6
  %s8 = sld [smem:[#allocation0]]
  $region69: #{block_forward.3} parent=0
    _
  %s10 = ssub.s32 1, %s8
  %s11 = scalar_select 0, %s10, %s8
  loop: start=0, step=1, limit=4
  $region2: #{block_forward.3} parent=0 // loop_pre_header
    _
  $region3: #{block_forward.3} parent=0 // loop_header
    %s13 = sphi 0, %s17
    %p14 = scmp.ge.s32.totalorder %s13, 4
    %s23 = sphi 0, %s25
    %s26 = sphi 0, %s23
    %s27 = sphi 0, %s26
    %s43 = sphi 0, %s27
    %s47 = sphi 0, %s47
    %s49 = sphi 0, %s47
    %s50 = sphi 0, %s49
    %s64 = sphi 0, %s50
    %s68 = sphi 0, %s68
    %s70 = sphi 0, %s68
    %s71 = sphi 0, %s70
    %s85 = sphi 0, %s71
    %s91 = sphi 0, %s93
    %s94 = sphi 0, %s91
    %s95 = sphi 0, %s94
    %s111 = sphi 0, %s95
    %s117 = sphi 0, %s119
    %s120 = sphi 0, %s117
    %s121 = sphi 0, %s120
    %s137 = sphi 0, %s121
    %s143 = sphi 0, %s145
    %s146 = sphi 0, %s143
    %s147 = sphi 0, %s146
    %s163 = sphi 0, %s147
    %s169 = sphi 0, %s171
    %s172 = sphi 0, %s169
    %s173 = sphi 0, %s172
    %s189 = sphi 0, %s173
  $region4: #{block_forward.3} parent=0 // loop_header_branch
    %16 = sbr.rel (%p14) target = $region8
  $region5: #{block_forward.3} parent=0 // loop_body
    %s18 = ssub.s32 %s13, 1
    %s19 = ssub.s32 %s13, 2
    %s20 = sadd.s32 %s13, 1
    %s21 = ssub.s32 %s13, %s20
    %p22 = scmp.eq.s32.totalorder %s21, 0
    %s24 = sadd.s32 %s23, 1
    %s25 = scalar_select %p22, %s23, %s24
    %p28 = pneg %p22
    %p29 = scmp.eq.s32.totalorder %s13, 1
    %p30 = por %p28, %p29
    %p31 = scmp.ne.s32.totalorder %s23, %s26
    %p32 = scmp.eq.s32.totalorder %s13, 0
    %p33 = por %p31, %p32
    %p34 = scmp.ne.s32.totalorder %s23, %s26
    %p35 = scmp.eq.s32.totalorder %s18, 1
    %p36 = por %p34, %p35
    %p37 = scmp.ne.s32.totalorder %s26, %s27
    %p38 = scmp.eq.s32.totalorder %s18, 0
    %p39 = por %p37, %p38
    %p40 = scmp.ne.s32.totalorder %s26, %s27
    %p41 = scmp.eq.s32.totalorder %s19, 1
    %p42 = por %p40, %p41
    %p44 = scmp.ne.s32.totalorder %s27, %s43
    %p45 = scmp.eq.s32.totalorder %s19, 0
    %p46 = por %p44, %p45
    %s48 = sadd.s32 %s47, 1
    %p51 = scmp.eq.s32.totalorder %s13, 1
    %p52 = scmp.ne.s32.totalorder %s47, %s49
    %p53 = scmp.eq.s32.totalorder %s13, 0
    %p54 = por %p52, %p53
    %p55 = scmp.ne.s32.totalorder %s47, %s49
    %p56 = scmp.eq.s32.totalorder %s18, 1
    %p57 = por %p55, %p56
    %p58 = scmp.ne.s32.totalorder %s49, %s50
    %p59 = scmp.eq.s32.totalorder %s18, 0
    %p60 = por %p58, %p59
    %p61 = scmp.ne.s32.totalorder %s49, %s50
    %p62 = scmp.eq.s32.totalorder %s19, 1
    %p63 = por %p61, %p62
    %p65 = scmp.ne.s32.totalorder %s50, %s64
    %p66 = scmp.eq.s32.totalorder %s19, 0
    %p67 = por %p65, %p66
    %s69 = sadd.s32 %s68, 1
    %p72 = scmp.eq.s32.totalorder %s13, 1
    %p73 = scmp.ne.s32.totalorder %s68, %s70
    %p74 = scmp.eq.s32.totalorder %s13, 0
    %p75 = por %p73, %p74
    %p76 = scmp.ne.s32.totalorder %s68, %s70
    %p77 = scmp.eq.s32.totalorder %s18, 1
    %p78 = por %p76, %p77
    %p79 = scmp.ne.s32.totalorder %s70, %s71
    %p80 = scmp.eq.s32.totalorder %s18, 0
    %p81 = por %p79, %p80
    %p82 = scmp.ne.s32.totalorder %s70, %s71
    %p83 = scmp.eq.s32.totalorder %s19, 1
    %p84 = por %p82, %p83
    %p86 = scmp.ne.s32.totalorder %s71, %s85
    %p87 = scmp.eq.s32.totalorder %s19, 0
    %p88 = por %p86, %p87
    %s89 = ssub.s32 %s13, %s20
    %p90 = scmp.eq.s32.totalorder %s89, 0
    %s92 = sadd.s32 %s91, 1
    %s93 = scalar_select %p90, %s91, %s92
    %p96 = pneg %p90
    %p97 = scmp.eq.s32.totalorder %s13, 1
    %p98 = por %p96, %p97
    %p99 = scmp.ne.s32.totalorder %s91, %s94
    %p100 = scmp.eq.s32.totalorder %s13, 0
    %p101 = por %p99, %p100
    %p102 = scmp.ne.s32.totalorder %s91, %s94
    %p103 = scmp.eq.s32.totalorder %s18, 1
    %p104 = por %p102, %p103
    %p105 = scmp.ne.s32.totalorder %s94, %s95
    %p106 = scmp.eq.s32.totalorder %s18, 0
    %p107 = por %p105, %p106
    %p108 = scmp.ne.s32.totalorder %s94, %s95
    %p109 = scmp.eq.s32.totalorder %s19, 1
    %p110 = por %p108, %p109
    %p112 = scmp.ne.s32.totalorder %s95, %s111
    %p113 = scmp.eq.s32.totalorder %s19, 0
    %p114 = por %p112, %p113
    %s115 = ssub.s32 %s13, %s20
    %p116 = scmp.eq.s32.totalorder %s115, 0
    %s118 = sadd.s32 %s117, 1
    %s119 = scalar_select %p116, %s117, %s118
    %p122 = pneg %p116
    %p123 = scmp.eq.s32.totalorder %s13, 1
    %p124 = por %p122, %p123
    %p125 = scmp.ne.s32.totalorder %s117, %s120
    %p126 = scmp.eq.s32.totalorder %s13, 0
    %p127 = por %p125, %p126
    %p128 = scmp.ne.s32.totalorder %s117, %s120
    %p129 = scmp.eq.s32.totalorder %s18, 1
    %p130 = por %p128, %p129
    %p131 = scmp.ne.s32.totalorder %s120, %s121
    %p132 = scmp.eq.s32.totalorder %s18, 0
    %p133 = por %p131, %p132
    %p134 = scmp.ne.s32.totalorder %s120, %s121
    %p135 = scmp.eq.s32.totalorder %s19, 1
    %p136 = por %p134, %p135
    %p138 = scmp.ne.s32.totalorder %s121, %s137
    %p139 = scmp.eq.s32.totalorder %s19, 0
    %p140 = por %p138, %p139
    %s141 = ssub.s32 %s13, %s20
    %p142 = scmp.eq.s32.totalorder %s141, 0
    %s144 = sadd.s32 %s143, 1
    %s145 = scalar_select %p142, %s143, %s144
    %p148 = pneg %p142
    %p149 = scmp.eq.s32.totalorder %s13, 1
    %p150 = por %p148, %p149
    %p151 = scmp.ne.s32.totalorder %s143, %s146
    %p152 = scmp.eq.s32.totalorder %s13, 0
    %p153 = por %p151, %p152
    %p154 = scmp.ne.s32.totalorder %s143, %s146
    %p155 = scmp.eq.s32.totalorder %s18, 1
    %p156 = por %p154, %p155
    %p157 = scmp.ne.s32.totalorder %s146, %s147
    %p158 = scmp.eq.s32.totalorder %s18, 0
    %p159 = por %p157, %p158
    %p160 = scmp.ne.s32.totalorder %s146, %s147
    %p161 = scmp.eq.s32.totalorder %s19, 1
    %p162 = por %p160, %p161
    %p164 = scmp.ne.s32.totalorder %s147, %s163
    %p165 = scmp.eq.s32.totalorder %s19, 0
    %p166 = por %p164, %p165
    %s167 = ssub.s32 %s13, %s20
    %p168 = scmp.eq.s32.totalorder %s167, 0
    %s170 = sadd.s32 %s169, 1
    %s171 = scalar_select %p168, %s169, %s170
    %p174 = pneg %p168
    %p175 = scmp.eq.s32.totalorder %s13, 1
    %p176 = por %p174, %p175
    %p177 = scmp.ne.s32.totalorder %s169, %s172
    %p178 = scmp.eq.s32.totalorder %s13, 0
    %p179 = por %p177, %p178
    %p180 = scmp.ne.s32.totalorder %s169, %s172
    %p181 = scmp.eq.s32.totalorder %s18, 1
    %p182 = por %p180, %p181
    %p183 = scmp.ne.s32.totalorder %s172, %s173
    %p184 = scmp.eq.s32.totalorder %s18, 0
    %p185 = por %p183, %p184
    %p186 = scmp.ne.s32.totalorder %s172, %s173
    %p187 = scmp.eq.s32.totalorder %s19, 1
    %p188 = por %p186, %p187
    %p190 = scmp.ne.s32.totalorder %s173, %s189
    %p191 = scmp.eq.s32.totalorder %s19, 0
    %p192 = por %p190, %p191
    %p193 = scmp.le.s32.totalorder 1, %s13
    %p194 = scmp.lt.s32.totalorder %s13, 3
    %p195 = pnand %p193, %p194
    %p196 = pneg %p195
    // Predicated region
    $region9: #{block_forward.3} parent=5 // pred_check
      _
    $region10: #{block_forward.3} parent=5 // pred_check_branch
      %198 = sbr.rel (%p195) target = $region12
    $region11: #{block_forward.3} parent=5 // pred_region
      %s199 = ssub.s32 %s13, 1
      // Predicated region
      $region13: #{block_forward.3} parent=11 // pred_check
        %p200 = pneg %p60
      $region14: #{block_forward.3} parent=11 // pred_check_branch
        %202 = sbr.rel (%p200) target = $region16
      $region15: #{block_forward.3} parent=11 // pred_region
        _
      $region16: #{block_forward.3} parent=11 // pred_fallthru
        _
      // Predicated region
      $region17: #{block_forward.3} parent=11 // pred_check
        %p203 = pneg %p81
      $region18: #{block_forward.3} parent=11 // pred_check_branch
        %205 = sbr.rel (%p203) target = $region20
      $region19: #{block_forward.3} parent=11 // pred_region
        _
      $region20: #{block_forward.3} parent=11 // pred_fallthru
        _
    $region12: #{block_forward.3} parent=5 // pred_fallthru
      _
    %p206 = scmp.lt.s32.totalorder %s13, 2
    // Predicated region
    $region21: #{block_forward.3} parent=5 // pred_check
      %p207 = pneg %p206
    $region22: #{block_forward.3} parent=5 // pred_check_branch
      %209 = sbr.rel (%p207) target = $region24
    $region23: #{block_forward.3} parent=5 // pred_region
      // Predicated region
      $region25: #{block_forward.3} parent=23 // pred_check
        %p210 = pneg %p33
      $region26: #{block_forward.3} parent=23 // pred_check_branch
        %212 = sbr.rel (%p210) target = $region28
      $region27: #{block_forward.3} parent=23 // pred_region
        %p213 = scmp.lt.s32.totalorder %s13, 1
        %s214 = scalar_select %p213, %s13, 1
        %s215 = smul.addr %s214, 54
        %s216 = smul.addr %s215, 4
        %s217 = scalar_lea.vmem %s0, %s216
      $region28: #{block_forward.3} parent=23 // pred_fallthru
        _
    $region24: #{block_forward.3} parent=5 // pred_fallthru
      _
    %p218 = scmp.le.s32.totalorder 1, %s13
    %p219 = scmp.lt.s32.totalorder %s13, 3
    %p220 = pnand %p218, %p219
    %p221 = pneg %p220
    // Predicated region
    $region29: #{block_forward.3} parent=5 // pred_check
      _
    $region30: #{block_forward.3} parent=5 // pred_check_branch
      %223 = sbr.rel (%p220) target = $region32
    $region31: #{block_forward.3} parent=5 // pred_region
      %s224 = ssub.s32 %s13, 1
      %p225 = scmp.lt.s32.totalorder %s18, 1
      %s226 = scalar_select %p225, %s18, 1
      %s227 = smul.addr %s226, 54
      %s228 = smul.addr %s227, 4
      %s229 = scalar_lea.vmem %s0, %s228
      %p230 = pneg %p39
      %p231 = pneg %p36
      %p232 = pneg %p60
      %p233 = pneg %p57
      %p234 = pneg %p81
      %p235 = pneg %p78
      %p236 = pneg %p107
      %p237 = pneg %p104
      %p238 = scmp.lt.s32.totalorder %s18, 1
      %s239 = scalar_select %p238, %s18, 1
      %s240 = smul.addr %s239, 32
      %s241 = smul.addr %s240, 4
      %s242 = scalar_lea.vmem %s3, %s241
      %p243 = pneg %p133
      %p244 = pneg %p130
      %p245 = scmp.lt.s32.totalorder %s18, 1
      %s246 = scalar_select %p245, %s18, 1
      %s247 = smul.addr %s246, 2
      %s248 = scalar_lea.vmem %s4, %s247
      %p249 = pneg %p159
      %p250 = pneg %p156
      %p251 = scmp.lt.s32.totalorder %s18, 1
      %s252 = scalar_select %p251, %s18, 1
      %s253 = smul.addr %s252, 32
      %s254 = smul.addr %s253, 4
      %s255 = scalar_lea.vmem %s5, %s254
      %p256 = pneg %p185
      %p257 = pneg %p182
      %p258 = scmp.lt.s32.totalorder %s18, 1
      %s259 = scalar_select %p258, %s18, 1
      %s260 = smul.addr %s259, 2
      %s261 = scalar_lea.vmem %s6, %s260
      %p262 = scmp.lt.s32.totalorder %s18, 1
      %s263 = scalar_select %p262, %s18, 1
      %s264 = smul.addr %s263, 54
      %s265 = smul.addr %s264, 4
      %s266 = scalar_lea.vmem %s0, %s265
      %p267 = scmp.lt.s32.totalorder %s18, 1
      %s268 = scalar_select %p267, %s18, 1
      %s269 = smul.addr %s268, 32
      %s270 = smul.addr %s269, 4
      %s271 = scalar_lea.vmem %s3, %s270
      %p272 = scmp.lt.s32.totalorder %s18, 1
      %s273 = scalar_select %p272, %s18, 1
      %s274 = smul.addr %s273, 2
      %s275 = scalar_lea.vmem %s4, %s274
      %p276 = scmp.lt.s32.totalorder %s18, 1
      %s277 = scalar_select %p276, %s18, 1
      %s278 = smul.addr %s277, 32
      %s279 = smul.addr %s278, 4
      %s280 = scalar_lea.vmem %s5, %s279
      %p281 = scmp.lt.s32.totalorder %s18, 1
      %s282 = scalar_select %p281, %s18, 1
      %s283 = smul.addr %s282, 2
      %s284 = scalar_lea.vmem %s6, %s283
      %v286 = vld [vmem:[%s266] sm:$0xf]
      %v287 = vld [vmem:[%s266 + $0x4] sm:$0xf]
      %v288 = vld [vmem:[%s266 + $0xc] sm:$0xf]
      %v289 = vld [vmem:[%s266 + $0x10] sm:$0xf]
      %v290 = vld [vmem:[%s266 + $0x18] sm:$0xf]
      %v291 = vld [vmem:[%s266 + $0x1c] sm:$0xf]
      %v292 = vld [vmem:[%s266 + $0x24] sm:$0xf]
      %v293 = vld [vmem:[%s266 + $0x28] sm:$0xf]
      %v294 = vld [vmem:[%s266 + $0x30] sm:$0xf]
      %v295 = vld [vmem:[%s266 + $0x34] sm:$0xf]
      %v296 = vld [vmem:[%s266 + $0x3c] sm:$0xf]
      %v297 = vld [vmem:[%s266 + $0x40] sm:$0xf]
      %v298 = vld [vmem:[%s266 + $0x48] sm:$0xf]
      %v299 = vld [vmem:[%s266 + $0x4c] sm:$0xf]
      %v300 = vld [vmem:[%s266 + $0x54] sm:$0xf]
      %v301 = vld [vmem:[%s266 + $0x58] sm:$0xf]
      %v302 = vld [vmem:[%s266 + $0x60] sm:$0xf]
      %v303 = vld [vmem:[%s266 + $0x64] sm:$0xf]
      %v304 = vld [vmem:[%s266 + $0x6c] sm:$0xf]
      %v305 = vld [vmem:[%s266 + $0x70] sm:$0xf]
      %v306 = vld [vmem:[%s266 + $0x78] sm:$0xf]
      %v307 = vld [vmem:[%s266 + $0x7c] sm:$0xf]
      %v308 = vld [vmem:[%s266 + $0x84] sm:$0xf]
      %v309 = vld [vmem:[%s266 + $0x88] sm:$0xf]
      %v310 = vld [vmem:[%s266 + $0x90] sm:$0xf]
      %v311 = vld [vmem:[%s266 + $0x94] sm:$0xf]
      %v312 = vld [vmem:[%s266 + $0x9c] sm:$0xf]
      %v313 = vld [vmem:[%s266 + $0xa0] sm:$0xf]
      %v314 = vld [vmem:[%s266 + $0xa8] sm:$0xf]
      %v315 = vld [vmem:[%s266 + $0xac] sm:$0xf]
      %v316 = vld [vmem:[%s266 + $0xb4] sm:$0xf]
      %v317 = vld [vmem:[%s266 + $0xb8] sm:$0xf]
      %v318 = vld [vmem:[%s266 + $0x8] sm:$0x1]
      %v319 = vld [vmem:[%s266 + $0x14] sm:$0x1]
      %v320 = vld [vmem:[%s266 + $0x20] sm:$0x1]
      %v321 = vld [vmem:[%s266 + $0x2c] sm:$0x1]
      %v322 = vld [vmem:[%s266 + $0x38] sm:$0x1]
      %v323 = vld [vmem:[%s266 + $0x44] sm:$0x1]
      %v324 = vld [vmem:[%s266 + $0x50] sm:$0x1]
      %v325 = vld [vmem:[%s266 + $0x5c] sm:$0x1]
      %v326 = vld [vmem:[%s266 + $0x68] sm:$0x1]
      %v327 = vld [vmem:[%s266 + $0x74] sm:$0x1]
      %v328 = vld [vmem:[%s266 + $0x80] sm:$0x1]
      %v329 = vld [vmem:[%s266 + $0x8c] sm:$0x1]
      %v330 = vld [vmem:[%s266 + $0x98] sm:$0x1]
      %v331 = vld [vmem:[%s266 + $0xa4] sm:$0x1]
      %v332 = vld [vmem:[%s266 + $0xb0] sm:$0x1]
      %v333 = vld [vmem:[%s266 + $0xbc] sm:$0x1]
      %vm334 = vsmask.f32 3328
      %vm335 = vsmask.f32 7440
      %vm336 = vmor %vm334, %vm335
      %v338 = vshrl.u32 %v286, 16
      %v340 = vrot.slane %v338, 4
      %v341 = vshll.u32 %v286, 16
      %v343 = vrot.slane %v341, 5
      %v344 = vor.u32 %v340, %v343
      %v345 = vrot.slane %v344, 4
      %v347 = vshll.u32 %v287, 16
      %v349 = vrot.slane %v347, 5
      %v350 = vsel %vm336, %v345, %v349
      %v351 = vshrl.u32 %v287, 16
      %v353 = vrot.slane %v351, 4
      %v354 = vor.u32 %v353, %v349
      %v355 = vrot.slane %v354, 4
      %v357 = vshll.u32 %v318, 16
      %v359 = vrot.slane %v357, 5
      %v360 = vsel %vm336, %v355, %v359
      %v362 = vshrl.u32 %v288, 16
      %v364 = vrot.slane %v362, 4
      %v365 = vshll.u32 %v288, 16
      %v367 = vrot.slane %v365, 5
      %v368 = vor.u32 %v364, %v367
      %v369 = vrot.slane %v368, 4
      %v371 = vshll.u32 %v289, 16
      %v373 = vrot.slane %v371, 5
      %v374 = vsel %vm336, %v369, %v373
      %v375 = vshrl.u32 %v289, 16
      %v377 = vrot.slane %v375, 4
      %v378 = vor.u32 %v377, %v373
      %v379 = vrot.slane %v378, 4
      %v381 = vshll.u32 %v319, 16
      %v383 = vrot.slane %v381, 5
      %v384 = vsel %vm336, %v379, %v383
      %v386 = vshrl.u32 %v290, 16
      %v388 = vrot.slane %v386, 4
      %v389 = vshll.u32 %v290, 16
      %v391 = vrot.slane %v389, 5
      %v392 = vor.u32 %v388, %v391
      %v393 = vrot.slane %v392, 4
      %v395 = vshll.u32 %v291, 16
      %v397 = vrot.slane %v395, 5
      %v398 = vsel %vm336, %v393, %v397
      %v399 = vshrl.u32 %v291, 16
      %v401 = vrot.slane %v399, 4
      %v402 = vor.u32 %v401, %v397
      %v403 = vrot.slane %v402, 4
      %v405 = vshll.u32 %v320, 16
      %v407 = vrot.slane %v405, 5
      %v408 = vsel %vm336, %v403, %v407
      %v410 = vshrl.u32 %v292, 16
      %v412 = vrot.slane %v410, 4
      %v413 = vshll.u32 %v292, 16
      %v415 = vrot.slane %v413, 5
      %v416 = vor.u32 %v412, %v415
      %v417 = vrot.slane %v416, 4
      %v419 = vshll.u32 %v293, 16
      %v421 = vrot.slane %v419, 5
      %v422 = vsel %vm336, %v417, %v421
      %v423 = vshrl.u32 %v293, 16
      %v425 = vrot.slane %v423, 4
      %v426 = vor.u32 %v425, %v421
      %v427 = vrot.slane %v426, 4
      %v429 = vshll.u32 %v321, 16
      %v431 = vrot.slane %v429, 5
      %v432 = vsel %vm336, %v427, %v431
      %v434 = vshrl.u32 %v294, 16
      %v436 = vrot.slane %v434, 4
      %v437 = vshll.u32 %v294, 16
      %v439 = vrot.slane %v437, 5
      %v440 = vor.u32 %v436, %v439
      %v441 = vrot.slane %v440, 4
      %v443 = vshll.u32 %v295, 16
      %v445 = vrot.slane %v443, 5
      %v446 = vsel %vm336, %v441, %v445
      %v447 = vshrl.u32 %v295, 16
      %v449 = vrot.slane %v447, 4
      %v450 = vor.u32 %v449, %v445
      %v451 = vrot.slane %v450, 4
      %v453 = vshll.u32 %v322, 16
      %v455 = vrot.slane %v453, 5
      %v456 = vsel %vm336, %v451, %v455
      %v458 = vshrl.u32 %v296, 16
      %v460 = vrot.slane %v458, 4
      %v461 = vshll.u32 %v296, 16
      %v463 = vrot.slane %v461, 5
      %v464 = vor.u32 %v460, %v463
      %v465 = vrot.slane %v464, 4
      %v467 = vshll.u32 %v297, 16
      %v469 = vrot.slane %v467, 5
      %v470 = vsel %vm336, %v465, %v469
      %v471 = vshrl.u32 %v297, 16
      %v473 = vrot.slane %v471, 4
      %v474 = vor.u32 %v473, %v469
      %v475 = vrot.slane %v474, 4
      %v477 = vshll.u32 %v323, 16
      %v479 = vrot.slane %v477, 5
      %v480 = vsel %vm336, %v475, %v479
      %v482 = vshrl.u32 %v298, 16
      %v484 = vrot.slane %v482, 4
      %v485 = vshll.u32 %v298, 16
      %v487 = vrot.slane %v485, 5
      %v488 = vor.u32 %v484, %v487
      %v489 = vrot.slane %v488, 4
      %v491 = vshll.u32 %v299, 16
      %v493 = vrot.slane %v491, 5
      %v494 = vsel %vm336, %v489, %v493
      %v495 = vshrl.u32 %v299, 16
      %v497 = vrot.slane %v495, 4
      %v498 = vor.u32 %v497, %v493
      %v499 = vrot.slane %v498, 4
      %v501 = vshll.u32 %v324, 16
      %v503 = vrot.slane %v501, 5
      %v504 = vsel %vm336, %v499, %v503
      %v506 = vshrl.u32 %v300, 16
      %v508 = vrot.slane %v506, 4
      %v509 = vshll.u32 %v300, 16
      %v511 = vrot.slane %v509, 5
      %v512 = vor.u32 %v508, %v511
      %v513 = vrot.slane %v512, 4
      %v515 = vshll.u32 %v301, 16
      %v517 = vrot.slane %v515, 5
      %v518 = vsel %vm336, %v513, %v517
      %v519 = vshrl.u32 %v301, 16
      %v521 = vrot.slane %v519, 4
      %v522 = vor.u32 %v521, %v517
      %v523 = vrot.slane %v522, 4
      %v525 = vshll.u32 %v325, 16
      %v527 = vrot.slane %v525, 5
      %v528 = vsel %vm336, %v523, %v527
      %v530 = vshrl.u32 %v302, 16
      %v532 = vrot.slane %v530, 4
      %v533 = vshll.u32 %v302, 16
      %v535 = vrot.slane %v533, 5
      %v536 = vor.u32 %v532, %v535
      %v537 = vrot.slane %v536, 4
      %v539 = vshll.u32 %v303, 16
      %v541 = vrot.slane %v539, 5
      %v542 = vsel %vm336, %v537, %v541
      %v543 = vshrl.u32 %v303, 16
      %v545 = vrot.slane %v543, 4
      %v546 = vor.u32 %v545, %v541
      %v547 = vrot.slane %v546, 4
      %v549 = vshll.u32 %v326, 16
      %v551 = vrot.slane %v549, 5
      %v552 = vsel %vm336, %v547, %v551
      %v554 = vshrl.u32 %v304, 16
      %v556 = vrot.slane %v554, 4
      %v557 = vshll.u32 %v304, 16
      %v559 = vrot.slane %v557, 5
      %v560 = vor.u32 %v556, %v559
      %v561 = vrot.slane %v560, 4
      %v563 = vshll.u32 %v305, 16
      %v565 = vrot.slane %v563, 5
      %v566 = vsel %vm336, %v561, %v565
      %v567 = vshrl.u32 %v305, 16
      %v569 = vrot.slane %v567, 4
      %v570 = vor.u32 %v569, %v565
      %v571 = vrot.slane %v570, 4
      %v573 = vshll.u32 %v327, 16
      %v575 = vrot.slane %v573, 5
      %v576 = vsel %vm336, %v571, %v575
      %v578 = vshrl.u32 %v306, 16
      %v580 = vrot.slane %v578, 4
      %v581 = vshll.u32 %v306, 16
      %v583 = vrot.slane %v581, 5
      %v584 = vor.u32 %v580, %v583
      %v585 = vrot.slane %v584, 4
      %v587 = vshll.u32 %v307, 16
      %v589 = vrot.slane %v587, 5
      %v590 = vsel %vm336, %v585, %v589
      %v591 = vshrl.u32 %v307, 16
      %v593 = vrot.slane %v591, 4
      %v594 = vor.u32 %v593, %v589
      %v595 = vrot.slane %v594, 4
      %v597 = vshll.u32 %v328, 16
      %v599 = vrot.slane %v597, 5
      %v600 = vsel %vm336, %v595, %v599
      %v602 = vshrl.u32 %v308, 16
      %v604 = vrot.slane %v602, 4
      %v605 = vshll.u32 %v308, 16
      %v607 = vrot.slane %v605, 5
      %v608 = vor.u32 %v604, %v607
      %v609 = vrot.slane %v608, 4
      %v611 = vshll.u32 %v309, 16
      %v613 = vrot.slane %v611, 5
      %v614 = vsel %vm336, %v609, %v613
      %v615 = vshrl.u32 %v309, 16
      %v617 = vrot.slane %v615, 4
      %v618 = vor.u32 %v617, %v613
      %v619 = vrot.slane %v618, 4
      %v621 = vshll.u32 %v329, 16
      %v623 = vrot.slane %v621, 5
      %v624 = vsel %vm336, %v619, %v623
      %v626 = vshrl.u32 %v310, 16
      %v628 = vrot.slane %v626, 4
      %v629 = vshll.u32 %v310, 16
      %v631 = vrot.slane %v629, 5
      %v632 = vor.u32 %v628, %v631
      %v633 = vrot.slane %v632, 4
      %v635 = vshll.u32 %v311, 16
      %v637 = vrot.slane %v635, 5
      %v638 = vsel %vm336, %v633, %v637
      %v639 = vshrl.u32 %v311, 16
      %v641 = vrot.slane %v639, 4
      %v642 = vor.u32 %v641, %v637
      %v643 = vrot.slane %v642, 4
      %v645 = vshll.u32 %v330, 16
      %v647 = vrot.slane %v645, 5
      %v648 = vsel %vm336, %v643, %v647
      %v650 = vshrl.u32 %v312, 16
      %v652 = vrot.slane %v650, 4
      %v653 = vshll.u32 %v312, 16
      %v655 = vrot.slane %v653, 5
      %v656 = vor.u32 %v652, %v655
      %v657 = vrot.slane %v656, 4
      %v659 = vshll.u32 %v313, 16
      %v661 = vrot.slane %v659, 5
      %v662 = vsel %vm336, %v657, %v661
      %v663 = vshrl.u32 %v313, 16
      %v665 = vrot.slane %v663, 4
      %v666 = vor.u32 %v665, %v661
      %v667 = vrot.slane %v666, 4
      %v669 = vshll.u32 %v331, 16
      %v671 = vrot.slane %v669, 5
      %v672 = vsel %vm336, %v667, %v671
      %v674 = vshrl.u32 %v314, 16
      %v676 = vrot.slane %v674, 4
      %v677 = vshll.u32 %v314, 16
      %v679 = vrot.slane %v677, 5
      %v680 = vor.u32 %v676, %v679
      %v681 = vrot.slane %v680, 4
      %v683 = vshll.u32 %v315, 16
      %v685 = vrot.slane %v683, 5
      %v686 = vsel %vm336, %v681, %v685
      %v687 = vshrl.u32 %v315, 16
      %v689 = vrot.slane %v687, 4
      %v690 = vor.u32 %v689, %v685
      %v691 = vrot.slane %v690, 4
      %v693 = vshll.u32 %v332, 16
      %v695 = vrot.slane %v693, 5
      %v696 = vsel %vm336, %v691, %v695
      %v698 = vshrl.u32 %v316, 16
      %v700 = vrot.slane %v698, 4
      %v701 = vshll.u32 %v316, 16
      %v703 = vrot.slane %v701, 5
      %v704 = vor.u32 %v700, %v703
      %v705 = vrot.slane %v704, 4
      %v707 = vshll.u32 %v317, 16
      %v709 = vrot.slane %v707, 5
      %v710 = vsel %vm336, %v705, %v709
      %v711 = vshrl.u32 %v317, 16
      %v713 = vrot.slane %v711, 4
      %v714 = vor.u32 %v713, %v709
      %v715 = vrot.slane %v714, 4
      %v717 = vshll.u32 %v333, 16
      %v719 = vrot.slane %v717, 5
      %v720 = vsel %vm336, %v715, %v719
      %v721 = vld [vmem:[%s266] sm:$0xe]
      %v722 = vld [vmem:[%s266 + $0xc] sm:$0xe]
      %v723 = vld [vmem:[%s266 + $0x18] sm:$0xe]
      %v724 = vld [vmem:[%s266 + $0x24] sm:$0xe]
      %v725 = vld [vmem:[%s266 + $0x30] sm:$0xe]
      %v726 = vld [vmem:[%s266 + $0x3c] sm:$0xe]
      %v727 = vld [vmem:[%s266 + $0x48] sm:$0xe]
      %v728 = vld [vmem:[%s266 + $0x54] sm:$0xe]
      %v729 = vld [vmem:[%s266 + $0x60] sm:$0xe]
      %v730 = vld [vmem:[%s266 + $0x6c] sm:$0xe]
      %v731 = vld [vmem:[%s266 + $0x78] sm:$0xe]
      %v732 = vld [vmem:[%s266 + $0x84] sm:$0xe]
      %v733 = vld [vmem:[%s266 + $0x90] sm:$0xe]
      %v734 = vld [vmem:[%s266 + $0x9c] sm:$0xe]
      %v735 = vld [vmem:[%s266 + $0xa8] sm:$0xe]
      %v736 = vld [vmem:[%s266 + $0xb4] sm:$0xe]
      %vm785 = vcmask 1042432
      %vm786 = vcmask 1046532
      %vm787 = vmor %vm785, %vm786
      %v788 = vrot.slane %v721, 5
      %v789 = vrot.slane %v788, 4
      %v790 = vrot.slane %v287, 5
      %v791 = vsel %vm787, %v789, %v790
      %v792 = vrot.slane %v790, 4
      %v793 = vrot.slane %v318, 5
      %v794 = vsel %vm787, %v792, %v793
      %v795 = vrot.slane %v722, 5
      %v796 = vrot.slane %v795, 4
      %v797 = vrot.slane %v289, 5
      %v798 = vsel %vm787, %v796, %v797
      %v799 = vrot.slane %v797, 4
      %v800 = vrot.slane %v319, 5
      %v801 = vsel %vm787, %v799, %v800
      %v802 = vrot.slane %v723, 5
      %v803 = vrot.slane %v802, 4
      %v804 = vrot.slane %v291, 5
      %v805 = vsel %vm787, %v803, %v804
      %v806 = vrot.slane %v804, 4
      %v807 = vrot.slane %v320, 5
      %v808 = vsel %vm787, %v806, %v807
      %v809 = vrot.slane %v724, 5
      %v810 = vrot.slane %v809, 4
      %v811 = vrot.slane %v293, 5
      %v812 = vsel %vm787, %v810, %v811
      %v813 = vrot.slane %v811, 4
      %v814 = vrot.slane %v321, 5
      %v815 = vsel %vm787, %v813, %v814
      %v816 = vrot.slane %v725, 5
      %v817 = vrot.slane %v816, 4
      %v818 = vrot.slane %v295, 5
      %v819 = vsel %vm787, %v817, %v818
      %v820 = vrot.slane %v818, 4
      %v821 = vrot.slane %v322, 5
      %v822 = vsel %vm787, %v820, %v821
      %v823 = vrot.slane %v726, 5
      %v824 = vrot.slane %v823, 4
      %v825 = vrot.slane %v297, 5
      %v826 = vsel %vm787, %v824, %v825
      %v827 = vrot.slane %v825, 4
      %v828 = vrot.slane %v323, 5
      %v829 = vsel %vm787, %v827, %v828
      %v830 = vrot.slane %v727, 5
      %v831 = vrot.slane %v830, 4
      %v832 = vrot.slane %v299, 5
      %v833 = vsel %vm787, %v831, %v832
      %v834 = vrot.slane %v832, 4
      %v835 = vrot.slane %v324, 5
      %v836 = vsel %vm787, %v834, %v835
      %v837 = vrot.slane %v728, 5
      %v838 = vrot.slane %v837, 4
      %v839 = vrot.slane %v301, 5
      %v840 = vsel %vm787, %v838, %v839
      %v841 = vrot.slane %v839, 4
      %v842 = vrot.slane %v325, 5
      %v843 = vsel %vm787, %v841, %v842
      %v844 = vrot.slane %v729, 5
      %v845 = vrot.slane %v844, 4
      %v846 = vrot.slane %v303, 5
      %v847 = vsel %vm787, %v845, %v846
      %v848 = vrot.slane %v846, 4
      %v849 = vrot.slane %v326, 5
      %v850 = vsel %vm787, %v848, %v849
      %v851 = vrot.slane %v730, 5
      %v852 = vrot.slane %v851, 4
      %v853 = vrot.slane %v305, 5
      %v854 = vsel %vm787, %v852, %v853
      %v855 = vrot.slane %v853, 4
      %v856 = vrot.slane %v327, 5
      %v857 = vsel %vm787, %v855, %v856
      %v858 = vrot.slane %v731, 5
      %v859 = vrot.slane %v858, 4
      %v860 = vrot.slane %v307, 5
      %v861 = vsel %vm787, %v859, %v860
      %v862 = vrot.slane %v860, 4
      %v863 = vrot.slane %v328, 5
      %v864 = vsel %vm787, %v862, %v863
      %v865 = vrot.slane %v732, 5
      %v866 = vrot.slane %v865, 4
      %v867 = vrot.slane %v309, 5
      %v868 = vsel %vm787, %v866, %v867
      %v869 = vrot.slane %v867, 4
      %v870 = vrot.slane %v329, 5
      %v871 = vsel %vm787, %v869, %v870
      %v872 = vrot.slane %v733, 5
      %v873 = vrot.slane %v872, 4
      %v874 = vrot.slane %v311, 5
      %v875 = vsel %vm787, %v873, %v874
      %v876 = vrot.slane %v874, 4
      %v877 = vrot.slane %v330, 5
      %v878 = vsel %vm787, %v876, %v877
      %v879 = vrot.slane %v734, 5
      %v880 = vrot.slane %v879, 4
      %v881 = vrot.slane %v313, 5
      %v882 = vsel %vm787, %v880, %v881
      %v883 = vrot.slane %v881, 4
      %v884 = vrot.slane %v331, 5
      %v885 = vsel %vm787, %v883, %v884
      %v886 = vrot.slane %v735, 5
      %v887 = vrot.slane %v886, 4
      %v888 = vrot.slane %v315, 5
      %v889 = vsel %vm787, %v887, %v888
      %v890 = vrot.slane %v888, 4
      %v891 = vrot.slane %v332, 5
      %v892 = vsel %vm787, %v890, %v891
      %v893 = vrot.slane %v736, 5
      %v894 = vrot.slane %v893, 4
      %v895 = vrot.slane %v317, 5
      %v896 = vsel %vm787, %v894, %v895
      %v897 = vrot.slane %v895, 4
      %v898 = vrot.slane %v333, 5
      %v899 = vsel %vm787, %v897, %v898
      %s900 = scalar_lea.vmem %s266, 12
      %v901 = vld [vmem:[%s900] sm:$0xf]
      %v902 = vld [vmem:[%s900 + $0x4] sm:$0xf]
      %v903 = vld [vmem:[%s900 + $0xc] sm:$0xf]
      %v904 = vld [vmem:[%s900 + $0x10] sm:$0xf]
      %v905 = vld [vmem:[%s900 + $0x18] sm:$0xf]
      %v906 = vld [vmem:[%s900 + $0x1c] sm:$0xf]
      %v907 = vld [vmem:[%s900 + $0x24] sm:$0xf]
      %v908 = vld [vmem:[%s900 + $0x28] sm:$0xf]
      %v909 = vld [vmem:[%s900 + $0x30] sm:$0xf]
      %v910 = vld [vmem:[%s900 + $0x34] sm:$0xf]
      %v911 = vld [vmem:[%s900 + $0x3c] sm:$0xf]
      %v912 = vld [vmem:[%s900 + $0x40] sm:$0xf]
      %v913 = vld [vmem:[%s900 + $0x48] sm:$0xf]
      %v914 = vld [vmem:[%s900 + $0x4c] sm:$0xf]
      %v915 = vld [vmem:[%s900 + $0x54] sm:$0xf]
      %v916 = vld [vmem:[%s900 + $0x58] sm:$0xf]
      %v917 = vld [vmem:[%s900 + $0x60] sm:$0xf]
      %v918 = vld [vmem:[%s900 + $0x64] sm:$0xf]
      %v919 = vld [vmem:[%s900 + $0x6c] sm:$0xf]
      %v920 = vld [vmem:[%s900 + $0x70] sm:$0xf]
      %v921 = vld [vmem:[%s900 + $0x78] sm:$0xf]
      %v922 = vld [vmem:[%s900 + $0x7c] sm:$0xf]
      %v923 = vld [vmem:[%s900 + $0x84] sm:$0xf]
      %v924 = vld [vmem:[%s900 + $0x88] sm:$0xf]
      %v925 = vld [vmem:[%s900 + $0x90] sm:$0xf]
      %v926 = vld [vmem:[%s900 + $0x94] sm:$0xf]
      %v927 = vld [vmem:[%s900 + $0x9c] sm:$0xf]
      %v928 = vld [vmem:[%s900 + $0xa0] sm:$0xf]
      %v929 = vld [vmem:[%s900 + $0xa8] sm:$0xf]
      %v930 = vld [vmem:[%s900 + $0xac] sm:$0xf]
      %v931 = vld [vmem:[%s900 + $0xb4] sm:$0xf]
      %v932 = vld [vmem:[%s900 + $0xb8] sm:$0xf]
      %v933 = vld [vmem:[%s900 + $0x8] sm:$0x1]
      %v934 = vld [vmem:[%s900 + $0x14] sm:$0x1]
      %v935 = vld [vmem:[%s900 + $0x20] sm:$0x1]
      %v936 = vld [vmem:[%s900 + $0x2c] sm:$0x1]
      %v937 = vld [vmem:[%s900 + $0x38] sm:$0x1]
      %v938 = vld [vmem:[%s900 + $0x44] sm:$0x1]
      %v939 = vld [vmem:[%s900 + $0x50] sm:$0x1]
      %v940 = vld [vmem:[%s900 + $0x5c] sm:$0x1]
      %v941 = vld [vmem:[%s900 + $0x68] sm:$0x1]
      %v942 = vld [vmem:[%s900 + $0x74] sm:$0x1]
      %v943 = vld [vmem:[%s900 + $0x80] sm:$0x1]
      %v944 = vld [vmem:[%s900 + $0x8c] sm:$0x1]
      %v945 = vld [vmem:[%s900 + $0x98] sm:$0x1]
      %v946 = vld [vmem:[%s900 + $0xa4] sm:$0x1]
      %v947 = vld [vmem:[%s900 + $0xb0] sm:$0x1]
      %v948 = vld [vmem:[%s900 + $0xbc] sm:$0x1]
      %v950 = vshrl.u32 %v901, 16
      %v952 = vrot.slane %v950, 4
      %v953 = vshll.u32 %v901, 16
      %v955 = vrot.slane %v953, 5
      %v956 = vor.u32 %v952, %v955
      %v957 = vrot.slane %v956, 4
      %v959 = vshll.u32 %v902, 16
      %v961 = vrot.slane %v959, 5
      %v962 = vsel %vm336, %v957, %v961
      %v963 = vshrl.u32 %v902, 16
      %v965 = vrot.slane %v963, 4
      %v966 = vor.u32 %v965, %v961
      %v967 = vrot.slane %v966, 4
      %v969 = vshll.u32 %v933, 16
      %v971 = vrot.slane %v969, 5
      %v972 = vsel %vm336, %v967, %v971
      %v974 = vshrl.u32 %v903, 16
      %v976 = vrot.slane %v974, 4
      %v977 = vshll.u32 %v903, 16
      %v979 = vrot.slane %v977, 5
      %v980 = vor.u32 %v976, %v979
      %v981 = vrot.slane %v980, 4
      %v983 = vshll.u32 %v904, 16
      %v985 = vrot.slane %v983, 5
      %v986 = vsel %vm336, %v981, %v985
      %v987 = vshrl.u32 %v904, 16
      %v989 = vrot.slane %v987, 4
      %v990 = vor.u32 %v989, %v985
      %v991 = vrot.slane %v990, 4
      %v993 = vshll.u32 %v934, 16
      %v995 = vrot.slane %v993, 5
      %v996 = vsel %vm336, %v991, %v995
      %v998 = vshrl.u32 %v905, 16
      %v1000 = vrot.slane %v998, 4
      %v1001 = vshll.u32 %v905, 16
      %v1003 = vrot.slane %v1001, 5
      %v1004 = vor.u32 %v1000, %v1003
      %v1005 = vrot.slane %v1004, 4
      %v1007 = vshll.u32 %v906, 16
      %v1009 = vrot.slane %v1007, 5
      %v1010 = vsel %vm336, %v1005, %v1009
      %v1011 = vshrl.u32 %v906, 16
      %v1013 = vrot.slane %v1011, 4
      %v1014 = vor.u32 %v1013, %v1009
      %v1015 = vrot.slane %v1014, 4
      %v1017 = vshll.u32 %v935, 16
      %v1019 = vrot.slane %v1017, 5
      %v1020 = vsel %vm336, %v1015, %v1019
      %v1022 = vshrl.u32 %v907, 16
      %v1024 = vrot.slane %v1022, 4
      %v1025 = vshll.u32 %v907, 16
      %v1027 = vrot.slane %v1025, 5
      %v1028 = vor.u32 %v1024, %v1027
      %v1029 = vrot.slane %v1028, 4
      %v1031 = vshll.u32 %v908, 16
      %v1033 = vrot.slane %v1031, 5
      %v1034 = vsel %vm336, %v1029, %v1033
      %v1035 = vshrl.u32 %v908, 16
      %v1037 = vrot.slane %v1035, 4
      %v1038 = vor.u32 %v1037, %v1033
      %v1039 = vrot.slane %v1038, 4
      %v1041 = vshll.u32 %v936, 16
      %v1043 = vrot.slane %v1041, 5
      %v1044 = vsel %vm336, %v1039, %v1043
      %v1046 = vshrl.u32 %v909, 16
      %v1048 = vrot.slane %v1046, 4
      %v1049 = vshll.u32 %v909, 16
      %v1051 = vrot.slane %v1049, 5
      %v1052 = vor.u32 %v1048, %v1051
      %v1053 = vrot.slane %v1052, 4
      %v1055 = vshll.u32 %v910, 16
      %v1057 = vrot.slane %v1055, 5
      %v1058 = vsel %vm336, %v1053, %v1057
      %v1059 = vshrl.u32 %v910, 16
      %v1061 = vrot.slane %v1059, 4
      %v1062 = vor.u32 %v1061, %v1057
      %v1063 = vrot.slane %v1062, 4
      %v1065 = vshll.u32 %v937, 16
      %v1067 = vrot.slane %v1065, 5
      %v1068 = vsel %vm336, %v1063, %v1067
      %v1070 = vshrl.u32 %v911, 16
      %v1072 = vrot.slane %v1070, 4
      %v1073 = vshll.u32 %v911, 16
      %v1075 = vrot.slane %v1073, 5
      %v1076 = vor.u32 %v1072, %v1075
      %v1077 = vrot.slane %v1076, 4
      %v1079 = vshll.u32 %v912, 16
      %v1081 = vrot.slane %v1079, 5
      %v1082 = vsel %vm336, %v1077, %v1081
      %v1083 = vshrl.u32 %v912, 16
      %v1085 = vrot.slane %v1083, 4
      %v1086 = vor.u32 %v1085, %v1081
      %v1087 = vrot.slane %v1086, 4
      %v1089 = vshll.u32 %v938, 16
      %v1091 = vrot.slane %v1089, 5
      %v1092 = vsel %vm336, %v1087, %v1091
      %v1094 = vshrl.u32 %v913, 16
      %v1096 = vrot.slane %v1094, 4
      %v1097 = vshll.u32 %v913, 16
      %v1099 = vrot.slane %v1097, 5
      %v1100 = vor.u32 %v1096, %v1099
      %v1101 = vrot.slane %v1100, 4
      %v1103 = vshll.u32 %v914, 16
      %v1105 = vrot.slane %v1103, 5
      %v1106 = vsel %vm336, %v1101, %v1105
      %v1107 = vshrl.u32 %v914, 16
      %v1109 = vrot.slane %v1107, 4
      %v1110 = vor.u32 %v1109, %v1105
      %v1111 = vrot.slane %v1110, 4
      %v1113 = vshll.u32 %v939, 16
      %v1115 = vrot.slane %v1113, 5
      %v1116 = vsel %vm336, %v1111, %v1115
      %v1118 = vshrl.u32 %v915, 16
      %v1120 = vrot.slane %v1118, 4
      %v1121 = vshll.u32 %v915, 16
      %v1123 = vrot.slane %v1121, 5
      %v1124 = vor.u32 %v1120, %v1123
      %v1125 = vrot.slane %v1124, 4
      %v1127 = vshll.u32 %v916, 16
      %v1129 = vrot.slane %v1127, 5
      %v1130 = vsel %vm336, %v1125, %v1129
      %v1131 = vshrl.u32 %v916, 16
      %v1133 = vrot.slane %v1131, 4
      %v1134 = vor.u32 %v1133, %v1129
      %v1135 = vrot.slane %v1134, 4
      %v1137 = vshll.u32 %v940, 16
      %v1139 = vrot.slane %v1137, 5
      %v1140 = vsel %vm336, %v1135, %v1139
      %v1142 = vshrl.u32 %v917, 16
      %v1144 = vrot.slane %v1142, 4
      %v1145 = vshll.u32 %v917, 16
      %v1147 = vrot.slane %v1145, 5
      %v1148 = vor.u32 %v1144, %v1147
      %v1149 = vrot.slane %v1148, 4
      %v1151 = vshll.u32 %v918, 16
      %v1153 = vrot.slane %v1151, 5
      %v1154 = vsel %vm336, %v1149, %v1153
      %v1155 = vshrl.u32 %v918, 16
      %v1157 = vrot.slane %v1155, 4
      %v1158 = vor.u32 %v1157, %v1153
      %v1159 = vrot.slane %v1158, 4
      %v1161 = vshll.u32 %v941, 16
      %v1163 = vrot.slane %v1161, 5
      %v1164 = vsel %vm336, %v1159, %v1163
      %v1166 = vshrl.u32 %v919, 16
      %v1168 = vrot.slane %v1166, 4
      %v1169 = vshll.u32 %v919, 16
      %v1171 = vrot.slane %v1169, 5
      %v1172 = vor.u32 %v1168, %v1171
      %v1173 = vrot.slane %v1172, 4
      %v1175 = vshll.u32 %v920, 16
      %v1177 = vrot.slane %v1175, 5
      %v1178 = vsel %vm336, %v1173, %v1177
      %v1179 = vshrl.u32 %v920, 16
      %v1181 = vrot.slane %v1179, 4
      %v1182 = vor.u32 %v1181, %v1177
      %v1183 = vrot.slane %v1182, 4
      %v1185 = vshll.u32 %v942, 16
      %v1187 = vrot.slane %v1185, 5
      %v1188 = vsel %vm336, %v1183, %v1187
      %v1190 = vshrl.u32 %v921, 16
      %v1192 = vrot.slane %v1190, 4
      %v1193 = vshll.u32 %v921, 16
      %v1195 = vrot.slane %v1193, 5
      %v1196 = vor.u32 %v1192, %v1195
      %v1197 = vrot.slane %v1196, 4
      %v1199 = vshll.u32 %v922, 16
      %v1201 = vrot.slane %v1199, 5
      %v1202 = vsel %vm336, %v1197, %v1201
      %v1203 = vshrl.u32 %v922, 16
      %v1205 = vrot.slane %v1203, 4
      %v1206 = vor.u32 %v1205, %v1201
      %v1207 = vrot.slane %v1206, 4
      %v1209 = vshll.u32 %v943, 16
      %v1211 = vrot.slane %v1209, 5
      %v1212 = vsel %vm336, %v1207, %v1211
      %v1214 = vshrl.u32 %v923, 16
      %v1216 = vrot.slane %v1214, 4
      %v1217 = vshll.u32 %v923, 16
      %v1219 = vrot.slane %v1217, 5
      %v1220 = vor.u32 %v1216, %v1219
      %v1221 = vrot.slane %v1220, 4
      %v1223 = vshll.u32 %v924, 16
      %v1225 = vrot.slane %v1223, 5
      %v1226 = vsel %vm336, %v1221, %v1225
      %v1227 = vshrl.u32 %v924, 16
      %v1229 = vrot.slane %v1227, 4
      %v1230 = vor.u32 %v1229, %v1225
      %v1231 = vrot.slane %v1230, 4
      %v1233 = vshll.u32 %v944, 16
      %v1235 = vrot.slane %v1233, 5
      %v1236 = vsel %vm336, %v1231, %v1235
      %v1238 = vshrl.u32 %v925, 16
      %v1240 = vrot.slane %v1238, 4
      %v1241 = vshll.u32 %v925, 16
      %v1243 = vrot.slane %v1241, 5
      %v1244 = vor.u32 %v1240, %v1243
      %v1245 = vrot.slane %v1244, 4
      %v1247 = vshll.u32 %v926, 16
      %v1249 = vrot.slane %v1247, 5
      %v1250 = vsel %vm336, %v1245, %v1249
      %v1251 = vshrl.u32 %v926, 16
      %v1253 = vrot.slane %v1251, 4
      %v1254 = vor.u32 %v1253, %v1249
      %v1255 = vrot.slane %v1254, 4
      %v1257 = vshll.u32 %v945, 16
      %v1259 = vrot.slane %v1257, 5
      %v1260 = vsel %vm336, %v1255, %v1259
      %v1262 = vshrl.u32 %v927, 16
      %v1264 = vrot.slane %v1262, 4
      %v1265 = vshll.u32 %v927, 16
      %v1267 = vrot.slane %v1265, 5
      %v1268 = vor.u32 %v1264, %v1267
      %v1269 = vrot.slane %v1268, 4
      %v1271 = vshll.u32 %v928, 16
      %v1273 = vrot.slane %v1271, 5
      %v1274 = vsel %vm336, %v1269, %v1273
      %v1275 = vshrl.u32 %v928, 16
      %v1277 = vrot.slane %v1275, 4
      %v1278 = vor.u32 %v1277, %v1273
      %v1279 = vrot.slane %v1278, 4
      %v1281 = vshll.u32 %v946, 16
      %v1283 = vrot.slane %v1281, 5
      %v1284 = vsel %vm336, %v1279, %v1283
      %v1286 = vshrl.u32 %v929, 16
      %v1288 = vrot.slane %v1286, 4
      %v1289 = vshll.u32 %v929, 16
      %v1291 = vrot.slane %v1289, 5
      %v1292 = vor.u32 %v1288, %v1291
      %v1293 = vrot.slane %v1292, 4
      %v1295 = vshll.u32 %v930, 16
      %v1297 = vrot.slane %v1295, 5
      %v1298 = vsel %vm336, %v1293, %v1297
      %v1299 = vshrl.u32 %v930, 16
      %v1301 = vrot.slane %v1299, 4
      %v1302 = vor.u32 %v1301, %v1297
      %v1303 = vrot.slane %v1302, 4
      %v1305 = vshll.u32 %v947, 16
      %v1307 = vrot.slane %v1305, 5
      %v1308 = vsel %vm336, %v1303, %v1307
      %v1310 = vshrl.u32 %v931, 16
      %v1312 = vrot.slane %v1310, 4
      %v1313 = vshll.u32 %v931, 16
      %v1315 = vrot.slane %v1313, 5
      %v1316 = vor.u32 %v1312, %v1315
      %v1317 = vrot.slane %v1316, 4
      %v1319 = vshll.u32 %v932, 16
      %v1321 = vrot.slane %v1319, 5
      %v1322 = vsel %vm336, %v1317, %v1321
      %v1323 = vshrl.u32 %v932, 16
      %v1325 = vrot.slane %v1323, 4
      %v1326 = vor.u32 %v1325, %v1321
      %v1327 = vrot.slane %v1326, 4
      %v1329 = vshll.u32 %v948, 16
      %v1331 = vrot.slane %v1329, 5
      %v1332 = vsel %vm336, %v1327, %v1331
      %v1333 = vld [vmem:[%s900] sm:$0xe]
      %v1334 = vld [vmem:[%s900 + $0xc] sm:$0xe]
      %v1335 = vld [vmem:[%s900 + $0x18] sm:$0xe]
      %v1336 = vld [vmem:[%s900 + $0x24] sm:$0xe]
      %v1337 = vld [vmem:[%s900 + $0x30] sm:$0xe]
      %v1338 = vld [vmem:[%s900 + $0x3c] sm:$0xe]
      %v1339 = vld [vmem:[%s900 + $0x48] sm:$0xe]
      %v1340 = vld [vmem:[%s900 + $0x54] sm:$0xe]
      %v1341 = vld [vmem:[%s900 + $0x60] sm:$0xe]
      %v1342 = vld [vmem:[%s900 + $0x6c] sm:$0xe]
      %v1343 = vld [vmem:[%s900 + $0x78] sm:$0xe]
      %v1344 = vld [vmem:[%s900 + $0x84] sm:$0xe]
      %v1345 = vld [vmem:[%s900 + $0x90] sm:$0xe]
      %v1346 = vld [vmem:[%s900 + $0x9c] sm:$0xe]
      %v1347 = vld [vmem:[%s900 + $0xa8] sm:$0xe]
      %v1348 = vld [vmem:[%s900 + $0xb4] sm:$0xe]
      %v1397 = vrot.slane %v1333, 5
      %v1398 = vrot.slane %v1397, 4
      %v1399 = vrot.slane %v902, 5
      %v1400 = vsel %vm787, %v1398, %v1399
      %v1401 = vrot.slane %v1399, 4
      %v1402 = vrot.slane %v933, 5
      %v1403 = vsel %vm787, %v1401, %v1402
      %v1404 = vrot.slane %v1334, 5
      %v1405 = vrot.slane %v1404, 4
      %v1406 = vrot.slane %v904, 5
      %v1407 = vsel %vm787, %v1405, %v1406
      %v1408 = vrot.slane %v1406, 4
      %v1409 = vrot.slane %v934, 5
      %v1410 = vsel %vm787, %v1408, %v1409
      %v1411 = vrot.slane %v1335, 5
      %v1412 = vrot.slane %v1411, 4
      %v1413 = vrot.slane %v906, 5
      %v1414 = vsel %vm787, %v1412, %v1413
      %v1415 = vrot.slane %v1413, 4
      %v1416 = vrot.slane %v935, 5
      %v1417 = vsel %vm787, %v1415, %v1416
      %v1418 = vrot.slane %v1336, 5
      %v1419 = vrot.slane %v1418, 4
      %v1420 = vrot.slane %v908, 5
      %v1421 = vsel %vm787, %v1419, %v1420
      %v1422 = vrot.slane %v1420, 4
      %v1423 = vrot.slane %v936, 5
      %v1424 = vsel %vm787, %v1422, %v1423
      %v1425 = vrot.slane %v1337, 5
      %v1426 = vrot.slane %v1425, 4
      %v1427 = vrot.slane %v910, 5
      %v1428 = vsel %vm787, %v1426, %v1427
      %v1429 = vrot.slane %v1427, 4
      %v1430 = vrot.slane %v937, 5
      %v1431 = vsel %vm787, %v1429, %v1430
      %v1432 = vrot.slane %v1338, 5
      %v1433 = vrot.slane %v1432, 4
      %v1434 = vrot.slane %v912, 5
      %v1435 = vsel %vm787, %v1433, %v1434
      %v1436 = vrot.slane %v1434, 4
      %v1437 = vrot.slane %v938, 5
      %v1438 = vsel %vm787, %v1436, %v1437
      %v1439 = vrot.slane %v1339, 5
      %v1440 = vrot.slane %v1439, 4
      %v1441 = vrot.slane %v914, 5
      %v1442 = vsel %vm787, %v1440, %v1441
      %v1443 = vrot.slane %v1441, 4
      %v1444 = vrot.slane %v939, 5
      %v1445 = vsel %vm787, %v1443, %v1444
      %v1446 = vrot.slane %v1340, 5
      %v1447 = vrot.slane %v1446, 4
      %v1448 = vrot.slane %v916, 5
      %v1449 = vsel %vm787, %v1447, %v1448
      %v1450 = vrot.slane %v1448, 4
      %v1451 = vrot.slane %v940, 5
      %v1452 = vsel %vm787, %v1450, %v1451
      %v1453 = vrot.slane %v1341, 5
      %v1454 = vrot.slane %v1453, 4
      %v1455 = vrot.slane %v918, 5
      %v1456 = vsel %vm787, %v1454, %v1455
      %v1457 = vrot.slane %v1455, 4
      %v1458 = vrot.slane %v941, 5
      %v1459 = vsel %vm787, %v1457, %v1458
      %v1460 = vrot.slane %v1342, 5
      %v1461 = vrot.slane %v1460, 4
      %v1462 = vrot.slane %v920, 5
      %v1463 = vsel %vm787, %v1461, %v1462
      %v1464 = vrot.slane %v1462, 4
      %v1465 = vrot.slane %v942, 5
      %v1466 = vsel %vm787, %v1464, %v1465
      %v1467 = vrot.slane %v1343, 5
      %v1468 = vrot.slane %v1467, 4
      %v1469 = vrot.slane %v922, 5
      %v1470 = vsel %vm787, %v1468, %v1469
      %v1471 = vrot.slane %v1469, 4
      %v1472 = vrot.slane %v943, 5
      %v1473 = vsel %vm787, %v1471, %v1472
      %v1474 = vrot.slane %v1344, 5
      %v1475 = vrot.slane %v1474, 4
      %v1476 = vrot.slane %v924, 5
      %v1477 = vsel %vm787, %v1475, %v1476
      %v1478 = vrot.slane %v1476, 4
      %v1479 = vrot.slane %v944, 5
      %v1480 = vsel %vm787, %v1478, %v1479
      %v1481 = vrot.slane %v1345, 5
      %v1482 = vrot.slane %v1481, 4
      %v1483 = vrot.slane %v926, 5
      %v1484 = vsel %vm787, %v1482, %v1483
      %v1485 = vrot.slane %v1483, 4
      %v1486 = vrot.slane %v945, 5
      %v1487 = vsel %vm787, %v1485, %v1486
      %v1488 = vrot.slane %v1346, 5
      %v1489 = vrot.slane %v1488, 4
      %v1490 = vrot.slane %v928, 5
      %v1491 = vsel %vm787, %v1489, %v1490
      %v1492 = vrot.slane %v1490, 4
      %v1493 = vrot.slane %v946, 5
      %v1494 = vsel %vm787, %v1492, %v1493
      %v1495 = vrot.slane %v1347, 5
      %v1496 = vrot.slane %v1495, 4
      %v1497 = vrot.slane %v930, 5
      %v1498 = vsel %vm787, %v1496, %v1497
      %v1499 = vrot.slane %v1497, 4
      %v1500 = vrot.slane %v947, 5
      %v1501 = vsel %vm787, %v1499, %v1500
      %v1502 = vrot.slane %v1348, 5
      %v1503 = vrot.slane %v1502, 4
      %v1504 = vrot.slane %v932, 5
      %v1505 = vsel %vm787, %v1503, %v1504
      %v1506 = vrot.slane %v1504, 4
      %v1507 = vrot.slane %v948, 5
      %v1508 = vsel %vm787, %v1506, %v1507
      %s1509 = scalar_lea.vmem %s266, 24
      %v1510 = vld [vmem:[%s1509] sm:$0xf]
      %v1511 = vld [vmem:[%s1509 + $0x4] sm:$0xf]
      %v1512 = vld [vmem:[%s1509 + $0xc] sm:$0xf]
      %v1513 = vld [vmem:[%s1509 + $0x10] sm:$0xf]
      %v1514 = vld [vmem:[%s1509 + $0x18] sm:$0xf]
      %v1515 = vld [vmem:[%s1509 + $0x1c] sm:$0xf]
      %v1516 = vld [vmem:[%s1509 + $0x24] sm:$0xf]
      %v1517 = vld [vmem:[%s1509 + $0x28] sm:$0xf]
      %v1518 = vld [vmem:[%s1509 + $0x30] sm:$0xf]
      %v1519 = vld [vmem:[%s1509 + $0x34] sm:$0xf]
      %v1520 = vld [vmem:[%s1509 + $0x3c] sm:$0xf]
      %v1521 = vld [vmem:[%s1509 + $0x40] sm:$0xf]
      %v1522 = vld [vmem:[%s1509 + $0x48] sm:$0xf]
      %v1523 = vld [vmem:[%s1509 + $0x4c] sm:$0xf]
      %v1524 = vld [vmem:[%s1509 + $0x54] sm:$0xf]
      %v1525 = vld [vmem:[%s1509 + $0x58] sm:$0xf]
      %v1526 = vld [vmem:[%s1509 + $0x60] sm:$0xf]
      %v1527 = vld [vmem:[%s1509 + $0x64] sm:$0xf]
      %v1528 = vld [vmem:[%s1509 + $0x6c] sm:$0xf]
      %v1529 = vld [vmem:[%s1509 + $0x70] sm:$0xf]
      %v1530 = vld [vmem:[%s1509 + $0x78] sm:$0xf]
      %v1531 = vld [vmem:[%s1509 + $0x7c] sm:$0xf]
      %v1532 = vld [vmem:[%s1509 + $0x84] sm:$0xf]
      %v1533 = vld [vmem:[%s1509 + $0x88] sm:$0xf]
      %v1534 = vld [vmem:[%s1509 + $0x90] sm:$0xf]
      %v1535 = vld [vmem:[%s1509 + $0x94] sm:$0xf]
      %v1536 = vld [vmem:[%s1509 + $0x9c] sm:$0xf]
      %v1537 = vld [vmem:[%s1509 + $0xa0] sm:$0xf]
      %v1538 = vld [vmem:[%s1509 + $0xa8] sm:$0xf]
      %v1539 = vld [vmem:[%s1509 + $0xac] sm:$0xf]
      %v1540 = vld [vmem:[%s1509 + $0xb4] sm:$0xf]
      %v1541 = vld [vmem:[%s1509 + $0xb8] sm:$0xf]
      %v1542 = vld [vmem:[%s1509 + $0x8] sm:$0x1]
      %v1543 = vld [vmem:[%s1509 + $0x14] sm:$0x1]
      %v1544 = vld [vmem:[%s1509 + $0x20] sm:$0x1]
      %v1545 = vld [vmem:[%s1509 + $0x2c] sm:$0x1]
      %v1546 = vld [vmem:[%s1509 + $0x38] sm:$0x1]
      %v1547 = vld [vmem:[%s1509 + $0x44] sm:$0x1]
      %v1548 = vld [vmem:[%s1509 + $0x50] sm:$0x1]
      %v1549 = vld [vmem:[%s1509 + $0x5c] sm:$0x1]
      %v1550 = vld [vmem:[%s1509 + $0x68] sm:$0x1]
      %v1551 = vld [vmem:[%s1509 + $0x74] sm:$0x1]
      %v1552 = vld [vmem:[%s1509 + $0x80] sm:$0x1]
      %v1553 = vld [vmem:[%s1509 + $0x8c] sm:$0x1]
      %v1554 = vld [vmem:[%s1509 + $0x98] sm:$0x1]
      %v1555 = vld [vmem:[%s1509 + $0xa4] sm:$0x1]
      %v1556 = vld [vmem:[%s1509 + $0xb0] sm:$0x1]
      %v1557 = vld [vmem:[%s1509 + $0xbc] sm:$0x1]
      %v1559 = vshrl.u32 %v1510, 16
      %v1561 = vrot.slane %v1559, 4
      %v1562 = vshll.u32 %v1510, 16
      %v1564 = vrot.slane %v1562, 5
      %v1565 = vor.u32 %v1561, %v1564
      %v1566 = vrot.slane %v1565, 4
      %v1568 = vshll.u32 %v1511, 16
      %v1570 = vrot.slane %v1568, 5
      %v1571 = vsel %vm336, %v1566, %v1570
      %v1572 = vshrl.u32 %v1511, 16
      %v1574 = vrot.slane %v1572, 4
      %v1575 = vor.u32 %v1574, %v1570
      %v1576 = vrot.slane %v1575, 4
      %v1578 = vshll.u32 %v1542, 16
      %v1580 = vrot.slane %v1578, 5
      %v1581 = vsel %vm336, %v1576, %v1580
      %v1583 = vshrl.u32 %v1512, 16
      %v1585 = vrot.slane %v1583, 4
      %v1586 = vshll.u32 %v1512, 16
      %v1588 = vrot.slane %v1586, 5
      %v1589 = vor.u32 %v1585, %v1588
      %v1590 = vrot.slane %v1589, 4
      %v1592 = vshll.u32 %v1513, 16
      %v1594 = vrot.slane %v1592, 5
      %v1595 = vsel %vm336, %v1590, %v1594
      %v1596 = vshrl.u32 %v1513, 16
      %v1598 = vrot.slane %v1596, 4
      %v1599 = vor.u32 %v1598, %v1594
      %v1600 = vrot.slane %v1599, 4
      %v1602 = vshll.u32 %v1543, 16
      %v1604 = vrot.slane %v1602, 5
      %v1605 = vsel %vm336, %v1600, %v1604
      %v1607 = vshrl.u32 %v1514, 16
      %v1609 = vrot.slane %v1607, 4
      %v1610 = vshll.u32 %v1514, 16
      %v1612 = vrot.slane %v1610, 5
      %v1613 = vor.u32 %v1609, %v1612
      %v1614 = vrot.slane %v1613, 4
      %v1616 = vshll.u32 %v1515, 16
      %v1618 = vrot.slane %v1616, 5
      %v1619 = vsel %vm336, %v1614, %v1618
      %v1620 = vshrl.u32 %v1515, 16
      %v1622 = vrot.slane %v1620, 4
      %v1623 = vor.u32 %v1622, %v1618
      %v1624 = vrot.slane %v1623, 4
      %v1626 = vshll.u32 %v1544, 16
      %v1628 = vrot.slane %v1626, 5
      %v1629 = vsel %vm336, %v1624, %v1628
      %v1631 = vshrl.u32 %v1516, 16
      %v1633 = vrot.slane %v1631, 4
      %v1634 = vshll.u32 %v1516, 16
      %v1636 = vrot.slane %v1634, 5
      %v1637 = vor.u32 %v1633, %v1636
      %v1638 = vrot.slane %v1637, 4
      %v1640 = vshll.u32 %v1517, 16
      %v1642 = vrot.slane %v1640, 5
      %v1643 = vsel %vm336, %v1638, %v1642
      %v1644 = vshrl.u32 %v1517, 16
      %v1646 = vrot.slane %v1644, 4
      %v1647 = vor.u32 %v1646, %v1642
      %v1648 = vrot.slane %v1647, 4
      %v1650 = vshll.u32 %v1545, 16
      %v1652 = vrot.slane %v1650, 5
      %v1653 = vsel %vm336, %v1648, %v1652
      %v1655 = vshrl.u32 %v1518, 16
      %v1657 = vrot.slane %v1655, 4
      %v1658 = vshll.u32 %v1518, 16
      %v1660 = vrot.slane %v1658, 5
      %v1661 = vor.u32 %v1657, %v1660
      %v1662 = vrot.slane %v1661, 4
      %v1664 = vshll.u32 %v1519, 16
      %v1666 = vrot.slane %v1664, 5
      %v1667 = vsel %vm336, %v1662, %v1666
      %v1668 = vshrl.u32 %v1519, 16
      %v1670 = vrot.slane %v1668, 4
      %v1671 = vor.u32 %v1670, %v1666
      %v1672 = vrot.slane %v1671, 4
      %v1674 = vshll.u32 %v1546, 16
      %v1676 = vrot.slane %v1674, 5
      %v1677 = vsel %vm336, %v1672, %v1676
      %v1679 = vshrl.u32 %v1520, 16
      %v1681 = vrot.slane %v1679, 4
      %v1682 = vshll.u32 %v1520, 16
      %v1684 = vrot.slane %v1682, 5
      %v1685 = vor.u32 %v1681, %v1684
      %v1686 = vrot.slane %v1685, 4
      %v1688 = vshll.u32 %v1521, 16
      %v1690 = vrot.slane %v1688, 5
      %v1691 = vsel %vm336, %v1686, %v1690
      %v1692 = vshrl.u32 %v1521, 16
      %v1694 = vrot.slane %v1692, 4
      %v1695 = vor.u32 %v1694, %v1690
      %v1696 = vrot.slane %v1695, 4
      %v1698 = vshll.u32 %v1547, 16
      %v1700 = vrot.slane %v1698, 5
      %v1701 = vsel %vm336, %v1696, %v1700
      %v1703 = vshrl.u32 %v1522, 16
      %v1705 = vrot.slane %v1703, 4
      %v1706 = vshll.u32 %v1522, 16
      %v1708 = vrot.slane %v1706, 5
      %v1709 = vor.u32 %v1705, %v1708
      %v1710 = vrot.slane %v1709, 4
      %v1712 = vshll.u32 %v1523, 16
      %v1714 = vrot.slane %v1712, 5
      %v1715 = vsel %vm336, %v1710, %v1714
      %v1716 = vshrl.u32 %v1523, 16
      %v1718 = vrot.slane %v1716, 4
      %v1719 = vor.u32 %v1718, %v1714
      %v1720 = vrot.slane %v1719, 4
      %v1722 = vshll.u32 %v1548, 16
      %v1724 = vrot.slane %v1722, 5
      %v1725 = vsel %vm336, %v1720, %v1724
      %v1727 = vshrl.u32 %v1524, 16
      %v1729 = vrot.slane %v1727, 4
      %v1730 = vshll.u32 %v1524, 16
      %v1732 = vrot.slane %v1730, 5
      %v1733 = vor.u32 %v1729, %v1732
      %v1734 = vrot.slane %v1733, 4
      %v1736 = vshll.u32 %v1525, 16
      %v1738 = vrot.slane %v1736, 5
      %v1739 = vsel %vm336, %v1734, %v1738
      %v1740 = vshrl.u32 %v1525, 16
      %v1742 = vrot.slane %v1740, 4
      %v1743 = vor.u32 %v1742, %v1738
      %v1744 = vrot.slane %v1743, 4
      %v1746 = vshll.u32 %v1549, 16
      %v1748 = vrot.slane %v1746, 5
      %v1749 = vsel %vm336, %v1744, %v1748
      %v1751 = vshrl.u32 %v1526, 16
      %v1753 = vrot.slane %v1751, 4
      %v1754 = vshll.u32 %v1526, 16
      %v1756 = vrot.slane %v1754, 5
      %v1757 = vor.u32 %v1753, %v1756
      %v1758 = vrot.slane %v1757, 4
      %v1760 = vshll.u32 %v1527, 16
      %v1762 = vrot.slane %v1760, 5
      %v1763 = vsel %vm336, %v1758, %v1762
      %v1764 = vshrl.u32 %v1527, 16
      %v1766 = vrot.slane %v1764, 4
      %v1767 = vor.u32 %v1766, %v1762
      %v1768 = vrot.slane %v1767, 4
      %v1770 = vshll.u32 %v1550, 16
      %v1772 = vrot.slane %v1770, 5
      %v1773 = vsel %vm336, %v1768, %v1772
      %v1775 = vshrl.u32 %v1528, 16
      %v1777 = vrot.slane %v1775, 4
      %v1778 = vshll.u32 %v1528, 16
      %v1780 = vrot.slane %v1778, 5
      %v1781 = vor.u32 %v1777, %v1780
      %v1782 = vrot.slane %v1781, 4
      %v1784 = vshll.u32 %v1529, 16
      %v1786 = vrot.slane %v1784, 5
      %v1787 = vsel %vm336, %v1782, %v1786
      %v1788 = vshrl.u32 %v1529, 16
      %v1790 = vrot.slane %v1788, 4
      %v1791 = vor.u32 %v1790, %v1786
      %v1792 = vrot.slane %v1791, 4
      %v1794 = vshll.u32 %v1551, 16
      %v1796 = vrot.slane %v1794, 5
      %v1797 = vsel %vm336, %v1792, %v1796
      %v1799 = vshrl.u32 %v1530, 16
      %v1801 = vrot.slane %v1799, 4
      %v1802 = vshll.u32 %v1530, 16
      %v1804 = vrot.slane %v1802, 5
      %v1805 = vor.u32 %v1801, %v1804
      %v1806 = vrot.slane %v1805, 4
      %v1808 = vshll.u32 %v1531, 16
      %v1810 = vrot.slane %v1808, 5
      %v1811 = vsel %vm336, %v1806, %v1810
      %v1812 = vshrl.u32 %v1531, 16
      %v1814 = vrot.slane %v1812, 4
      %v1815 = vor.u32 %v1814, %v1810
      %v1816 = vrot.slane %v1815, 4
      %v1818 = vshll.u32 %v1552, 16
      %v1820 = vrot.slane %v1818, 5
      %v1821 = vsel %vm336, %v1816, %v1820
      %v1823 = vshrl.u32 %v1532, 16
      %v1825 = vrot.slane %v1823, 4
      %v1826 = vshll.u32 %v1532, 16
      %v1828 = vrot.slane %v1826, 5
      %v1829 = vor.u32 %v1825, %v1828
      %v1830 = vrot.slane %v1829, 4
      %v1832 = vshll.u32 %v1533, 16
      %v1834 = vrot.slane %v1832, 5
      %v1835 = vsel %vm336, %v1830, %v1834
      %v1836 = vshrl.u32 %v1533, 16
      %v1838 = vrot.slane %v1836, 4
      %v1839 = vor.u32 %v1838, %v1834
      %v1840 = vrot.slane %v1839, 4
      %v1842 = vshll.u32 %v1553, 16
      %v1844 = vrot.slane %v1842, 5
      %v1845 = vsel %vm336, %v1840, %v1844
      %v1847 = vshrl.u32 %v1534, 16
      %v1849 = vrot.slane %v1847, 4
      %v1850 = vshll.u32 %v1534, 16
      %v1852 = vrot.slane %v1850, 5
      %v1853 = vor.u32 %v1849, %v1852
      %v1854 = vrot.slane %v1853, 4
      %v1856 = vshll.u32 %v1535, 16
      %v1858 = vrot.slane %v1856, 5
      %v1859 = vsel %vm336, %v1854, %v1858
      %v1860 = vshrl.u32 %v1535, 16
      %v1862 = vrot.slane %v1860, 4
      %v1863 = vor.u32 %v1862, %v1858
      %v1864 = vrot.slane %v1863, 4
      %v1866 = vshll.u32 %v1554, 16
      %v1868 = vrot.slane %v1866, 5
      %v1869 = vsel %vm336, %v1864, %v1868
      %v1871 = vshrl.u32 %v1536, 16
      %v1873 = vrot.slane %v1871, 4
      %v1874 = vshll.u32 %v1536, 16
      %v1876 = vrot.slane %v1874, 5
      %v1877 = vor.u32 %v1873, %v1876
      %v1878 = vrot.slane %v1877, 4
      %v1880 = vshll.u32 %v1537, 16
      %v1882 = vrot.slane %v1880, 5
      %v1883 = vsel %vm336, %v1878, %v1882
      %v1884 = vshrl.u32 %v1537, 16
      %v1886 = vrot.slane %v1884, 4
      %v1887 = vor.u32 %v1886, %v1882
      %v1888 = vrot.slane %v1887, 4
      %v1890 = vshll.u32 %v1555, 16
      %v1892 = vrot.slane %v1890, 5
      %v1893 = vsel %vm336, %v1888, %v1892
      %v1895 = vshrl.u32 %v1538, 16
      %v1897 = vrot.slane %v1895, 4
      %v1898 = vshll.u32 %v1538, 16
      %v1900 = vrot.slane %v1898, 5
      %v1901 = vor.u32 %v1897, %v1900
      %v1902 = vrot.slane %v1901, 4
      %v1904 = vshll.u32 %v1539, 16
      %v1906 = vrot.slane %v1904, 5
      %v1907 = vsel %vm336, %v1902, %v1906
      %v1908 = vshrl.u32 %v1539, 16
      %v1910 = vrot.slane %v1908, 4
      %v1911 = vor.u32 %v1910, %v1906
      %v1912 = vrot.slane %v1911, 4
      %v1914 = vshll.u32 %v1556, 16
      %v1916 = vrot.slane %v1914, 5
      %v1917 = vsel %vm336, %v1912, %v1916
      %v1919 = vshrl.u32 %v1540, 16
      %v1921 = vrot.slane %v1919, 4
      %v1922 = vshll.u32 %v1540, 16
      %v1924 = vrot.slane %v1922, 5
      %v1925 = vor.u32 %v1921, %v1924
      %v1926 = vrot.slane %v1925, 4
      %v1928 = vshll.u32 %v1541, 16
      %v1930 = vrot.slane %v1928, 5
      %v1931 = vsel %vm336, %v1926, %v1930
      %v1932 = vshrl.u32 %v1541, 16
      %v1934 = vrot.slane %v1932, 4
      %v1935 = vor.u32 %v1934, %v1930
      %v1936 = vrot.slane %v1935, 4
      %v1938 = vshll.u32 %v1557, 16
      %v1940 = vrot.slane %v1938, 5
      %v1941 = vsel %vm336, %v1936, %v1940
      %v1942 = vld [vmem:[%s1509] sm:$0xe]
      %v1943 = vld [vmem:[%s1509 + $0xc] sm:$0xe]
      %v1944 = vld [vmem:[%s1509 + $0x18] sm:$0xe]
      %v1945 = vld [vmem:[%s1509 + $0x24] sm:$0xe]
      %v1946 = vld [vmem:[%s1509 + $0x30] sm:$0xe]
      %v1947 = vld [vmem:[%s1509 + $0x3c] sm:$0xe]
      %v1948 = vld [vmem:[%s1509 + $0x48] sm:$0xe]
      %v1949 = vld [vmem:[%s1509 + $0x54] sm:$0xe]
      %v1950 = vld [vmem:[%s1509 + $0x60] sm:$0xe]
      %v1951 = vld [vmem:[%s1509 + $0x6c] sm:$0xe]
      %v1952 = vld [vmem:[%s1509 + $0x78] sm:$0xe]
      %v1953 = vld [vmem:[%s1509 + $0x84] sm:$0xe]
      %v1954 = vld [vmem:[%s1509 + $0x90] sm:$0xe]
      %v1955 = vld [vmem:[%s1509 + $0x9c] sm:$0xe]
      %v1956 = vld [vmem:[%s1509 + $0xa8] sm:$0xe]
      %v1957 = vld [vmem:[%s1509 + $0xb4] sm:$0xe]
      %v2006 = vrot.slane %v1942, 5
      %v2007 = vrot.slane %v2006, 4
      %v2008 = vrot.slane %v1511, 5
      %v2009 = vsel %vm787, %v2007, %v2008
      %v2010 = vrot.slane %v2008, 4
      %v2011 = vrot.slane %v1542, 5
      %v2012 = vsel %vm787, %v2010, %v2011
      %v2013 = vrot.slane %v1943, 5
      %v2014 = vrot.slane %v2013, 4
      %v2015 = vrot.slane %v1513, 5
      %v2016 = vsel %vm787, %v2014, %v2015
      %v2017 = vrot.slane %v2015, 4
      %v2018 = vrot.slane %v1543, 5
      %v2019 = vsel %vm787, %v2017, %v2018
      %v2020 = vrot.slane %v1944, 5
      %v2021 = vrot.slane %v2020, 4
      %v2022 = vrot.slane %v1515, 5
      %v2023 = vsel %vm787, %v2021, %v2022
      %v2024 = vrot.slane %v2022, 4
      %v2025 = vrot.slane %v1544, 5
      %v2026 = vsel %vm787, %v2024, %v2025
      %v2027 = vrot.slane %v1945, 5
      %v2028 = vrot.slane %v2027, 4
      %v2029 = vrot.slane %v1517, 5
      %v2030 = vsel %vm787, %v2028, %v2029
      %v2031 = vrot.slane %v2029, 4
      %v2032 = vrot.slane %v1545, 5
      %v2033 = vsel %vm787, %v2031, %v2032
      %v2034 = vrot.slane %v1946, 5
      %v2035 = vrot.slane %v2034, 4
      %v2036 = vrot.slane %v1519, 5
      %v2037 = vsel %vm787, %v2035, %v2036
      %v2038 = vrot.slane %v2036, 4
      %v2039 = vrot.slane %v1546, 5
      %v2040 = vsel %vm787, %v2038, %v2039
      %v2041 = vrot.slane %v1947, 5
      %v2042 = vrot.slane %v2041, 4
      %v2043 = vrot.slane %v1521, 5
      %v2044 = vsel %vm787, %v2042, %v2043
      %v2045 = vrot.slane %v2043, 4
      %v2046 = vrot.slane %v1547, 5
      %v2047 = vsel %vm787, %v2045, %v2046
      %v2048 = vrot.slane %v1948, 5
      %v2049 = vrot.slane %v2048, 4
      %v2050 = vrot.slane %v1523, 5
      %v2051 = vsel %vm787, %v2049, %v2050
      %v2052 = vrot.slane %v2050, 4
      %v2053 = vrot.slane %v1548, 5
      %v2054 = vsel %vm787, %v2052, %v2053
      %v2055 = vrot.slane %v1949, 5
      %v2056 = vrot.slane %v2055, 4
      %v2057 = vrot.slane %v1525, 5
      %v2058 = vsel %vm787, %v2056, %v2057
      %v2059 = vrot.slane %v2057, 4
      %v2060 = vrot.slane %v1549, 5
      %v2061 = vsel %vm787, %v2059, %v2060
      %v2062 = vrot.slane %v1950, 5
      %v2063 = vrot.slane %v2062, 4
      %v2064 = vrot.slane %v1527, 5
      %v2065 = vsel %vm787, %v2063, %v2064
      %v2066 = vrot.slane %v2064, 4
      %v2067 = vrot.slane %v1550, 5
      %v2068 = vsel %vm787, %v2066, %v2067
      %v2069 = vrot.slane %v1951, 5
      %v2070 = vrot.slane %v2069, 4
      %v2071 = vrot.slane %v1529, 5
      %v2072 = vsel %vm787, %v2070, %v2071
      %v2073 = vrot.slane %v2071, 4
      %v2074 = vrot.slane %v1551, 5
      %v2075 = vsel %vm787, %v2073, %v2074
      %v2076 = vrot.slane %v1952, 5
      %v2077 = vrot.slane %v2076, 4
      %v2078 = vrot.slane %v1531, 5
      %v2079 = vsel %vm787, %v2077, %v2078
      %v2080 = vrot.slane %v2078, 4
      %v2081 = vrot.slane %v1552, 5
      %v2082 = vsel %vm787, %v2080, %v2081
      %v2083 = vrot.slane %v1953, 5
      %v2084 = vrot.slane %v2083, 4
      %v2085 = vrot.slane %v1533, 5
      %v2086 = vsel %vm787, %v2084, %v2085
      %v2087 = vrot.slane %v2085, 4
      %v2088 = vrot.slane %v1553, 5
      %v2089 = vsel %vm787, %v2087, %v2088
      %v2090 = vrot.slane %v1954, 5
      %v2091 = vrot.slane %v2090, 4
      %v2092 = vrot.slane %v1535, 5
      %v2093 = vsel %vm787, %v2091, %v2092
      %v2094 = vrot.slane %v2092, 4
      %v2095 = vrot.slane %v1554, 5
      %v2096 = vsel %vm787, %v2094, %v2095
      %v2097 = vrot.slane %v1955, 5
      %v2098 = vrot.slane %v2097, 4
      %v2099 = vrot.slane %v1537, 5
      %v2100 = vsel %vm787, %v2098, %v2099
      %v2101 = vrot.slane %v2099, 4
      %v2102 = vrot.slane %v1555, 5
      %v2103 = vsel %vm787, %v2101, %v2102
      %v2104 = vrot.slane %v1956, 5
      %v2105 = vrot.slane %v2104, 4
      %v2106 = vrot.slane %v1539, 5
      %v2107 = vsel %vm787, %v2105, %v2106
      %v2108 = vrot.slane %v2106, 4
      %v2109 = vrot.slane %v1556, 5
      %v2110 = vsel %vm787, %v2108, %v2109
      %v2111 = vrot.slane %v1957, 5
      %v2112 = vrot.slane %v2111, 4
      %v2113 = vrot.slane %v1541, 5
      %v2114 = vsel %vm787, %v2112, %v2113
      %v2115 = vrot.slane %v2113, 4
      %v2116 = vrot.slane %v1557, 5
      %v2117 = vsel %vm787, %v2115, %v2116
      %v2134 = vunpack.c.l.b16 %v286
      %v2135 = vunpack.c.l.b16 %v287
      %v2136 = vunpack.c.l.b16 %v288
      %v2137 = vunpack.c.l.b16 %v289
      %v2138 = vunpack.c.l.b16 %v290
      %v2139 = vunpack.c.l.b16 %v291
      %v2140 = vunpack.c.l.b16 %v292
      %v2141 = vunpack.c.l.b16 %v293
      %v2142 = vunpack.c.l.b16 %v294
      %v2143 = vunpack.c.l.b16 %v295
      %v2144 = vunpack.c.l.b16 %v296
      %v2145 = vunpack.c.l.b16 %v297
      %v2146 = vunpack.c.l.b16 %v298
      %v2147 = vunpack.c.l.b16 %v299
      %v2148 = vunpack.c.l.b16 %v300
      %v2149 = vunpack.c.l.b16 %v301
      %v2150 = vunpack.c.l.b16 %v302
      %v2151 = vunpack.c.l.b16 %v303
      %v2152 = vunpack.c.l.b16 %v304
      %v2153 = vunpack.c.l.b16 %v305
      %v2154 = vunpack.c.l.b16 %v306
      %v2155 = vunpack.c.l.b16 %v307
      %v2156 = vunpack.c.l.b16 %v308
      %v2157 = vunpack.c.l.b16 %v309
      %v2158 = vunpack.c.l.b16 %v310
      %v2159 = vunpack.c.l.b16 %v311
      %v2160 = vunpack.c.l.b16 %v312
      %v2161 = vunpack.c.l.b16 %v313
      %v2162 = vunpack.c.l.b16 %v314
      %v2163 = vunpack.c.l.b16 %v315
      %v2164 = vunpack.c.l.b16 %v316
      %v2165 = vunpack.c.l.b16 %v317
      %v2166 = vpack.c.b16 %v2135, %v2134
      %v2167 = vpack.c.b16 %v2137, %v2136
      %v2168 = vpack.c.b16 %v2139, %v2138
      %v2169 = vpack.c.b16 %v2141, %v2140
      %v2170 = vpack.c.b16 %v2143, %v2142
      %v2171 = vpack.c.b16 %v2145, %v2144
      %v2172 = vpack.c.b16 %v2147, %v2146
      %v2173 = vpack.c.b16 %v2149, %v2148
      %v2174 = vpack.c.b16 %v2151, %v2150
      %v2175 = vpack.c.b16 %v2153, %v2152
      %v2176 = vpack.c.b16 %v2155, %v2154
      %v2177 = vpack.c.b16 %v2157, %v2156
      %v2178 = vpack.c.b16 %v2159, %v2158
      %v2179 = vpack.c.b16 %v2161, %v2160
      %v2180 = vpack.c.b16 %v2163, %v2162
      %v2181 = vpack.c.b16 %v2165, %v2164
      %v2198 = vunpack.c.l.b16 %v350
      %v2199 = vunpack.c.l.b16 %v360
      %v2200 = vunpack.c.l.b16 %v374
      %v2201 = vunpack.c.l.b16 %v384
      %v2202 = vunpack.c.l.b16 %v398
      %v2203 = vunpack.c.l.b16 %v408
      %v2204 = vunpack.c.l.b16 %v422
      %v2205 = vunpack.c.l.b16 %v432
      %v2206 = vunpack.c.l.b16 %v446
      %v2207 = vunpack.c.l.b16 %v456
      %v2208 = vunpack.c.l.b16 %v470
      %v2209 = vunpack.c.l.b16 %v480
      %v2210 = vunpack.c.l.b16 %v494
      %v2211 = vunpack.c.l.b16 %v504
      %v2212 = vunpack.c.l.b16 %v518
      %v2213 = vunpack.c.l.b16 %v528
      %v2214 = vunpack.c.l.b16 %v542
      %v2215 = vunpack.c.l.b16 %v552
      %v2216 = vunpack.c.l.b16 %v566
      %v2217 = vunpack.c.l.b16 %v576
      %v2218 = vunpack.c.l.b16 %v590
      %v2219 = vunpack.c.l.b16 %v600
      %v2220 = vunpack.c.l.b16 %v614
      %v2221 = vunpack.c.l.b16 %v624
      %v2222 = vunpack.c.l.b16 %v638
      %v2223 = vunpack.c.l.b16 %v648
      %v2224 = vunpack.c.l.b16 %v662
      %v2225 = vunpack.c.l.b16 %v672
      %v2226 = vunpack.c.l.b16 %v686
      %v2227 = vunpack.c.l.b16 %v696
      %v2228 = vunpack.c.l.b16 %v710
      %v2229 = vunpack.c.l.b16 %v720
      %v2230 = vpack.c.b16 %v2199, %v2198
      %v2231 = vpack.c.b16 %v2201, %v2200
      %v2232 = vpack.c.b16 %v2203, %v2202
      %v2233 = vpack.c.b16 %v2205, %v2204
      %v2234 = vpack.c.b16 %v2207, %v2206
      %v2235 = vpack.c.b16 %v2209, %v2208
      %v2236 = vpack.c.b16 %v2211, %v2210
      %v2237 = vpack.c.b16 %v2213, %v2212
      %v2238 = vpack.c.b16 %v2215, %v2214
      %v2239 = vpack.c.b16 %v2217, %v2216
      %v2240 = vpack.c.b16 %v2219, %v2218
      %v2241 = vpack.c.b16 %v2221, %v2220
      %v2242 = vpack.c.b16 %v2223, %v2222
      %v2243 = vpack.c.b16 %v2225, %v2224
      %v2244 = vpack.c.b16 %v2227, %v2226
      %v2245 = vpack.c.b16 %v2229, %v2228
      %v2262 = vunpack.c.l.b16 %v791
      %v2263 = vunpack.c.l.b16 %v794
      %v2264 = vunpack.c.l.b16 %v798
      %v2265 = vunpack.c.l.b16 %v801
      %v2266 = vunpack.c.l.b16 %v805
      %v2267 = vunpack.c.l.b16 %v808
      %v2268 = vunpack.c.l.b16 %v812
      %v2269 = vunpack.c.l.b16 %v815
      %v2270 = vunpack.c.l.b16 %v819
      %v2271 = vunpack.c.l.b16 %v822
      %v2272 = vunpack.c.l.b16 %v826
      %v2273 = vunpack.c.l.b16 %v829
      %v2274 = vunpack.c.l.b16 %v833
      %v2275 = vunpack.c.l.b16 %v836
      %v2276 = vunpack.c.l.b16 %v840
      %v2277 = vunpack.c.l.b16 %v843
      %v2278 = vunpack.c.l.b16 %v847
      %v2279 = vunpack.c.l.b16 %v850
      %v2280 = vunpack.c.l.b16 %v854
      %v2281 = vunpack.c.l.b16 %v857
      %v2282 = vunpack.c.l.b16 %v861
      %v2283 = vunpack.c.l.b16 %v864
      %v2284 = vunpack.c.l.b16 %v868
      %v2285 = vunpack.c.l.b16 %v871
      %v2286 = vunpack.c.l.b16 %v875
      %v2287 = vunpack.c.l.b16 %v878
      %v2288 = vunpack.c.l.b16 %v882
      %v2289 = vunpack.c.l.b16 %v885
      %v2290 = vunpack.c.l.b16 %v889
      %v2291 = vunpack.c.l.b16 %v892
      %v2292 = vunpack.c.l.b16 %v896
      %v2293 = vunpack.c.l.b16 %v899
      %v2294 = vpack.c.b16 %v2263, %v2262
      %v2295 = vpack.c.b16 %v2265, %v2264
      %v2296 = vpack.c.b16 %v2267, %v2266
      %v2297 = vpack.c.b16 %v2269, %v2268
      %v2298 = vpack.c.b16 %v2271, %v2270
      %v2299 = vpack.c.b16 %v2273, %v2272
      %v2300 = vpack.c.b16 %v2275, %v2274
      %v2301 = vpack.c.b16 %v2277, %v2276
      %v2302 = vpack.c.b16 %v2279, %v2278
      %v2303 = vpack.c.b16 %v2281, %v2280
      %v2304 = vpack.c.b16 %v2283, %v2282
      %v2305 = vpack.c.b16 %v2285, %v2284
      %v2306 = vpack.c.b16 %v2287, %v2286
      %v2307 = vpack.c.b16 %v2289, %v2288
      %v2308 = vpack.c.b16 %v2291, %v2290
      %v2309 = vpack.c.b16 %v2293, %v2292
      %v2342 = vunpack.c.l.b16 %v901
      %v2343 = vunpack.c.l.b16 %v902
      %v2344 = vunpack.c.l.b16 %v903
      %v2345 = vunpack.c.l.b16 %v904
      %v2346 = vunpack.c.l.b16 %v905
      %v2347 = vunpack.c.l.b16 %v906
      %v2348 = vunpack.c.l.b16 %v907
      %v2349 = vunpack.c.l.b16 %v908
      %v2350 = vunpack.c.l.b16 %v909
      %v2351 = vunpack.c.l.b16 %v910
      %v2352 = vunpack.c.l.b16 %v911
      %v2353 = vunpack.c.l.b16 %v912
      %v2354 = vunpack.c.l.b16 %v913
      %v2355 = vunpack.c.l.b16 %v914
      %v2356 = vunpack.c.l.b16 %v915
      %v2357 = vunpack.c.l.b16 %v916
      %v2358 = vunpack.c.l.b16 %v917
      %v2359 = vunpack.c.l.b16 %v918
      %v2360 = vunpack.c.l.b16 %v919
      %v2361 = vunpack.c.l.b16 %v920
      %v2362 = vunpack.c.l.b16 %v921
      %v2363 = vunpack.c.l.b16 %v922
      %v2364 = vunpack.c.l.b16 %v923
      %v2365 = vunpack.c.l.b16 %v924
      %v2366 = vunpack.c.l.b16 %v925
      %v2367 = vunpack.c.l.b16 %v926
      %v2368 = vunpack.c.l.b16 %v927
      %v2369 = vunpack.c.l.b16 %v928
      %v2370 = vunpack.c.l.b16 %v929
      %v2371 = vunpack.c.l.b16 %v930
      %v2372 = vunpack.c.l.b16 %v931
      %v2373 = vunpack.c.l.b16 %v932
      %v2374 = vpack.c.b16 %v2343, %v2342
      %v2375 = vpack.c.b16 %v2345, %v2344
      %v2376 = vpack.c.b16 %v2347, %v2346
      %v2377 = vpack.c.b16 %v2349, %v2348
      %v2378 = vpack.c.b16 %v2351, %v2350
      %v2379 = vpack.c.b16 %v2353, %v2352
      %v2380 = vpack.c.b16 %v2355, %v2354
      %v2381 = vpack.c.b16 %v2357, %v2356
      %v2382 = vpack.c.b16 %v2359, %v2358
      %v2383 = vpack.c.b16 %v2361, %v2360
      %v2384 = vpack.c.b16 %v2363, %v2362
      %v2385 = vpack.c.b16 %v2365, %v2364
      %v2386 = vpack.c.b16 %v2367, %v2366
      %v2387 = vpack.c.b16 %v2369, %v2368
      %v2388 = vpack.c.b16 %v2371, %v2370
      %v2389 = vpack.c.b16 %v2373, %v2372
      %v2406 = vunpack.c.l.b16 %v962
      %v2407 = vunpack.c.l.b16 %v972
      %v2408 = vunpack.c.l.b16 %v986
      %v2409 = vunpack.c.l.b16 %v996
      %v2410 = vunpack.c.l.b16 %v1010
      %v2411 = vunpack.c.l.b16 %v1020
      %v2412 = vunpack.c.l.b16 %v1034
      %v2413 = vunpack.c.l.b16 %v1044
      %v2414 = vunpack.c.l.b16 %v1058
      %v2415 = vunpack.c.l.b16 %v1068
      %v2416 = vunpack.c.l.b16 %v1082
      %v2417 = vunpack.c.l.b16 %v1092
      %v2418 = vunpack.c.l.b16 %v1106
      %v2419 = vunpack.c.l.b16 %v1116
      %v2420 = vunpack.c.l.b16 %v1130
      %v2421 = vunpack.c.l.b16 %v1140
      %v2422 = vunpack.c.l.b16 %v1154
      %v2423 = vunpack.c.l.b16 %v1164
      %v2424 = vunpack.c.l.b16 %v1178
      %v2425 = vunpack.c.l.b16 %v1188
      %v2426 = vunpack.c.l.b16 %v1202
      %v2427 = vunpack.c.l.b16 %v1212
      %v2428 = vunpack.c.l.b16 %v1226
      %v2429 = vunpack.c.l.b16 %v1236
      %v2430 = vunpack.c.l.b16 %v1250
      %v2431 = vunpack.c.l.b16 %v1260
      %v2432 = vunpack.c.l.b16 %v1274
      %v2433 = vunpack.c.l.b16 %v1284
      %v2434 = vunpack.c.l.b16 %v1298
      %v2435 = vunpack.c.l.b16 %v1308
      %v2436 = vunpack.c.l.b16 %v1322
      %v2437 = vunpack.c.l.b16 %v1332
      %v2438 = vpack.c.b16 %v2407, %v2406
      %v2439 = vpack.c.b16 %v2409, %v2408
      %v2440 = vpack.c.b16 %v2411, %v2410
      %v2441 = vpack.c.b16 %v2413, %v2412
      %v2442 = vpack.c.b16 %v2415, %v2414
      %v2443 = vpack.c.b16 %v2417, %v2416
      %v2444 = vpack.c.b16 %v2419, %v2418
      %v2445 = vpack.c.b16 %v2421, %v2420
      %v2446 = vpack.c.b16 %v2423, %v2422
      %v2447 = vpack.c.b16 %v2425, %v2424
      %v2448 = vpack.c.b16 %v2427, %v2426
      %v2449 = vpack.c.b16 %v2429, %v2428
      %v2450 = vpack.c.b16 %v2431, %v2430
      %v2451 = vpack.c.b16 %v2433, %v2432
      %v2452 = vpack.c.b16 %v2435, %v2434
      %v2453 = vpack.c.b16 %v2437, %v2436
      %v2470 = vunpack.c.l.b16 %v1400
      %v2471 = vunpack.c.l.b16 %v1403
      %v2472 = vunpack.c.l.b16 %v1407
      %v2473 = vunpack.c.l.b16 %v1410
      %v2474 = vunpack.c.l.b16 %v1414
      %v2475 = vunpack.c.l.b16 %v1417
      %v2476 = vunpack.c.l.b16 %v1421
      %v2477 = vunpack.c.l.b16 %v1424
      %v2478 = vunpack.c.l.b16 %v1428
      %v2479 = vunpack.c.l.b16 %v1431
      %v2480 = vunpack.c.l.b16 %v1435
      %v2481 = vunpack.c.l.b16 %v1438
      %v2482 = vunpack.c.l.b16 %v1442
      %v2483 = vunpack.c.l.b16 %v1445
      %v2484 = vunpack.c.l.b16 %v1449
      %v2485 = vunpack.c.l.b16 %v1452
      %v2486 = vunpack.c.l.b16 %v1456
      %v2487 = vunpack.c.l.b16 %v1459
      %v2488 = vunpack.c.l.b16 %v1463
      %v2489 = vunpack.c.l.b16 %v1466
      %v2490 = vunpack.c.l.b16 %v1470
      %v2491 = vunpack.c.l.b16 %v1473
      %v2492 = vunpack.c.l.b16 %v1477
      %v2493 = vunpack.c.l.b16 %v1480
      %v2494 = vunpack.c.l.b16 %v1484
      %v2495 = vunpack.c.l.b16 %v1487
      %v2496 = vunpack.c.l.b16 %v1491
      %v2497 = vunpack.c.l.b16 %v1494
      %v2498 = vunpack.c.l.b16 %v1498
      %v2499 = vunpack.c.l.b16 %v1501
      %v2500 = vunpack.c.l.b16 %v1505
      %v2501 = vunpack.c.l.b16 %v1508
      %v2502 = vpack.c.b16 %v2471, %v2470
      %v2503 = vpack.c.b16 %v2473, %v2472
      %v2504 = vpack.c.b16 %v2475, %v2474
      %v2505 = vpack.c.b16 %v2477, %v2476
      %v2506 = vpack.c.b16 %v2479, %v2478
      %v2507 = vpack.c.b16 %v2481, %v2480
      %v2508 = vpack.c.b16 %v2483, %v2482
      %v2509 = vpack.c.b16 %v2485, %v2484
      %v2510 = vpack.c.b16 %v2487, %v2486
      %v2511 = vpack.c.b16 %v2489, %v2488
      %v2512 = vpack.c.b16 %v2491, %v2490
      %v2513 = vpack.c.b16 %v2493, %v2492
      %v2514 = vpack.c.b16 %v2495, %v2494
      %v2515 = vpack.c.b16 %v2497, %v2496
      %v2516 = vpack.c.b16 %v2499, %v2498
      %v2517 = vpack.c.b16 %v2501, %v2500
      %v2550 = vunpack.c.l.b16 %v1510
      %v2551 = vunpack.c.l.b16 %v1511
      %v2552 = vunpack.c.l.b16 %v1512
      %v2553 = vunpack.c.l.b16 %v1513
      %v2554 = vunpack.c.l.b16 %v1514
      %v2555 = vunpack.c.l.b16 %v1515
      %v2556 = vunpack.c.l.b16 %v1516
      %v2557 = vunpack.c.l.b16 %v1517
      %v2558 = vunpack.c.l.b16 %v1518
      %v2559 = vunpack.c.l.b16 %v1519
      %v2560 = vunpack.c.l.b16 %v1520
      %v2561 = vunpack.c.l.b16 %v1521
      %v2562 = vunpack.c.l.b16 %v1522
      %v2563 = vunpack.c.l.b16 %v1523
      %v2564 = vunpack.c.l.b16 %v1524
      %v2565 = vunpack.c.l.b16 %v1525
      %v2566 = vunpack.c.l.b16 %v1526
      %v2567 = vunpack.c.l.b16 %v1527
      %v2568 = vunpack.c.l.b16 %v1528
      %v2569 = vunpack.c.l.b16 %v1529
      %v2570 = vunpack.c.l.b16 %v1530
      %v2571 = vunpack.c.l.b16 %v1531
      %v2572 = vunpack.c.l.b16 %v1532
      %v2573 = vunpack.c.l.b16 %v1533
      %v2574 = vunpack.c.l.b16 %v1534
      %v2575 = vunpack.c.l.b16 %v1535
      %v2576 = vunpack.c.l.b16 %v1536
      %v2577 = vunpack.c.l.b16 %v1537
      %v2578 = vunpack.c.l.b16 %v1538
      %v2579 = vunpack.c.l.b16 %v1539
      %v2580 = vunpack.c.l.b16 %v1540
      %v2581 = vunpack.c.l.b16 %v1541
      %v2582 = vpack.c.b16 %v2551, %v2550
      %v2583 = vpack.c.b16 %v2553, %v2552
      %v2584 = vpack.c.b16 %v2555, %v2554
      %v2585 = vpack.c.b16 %v2557, %v2556
      %v2586 = vpack.c.b16 %v2559, %v2558
      %v2587 = vpack.c.b16 %v2561, %v2560
      %v2588 = vpack.c.b16 %v2563, %v2562
      %v2589 = vpack.c.b16 %v2565, %v2564
      %v2590 = vpack.c.b16 %v2567, %v2566
      %v2591 = vpack.c.b16 %v2569, %v2568
      %v2592 = vpack.c.b16 %v2571, %v2570
      %v2593 = vpack.c.b16 %v2573, %v2572
      %v2594 = vpack.c.b16 %v2575, %v2574
      %v2595 = vpack.c.b16 %v2577, %v2576
      %v2596 = vpack.c.b16 %v2579, %v2578
      %v2597 = vpack.c.b16 %v2581, %v2580
      %v2614 = vunpack.c.l.b16 %v1571
      %v2615 = vunpack.c.l.b16 %v1581
      %v2616 = vunpack.c.l.b16 %v1595
      %v2617 = vunpack.c.l.b16 %v1605
      %v2618 = vunpack.c.l.b16 %v1619
      %v2619 = vunpack.c.l.b16 %v1629
      %v2620 = vunpack.c.l.b16 %v1643
      %v2621 = vunpack.c.l.b16 %v1653
      %v2622 = vunpack.c.l.b16 %v1667
      %v2623 = vunpack.c.l.b16 %v1677
      %v2624 = vunpack.c.l.b16 %v1691
      %v2625 = vunpack.c.l.b16 %v1701
      %v2626 = vunpack.c.l.b16 %v1715
      %v2627 = vunpack.c.l.b16 %v1725
      %v2628 = vunpack.c.l.b16 %v1739
      %v2629 = vunpack.c.l.b16 %v1749
      %v2630 = vunpack.c.l.b16 %v1763
      %v2631 = vunpack.c.l.b16 %v1773
      %v2632 = vunpack.c.l.b16 %v1787
      %v2633 = vunpack.c.l.b16 %v1797
      %v2634 = vunpack.c.l.b16 %v1811
      %v2635 = vunpack.c.l.b16 %v1821
      %v2636 = vunpack.c.l.b16 %v1835
      %v2637 = vunpack.c.l.b16 %v1845
      %v2638 = vunpack.c.l.b16 %v1859
      %v2639 = vunpack.c.l.b16 %v1869
      %v2640 = vunpack.c.l.b16 %v1883
      %v2641 = vunpack.c.l.b16 %v1893
      %v2642 = vunpack.c.l.b16 %v1907
      %v2643 = vunpack.c.l.b16 %v1917
      %v2644 = vunpack.c.l.b16 %v1931
      %v2645 = vunpack.c.l.b16 %v1941
      %v2646 = vpack.c.b16 %v2615, %v2614
      %v2647 = vpack.c.b16 %v2617, %v2616
      %v2648 = vpack.c.b16 %v2619, %v2618
      %v2649 = vpack.c.b16 %v2621, %v2620
      %v2650 = vpack.c.b16 %v2623, %v2622
      %v2651 = vpack.c.b16 %v2625, %v2624
      %v2652 = vpack.c.b16 %v2627, %v2626
      %v2653 = vpack.c.b16 %v2629, %v2628
      %v2654 = vpack.c.b16 %v2631, %v2630
      %v2655 = vpack.c.b16 %v2633, %v2632
      %v2656 = vpack.c.b16 %v2635, %v2634
      %v2657 = vpack.c.b16 %v2637, %v2636
      %v2658 = vpack.c.b16 %v2639, %v2638
      %v2659 = vpack.c.b16 %v2641, %v2640
      %v2660 = vpack.c.b16 %v2643, %v2642
      %v2661 = vpack.c.b16 %v2645, %v2644
      %v2678 = vunpack.c.l.b16 %v2009
      %v2679 = vunpack.c.l.b16 %v2012
      %v2680 = vunpack.c.l.b16 %v2016
      %v2681 = vunpack.c.l.b16 %v2019
      %v2682 = vunpack.c.l.b16 %v2023
      %v2683 = vunpack.c.l.b16 %v2026
      %v2684 = vunpack.c.l.b16 %v2030
      %v2685 = vunpack.c.l.b16 %v2033
      %v2686 = vunpack.c.l.b16 %v2037
      %v2687 = vunpack.c.l.b16 %v2040
      %v2688 = vunpack.c.l.b16 %v2044
      %v2689 = vunpack.c.l.b16 %v2047
      %v2690 = vunpack.c.l.b16 %v2051
      %v2691 = vunpack.c.l.b16 %v2054
      %v2692 = vunpack.c.l.b16 %v2058
      %v2693 = vunpack.c.l.b16 %v2061
      %v2694 = vunpack.c.l.b16 %v2065
      %v2695 = vunpack.c.l.b16 %v2068
      %v2696 = vunpack.c.l.b16 %v2072
      %v2697 = vunpack.c.l.b16 %v2075
      %v2698 = vunpack.c.l.b16 %v2079
      %v2699 = vunpack.c.l.b16 %v2082
      %v2700 = vunpack.c.l.b16 %v2086
      %v2701 = vunpack.c.l.b16 %v2089
      %v2702 = vunpack.c.l.b16 %v2093
      %v2703 = vunpack.c.l.b16 %v2096
      %v2704 = vunpack.c.l.b16 %v2100
      %v2705 = vunpack.c.l.b16 %v2103
      %v2706 = vunpack.c.l.b16 %v2107
      %v2707 = vunpack.c.l.b16 %v2110
      %v2708 = vunpack.c.l.b16 %v2114
      %v2709 = vunpack.c.l.b16 %v2117
      %v2710 = vpack.c.b16 %v2679, %v2678
      %v2711 = vpack.c.b16 %v2681, %v2680
      %v2712 = vpack.c.b16 %v2683, %v2682
      %v2713 = vpack.c.b16 %v2685, %v2684
      %v2714 = vpack.c.b16 %v2687, %v2686
      %v2715 = vpack.c.b16 %v2689, %v2688
      %v2716 = vpack.c.b16 %v2691, %v2690
      %v2717 = vpack.c.b16 %v2693, %v2692
      %v2718 = vpack.c.b16 %v2695, %v2694
      %v2719 = vpack.c.b16 %v2697, %v2696
      %v2720 = vpack.c.b16 %v2699, %v2698
      %v2721 = vpack.c.b16 %v2701, %v2700
      %v2722 = vpack.c.b16 %v2703, %v2702
      %v2723 = vpack.c.b16 %v2705, %v2704
      %v2724 = vpack.c.b16 %v2707, %v2706
      %v2725 = vpack.c.b16 %v2709, %v2708
      %v2742 = vld [vmem:[%s1] sm:$0xf]
      %v2743 = vld [vmem:[%s1 + $0x4] sm:$0xf]
      %v2744 = vld [vmem:[%s1 + $0x8] sm:$0xf]
      %v2745 = vld [vmem:[%s1 + $0xc] sm:$0xf]
      %v2746 = vld [vmem:[%s1 + $0x10] sm:$0xf]
      %v2747 = vld [vmem:[%s1 + $0x14] sm:$0xf]
      %v2748 = vld [vmem:[%s1 + $0x18] sm:$0xf]
      %v2749 = vld [vmem:[%s1 + $0x1c] sm:$0xf]
      %v2750 = vld [vmem:[%s1 + $0x20] sm:$0xf]
      %v2751 = vld [vmem:[%s1 + $0x24] sm:$0xf]
      %v2752 = vld [vmem:[%s1 + $0x28] sm:$0xf]
      %v2753 = vld [vmem:[%s1 + $0x2c] sm:$0xf]
      %v2754 = vld [vmem:[%s1 + $0x30] sm:$0xf]
      %v2755 = vld [vmem:[%s1 + $0x34] sm:$0xf]
      %v2756 = vld [vmem:[%s1 + $0x38] sm:$0xf]
      %v2757 = vld [vmem:[%s1 + $0x3c] sm:$0xf]
      %v2758 = vld [vmem:[%s1 + $0x40] sm:$0xf]
      %v2759 = vld [vmem:[%s1 + $0x44] sm:$0xf]
      %v2760 = vld [vmem:[%s1 + $0x48] sm:$0xf]
      %v2761 = vld [vmem:[%s1 + $0x4c] sm:$0xf]
      %v2762 = vld [vmem:[%s1 + $0x50] sm:$0xf]
      %v2763 = vld [vmem:[%s1 + $0x54] sm:$0xf]
      %v2764 = vld [vmem:[%s1 + $0x58] sm:$0xf]
      %v2765 = vld [vmem:[%s1 + $0x5c] sm:$0xf]
      %v2766 = vld [vmem:[%s1 + $0x60] sm:$0xf]
      %v2767 = vld [vmem:[%s1 + $0x64] sm:$0xf]
      %v2768 = vld [vmem:[%s1 + $0x68] sm:$0xf]
      %v2769 = vld [vmem:[%s1 + $0x6c] sm:$0xf]
      %v2770 = vld [vmem:[%s1 + $0x70] sm:$0xf]
      %v2771 = vld [vmem:[%s1 + $0x74] sm:$0xf]
      %v2772 = vld [vmem:[%s1 + $0x78] sm:$0xf]
      %v2773 = vld [vmem:[%s1 + $0x7c] sm:$0xf]
      %v2774 = vld [vmem:[%s1 + $0x80] sm:$0xf]
      %v2775 = vld [vmem:[%s1 + $0x84] sm:$0xf]
      %v2776 = vld [vmem:[%s1 + $0x88] sm:$0xf]
      %v2777 = vld [vmem:[%s1 + $0x8c] sm:$0xf]
      %v2778 = vld [vmem:[%s1 + $0x90] sm:$0xf]
      %v2779 = vld [vmem:[%s1 + $0x94] sm:$0xf]
      %v2780 = vld [vmem:[%s1 + $0x98] sm:$0xf]
      %v2781 = vld [vmem:[%s1 + $0x9c] sm:$0xf]
      %v2782 = vld [vmem:[%s1 + $0xa0] sm:$0xf]
      %v2783 = vld [vmem:[%s1 + $0xa4] sm:$0xf]
      %v2784 = vld [vmem:[%s1 + $0xa8] sm:$0xf]
      %v2785 = vld [vmem:[%s1 + $0xac] sm:$0xf]
      %v2786 = vld [vmem:[%s1 + $0xb0] sm:$0xf]
      %v2787 = vld [vmem:[%s1 + $0xb4] sm:$0xf]
      %v2788 = vld [vmem:[%s1 + $0xb8] sm:$0xf]
      %v2789 = vld [vmem:[%s1 + $0xbc] sm:$0xf]
      %v2790 = vld [vmem:[%s1 + $0xc0] sm:$0xf]
      %v2791 = vld [vmem:[%s1 + $0xc4] sm:$0xf]
      %v2792 = vld [vmem:[%s1 + $0xc8] sm:$0xf]
      %v2793 = vld [vmem:[%s1 + $0xcc] sm:$0xf]
      %v2794 = vld [vmem:[%s1 + $0xd0] sm:$0xf]
      %v2795 = vld [vmem:[%s1 + $0xd4] sm:$0xf]
      %v2796 = vld [vmem:[%s1 + $0xd8] sm:$0xf]
      %v2797 = vld [vmem:[%s1 + $0xdc] sm:$0xf]
      %v2798 = vld [vmem:[%s1 + $0xe0] sm:$0xf]
      %v2799 = vld [vmem:[%s1 + $0xe4] sm:$0xf]
      %v2800 = vld [vmem:[%s1 + $0xe8] sm:$0xf]
      %v2801 = vld [vmem:[%s1 + $0xec] sm:$0xf]
      %v2802 = vld [vmem:[%s1 + $0xf0] sm:$0xf]
      %v2803 = vld [vmem:[%s1 + $0xf4] sm:$0xf]
      %v2804 = vld [vmem:[%s1 + $0xf8] sm:$0xf]
      %v2805 = vld [vmem:[%s1 + $0xfc] sm:$0xf]
      %v2806 = vld [vmem:[%s1 + $0x100] sm:$0xf]
      %v2807 = vld [vmem:[%s1 + $0x104] sm:$0xf]
      %v2808 = vld [vmem:[%s1 + $0x108] sm:$0xf]
      %v2809 = vld [vmem:[%s1 + $0x10c] sm:$0xf]
      %v2810 = vld [vmem:[%s1 + $0x110] sm:$0xf]
      %v2811 = vld [vmem:[%s1 + $0x114] sm:$0xf]
      %v2812 = vld [vmem:[%s1 + $0x118] sm:$0xf]
      %v2813 = vld [vmem:[%s1 + $0x11c] sm:$0xf]
      %v2814 = vld [vmem:[%s1 + $0x120] sm:$0xf]
      %v2815 = vld [vmem:[%s1 + $0x124] sm:$0xf]
      %v2816 = vld [vmem:[%s1 + $0x128] sm:$0xf]
      %v2817 = vld [vmem:[%s1 + $0x12c] sm:$0xf]
      %v2818 = vld [vmem:[%s1 + $0x130] sm:$0xf]
      %v2819 = vld [vmem:[%s1 + $0x134] sm:$0xf]
      %v2820 = vld [vmem:[%s1 + $0x138] sm:$0xf]
      %v2821 = vld [vmem:[%s1 + $0x13c] sm:$0xf]
      %v2822 = vld [vmem:[%s1 + $0x140] sm:$0xf]
      %v2823 = vld [vmem:[%s1 + $0x144] sm:$0xf]
      %v2824 = vld [vmem:[%s1 + $0x148] sm:$0xf]
      %v2825 = vld [vmem:[%s1 + $0x14c] sm:$0xf]
      %v2826 = vld [vmem:[%s1 + $0x150] sm:$0xf]
      %v2827 = vld [vmem:[%s1 + $0x154] sm:$0xf]
      %v2828 = vld [vmem:[%s1 + $0x158] sm:$0xf]
      %v2829 = vld [vmem:[%s1 + $0x15c] sm:$0xf]
      %v2830 = vld [vmem:[%s1 + $0x160] sm:$0xf]
      %v2831 = vld [vmem:[%s1 + $0x164] sm:$0xf]
      %v2832 = vld [vmem:[%s1 + $0x168] sm:$0xf]
      %v2833 = vld [vmem:[%s1 + $0x16c] sm:$0xf]
      %v2834 = vld [vmem:[%s1 + $0x170] sm:$0xf]
      %v2835 = vld [vmem:[%s1 + $0x174] sm:$0xf]
      %v2836 = vld [vmem:[%s1 + $0x178] sm:$0xf]
      %v2837 = vld [vmem:[%s1 + $0x17c] sm:$0xf]
      %v2838 = vld [vmem:[%s1 + $0x180] sm:$0xf]
      %v2839 = vld [vmem:[%s1 + $0x184] sm:$0xf]
      %v2840 = vld [vmem:[%s1 + $0x188] sm:$0xf]
      %v2841 = vld [vmem:[%s1 + $0x18c] sm:$0xf]
      %v2842 = vld [vmem:[%s1 + $0x190] sm:$0xf]
      %v2843 = vld [vmem:[%s1 + $0x194] sm:$0xf]
      %v2844 = vld [vmem:[%s1 + $0x198] sm:$0xf]
      %v2845 = vld [vmem:[%s1 + $0x19c] sm:$0xf]
      %v2846 = vld [vmem:[%s1 + $0x1a0] sm:$0xf]
      %v2847 = vld [vmem:[%s1 + $0x1a4] sm:$0xf]
      %v2848 = vld [vmem:[%s1 + $0x1a8] sm:$0xf]
      %v2849 = vld [vmem:[%s1 + $0x1ac] sm:$0xf]
      %v2850 = vld [vmem:[%s1 + $0x1b0] sm:$0xf]
      %v2851 = vld [vmem:[%s1 + $0x1b4] sm:$0xf]
      %v2852 = vld [vmem:[%s1 + $0x1b8] sm:$0xf]
      %v2853 = vld [vmem:[%s1 + $0x1bc] sm:$0xf]
      %v2854 = vld [vmem:[%s1 + $0x1c0] sm:$0xf]
      %v2855 = vld [vmem:[%s1 + $0x1c4] sm:$0xf]
      %v2856 = vld [vmem:[%s1 + $0x1c8] sm:$0xf]
      %v2857 = vld [vmem:[%s1 + $0x1cc] sm:$0xf]
      %v2858 = vld [vmem:[%s1 + $0x1d0] sm:$0xf]
      %v2859 = vld [vmem:[%s1 + $0x1d4] sm:$0xf]
      %v2860 = vld [vmem:[%s1 + $0x1d8] sm:$0xf]
      %v2861 = vld [vmem:[%s1 + $0x1dc] sm:$0xf]
      %v2862 = vld [vmem:[%s1 + $0x1e0] sm:$0xf]
      %v2863 = vld [vmem:[%s1 + $0x1e4] sm:$0xf]
      %v2864 = vld [vmem:[%s1 + $0x1e8] sm:$0xf]
      %v2865 = vld [vmem:[%s1 + $0x1ec] sm:$0xf]
      %v2866 = vld [vmem:[%s1 + $0x1f0] sm:$0xf]
      %v2867 = vld [vmem:[%s1 + $0x1f4] sm:$0xf]
      %v2868 = vld [vmem:[%s1 + $0x1f8] sm:$0xf]
      %v2869 = vld [vmem:[%s1 + $0x1fc] sm:$0xf]
      %v2870 = vld [vmem:[%s1 + $0x200] sm:$0xf]
      %v2871 = vld [vmem:[%s1 + $0x204] sm:$0xf]
      %v2872 = vld [vmem:[%s1 + $0x208] sm:$0xf]
      %v2873 = vld [vmem:[%s1 + $0x20c] sm:$0xf]
      %v2874 = vld [vmem:[%s1 + $0x210] sm:$0xf]
      %v2875 = vld [vmem:[%s1 + $0x214] sm:$0xf]
      %v2876 = vld [vmem:[%s1 + $0x218] sm:$0xf]
      %v2877 = vld [vmem:[%s1 + $0x21c] sm:$0xf]
      %v2878 = vld [vmem:[%s1 + $0x220] sm:$0xf]
      %v2879 = vld [vmem:[%s1 + $0x224] sm:$0xf]
      %v2880 = vld [vmem:[%s1 + $0x228] sm:$0xf]
      %v2881 = vld [vmem:[%s1 + $0x22c] sm:$0xf]
      %v2882 = vld [vmem:[%s1 + $0x230] sm:$0xf]
      %v2883 = vld [vmem:[%s1 + $0x234] sm:$0xf]
      %v2884 = vld [vmem:[%s1 + $0x238] sm:$0xf]
      %v2885 = vld [vmem:[%s1 + $0x23c] sm:$0xf]
      %v3030 = vunpack.c.l.b16 %v2742
      %v3031 = vunpack.c.l.b16 %v2743
      %v3032 = vunpack.c.l.b16 %v2744
      %v3033 = vunpack.c.l.b16 %v2745
      %v3034 = vunpack.c.l.b16 %v2746
      %v3035 = vunpack.c.l.b16 %v2747
      %v3036 = vunpack.c.l.b16 %v2748
      %v3037 = vunpack.c.l.b16 %v2749
      %v3038 = vunpack.c.l.b16 %v2750
      %v3039 = vunpack.c.l.b16 %v2751
      %v3040 = vunpack.c.l.b16 %v2752
      %v3041 = vunpack.c.l.b16 %v2753
      %v3042 = vunpack.c.l.b16 %v2754
      %v3043 = vunpack.c.l.b16 %v2755
      %v3044 = vunpack.c.l.b16 %v2756
      %v3045 = vunpack.c.l.b16 %v2757
      %v3046 = vunpack.c.l.b16 %v2758
      %v3047 = vunpack.c.l.b16 %v2759
      %v3048 = vunpack.c.l.b16 %v2760
      %v3049 = vunpack.c.l.b16 %v2761
      %v3050 = vunpack.c.l.b16 %v2762
      %v3051 = vunpack.c.l.b16 %v2763
      %v3052 = vunpack.c.l.b16 %v2764
      %v3053 = vunpack.c.l.b16 %v2765
      %v3054 = vunpack.c.l.b16 %v2766
      %v3055 = vunpack.c.l.b16 %v2767
      %v3056 = vunpack.c.l.b16 %v2768
      %v3057 = vunpack.c.l.b16 %v2769
      %v3058 = vunpack.c.l.b16 %v2770
      %v3059 = vunpack.c.l.b16 %v2771
      %v3060 = vunpack.c.l.b16 %v2772
      %v3061 = vunpack.c.l.b16 %v2773
      %v3062 = vunpack.c.l.b16 %v2774
      %v3063 = vunpack.c.l.b16 %v2775
      %v3064 = vunpack.c.l.b16 %v2776
      %v3065 = vunpack.c.l.b16 %v2777
      %v3066 = vunpack.c.l.b16 %v2778
      %v3067 = vunpack.c.l.b16 %v2779
      %v3068 = vunpack.c.l.b16 %v2780
      %v3069 = vunpack.c.l.b16 %v2781
      %v3070 = vunpack.c.l.b16 %v2782
      %v3071 = vunpack.c.l.b16 %v2783
      %v3072 = vunpack.c.l.b16 %v2784
      %v3073 = vunpack.c.l.b16 %v2785
      %v3074 = vunpack.c.l.b16 %v2786
      %v3075 = vunpack.c.l.b16 %v2787
      %v3076 = vunpack.c.l.b16 %v2788
      %v3077 = vunpack.c.l.b16 %v2789
      %v3078 = vunpack.c.l.b16 %v2790
      %v3079 = vunpack.c.l.b16 %v2791
      %v3080 = vunpack.c.l.b16 %v2792
      %v3081 = vunpack.c.l.b16 %v2793
      %v3082 = vunpack.c.l.b16 %v2794
      %v3083 = vunpack.c.l.b16 %v2795
      %v3084 = vunpack.c.l.b16 %v2796
      %v3085 = vunpack.c.l.b16 %v2797
      %v3086 = vunpack.c.l.b16 %v2798
      %v3087 = vunpack.c.l.b16 %v2799
      %v3088 = vunpack.c.l.b16 %v2800
      %v3089 = vunpack.c.l.b16 %v2801
      %v3090 = vunpack.c.l.b16 %v2802
      %v3091 = vunpack.c.l.b16 %v2803
      %v3092 = vunpack.c.l.b16 %v2804
      %v3093 = vunpack.c.l.b16 %v2805
      %v3094 = vunpack.c.l.b16 %v2806
      %v3095 = vunpack.c.l.b16 %v2807
      %v3096 = vunpack.c.l.b16 %v2808
      %v3097 = vunpack.c.l.b16 %v2809
      %v3098 = vunpack.c.l.b16 %v2810
      %v3099 = vunpack.c.l.b16 %v2811
      %v3100 = vunpack.c.l.b16 %v2812
      %v3101 = vunpack.c.l.b16 %v2813
      %v3102 = vunpack.c.l.b16 %v2814
      %v3103 = vunpack.c.l.b16 %v2815
      %v3104 = vunpack.c.l.b16 %v2816
      %v3105 = vunpack.c.l.b16 %v2817
      %v3106 = vunpack.c.l.b16 %v2818
      %v3107 = vunpack.c.l.b16 %v2819
      %v3108 = vunpack.c.l.b16 %v2820
      %v3109 = vunpack.c.l.b16 %v2821
      %v3110 = vunpack.c.l.b16 %v2822
      %v3111 = vunpack.c.l.b16 %v2823
      %v3112 = vunpack.c.l.b16 %v2824
      %v3113 = vunpack.c.l.b16 %v2825
      %v3114 = vunpack.c.l.b16 %v2826
      %v3115 = vunpack.c.l.b16 %v2827
      %v3116 = vunpack.c.l.b16 %v2828
      %v3117 = vunpack.c.l.b16 %v2829
      %v3118 = vunpack.c.l.b16 %v2830
      %v3119 = vunpack.c.l.b16 %v2831
      %v3120 = vunpack.c.l.b16 %v2832
      %v3121 = vunpack.c.l.b16 %v2833
      %v3122 = vunpack.c.l.b16 %v2834
      %v3123 = vunpack.c.l.b16 %v2835
      %v3124 = vunpack.c.l.b16 %v2836
      %v3125 = vunpack.c.l.b16 %v2837
      %v3126 = vunpack.c.l.b16 %v2838
      %v3127 = vunpack.c.l.b16 %v2839
      %v3128 = vunpack.c.l.b16 %v2840
      %v3129 = vunpack.c.l.b16 %v2841
      %v3130 = vunpack.c.l.b16 %v2842
      %v3131 = vunpack.c.l.b16 %v2843
      %v3132 = vunpack.c.l.b16 %v2844
      %v3133 = vunpack.c.l.b16 %v2845
      %v3134 = vunpack.c.l.b16 %v2846
      %v3135 = vunpack.c.l.b16 %v2847
      %v3136 = vunpack.c.l.b16 %v2848
      %v3137 = vunpack.c.l.b16 %v2849
      %v3138 = vunpack.c.l.b16 %v2850
      %v3139 = vunpack.c.l.b16 %v2851
      %v3140 = vunpack.c.l.b16 %v2852
      %v3141 = vunpack.c.l.b16 %v2853
      %v3142 = vunpack.c.l.b16 %v2854
      %v3143 = vunpack.c.l.b16 %v2855
      %v3144 = vunpack.c.l.b16 %v2856
      %v3145 = vunpack.c.l.b16 %v2857
      %v3146 = vunpack.c.l.b16 %v2858
      %v3147 = vunpack.c.l.b16 %v2859
      %v3148 = vunpack.c.l.b16 %v2860
      %v3149 = vunpack.c.l.b16 %v2861
      %v3150 = vunpack.c.l.b16 %v2862
      %v3151 = vunpack.c.l.b16 %v2863
      %v3152 = vunpack.c.l.b16 %v2864
      %v3153 = vunpack.c.l.b16 %v2865
      %v3154 = vunpack.c.l.b16 %v2866
      %v3155 = vunpack.c.l.b16 %v2867
      %v3156 = vunpack.c.l.b16 %v2868
      %v3157 = vunpack.c.l.b16 %v2869
      %v3158 = vunpack.c.l.b16 %v2870
      %v3159 = vunpack.c.l.b16 %v2871
      %v3160 = vunpack.c.l.b16 %v2872
      %v3161 = vunpack.c.l.b16 %v2873
      %v3162 = vunpack.c.l.b16 %v2874
      %v3163 = vunpack.c.l.b16 %v2875
      %v3164 = vunpack.c.l.b16 %v2876
      %v3165 = vunpack.c.l.b16 %v2877
      %v3166 = vunpack.c.l.b16 %v2878
      %v3167 = vunpack.c.l.b16 %v2879
      %v3168 = vunpack.c.l.b16 %v2880
      %v3169 = vunpack.c.l.b16 %v2881
      %v3170 = vunpack.c.l.b16 %v2882
      %v3171 = vunpack.c.l.b16 %v2883
      %v3172 = vunpack.c.l.b16 %v2884
      %v3173 = vunpack.c.l.b16 %v2885
      %v3174 = vpack.c.b16 %v3031, %v3030
      %v3175 = vpack.c.b16 %v3033, %v3032
      %v3176 = vpack.c.b16 %v3035, %v3034
      %v3177 = vpack.c.b16 %v3037, %v3036
      %v3178 = vpack.c.b16 %v3039, %v3038
      %v3179 = vpack.c.b16 %v3041, %v3040
      %v3180 = vpack.c.b16 %v3043, %v3042
      %v3181 = vpack.c.b16 %v3045, %v3044
      %v3182 = vpack.c.b16 %v3047, %v3046
      %v3183 = vpack.c.b16 %v3049, %v3048
      %v3184 = vpack.c.b16 %v3051, %v3050
      %v3185 = vpack.c.b16 %v3053, %v3052
      %v3186 = vpack.c.b16 %v3055, %v3054
      %v3187 = vpack.c.b16 %v3057, %v3056
      %v3188 = vpack.c.b16 %v3059, %v3058
      %v3189 = vpack.c.b16 %v3061, %v3060
      %v3190 = vpack.c.b16 %v3063, %v3062
      %v3191 = vpack.c.b16 %v3065, %v3064
      %v3192 = vpack.c.b16 %v3067, %v3066
      %v3193 = vpack.c.b16 %v3069, %v3068
      %v3194 = vpack.c.b16 %v3071, %v3070
      %v3195 = vpack.c.b16 %v3073, %v3072
      %v3196 = vpack.c.b16 %v3075, %v3074
      %v3197 = vpack.c.b16 %v3077, %v3076
      %v3198 = vpack.c.b16 %v3079, %v3078
      %v3199 = vpack.c.b16 %v3081, %v3080
      %v3200 = vpack.c.b16 %v3083, %v3082
      %v3201 = vpack.c.b16 %v3085, %v3084
      %v3202 = vpack.c.b16 %v3087, %v3086
      %v3203 = vpack.c.b16 %v3089, %v3088
      %v3204 = vpack.c.b16 %v3091, %v3090
      %v3205 = vpack.c.b16 %v3093, %v3092
      %v3206 = vpack.c.b16 %v3095, %v3094
      %v3207 = vpack.c.b16 %v3097, %v3096
      %v3208 = vpack.c.b16 %v3099, %v3098
      %v3209 = vpack.c.b16 %v3101, %v3100
      %v3210 = vpack.c.b16 %v3103, %v3102
      %v3211 = vpack.c.b16 %v3105, %v3104
      %v3212 = vpack.c.b16 %v3107, %v3106
      %v3213 = vpack.c.b16 %v3109, %v3108
      %v3214 = vpack.c.b16 %v3111, %v3110
      %v3215 = vpack.c.b16 %v3113, %v3112
      %v3216 = vpack.c.b16 %v3115, %v3114
      %v3217 = vpack.c.b16 %v3117, %v3116
      %v3218 = vpack.c.b16 %v3119, %v3118
      %v3219 = vpack.c.b16 %v3121, %v3120
      %v3220 = vpack.c.b16 %v3123, %v3122
      %v3221 = vpack.c.b16 %v3125, %v3124
      %v3222 = vpack.c.b16 %v3127, %v3126
      %v3223 = vpack.c.b16 %v3129, %v3128
      %v3224 = vpack.c.b16 %v3131, %v3130
      %v3225 = vpack.c.b16 %v3133, %v3132
      %v3226 = vpack.c.b16 %v3135, %v3134
      %v3227 = vpack.c.b16 %v3137, %v3136
      %v3228 = vpack.c.b16 %v3139, %v3138
      %v3229 = vpack.c.b16 %v3141, %v3140
      %v3230 = vpack.c.b16 %v3143, %v3142
      %v3231 = vpack.c.b16 %v3145, %v3144
      %v3232 = vpack.c.b16 %v3147, %v3146
      %v3233 = vpack.c.b16 %v3149, %v3148
      %v3234 = vpack.c.b16 %v3151, %v3150
      %v3235 = vpack.c.b16 %v3153, %v3152
      %v3236 = vpack.c.b16 %v3155, %v3154
      %v3237 = vpack.c.b16 %v3157, %v3156
      %v3238 = vpack.c.b16 %v3159, %v3158
      %v3239 = vpack.c.b16 %v3161, %v3160
      %v3240 = vpack.c.b16 %v3163, %v3162
      %v3241 = vpack.c.b16 %v3165, %v3164
      %v3242 = vpack.c.b16 %v3167, %v3166
      %v3243 = vpack.c.b16 %v3169, %v3168
      %v3244 = vpack.c.b16 %v3171, %v3170
      %v3245 = vpack.c.b16 %v3173, %v3172
      %3318 = vmatprep.subr.bf16.mxu0 0
      %3319 = vmatpush1.bf16.msra.mxu0 %v3181
      %3320 = vmatprep.subr.bf16.mxu0 0
      %3321 = vmatpush1.bf16.msra.mxu0 %v3180
      %3322 = vmatprep.subr.bf16.mxu0 0
      %3323 = vmatpush1.bf16.msra.mxu0 %v3179
      %3324 = vmatprep.subr.bf16.mxu0 0
      %3325 = vmatpush1.bf16.msra.mxu0 %v3178
      %3326 = vmatprep.subr.bf16.mxu0 0
      %3327 = vmatpush1.bf16.msra.mxu0 %v3177
      %3328 = vmatprep.subr.bf16.mxu0 0
      %3329 = vmatpush1.bf16.msra.mxu0 %v3176
      %3330 = vmatprep.subr.bf16.mxu0 0
      %3331 = vmatpush1.bf16.msra.mxu0 %v3175
      %3332 = vmatprep.subr.bf16.mxu0 0
      %3333 = vmatpush1.bf16.msra.mxu0 %v3174
      %3334 = vmatprep.subr.bf16.mxu0 0
      %3335 = vmatpush2.bf16.msra.mxu0 %v3189
      %3336 = vmatprep.subr.bf16.mxu0 0
      %3337 = vmatpush2.bf16.msra.mxu0 %v3188
      %3338 = vmatprep.subr.bf16.mxu0 0
      %3339 = vmatpush2.bf16.msra.mxu0 %v3187
      %3340 = vmatprep.subr.bf16.mxu0 0
      %3341 = vmatpush2.bf16.msra.mxu0 %v3186
      %3342 = vmatprep.subr.bf16.mxu0 0
      %3343 = vmatpush2.bf16.msra.mxu0 %v3185
      %3344 = vmatprep.subr.bf16.mxu0 0
      %3345 = vmatpush2.bf16.msra.mxu0 %v3184
      %3346 = vmatprep.subr.bf16.mxu0 0
      %3347 = vmatpush2.bf16.msra.mxu0 %v3183
      %3348 = vmatprep.subr.bf16.mxu0 0
      %3349 = vmatpush2.bf16.msra.mxu0 %v3182
      %3350 = vmatprep.mubr.bf16.mxu0 %v2230
      %3351 = vmatmul.mubr.bf16.gmra.mxu0 %v2166
      %v3352 = vpop.f32.mrf.mxu0
      %v3353 = vadd.f32 0.0, %v3352
      %v3354 = vpop.f32.mrf.mxu0
      %v3355 = vpop.f32.mrf.mxu0
      %v3356 = vadd.f32 0.0, %v3355
      %v3357 = vpop.f32.mrf.mxu0
      %3358 = vmatprep.mubr.bf16.mxu0 %v2231
      %3359 = vmatmul.mubr.bf16.gmra.mxu0 %v2167
      %v3360 = vpop.f32.mrf.mxu0
      %v3361 = vadd.f32 0.0, %v3360
      %v3362 = vpop.f32.mrf.mxu0
      %v3363 = vpop.f32.mrf.mxu0
      %v3364 = vadd.f32 0.0, %v3363
      %v3365 = vpop.f32.mrf.mxu0
      %3366 = vmatprep.mubr.bf16.mxu0 %v2232
      %3367 = vmatmul.mubr.bf16.gmra.mxu0 %v2168
      %v3368 = vpop.f32.mrf.mxu0
      %v3369 = vadd.f32 0.0, %v3368
      %v3370 = vpop.f32.mrf.mxu0
      %v3371 = vpop.f32.mrf.mxu0
      %v3372 = vadd.f32 0.0, %v3371
      %v3373 = vpop.f32.mrf.mxu0
      %3374 = vmatprep.mubr.bf16.mxu0 %v2233
      %3375 = vmatmul.mubr.bf16.gmra.mxu0 %v2169
      %v3376 = vpop.f32.mrf.mxu0
      %v3377 = vadd.f32 0.0, %v3376
      %v3378 = vpop.f32.mrf.mxu0
      %v3379 = vpop.f32.mrf.mxu0
      %v3380 = vadd.f32 0.0, %v3379
      %v3381 = vpop.f32.mrf.mxu0
      %3382 = vmatprep.mubr.bf16.mxu0 %v2234
      %3383 = vmatmul.mubr.bf16.gmra.mxu0 %v2170
      %v3384 = vpop.f32.mrf.mxu0
      %v3385 = vadd.f32 0.0, %v3384
      %v3386 = vpop.f32.mrf.mxu0
      %v3387 = vpop.f32.mrf.mxu0
      %v3388 = vadd.f32 0.0, %v3387
      %v3389 = vpop.f32.mrf.mxu0
      %3390 = vmatprep.mubr.bf16.mxu0 %v2235
      %3391 = vmatmul.mubr.bf16.gmra.mxu0 %v2171
      %v3392 = vpop.f32.mrf.mxu0
      %v3393 = vadd.f32 0.0, %v3392
      %v3394 = vpop.f32.mrf.mxu0
      %v3395 = vpop.f32.mrf.mxu0
      %v3396 = vadd.f32 0.0, %v3395
      %v3397 = vpop.f32.mrf.mxu0
      %3398 = vmatprep.mubr.bf16.mxu0 %v2236
      %3399 = vmatmul.mubr.bf16.gmra.mxu0 %v2172
      %v3400 = vpop.f32.mrf.mxu0
      %v3401 = vadd.f32 0.0, %v3400
      %v3402 = vpop.f32.mrf.mxu0
      %v3403 = vpop.f32.mrf.mxu0
      %v3404 = vadd.f32 0.0, %v3403
      %v3405 = vpop.f32.mrf.mxu0
      %3406 = vmatprep.mubr.bf16.mxu0 %v2237
      %3407 = vmatmul.mubr.bf16.gmra.mxu0 %v2173
      %v3408 = vpop.f32.mrf.mxu0
      %v3409 = vadd.f32 0.0, %v3408
      %v3410 = vpop.f32.mrf.mxu0
      %v3411 = vpop.f32.mrf.mxu0
      %v3412 = vadd.f32 0.0, %v3411
      %v3413 = vpop.f32.mrf.mxu0
      %3414 = vmatprep.mubr.bf16.mxu0 %v2238
      %3415 = vmatmul.mubr.bf16.gmra.mxu0 %v2174
      %v3416 = vpop.f32.mrf.mxu0
      %v3417 = vadd.f32 0.0, %v3416
      %v3418 = vpop.f32.mrf.mxu0
      %v3419 = vpop.f32.mrf.mxu0
      %v3420 = vadd.f32 0.0, %v3419
      %v3421 = vpop.f32.mrf.mxu0
      %3422 = vmatprep.mubr.bf16.mxu0 %v2239
      %3423 = vmatmul.mubr.bf16.gmra.mxu0 %v2175
      %v3424 = vpop.f32.mrf.mxu0
      %v3425 = vadd.f32 0.0, %v3424
      %v3426 = vpop.f32.mrf.mxu0
      %v3427 = vpop.f32.mrf.mxu0
      %v3428 = vadd.f32 0.0, %v3427
      %v3429 = vpop.f32.mrf.mxu0
      %3430 = vmatprep.mubr.bf16.mxu0 %v2240
      %3431 = vmatmul.mubr.bf16.gmra.mxu0 %v2176
      %v3432 = vpop.f32.mrf.mxu0
      %v3433 = vadd.f32 0.0, %v3432
      %v3434 = vpop.f32.mrf.mxu0
      %v3435 = vpop.f32.mrf.mxu0
      %v3436 = vadd.f32 0.0, %v3435
      %v3437 = vpop.f32.mrf.mxu0
      %3438 = vmatprep.mubr.bf16.mxu0 %v2241
      %3439 = vmatmul.mubr.bf16.gmra.mxu0 %v2177
      %v3440 = vpop.f32.mrf.mxu0
      %v3441 = vadd.f32 0.0, %v3440
      %v3442 = vpop.f32.mrf.mxu0
      %v3443 = vpop.f32.mrf.mxu0
      %v3444 = vadd.f32 0.0, %v3443
      %v3445 = vpop.f32.mrf.mxu0
      %3446 = vmatprep.mubr.bf16.mxu0 %v2242
      %3447 = vmatmul.mubr.bf16.gmra.mxu0 %v2178
      %v3448 = vpop.f32.mrf.mxu0
      %v3449 = vadd.f32 0.0, %v3448
      %v3450 = vpop.f32.mrf.mxu0
      %v3451 = vpop.f32.mrf.mxu0
      %v3452 = vadd.f32 0.0, %v3451
      %v3453 = vpop.f32.mrf.mxu0
      %3454 = vmatprep.mubr.bf16.mxu0 %v2243
      %3455 = vmatmul.mubr.bf16.gmra.mxu0 %v2179
      %v3456 = vpop.f32.mrf.mxu0
      %v3457 = vadd.f32 0.0, %v3456
      %v3458 = vpop.f32.mrf.mxu0
      %v3459 = vpop.f32.mrf.mxu0
      %v3460 = vadd.f32 0.0, %v3459
      %v3461 = vpop.f32.mrf.mxu0
      %3462 = vmatprep.mubr.bf16.mxu0 %v2244
      %3463 = vmatmul.mubr.bf16.gmra.mxu0 %v2180
      %v3464 = vpop.f32.mrf.mxu0
      %v3465 = vadd.f32 0.0, %v3464
      %v3466 = vpop.f32.mrf.mxu0
      %v3467 = vpop.f32.mrf.mxu0
      %v3468 = vadd.f32 0.0, %v3467
      %v3469 = vpop.f32.mrf.mxu0
      %3470 = vmatprep.mubr.bf16.mxu0 %v2245
      %3471 = vmatmul.mubr.bf16.gmra.mxu0 %v2181
      %v3472 = vpop.f32.mrf.mxu0
      %v3473 = vadd.f32 0.0, %v3472
      %v3474 = vpop.f32.mrf.mxu0
      %v3475 = vpop.f32.mrf.mxu0
      %v3476 = vadd.f32 0.0, %v3475
      %v3477 = vpop.f32.mrf.mxu0
      %3478 = vdwg.mxu0
      %3479 = vmatprep.subr.bf16.mxu0 0
      %3480 = vmatpush1.bf16.msra.mxu0 %v3197
      %3481 = vmatprep.subr.bf16.mxu0 0
      %3482 = vmatpush1.bf16.msra.mxu0 %v3196
      %3483 = vmatprep.subr.bf16.mxu0 0
      %3484 = vmatpush1.bf16.msra.mxu0 %v3195
      %3485 = vmatprep.subr.bf16.mxu0 0
      %3486 = vmatpush1.bf16.msra.mxu0 %v3194
      %3487 = vmatprep.subr.bf16.mxu0 0
      %3488 = vmatpush1.bf16.msra.mxu0 %v3193
      %3489 = vmatprep.subr.bf16.mxu0 0
      %3490 = vmatpush1.bf16.msra.mxu0 %v3192
      %3491 = vmatprep.subr.bf16.mxu0 0
      %3492 = vmatpush1.bf16.msra.mxu0 %v3191
      %3493 = vmatprep.subr.bf16.mxu0 0
      %3494 = vmatpush1.bf16.msra.mxu0 %v3190
      %3495 = vmatprep.subr.bf16.mxu0 0
      %3496 = vmatpush2.bf16.msra.mxu0 %v3205
      %3497 = vmatprep.subr.bf16.mxu0 0
      %3498 = vmatpush2.bf16.msra.mxu0 %v3204
      %3499 = vmatprep.subr.bf16.mxu0 0
      %3500 = vmatpush2.bf16.msra.mxu0 %v3203
      %3501 = vmatprep.subr.bf16.mxu0 0
      %3502 = vmatpush2.bf16.msra.mxu0 %v3202
      %3503 = vmatprep.subr.bf16.mxu0 0
      %3504 = vmatpush2.bf16.msra.mxu0 %v3201
      %3505 = vmatprep.subr.bf16.mxu0 0
      %3506 = vmatpush2.bf16.msra.mxu0 %v3200
      %3507 = vmatprep.subr.bf16.mxu0 0
      %3508 = vmatpush2.bf16.msra.mxu0 %v3199
      %3509 = vmatprep.subr.bf16.mxu0 0
      %3510 = vmatpush2.bf16.msra.mxu0 %v3198
      %3511 = vmatprep.mubr.bf16.mxu0 %v2374
      %3512 = vmatmul.mubr.bf16.gmra.mxu0 %v2294
      %v3513 = vpop.f32.mrf.mxu0
      %v3514 = vadd.f32 %v3353, %v3513
      %v3515 = vpop.f32.mrf.mxu0
      %v3516 = vpop.f32.mrf.mxu0
      %v3517 = vadd.f32 %v3356, %v3516
      %v3518 = vpop.f32.mrf.mxu0
      %3519 = vmatprep.mubr.bf16.mxu0 %v2375
      %3520 = vmatmul.mubr.bf16.gmra.mxu0 %v2295
      %v3521 = vpop.f32.mrf.mxu0
      %v3522 = vadd.f32 %v3361, %v3521
      %v3523 = vpop.f32.mrf.mxu0
      %v3524 = vpop.f32.mrf.mxu0
      %v3525 = vadd.f32 %v3364, %v3524
      %v3526 = vpop.f32.mrf.mxu0
      %3527 = vmatprep.mubr.bf16.mxu0 %v2376
      %3528 = vmatmul.mubr.bf16.gmra.mxu0 %v2296
      %v3529 = vpop.f32.mrf.mxu0
      %v3530 = vadd.f32 %v3369, %v3529
      %v3531 = vpop.f32.mrf.mxu0
      %v3532 = vpop.f32.mrf.mxu0
      %v3533 = vadd.f32 %v3372, %v3532
      %v3534 = vpop.f32.mrf.mxu0
      %3535 = vmatprep.mubr.bf16.mxu0 %v2377
      %3536 = vmatmul.mubr.bf16.gmra.mxu0 %v2297
      %v3537 = vpop.f32.mrf.mxu0
      %v3538 = vadd.f32 %v3377, %v3537
      %v3539 = vpop.f32.mrf.mxu0
      %v3540 = vpop.f32.mrf.mxu0
      %v3541 = vadd.f32 %v3380, %v3540
      %v3542 = vpop.f32.mrf.mxu0
      %3543 = vmatprep.mubr.bf16.mxu0 %v2378
      %3544 = vmatmul.mubr.bf16.gmra.mxu0 %v2298
      %v3545 = vpop.f32.mrf.mxu0
      %v3546 = vadd.f32 %v3385, %v3545
      %v3547 = vpop.f32.mrf.mxu0
      %v3548 = vpop.f32.mrf.mxu0
      %v3549 = vadd.f32 %v3388, %v3548
      %v3550 = vpop.f32.mrf.mxu0
      %3551 = vmatprep.mubr.bf16.mxu0 %v2379
      %3552 = vmatmul.mubr.bf16.gmra.mxu0 %v2299
      %v3553 = vpop.f32.mrf.mxu0
      %v3554 = vadd.f32 %v3393, %v3553
      %v3555 = vpop.f32.mrf.mxu0
      %v3556 = vpop.f32.mrf.mxu0
      %v3557 = vadd.f32 %v3396, %v3556
      %v3558 = vpop.f32.mrf.mxu0
      %3559 = vmatprep.mubr.bf16.mxu0 %v2380
      %3560 = vmatmul.mubr.bf16.gmra.mxu0 %v2300
      %v3561 = vpop.f32.mrf.mxu0
      %v3562 = vadd.f32 %v3401, %v3561
      %v3563 = vpop.f32.mrf.mxu0
      %v3564 = vpop.f32.mrf.mxu0
      %v3565 = vadd.f32 %v3404, %v3564
      %v3566 = vpop.f32.mrf.mxu0
      %3567 = vmatprep.mubr.bf16.mxu0 %v2381
      %3568 = vmatmul.mubr.bf16.gmra.mxu0 %v2301
      %v3569 = vpop.f32.mrf.mxu0
      %v3570 = vadd.f32 %v3409, %v3569
      %v3571 = vpop.f32.mrf.mxu0
      %v3572 = vpop.f32.mrf.mxu0
      %v3573 = vadd.f32 %v3412, %v3572
      %v3574 = vpop.f32.mrf.mxu0
      %3575 = vmatprep.mubr.bf16.mxu0 %v2382
      %3576 = vmatmul.mubr.bf16.gmra.mxu0 %v2302
      %v3577 = vpop.f32.mrf.mxu0
      %v3578 = vadd.f32 %v3417, %v3577
      %v3579 = vpop.f32.mrf.mxu0
      %v3580 = vpop.f32.mrf.mxu0
      %v3581 = vadd.f32 %v3420, %v3580
      %v3582 = vpop.f32.mrf.mxu0
      %3583 = vmatprep.mubr.bf16.mxu0 %v2383
      %3584 = vmatmul.mubr.bf16.gmra.mxu0 %v2303
      %v3585 = vpop.f32.mrf.mxu0
      %v3586 = vadd.f32 %v3425, %v3585
      %v3587 = vpop.f32.mrf.mxu0
      %v3588 = vpop.f32.mrf.mxu0
      %v3589 = vadd.f32 %v3428, %v3588
      %v3590 = vpop.f32.mrf.mxu0
      %3591 = vmatprep.mubr.bf16.mxu0 %v2384
      %3592 = vmatmul.mubr.bf16.gmra.mxu0 %v2304
      %v3593 = vpop.f32.mrf.mxu0
      %v3594 = vadd.f32 %v3433, %v3593
      %v3595 = vpop.f32.mrf.mxu0
      %v3596 = vpop.f32.mrf.mxu0
      %v3597 = vadd.f32 %v3436, %v3596
      %v3598 = vpop.f32.mrf.mxu0
      %3599 = vmatprep.mubr.bf16.mxu0 %v2385
      %3600 = vmatmul.mubr.bf16.gmra.mxu0 %v2305
      %v3601 = vpop.f32.mrf.mxu0
      %v3602 = vadd.f32 %v3441, %v3601
      %v3603 = vpop.f32.mrf.mxu0
      %v3604 = vpop.f32.mrf.mxu0
      %v3605 = vadd.f32 %v3444, %v3604
      %v3606 = vpop.f32.mrf.mxu0
      %3607 = vmatprep.mubr.bf16.mxu0 %v2386
      %3608 = vmatmul.mubr.bf16.gmra.mxu0 %v2306
      %v3609 = vpop.f32.mrf.mxu0
      %v3610 = vadd.f32 %v3449, %v3609
      %v3611 = vpop.f32.mrf.mxu0
      %v3612 = vpop.f32.mrf.mxu0
      %v3613 = vadd.f32 %v3452, %v3612
      %v3614 = vpop.f32.mrf.mxu0
      %3615 = vmatprep.mubr.bf16.mxu0 %v2387
      %3616 = vmatmul.mubr.bf16.gmra.mxu0 %v2307
      %v3617 = vpop.f32.mrf.mxu0
      %v3618 = vadd.f32 %v3457, %v3617
      %v3619 = vpop.f32.mrf.mxu0
      %v3620 = vpop.f32.mrf.mxu0
      %v3621 = vadd.f32 %v3460, %v3620
      %v3622 = vpop.f32.mrf.mxu0
      %3623 = vmatprep.mubr.bf16.mxu0 %v2388
      %3624 = vmatmul.mubr.bf16.gmra.mxu0 %v2308
      %v3625 = vpop.f32.mrf.mxu0
      %v3626 = vadd.f32 %v3465, %v3625
      %v3627 = vpop.f32.mrf.mxu0
      %v3628 = vpop.f32.mrf.mxu0
      %v3629 = vadd.f32 %v3468, %v3628
      %v3630 = vpop.f32.mrf.mxu0
      %3631 = vmatprep.mubr.bf16.mxu0 %v2389
      %3632 = vmatmul.mubr.bf16.gmra.mxu0 %v2309
      %v3633 = vpop.f32.mrf.mxu0
      %v3634 = vadd.f32 %v3473, %v3633
      %v3635 = vpop.f32.mrf.mxu0
      %v3636 = vpop.f32.mrf.mxu0
      %v3637 = vadd.f32 %v3476, %v3636
      %v3638 = vpop.f32.mrf.mxu0
      %3639 = vdwg.mxu0
      %3640 = vmatprep.subr.bf16.mxu0 0
      %3641 = vmatpush1.bf16.msra.mxu0 %v3213
      %3642 = vmatprep.subr.bf16.mxu0 0
      %3643 = vmatpush1.bf16.msra.mxu0 %v3212
      %3644 = vmatprep.subr.bf16.mxu0 0
      %3645 = vmatpush1.bf16.msra.mxu0 %v3211
      %3646 = vmatprep.subr.bf16.mxu0 0
      %3647 = vmatpush1.bf16.msra.mxu0 %v3210
      %3648 = vmatprep.subr.bf16.mxu0 0
      %3649 = vmatpush1.bf16.msra.mxu0 %v3209
      %3650 = vmatprep.subr.bf16.mxu0 0
      %3651 = vmatpush1.bf16.msra.mxu0 %v3208
      %3652 = vmatprep.subr.bf16.mxu0 0
      %3653 = vmatpush1.bf16.msra.mxu0 %v3207
      %3654 = vmatprep.subr.bf16.mxu0 0
      %3655 = vmatpush1.bf16.msra.mxu0 %v3206
      %3656 = vmatprep.subr.bf16.mxu0 0
      %3657 = vmatpush2.bf16.msra.mxu0 %v3221
      %3658 = vmatprep.subr.bf16.mxu0 0
      %3659 = vmatpush2.bf16.msra.mxu0 %v3220
      %3660 = vmatprep.subr.bf16.mxu0 0
      %3661 = vmatpush2.bf16.msra.mxu0 %v3219
      %3662 = vmatprep.subr.bf16.mxu0 0
      %3663 = vmatpush2.bf16.msra.mxu0 %v3218
      %3664 = vmatprep.subr.bf16.mxu0 0
      %3665 = vmatpush2.bf16.msra.mxu0 %v3217
      %3666 = vmatprep.subr.bf16.mxu0 0
      %3667 = vmatpush2.bf16.msra.mxu0 %v3216
      %3668 = vmatprep.subr.bf16.mxu0 0
      %3669 = vmatpush2.bf16.msra.mxu0 %v3215
      %3670 = vmatprep.subr.bf16.mxu0 0
      %3671 = vmatpush2.bf16.msra.mxu0 %v3214
      %3672 = vmatprep.mubr.bf16.mxu0 %v2502
      %3673 = vmatmul.mubr.bf16.gmra.mxu0 %v2438
      %v3674 = vpop.f32.mrf.mxu0
      %v3675 = vadd.f32 %v3514, %v3674
      %v3676 = vpop.f32.mrf.mxu0
      %v3677 = vpop.f32.mrf.mxu0
      %v3678 = vadd.f32 %v3517, %v3677
      %v3679 = vpop.f32.mrf.mxu0
      %3680 = vmatprep.mubr.bf16.mxu0 %v2503
      %3681 = vmatmul.mubr.bf16.gmra.mxu0 %v2439
      %v3682 = vpop.f32.mrf.mxu0
      %v3683 = vadd.f32 %v3522, %v3682
      %v3684 = vpop.f32.mrf.mxu0
      %v3685 = vpop.f32.mrf.mxu0
      %v3686 = vadd.f32 %v3525, %v3685
      %v3687 = vpop.f32.mrf.mxu0
      %3688 = vmatprep.mubr.bf16.mxu0 %v2504
      %3689 = vmatmul.mubr.bf16.gmra.mxu0 %v2440
      %v3690 = vpop.f32.mrf.mxu0
      %v3691 = vadd.f32 %v3530, %v3690
      %v3692 = vpop.f32.mrf.mxu0
      %v3693 = vpop.f32.mrf.mxu0
      %v3694 = vadd.f32 %v3533, %v3693
      %v3695 = vpop.f32.mrf.mxu0
      %3696 = vmatprep.mubr.bf16.mxu0 %v2505
      %3697 = vmatmul.mubr.bf16.gmra.mxu0 %v2441
      %v3698 = vpop.f32.mrf.mxu0
      %v3699 = vadd.f32 %v3538, %v3698
      %v3700 = vpop.f32.mrf.mxu0
      %v3701 = vpop.f32.mrf.mxu0
      %v3702 = vadd.f32 %v3541, %v3701
      %v3703 = vpop.f32.mrf.mxu0
      %3704 = vmatprep.mubr.bf16.mxu0 %v2506
      %3705 = vmatmul.mubr.bf16.gmra.mxu0 %v2442
      %v3706 = vpop.f32.mrf.mxu0
      %v3707 = vadd.f32 %v3546, %v3706
      %v3708 = vpop.f32.mrf.mxu0
      %v3709 = vpop.f32.mrf.mxu0
      %v3710 = vadd.f32 %v3549, %v3709
      %v3711 = vpop.f32.mrf.mxu0
      %3712 = vmatprep.mubr.bf16.mxu0 %v2507
      %3713 = vmatmul.mubr.bf16.gmra.mxu0 %v2443
      %v3714 = vpop.f32.mrf.mxu0
      %v3715 = vadd.f32 %v3554, %v3714
      %v3716 = vpop.f32.mrf.mxu0
      %v3717 = vpop.f32.mrf.mxu0
      %v3718 = vadd.f32 %v3557, %v3717
      %v3719 = vpop.f32.mrf.mxu0
      %3720 = vmatprep.mubr.bf16.mxu0 %v2508
      %3721 = vmatmul.mubr.bf16.gmra.mxu0 %v2444
      %v3722 = vpop.f32.mrf.mxu0
      %v3723 = vadd.f32 %v3562, %v3722
      %v3724 = vpop.f32.mrf.mxu0
      %v3725 = vpop.f32.mrf.mxu0
      %v3726 = vadd.f32 %v3565, %v3725
      %v3727 = vpop.f32.mrf.mxu0
      %3728 = vmatprep.mubr.bf16.mxu0 %v2509
      %3729 = vmatmul.mubr.bf16.gmra.mxu0 %v2445
      %v3730 = vpop.f32.mrf.mxu0
      %v3731 = vadd.f32 %v3570, %v3730
      %v3732 = vpop.f32.mrf.mxu0
      %v3733 = vpop.f32.mrf.mxu0
      %v3734 = vadd.f32 %v3573, %v3733
      %v3735 = vpop.f32.mrf.mxu0
      %3736 = vmatprep.mubr.bf16.mxu0 %v2510
      %3737 = vmatmul.mubr.bf16.gmra.mxu0 %v2446
      %v3738 = vpop.f32.mrf.mxu0
      %v3739 = vadd.f32 %v3578, %v3738
      %v3740 = vpop.f32.mrf.mxu0
      %v3741 = vpop.f32.mrf.mxu0
      %v3742 = vadd.f32 %v3581, %v3741
      %v3743 = vpop.f32.mrf.mxu0
      %3744 = vmatprep.mubr.bf16.mxu0 %v2511
      %3745 = vmatmul.mubr.bf16.gmra.mxu0 %v2447
      %v3746 = vpop.f32.mrf.mxu0
      %v3747 = vadd.f32 %v3586, %v3746
      %v3748 = vpop.f32.mrf.mxu0
      %v3749 = vpop.f32.mrf.mxu0
      %v3750 = vadd.f32 %v3589, %v3749
      %v3751 = vpop.f32.mrf.mxu0
      %3752 = vmatprep.mubr.bf16.mxu0 %v2512
      %3753 = vmatmul.mubr.bf16.gmra.mxu0 %v2448
      %v3754 = vpop.f32.mrf.mxu0
      %v3755 = vadd.f32 %v3594, %v3754
      %v3756 = vpop.f32.mrf.mxu0
      %v3757 = vpop.f32.mrf.mxu0
      %v3758 = vadd.f32 %v3597, %v3757
      %v3759 = vpop.f32.mrf.mxu0
      %3760 = vmatprep.mubr.bf16.mxu0 %v2513
      %3761 = vmatmul.mubr.bf16.gmra.mxu0 %v2449
      %v3762 = vpop.f32.mrf.mxu0
      %v3763 = vadd.f32 %v3602, %v3762
      %v3764 = vpop.f32.mrf.mxu0
      %v3765 = vpop.f32.mrf.mxu0
      %v3766 = vadd.f32 %v3605, %v3765
      %v3767 = vpop.f32.mrf.mxu0
      %3768 = vmatprep.mubr.bf16.mxu0 %v2514
      %3769 = vmatmul.mubr.bf16.gmra.mxu0 %v2450
      %v3770 = vpop.f32.mrf.mxu0
      %v3771 = vadd.f32 %v3610, %v3770
      %v3772 = vpop.f32.mrf.mxu0
      %v3773 = vpop.f32.mrf.mxu0
      %v3774 = vadd.f32 %v3613, %v3773
      %v3775 = vpop.f32.mrf.mxu0
      %3776 = vmatprep.mubr.bf16.mxu0 %v2515
      %3777 = vmatmul.mubr.bf16.gmra.mxu0 %v2451
      %v3778 = vpop.f32.mrf.mxu0
      %v3779 = vadd.f32 %v3618, %v3778
      %v3780 = vpop.f32.mrf.mxu0
      %v3781 = vpop.f32.mrf.mxu0
      %v3782 = vadd.f32 %v3621, %v3781
      %v3783 = vpop.f32.mrf.mxu0
      %3784 = vmatprep.mubr.bf16.mxu0 %v2516
      %3785 = vmatmul.mubr.bf16.gmra.mxu0 %v2452
      %v3786 = vpop.f32.mrf.mxu0
      %v3787 = vadd.f32 %v3626, %v3786
      %v3788 = vpop.f32.mrf.mxu0
      %v3789 = vpop.f32.mrf.mxu0
      %v3790 = vadd.f32 %v3629, %v3789
      %v3791 = vpop.f32.mrf.mxu0
      %3792 = vmatprep.mubr.bf16.mxu0 %v2517
      %3793 = vmatmul.mubr.bf16.gmra.mxu0 %v2453
      %v3794 = vpop.f32.mrf.mxu0
      %v3795 = vadd.f32 %v3634, %v3794
      %v3796 = vpop.f32.mrf.mxu0
      %v3797 = vpop.f32.mrf.mxu0
      %v3798 = vadd.f32 %v3637, %v3797
      %v3799 = vpop.f32.mrf.mxu0
      %3800 = vdwg.mxu0
      %3801 = vmatprep.subr.bf16.mxu0 0
      %3802 = vmatpush1.bf16.msra.mxu0 %v3229
      %3803 = vmatprep.subr.bf16.mxu0 0
      %3804 = vmatpush1.bf16.msra.mxu0 %v3228
      %3805 = vmatprep.subr.bf16.mxu0 0
      %3806 = vmatpush1.bf16.msra.mxu0 %v3227
      %3807 = vmatprep.subr.bf16.mxu0 0
      %3808 = vmatpush1.bf16.msra.mxu0 %v3226
      %3809 = vmatprep.subr.bf16.mxu0 0
      %3810 = vmatpush1.bf16.msra.mxu0 %v3225
      %3811 = vmatprep.subr.bf16.mxu0 0
      %3812 = vmatpush1.bf16.msra.mxu0 %v3224
      %3813 = vmatprep.subr.bf16.mxu0 0
      %3814 = vmatpush1.bf16.msra.mxu0 %v3223
      %3815 = vmatprep.subr.bf16.mxu0 0
      %3816 = vmatpush1.bf16.msra.mxu0 %v3222
      %3817 = vmatprep.subr.bf16.mxu0 0
      %3818 = vmatpush2.bf16.msra.mxu0 %v3237
      %3819 = vmatprep.subr.bf16.mxu0 0
      %3820 = vmatpush2.bf16.msra.mxu0 %v3236
      %3821 = vmatprep.subr.bf16.mxu0 0
      %3822 = vmatpush2.bf16.msra.mxu0 %v3235
      %3823 = vmatprep.subr.bf16.mxu0 0
      %3824 = vmatpush2.bf16.msra.mxu0 %v3234
      %3825 = vmatprep.subr.bf16.mxu0 0
      %3826 = vmatpush2.bf16.msra.mxu0 %v3233
      %3827 = vmatprep.subr.bf16.mxu0 0
      %3828 = vmatpush2.bf16.msra.mxu0 %v3232
      %3829 = vmatprep.subr.bf16.mxu0 0
      %3830 = vmatpush2.bf16.msra.mxu0 %v3231
      %3831 = vmatprep.subr.bf16.mxu0 0
      %3832 = vmatpush2.bf16.msra.mxu0 %v3230
      %3833 = vmatprep.mubr.bf16.mxu0 %v2646
      %3834 = vmatmul.mubr.bf16.gmra.mxu0 %v2582
      %v3835 = vpop.f32.mrf.mxu0
      %v3836 = vadd.f32 %v3675, %v3835
      %v3837 = vpop.f32.mrf.mxu0
      %v3838 = vpop.f32.mrf.mxu0
      %v3839 = vadd.f32 %v3678, %v3838
      %v3840 = vpop.f32.mrf.mxu0
      %3841 = vmatprep.mubr.bf16.mxu0 %v2647
      %3842 = vmatmul.mubr.bf16.gmra.mxu0 %v2583
      %v3843 = vpop.f32.mrf.mxu0
      %v3844 = vadd.f32 %v3683, %v3843
      %v3845 = vpop.f32.mrf.mxu0
      %v3846 = vpop.f32.mrf.mxu0
      %v3847 = vadd.f32 %v3686, %v3846
      %v3848 = vpop.f32.mrf.mxu0
      %3849 = vmatprep.mubr.bf16.mxu0 %v2648
      %3850 = vmatmul.mubr.bf16.gmra.mxu0 %v2584
      %v3851 = vpop.f32.mrf.mxu0
      %v3852 = vadd.f32 %v3691, %v3851
      %v3853 = vpop.f32.mrf.mxu0
      %v3854 = vpop.f32.mrf.mxu0
      %v3855 = vadd.f32 %v3694, %v3854
      %v3856 = vpop.f32.mrf.mxu0
      %3857 = vmatprep.mubr.bf16.mxu0 %v2649
      %3858 = vmatmul.mubr.bf16.gmra.mxu0 %v2585
      %v3859 = vpop.f32.mrf.mxu0
      %v3860 = vadd.f32 %v3699, %v3859
      %v3861 = vpop.f32.mrf.mxu0
      %v3862 = vpop.f32.mrf.mxu0
      %v3863 = vadd.f32 %v3702, %v3862
      %v3864 = vpop.f32.mrf.mxu0
      %3865 = vmatprep.mubr.bf16.mxu0 %v2650
      %3866 = vmatmul.mubr.bf16.gmra.mxu0 %v2586
      %v3867 = vpop.f32.mrf.mxu0
      %v3868 = vadd.f32 %v3707, %v3867
      %v3869 = vpop.f32.mrf.mxu0
      %v3870 = vpop.f32.mrf.mxu0
      %v3871 = vadd.f32 %v3710, %v3870
      %v3872 = vpop.f32.mrf.mxu0
      %3873 = vmatprep.mubr.bf16.mxu0 %v2651
      %3874 = vmatmul.mubr.bf16.gmra.mxu0 %v2587
      %v3875 = vpop.f32.mrf.mxu0
      %v3876 = vadd.f32 %v3715, %v3875
      %v3877 = vpop.f32.mrf.mxu0
      %v3878 = vpop.f32.mrf.mxu0
      %v3879 = vadd.f32 %v3718, %v3878
      %v3880 = vpop.f32.mrf.mxu0
      %3881 = vmatprep.mubr.bf16.mxu0 %v2652
      %3882 = vmatmul.mubr.bf16.gmra.mxu0 %v2588
      %v3883 = vpop.f32.mrf.mxu0
      %v3884 = vadd.f32 %v3723, %v3883
      %v3885 = vpop.f32.mrf.mxu0
      %v3886 = vpop.f32.mrf.mxu0
      %v3887 = vadd.f32 %v3726, %v3886
      %v3888 = vpop.f32.mrf.mxu0
      %3889 = vmatprep.mubr.bf16.mxu0 %v2653
      %3890 = vmatmul.mubr.bf16.gmra.mxu0 %v2589
      %v3891 = vpop.f32.mrf.mxu0
      %v3892 = vadd.f32 %v3731, %v3891
      %v3893 = vpop.f32.mrf.mxu0
      %v3894 = vpop.f32.mrf.mxu0
      %v3895 = vadd.f32 %v3734, %v3894
      %v3896 = vpop.f32.mrf.mxu0
      %3897 = vmatprep.mubr.bf16.mxu0 %v2654
      %3898 = vmatmul.mubr.bf16.gmra.mxu0 %v2590
      %v3899 = vpop.f32.mrf.mxu0
      %v3900 = vadd.f32 %v3739, %v3899
      %v3901 = vpop.f32.mrf.mxu0
      %v3902 = vpop.f32.mrf.mxu0
      %v3903 = vadd.f32 %v3742, %v3902
      %v3904 = vpop.f32.mrf.mxu0
      %3905 = vmatprep.mubr.bf16.mxu0 %v2655
      %3906 = vmatmul.mubr.bf16.gmra.mxu0 %v2591
      %v3907 = vpop.f32.mrf.mxu0
      %v3908 = vadd.f32 %v3747, %v3907
      %v3909 = vpop.f32.mrf.mxu0
      %v3910 = vpop.f32.mrf.mxu0
      %v3911 = vadd.f32 %v3750, %v3910
      %v3912 = vpop.f32.mrf.mxu0
      %3913 = vmatprep.mubr.bf16.mxu0 %v2656
      %3914 = vmatmul.mubr.bf16.gmra.mxu0 %v2592
      %v3915 = vpop.f32.mrf.mxu0
      %v3916 = vadd.f32 %v3755, %v3915
      %v3917 = vpop.f32.mrf.mxu0
      %v3918 = vpop.f32.mrf.mxu0
      %v3919 = vadd.f32 %v3758, %v3918
      %v3920 = vpop.f32.mrf.mxu0
      %3921 = vmatprep.mubr.bf16.mxu0 %v2657
      %3922 = vmatmul.mubr.bf16.gmra.mxu0 %v2593
      %v3923 = vpop.f32.mrf.mxu0
      %v3924 = vadd.f32 %v3763, %v3923
      %v3925 = vpop.f32.mrf.mxu0
      %v3926 = vpop.f32.mrf.mxu0
      %v3927 = vadd.f32 %v3766, %v3926
      %v3928 = vpop.f32.mrf.mxu0
      %3929 = vmatprep.mubr.bf16.mxu0 %v2658
      %3930 = vmatmul.mubr.bf16.gmra.mxu0 %v2594
      %v3931 = vpop.f32.mrf.mxu0
      %v3932 = vadd.f32 %v3771, %v3931
      %v3933 = vpop.f32.mrf.mxu0
      %v3934 = vpop.f32.mrf.mxu0
      %v3935 = vadd.f32 %v3774, %v3934
      %v3936 = vpop.f32.mrf.mxu0
      %3937 = vmatprep.mubr.bf16.mxu0 %v2659
      %3938 = vmatmul.mubr.bf16.gmra.mxu0 %v2595
      %v3939 = vpop.f32.mrf.mxu0
      %v3940 = vadd.f32 %v3779, %v3939
      %v3941 = vpop.f32.mrf.mxu0
      %v3942 = vpop.f32.mrf.mxu0
      %v3943 = vadd.f32 %v3782, %v3942
      %v3944 = vpop.f32.mrf.mxu0
      %3945 = vmatprep.mubr.bf16.mxu0 %v2660
      %3946 = vmatmul.mubr.bf16.gmra.mxu0 %v2596
      %v3947 = vpop.f32.mrf.mxu0
      %v3948 = vadd.f32 %v3787, %v3947
      %v3949 = vpop.f32.mrf.mxu0
      %v3950 = vpop.f32.mrf.mxu0
      %v3951 = vadd.f32 %v3790, %v3950
      %v3952 = vpop.f32.mrf.mxu0
      %3953 = vmatprep.mubr.bf16.mxu0 %v2661
      %3954 = vmatmul.mubr.bf16.gmra.mxu0 %v2597
      %v3955 = vpop.f32.mrf.mxu0
      %v3956 = vadd.f32 %v3795, %v3955
      %v3957 = vpop.f32.mrf.mxu0
      %v3958 = vpop.f32.mrf.mxu0
      %v3959 = vadd.f32 %v3798, %v3958
      %v3960 = vpop.f32.mrf.mxu0
      %3961 = vdwg.mxu0
      %3962 = vmatprep.subr.bf16.mxu0 0
      %3963 = vmatpush1.bf16.msra.mxu0 %v3245
      %3964 = vmatprep.subr.bf16.mxu0 0
      %3965 = vmatpush1.bf16.msra.mxu0 %v3244
      %3966 = vmatprep.subr.bf16.mxu0 0
      %3967 = vmatpush1.bf16.msra.mxu0 %v3243
      %3968 = vmatprep.subr.bf16.mxu0 0
      %3969 = vmatpush1.bf16.msra.mxu0 %v3242
      %3970 = vmatprep.subr.bf16.mxu0 0
      %3971 = vmatpush1.bf16.msra.mxu0 %v3241
      %3972 = vmatprep.subr.bf16.mxu0 0
      %3973 = vmatpush1.bf16.msra.mxu0 %v3240
      %3974 = vmatprep.subr.bf16.mxu0 0
      %3975 = vmatpush1.bf16.msra.mxu0 %v3239
      %3976 = vmatprep.subr.bf16.mxu0 0
      %3977 = vmatpush1.bf16.msra.mxu0 %v3238
      %3978 = vmatprep.subr.bf16.mxu0 0
      %3979 = vmatpush2.bf16.msra.mxu0 0
      %3980 = vmatprep.subr.bf16.mxu0 0
      %3981 = vmatpush2.bf16.msra.mxu0 0
      %3982 = vmatprep.subr.bf16.mxu0 0
      %3983 = vmatpush2.bf16.msra.mxu0 0
      %3984 = vmatprep.subr.bf16.mxu0 0
      %3985 = vmatpush2.bf16.msra.mxu0 0
      %3986 = vmatprep.subr.bf16.mxu0 0
      %3987 = vmatpush2.bf16.msra.mxu0 0
      %3988 = vmatprep.subr.bf16.mxu0 0
      %3989 = vmatpush2.bf16.msra.mxu0 0
      %3990 = vmatprep.subr.bf16.mxu0 0
      %3991 = vmatpush2.bf16.msra.mxu0 0
      %3992 = vmatprep.subr.bf16.mxu0 0
      %3993 = vmatpush2.bf16.msra.mxu0 0
      %3994 = vmatprep.mubr.bf16.mxu0 0
      %3995 = vmatmul.mubr.bf16.gmra.mxu0 %v2710
      %v3996 = vpop.f32.mrf.mxu0
      %v3997 = vadd.f32 %v3836, %v3996
      %v3998 = vpop.f32.mrf.mxu0
      %v3999 = vpop.f32.mrf.mxu0
      %v4000 = vadd.f32 %v3839, %v3999
      %v4001 = vpop.f32.mrf.mxu0
      %4002 = vmatprep.mubr.bf16.mxu0 0
      %4003 = vmatmul.mubr.bf16.gmra.mxu0 %v2711
      %v4004 = vpop.f32.mrf.mxu0
      %v4005 = vadd.f32 %v3844, %v4004
      %v4006 = vpop.f32.mrf.mxu0
      %v4007 = vpop.f32.mrf.mxu0
      %v4008 = vadd.f32 %v3847, %v4007
      %v4009 = vpop.f32.mrf.mxu0
      %4010 = vmatprep.mubr.bf16.mxu0 0
      %4011 = vmatmul.mubr.bf16.gmra.mxu0 %v2712
      %v4012 = vpop.f32.mrf.mxu0
      %v4013 = vadd.f32 %v3852, %v4012
      %v4014 = vpop.f32.mrf.mxu0
      %v4015 = vpop.f32.mrf.mxu0
      %v4016 = vadd.f32 %v3855, %v4015
      %v4017 = vpop.f32.mrf.mxu0
      %4018 = vmatprep.mubr.bf16.mxu0 0
      %4019 = vmatmul.mubr.bf16.gmra.mxu0 %v2713
      %v4020 = vpop.f32.mrf.mxu0
      %v4021 = vadd.f32 %v3860, %v4020
      %v4022 = vpop.f32.mrf.mxu0
      %v4023 = vpop.f32.mrf.mxu0
      %v4024 = vadd.f32 %v3863, %v4023
      %v4025 = vpop.f32.mrf.mxu0
      %4026 = vmatprep.mubr.bf16.mxu0 0
      %4027 = vmatmul.mubr.bf16.gmra.mxu0 %v2714
      %v4028 = vpop.f32.mrf.mxu0
      %v4029 = vadd.f32 %v3868, %v4028
      %v4030 = vpop.f32.mrf.mxu0
      %v4031 = vpop.f32.mrf.mxu0
      %v4032 = vadd.f32 %v3871, %v4031
      %v4033 = vpop.f32.mrf.mxu0
      %4034 = vmatprep.mubr.bf16.mxu0 0
      %4035 = vmatmul.mubr.bf16.gmra.mxu0 %v2715
      %v4036 = vpop.f32.mrf.mxu0
      %v4037 = vadd.f32 %v3876, %v4036
      %v4038 = vpop.f32.mrf.mxu0
      %v4039 = vpop.f32.mrf.mxu0
      %v4040 = vadd.f32 %v3879, %v4039
      %v4041 = vpop.f32.mrf.mxu0
      %4042 = vmatprep.mubr.bf16.mxu0 0
      %4043 = vmatmul.mubr.bf16.gmra.mxu0 %v2716
      %v4044 = vpop.f32.mrf.mxu0
      %v4045 = vadd.f32 %v3884, %v4044
      %v4046 = vpop.f32.mrf.mxu0
      %v4047 = vpop.f32.mrf.mxu0
      %v4048 = vadd.f32 %v3887, %v4047
      %v4049 = vpop.f32.mrf.mxu0
      %4050 = vmatprep.mubr.bf16.mxu0 0
      %4051 = vmatmul.mubr.bf16.gmra.mxu0 %v2717
      %v4052 = vpop.f32.mrf.mxu0
      %v4053 = vadd.f32 %v3892, %v4052
      %v4054 = vpop.f32.mrf.mxu0
      %v4055 = vpop.f32.mrf.mxu0
      %v4056 = vadd.f32 %v3895, %v4055
      %v4057 = vpop.f32.mrf.mxu0
      %4058 = vmatprep.mubr.bf16.mxu0 0
      %4059 = vmatmul.mubr.bf16.gmra.mxu0 %v2718
      %v4060 = vpop.f32.mrf.mxu0
      %v4061 = vadd.f32 %v3900, %v4060
      %v4062 = vpop.f32.mrf.mxu0
      %v4063 = vpop.f32.mrf.mxu0
      %v4064 = vadd.f32 %v3903, %v4063
      %v4065 = vpop.f32.mrf.mxu0
      %4066 = vmatprep.mubr.bf16.mxu0 0
      %4067 = vmatmul.mubr.bf16.gmra.mxu0 %v2719
      %v4068 = vpop.f32.mrf.mxu0
      %v4069 = vadd.f32 %v3908, %v4068
      %v4070 = vpop.f32.mrf.mxu0
      %v4071 = vpop.f32.mrf.mxu0
      %v4072 = vadd.f32 %v3911, %v4071
      %v4073 = vpop.f32.mrf.mxu0
      %4074 = vmatprep.mubr.bf16.mxu0 0
      %4075 = vmatmul.mubr.bf16.gmra.mxu0 %v2720
      %v4076 = vpop.f32.mrf.mxu0
      %v4077 = vadd.f32 %v3916, %v4076
      %v4078 = vpop.f32.mrf.mxu0
      %v4079 = vpop.f32.mrf.mxu0
      %v4080 = vadd.f32 %v3919, %v4079
      %v4081 = vpop.f32.mrf.mxu0
      %4082 = vmatprep.mubr.bf16.mxu0 0
      %4083 = vmatmul.mubr.bf16.gmra.mxu0 %v2721
      %v4084 = vpop.f32.mrf.mxu0
      %v4085 = vadd.f32 %v3924, %v4084
      %v4086 = vpop.f32.mrf.mxu0
      %v4087 = vpop.f32.mrf.mxu0
      %v4088 = vadd.f32 %v3927, %v4087
      %v4089 = vpop.f32.mrf.mxu0
      %4090 = vmatprep.mubr.bf16.mxu0 0
      %4091 = vmatmul.mubr.bf16.gmra.mxu0 %v2722
      %v4092 = vpop.f32.mrf.mxu0
      %v4093 = vadd.f32 %v3932, %v4092
      %v4094 = vpop.f32.mrf.mxu0
      %v4095 = vpop.f32.mrf.mxu0
      %v4096 = vadd.f32 %v3935, %v4095
      %v4097 = vpop.f32.mrf.mxu0
      %4098 = vmatprep.mubr.bf16.mxu0 0
      %4099 = vmatmul.mubr.bf16.gmra.mxu0 %v2723
      %v4100 = vpop.f32.mrf.mxu0
      %v4101 = vadd.f32 %v3940, %v4100
      %v4102 = vpop.f32.mrf.mxu0
      %v4103 = vpop.f32.mrf.mxu0
      %v4104 = vadd.f32 %v3943, %v4103
      %v4105 = vpop.f32.mrf.mxu0
      %4106 = vmatprep.mubr.bf16.mxu0 0
      %4107 = vmatmul.mubr.bf16.gmra.mxu0 %v2724
      %v4108 = vpop.f32.mrf.mxu0
      %v4109 = vadd.f32 %v3948, %v4108
      %v4110 = vpop.f32.mrf.mxu0
      %v4111 = vpop.f32.mrf.mxu0
      %v4112 = vadd.f32 %v3951, %v4111
      %v4113 = vpop.f32.mrf.mxu0
      %4114 = vmatprep.mubr.bf16.mxu0 0
      %4115 = vmatmul.mubr.bf16.gmra.mxu0 %v2725
      %v4116 = vpop.f32.mrf.mxu0
      %v4117 = vadd.f32 %v3956, %v4116
      %v4118 = vpop.f32.mrf.mxu0
      %v4119 = vpop.f32.mrf.mxu0
      %v4120 = vadd.f32 %v3959, %v4119
      %v4121 = vpop.f32.mrf.mxu0
      %4122 = vdwg.mxu0
      %v4123 = vpack.c.bf16 %v4000, %v3997
      %v4124 = vpack.c.bf16 %v4008, %v4005
      %v4125 = vpack.c.bf16 %v4016, %v4013
      %v4126 = vpack.c.bf16 %v4024, %v4021
      %v4127 = vpack.c.bf16 %v4032, %v4029
      %v4128 = vpack.c.bf16 %v4040, %v4037
      %v4129 = vpack.c.bf16 %v4048, %v4045
      %v4130 = vpack.c.bf16 %v4056, %v4053
      %v4131 = vpack.c.bf16 %v4064, %v4061
      %v4132 = vpack.c.bf16 %v4072, %v4069
      %v4133 = vpack.c.bf16 %v4080, %v4077
      %v4134 = vpack.c.bf16 %v4088, %v4085
      %v4135 = vpack.c.bf16 %v4096, %v4093
      %v4136 = vpack.c.bf16 %v4104, %v4101
      %v4137 = vpack.c.bf16 %v4112, %v4109
      %v4138 = vpack.c.bf16 %v4120, %v4117
      %v4155 = vunpack.c.l.b16 %v4123
      %v4156 = vunpack.c.h.b16 %v4123
      %v4157 = vunpack.c.l.b16 %v4124
      %v4158 = vunpack.c.h.b16 %v4124
      %v4159 = vunpack.c.l.b16 %v4125
      %v4160 = vunpack.c.h.b16 %v4125
      %v4161 = vunpack.c.l.b16 %v4126
      %v4162 = vunpack.c.h.b16 %v4126
      %v4163 = vunpack.c.l.b16 %v4127
      %v4164 = vunpack.c.h.b16 %v4127
      %v4165 = vunpack.c.l.b16 %v4128
      %v4166 = vunpack.c.h.b16 %v4128
      %v4167 = vunpack.c.l.b16 %v4129
      %v4168 = vunpack.c.h.b16 %v4129
      %v4169 = vunpack.c.l.b16 %v4130
      %v4170 = vunpack.c.h.b16 %v4130
      %v4171 = vunpack.c.l.b16 %v4131
      %v4172 = vunpack.c.h.b16 %v4131
      %v4173 = vunpack.c.l.b16 %v4132
      %v4174 = vunpack.c.h.b16 %v4132
      %v4175 = vunpack.c.l.b16 %v4133
      %v4176 = vunpack.c.h.b16 %v4133
      %v4177 = vunpack.c.l.b16 %v4134
      %v4178 = vunpack.c.h.b16 %v4134
      %v4179 = vunpack.c.l.b16 %v4135
      %v4180 = vunpack.c.h.b16 %v4135
      %v4181 = vunpack.c.l.b16 %v4136
      %v4182 = vunpack.c.h.b16 %v4136
      %v4183 = vunpack.c.l.b16 %v4137
      %v4184 = vunpack.c.h.b16 %v4137
      %v4185 = vunpack.c.l.b16 %v4138
      %v4186 = vunpack.c.h.b16 %v4138
      %v4187 = vpack.c.b16 %v4155, %v4155
      %v4188 = vpack.c.b16 %v4156, %v4156
      %v4189 = vpack.c.b16 %v4157, %v4157
      %v4190 = vpack.c.b16 %v4158, %v4158
      %v4191 = vpack.c.b16 %v4159, %v4159
      %v4192 = vpack.c.b16 %v4160, %v4160
      %v4193 = vpack.c.b16 %v4161, %v4161
      %v4194 = vpack.c.b16 %v4162, %v4162
      %v4195 = vpack.c.b16 %v4163, %v4163
      %v4196 = vpack.c.b16 %v4164, %v4164
      %v4197 = vpack.c.b16 %v4165, %v4165
      %v4198 = vpack.c.b16 %v4166, %v4166
      %v4199 = vpack.c.b16 %v4167, %v4167
      %v4200 = vpack.c.b16 %v4168, %v4168
      %v4201 = vpack.c.b16 %v4169, %v4169
      %v4202 = vpack.c.b16 %v4170, %v4170
      %v4203 = vpack.c.b16 %v4171, %v4171
      %v4204 = vpack.c.b16 %v4172, %v4172
      %v4205 = vpack.c.b16 %v4173, %v4173
      %v4206 = vpack.c.b16 %v4174, %v4174
      %v4207 = vpack.c.b16 %v4175, %v4175
      %v4208 = vpack.c.b16 %v4176, %v4176
      %v4209 = vpack.c.b16 %v4177, %v4177
      %v4210 = vpack.c.b16 %v4178, %v4178
      %v4211 = vpack.c.b16 %v4179, %v4179
      %v4212 = vpack.c.b16 %v4180, %v4180
      %v4213 = vpack.c.b16 %v4181, %v4181
      %v4214 = vpack.c.b16 %v4182, %v4182
      %v4215 = vpack.c.b16 %v4183, %v4183
      %v4216 = vpack.c.b16 %v4184, %v4184
      %v4217 = vpack.c.b16 %v4185, %v4185
      %v4218 = vpack.c.b16 %v4186, %v4186
      %4251 = vst [vmem:[%s271] sm:$0xf] %v4187
      %4252 = vst [vmem:[%s271 + $0x4] sm:$0xf] %v4188
      %4253 = vst [vmem:[%s271 + $0x8] sm:$0xf] %v4189
      %4254 = vst [vmem:[%s271 + $0xc] sm:$0xf] %v4190
      %4255 = vst [vmem:[%s271 + $0x10] sm:$0xf] %v4191
      %4256 = vst [vmem:[%s271 + $0x14] sm:$0xf] %v4192
      %4257 = vst [vmem:[%s271 + $0x18] sm:$0xf] %v4193
      %4258 = vst [vmem:[%s271 + $0x1c] sm:$0xf] %v4194
      %4259 = vst [vmem:[%s271 + $0x20] sm:$0xf] %v4195
      %4260 = vst [vmem:[%s271 + $0x24] sm:$0xf] %v4196
      %4261 = vst [vmem:[%s271 + $0x28] sm:$0xf] %v4197
      %4262 = vst [vmem:[%s271 + $0x2c] sm:$0xf] %v4198
      %4263 = vst [vmem:[%s271 + $0x30] sm:$0xf] %v4199
      %4264 = vst [vmem:[%s271 + $0x34] sm:$0xf] %v4200
      %4265 = vst [vmem:[%s271 + $0x38] sm:$0xf] %v4201
      %4266 = vst [vmem:[%s271 + $0x3c] sm:$0xf] %v4202
      %4267 = vst [vmem:[%s271 + $0x40] sm:$0xf] %v4203
      %4268 = vst [vmem:[%s271 + $0x44] sm:$0xf] %v4204
      %4269 = vst [vmem:[%s271 + $0x48] sm:$0xf] %v4205
      %4270 = vst [vmem:[%s271 + $0x4c] sm:$0xf] %v4206
      %4271 = vst [vmem:[%s271 + $0x50] sm:$0xf] %v4207
      %4272 = vst [vmem:[%s271 + $0x54] sm:$0xf] %v4208
      %4273 = vst [vmem:[%s271 + $0x58] sm:$0xf] %v4209
      %4274 = vst [vmem:[%s271 + $0x5c] sm:$0xf] %v4210
      %4275 = vst [vmem:[%s271 + $0x60] sm:$0xf] %v4211
      %4276 = vst [vmem:[%s271 + $0x64] sm:$0xf] %v4212
      %4277 = vst [vmem:[%s271 + $0x68] sm:$0xf] %v4213
      %4278 = vst [vmem:[%s271 + $0x6c] sm:$0xf] %v4214
      %4279 = vst [vmem:[%s271 + $0x70] sm:$0xf] %v4215
      %4280 = vst [vmem:[%s271 + $0x74] sm:$0xf] %v4216
      %4281 = vst [vmem:[%s271 + $0x78] sm:$0xf] %v4217
      %4282 = vst [vmem:[%s271 + $0x7c] sm:$0xf] %v4218
      %v4283 = vadd.f32 %v3997, %v4000
      %v4284 = vadd.f32 %v4283, %v4005
      %v4285 = vadd.f32 %v4284, %v4008
      %v4286 = vadd.f32 %v4285, %v4013
      %v4287 = vadd.f32 %v4286, %v4016
      %v4288 = vadd.f32 %v4287, %v4021
      %v4289 = vadd.f32 %v4288, %v4024
      %v4290 = vadd.f32 %v4289, %v4029
      %v4291 = vadd.f32 %v4290, %v4032
      %v4292 = vadd.f32 %v4291, %v4037
      %v4293 = vadd.f32 %v4292, %v4040
      %v4294 = vadd.f32 %v4293, %v4045
      %v4295 = vadd.f32 %v4294, %v4048
      %v4296 = vadd.f32 %v4295, %v4053
      %v4297 = vadd.f32 %v4296, %v4056
      %v4298 = vadd.f32 %v4297, %v4061
      %v4299 = vadd.f32 %v4298, %v4064
      %v4300 = vadd.f32 %v4299, %v4069
      %v4301 = vadd.f32 %v4300, %v4072
      %v4302 = vadd.f32 %v4301, %v4077
      %v4303 = vadd.f32 %v4302, %v4080
      %v4304 = vadd.f32 %v4303, %v4085
      %v4305 = vadd.f32 %v4304, %v4088
      %v4306 = vadd.f32 %v4305, %v4093
      %v4307 = vadd.f32 %v4306, %v4096
      %v4308 = vadd.f32 %v4307, %v4101
      %v4309 = vadd.f32 %v4308, %v4104
      %v4310 = vadd.f32 %v4309, %v4109
      %v4311 = vadd.f32 %v4310, %v4112
      %v4312 = vadd.f32 %v4311, %v4117
      %v4313 = vadd.f32 %v4312, %v4120
      %v4314 = vrot.slane %v4313, 4
      %v4315 = vadd.f32 %v4313, %v4314
      %v4316 = vrot.slane %v4315, 2
      %v4317 = vadd.f32 %v4315, %v4316
      %v4318 = vrot.slane %v4317, 1
      %v4319 = vadd.f32 %v4317, %v4318
      %v4320 = vmul.f32 %v3997, %v3997
      %v4321 = vmul.f32 %v4000, %v4000
      %v4322 = vmul.f32 %v4005, %v4005
      %v4323 = vmul.f32 %v4008, %v4008
      %v4324 = vmul.f32 %v4013, %v4013
      %v4325 = vmul.f32 %v4016, %v4016
      %v4326 = vmul.f32 %v4021, %v4021
      %v4327 = vmul.f32 %v4024, %v4024
      %v4328 = vmul.f32 %v4029, %v4029
      %v4329 = vmul.f32 %v4032, %v4032
      %v4330 = vmul.f32 %v4037, %v4037
      %v4331 = vmul.f32 %v4040, %v4040
      %v4332 = vmul.f32 %v4045, %v4045
      %v4333 = vmul.f32 %v4048, %v4048
      %v4334 = vmul.f32 %v4053, %v4053
      %v4335 = vmul.f32 %v4056, %v4056
      %v4336 = vmul.f32 %v4061, %v4061
      %v4337 = vmul.f32 %v4064, %v4064
      %v4338 = vmul.f32 %v4069, %v4069
      %v4339 = vmul.f32 %v4072, %v4072
      %v4340 = vmul.f32 %v4077, %v4077
      %v4341 = vmul.f32 %v4080, %v4080
      %v4342 = vmul.f32 %v4085, %v4085
      %v4343 = vmul.f32 %v4088, %v4088
      %v4344 = vmul.f32 %v4093, %v4093
      %v4345 = vmul.f32 %v4096, %v4096
      %v4346 = vmul.f32 %v4101, %v4101
      %v4347 = vmul.f32 %v4104, %v4104
      %v4348 = vmul.f32 %v4109, %v4109
      %v4349 = vmul.f32 %v4112, %v4112
      %v4350 = vmul.f32 %v4117, %v4117
      %v4351 = vmul.f32 %v4120, %v4120
      %v4352 = vadd.f32 %v4320, %v4321
      %v4353 = vadd.f32 %v4352, %v4322
      %v4354 = vadd.f32 %v4353, %v4323
      %v4355 = vadd.f32 %v4354, %v4324
      %v4356 = vadd.f32 %v4355, %v4325
      %v4357 = vadd.f32 %v4356, %v4326
      %v4358 = vadd.f32 %v4357, %v4327
      %v4359 = vadd.f32 %v4358, %v4328
      %v4360 = vadd.f32 %v4359, %v4329
      %v4361 = vadd.f32 %v4360, %v4330
      %v4362 = vadd.f32 %v4361, %v4331
      %v4363 = vadd.f32 %v4362, %v4332
      %v4364 = vadd.f32 %v4363, %v4333
      %v4365 = vadd.f32 %v4364, %v4334
      %v4366 = vadd.f32 %v4365, %v4335
      %v4367 = vadd.f32 %v4366, %v4336
      %v4368 = vadd.f32 %v4367, %v4337
      %v4369 = vadd.f32 %v4368, %v4338
      %v4370 = vadd.f32 %v4369, %v4339
      %v4371 = vadd.f32 %v4370, %v4340
      %v4372 = vadd.f32 %v4371, %v4341
      %v4373 = vadd.f32 %v4372, %v4342
      %v4374 = vadd.f32 %v4373, %v4343
      %v4375 = vadd.f32 %v4374, %v4344
      %v4376 = vadd.f32 %v4375, %v4345
      %v4377 = vadd.f32 %v4376, %v4346
      %v4378 = vadd.f32 %v4377, %v4347
      %v4379 = vadd.f32 %v4378, %v4348
      %v4380 = vadd.f32 %v4379, %v4349
      %v4381 = vadd.f32 %v4380, %v4350
      %v4382 = vadd.f32 %v4381, %v4351
      %v4383 = vrot.slane %v4382, 4
      %v4384 = vadd.f32 %v4382, %v4383
      %v4385 = vrot.slane %v4384, 2
      %v4386 = vadd.f32 %v4384, %v4385
      %v4387 = vrot.slane %v4386, 1
      %v4388 = vadd.f32 %v4386, %v4387
      %vm4389 = vcmask 1040384
      %v4390 = vsel %vm4389, %v4319, %v4388
      %4391 = vst [vmem:[%s275] sm:$0x3] %v4390
      %v4392 = vld [vmem:[%s900] sm:$0xf]
      %v4393 = vld [vmem:[%s900 + $0x4] sm:$0xf]
      %v4394 = vld [vmem:[%s900 + $0x8] sm:$0x1]
      %v4395 = vld [vmem:[%s900 + $0xc] sm:$0xf]
      %v4396 = vld [vmem:[%s900 + $0x10] sm:$0xf]
      %v4397 = vld [vmem:[%s900 + $0x14] sm:$0x1]
      %v4398 = vld [vmem:[%s900 + $0x18] sm:$0xf]
      %v4399 = vld [vmem:[%s900 + $0x1c] sm:$0xf]
      %v4400 = vld [vmem:[%s900 + $0x20] sm:$0x1]
      %v4401 = vld [vmem:[%s900 + $0x24] sm:$0xf]
      %v4402 = vld [vmem:[%s900 + $0x28] sm:$0xf]
      %v4403 = vld [vmem:[%s900 + $0x2c] sm:$0x1]
      %v4404 = vld [vmem:[%s900 + $0x30] sm:$0xf]
      %v4405 = vld [vmem:[%s900 + $0x34] sm:$0xf]
      %v4406 = vld [vmem:[%s900 + $0x38] sm:$0x1]
      %v4407 = vld [vmem:[%s900 + $0x3c] sm:$0xf]
      %v4408 = vld [vmem:[%s900 + $0x40] sm:$0xf]
      %v4409 = vld [vmem:[%s900 + $0x44] sm:$0x1]
      %v4410 = vld [vmem:[%s900 + $0x48] sm:$0xf]
      %v4411 = vld [vmem:[%s900 + $0x4c] sm:$0xf]
      %v4412 = vld [vmem:[%s900 + $0x50] sm:$0x1]
      %v4413 = vld [vmem:[%s900 + $0x54] sm:$0xf]
      %v4414 = vld [vmem:[%s900 + $0x58] sm:$0xf]
      %v4415 = vld [vmem:[%s900 + $0x5c] sm:$0x1]
      %v4416 = vld [vmem:[%s900 + $0x60] sm:$0xf]
      %v4417 = vld [vmem:[%s900 + $0x64] sm:$0xf]
      %v4418 = vld [vmem:[%s900 + $0x68] sm:$0x1]
      %v4419 = vld [vmem:[%s900 + $0x6c] sm:$0xf]
      %v4420 = vld [vmem:[%s900 + $0x70] sm:$0xf]
      %v4421 = vld [vmem:[%s900 + $0x74] sm:$0x1]
      %v4422 = vld [vmem:[%s900 + $0x78] sm:$0xf]
      %v4423 = vld [vmem:[%s900 + $0x7c] sm:$0xf]
      %v4424 = vld [vmem:[%s900 + $0x80] sm:$0x1]
      %v4425 = vld [vmem:[%s900 + $0x84] sm:$0xf]
      %v4426 = vld [vmem:[%s900 + $0x88] sm:$0xf]
      %v4427 = vld [vmem:[%s900 + $0x8c] sm:$0x1]
      %v4428 = vld [vmem:[%s900 + $0x90] sm:$0xf]
      %v4429 = vld [vmem:[%s900 + $0x94] sm:$0xf]
      %v4430 = vld [vmem:[%s900 + $0x98] sm:$0x1]
      %v4431 = vld [vmem:[%s900 + $0x9c] sm:$0xf]
      %v4432 = vld [vmem:[%s900 + $0xa0] sm:$0xf]
      %v4433 = vld [vmem:[%s900 + $0xa4] sm:$0x1]
      %v4434 = vld [vmem:[%s900 + $0xa8] sm:$0xf]
      %v4435 = vld [vmem:[%s900 + $0xac] sm:$0xf]
      %v4436 = vld [vmem:[%s900 + $0xb0] sm:$0x1]
      %v4437 = vld [vmem:[%s900 + $0xb4] sm:$0xf]
      %v4438 = vld [vmem:[%s900 + $0xb8] sm:$0xf]
      %v4439 = vld [vmem:[%s900 + $0xbc] sm:$0x1]
      %v4441 = vshrl.u32 %v4392, 16
      %v4443 = vrot.slane %v4441, 4
      %v4444 = vshll.u32 %v4392, 16
      %v4446 = vrot.slane %v4444, 5
      %v4447 = vor.u32 %v4443, %v4446
      %v4448 = vrot.slane %v4447, 4
      %v4450 = vshll.u32 %v4393, 16
      %v4452 = vrot.slane %v4450, 5
      %v4453 = vsel %vm336, %v4448, %v4452
      %v4454 = vshrl.u32 %v4393, 16
      %v4456 = vrot.slane %v4454, 4
      %v4457 = vor.u32 %v4456, %v4452
      %v4458 = vrot.slane %v4457, 4
      %v4460 = vshll.u32 %v4394, 16
      %v4462 = vrot.slane %v4460, 5
      %v4463 = vsel %vm336, %v4458, %v4462
      %v4465 = vshrl.u32 %v4395, 16
      %v4467 = vrot.slane %v4465, 4
      %v4468 = vshll.u32 %v4395, 16
      %v4470 = vrot.slane %v4468, 5
      %v4471 = vor.u32 %v4467, %v4470
      %v4472 = vrot.slane %v4471, 4
      %v4474 = vshll.u32 %v4396, 16
      %v4476 = vrot.slane %v4474, 5
      %v4477 = vsel %vm336, %v4472, %v4476
      %v4478 = vshrl.u32 %v4396, 16
      %v4480 = vrot.slane %v4478, 4
      %v4481 = vor.u32 %v4480, %v4476
      %v4482 = vrot.slane %v4481, 4
      %v4484 = vshll.u32 %v4397, 16
      %v4486 = vrot.slane %v4484, 5
      %v4487 = vsel %vm336, %v4482, %v4486
      %v4489 = vshrl.u32 %v4398, 16
      %v4491 = vrot.slane %v4489, 4
      %v4492 = vshll.u32 %v4398, 16
      %v4494 = vrot.slane %v4492, 5
      %v4495 = vor.u32 %v4491, %v4494
      %v4496 = vrot.slane %v4495, 4
      %v4498 = vshll.u32 %v4399, 16
      %v4500 = vrot.slane %v4498, 5
      %v4501 = vsel %vm336, %v4496, %v4500
      %v4502 = vshrl.u32 %v4399, 16
      %v4504 = vrot.slane %v4502, 4
      %v4505 = vor.u32 %v4504, %v4500
      %v4506 = vrot.slane %v4505, 4
      %v4508 = vshll.u32 %v4400, 16
      %v4510 = vrot.slane %v4508, 5
      %v4511 = vsel %vm336, %v4506, %v4510
      %v4513 = vshrl.u32 %v4401, 16
      %v4515 = vrot.slane %v4513, 4
      %v4516 = vshll.u32 %v4401, 16
      %v4518 = vrot.slane %v4516, 5
      %v4519 = vor.u32 %v4515, %v4518
      %v4520 = vrot.slane %v4519, 4
      %v4522 = vshll.u32 %v4402, 16
      %v4524 = vrot.slane %v4522, 5
      %v4525 = vsel %vm336, %v4520, %v4524
      %v4526 = vshrl.u32 %v4402, 16
      %v4528 = vrot.slane %v4526, 4
      %v4529 = vor.u32 %v4528, %v4524
      %v4530 = vrot.slane %v4529, 4
      %v4532 = vshll.u32 %v4403, 16
      %v4534 = vrot.slane %v4532, 5
      %v4535 = vsel %vm336, %v4530, %v4534
      %v4537 = vshrl.u32 %v4404, 16
      %v4539 = vrot.slane %v4537, 4
      %v4540 = vshll.u32 %v4404, 16
      %v4542 = vrot.slane %v4540, 5
      %v4543 = vor.u32 %v4539, %v4542
      %v4544 = vrot.slane %v4543, 4
      %v4546 = vshll.u32 %v4405, 16
      %v4548 = vrot.slane %v4546, 5
      %v4549 = vsel %vm336, %v4544, %v4548
      %v4550 = vshrl.u32 %v4405, 16
      %v4552 = vrot.slane %v4550, 4
      %v4553 = vor.u32 %v4552, %v4548
      %v4554 = vrot.slane %v4553, 4
      %v4556 = vshll.u32 %v4406, 16
      %v4558 = vrot.slane %v4556, 5
      %v4559 = vsel %vm336, %v4554, %v4558
      %v4561 = vshrl.u32 %v4407, 16
      %v4563 = vrot.slane %v4561, 4
      %v4564 = vshll.u32 %v4407, 16
      %v4566 = vrot.slane %v4564, 5
      %v4567 = vor.u32 %v4563, %v4566
      %v4568 = vrot.slane %v4567, 4
      %v4570 = vshll.u32 %v4408, 16
      %v4572 = vrot.slane %v4570, 5
      %v4573 = vsel %vm336, %v4568, %v4572
      %v4574 = vshrl.u32 %v4408, 16
      %v4576 = vrot.slane %v4574, 4
      %v4577 = vor.u32 %v4576, %v4572
      %v4578 = vrot.slane %v4577, 4
      %v4580 = vshll.u32 %v4409, 16
      %v4582 = vrot.slane %v4580, 5
      %v4583 = vsel %vm336, %v4578, %v4582
      %v4585 = vshrl.u32 %v4410, 16
      %v4587 = vrot.slane %v4585, 4
      %v4588 = vshll.u32 %v4410, 16
      %v4590 = vrot.slane %v4588, 5
      %v4591 = vor.u32 %v4587, %v4590
      %v4592 = vrot.slane %v4591, 4
      %v4594 = vshll.u32 %v4411, 16
      %v4596 = vrot.slane %v4594, 5
      %v4597 = vsel %vm336, %v4592, %v4596
      %v4598 = vshrl.u32 %v4411, 16
      %v4600 = vrot.slane %v4598, 4
      %v4601 = vor.u32 %v4600, %v4596
      %v4602 = vrot.slane %v4601, 4
      %v4604 = vshll.u32 %v4412, 16
      %v4606 = vrot.slane %v4604, 5
      %v4607 = vsel %vm336, %v4602, %v4606
      %v4609 = vshrl.u32 %v4413, 16
      %v4611 = vrot.slane %v4609, 4
      %v4612 = vshll.u32 %v4413, 16
      %v4614 = vrot.slane %v4612, 5
      %v4615 = vor.u32 %v4611, %v4614
      %v4616 = vrot.slane %v4615, 4
      %v4618 = vshll.u32 %v4414, 16
      %v4620 = vrot.slane %v4618, 5
      %v4621 = vsel %vm336, %v4616, %v4620
      %v4622 = vshrl.u32 %v4414, 16
      %v4624 = vrot.slane %v4622, 4
      %v4625 = vor.u32 %v4624, %v4620
      %v4626 = vrot.slane %v4625, 4
      %v4628 = vshll.u32 %v4415, 16
      %v4630 = vrot.slane %v4628, 5
      %v4631 = vsel %vm336, %v4626, %v4630
      %v4633 = vshrl.u32 %v4416, 16
      %v4635 = vrot.slane %v4633, 4
      %v4636 = vshll.u32 %v4416, 16
      %v4638 = vrot.slane %v4636, 5
      %v4639 = vor.u32 %v4635, %v4638
      %v4640 = vrot.slane %v4639, 4
      %v4642 = vshll.u32 %v4417, 16
      %v4644 = vrot.slane %v4642, 5
      %v4645 = vsel %vm336, %v4640, %v4644
      %v4646 = vshrl.u32 %v4417, 16
      %v4648 = vrot.slane %v4646, 4
      %v4649 = vor.u32 %v4648, %v4644
      %v4650 = vrot.slane %v4649, 4
      %v4652 = vshll.u32 %v4418, 16
      %v4654 = vrot.slane %v4652, 5
      %v4655 = vsel %vm336, %v4650, %v4654
      %v4657 = vshrl.u32 %v4419, 16
      %v4659 = vrot.slane %v4657, 4
      %v4660 = vshll.u32 %v4419, 16
      %v4662 = vrot.slane %v4660, 5
      %v4663 = vor.u32 %v4659, %v4662
      %v4664 = vrot.slane %v4663, 4
      %v4666 = vshll.u32 %v4420, 16
      %v4668 = vrot.slane %v4666, 5
      %v4669 = vsel %vm336, %v4664, %v4668
      %v4670 = vshrl.u32 %v4420, 16
      %v4672 = vrot.slane %v4670, 4
      %v4673 = vor.u32 %v4672, %v4668
      %v4674 = vrot.slane %v4673, 4
      %v4676 = vshll.u32 %v4421, 16
      %v4678 = vrot.slane %v4676, 5
      %v4679 = vsel %vm336, %v4674, %v4678
      %v4681 = vshrl.u32 %v4422, 16
      %v4683 = vrot.slane %v4681, 4
      %v4684 = vshll.u32 %v4422, 16
      %v4686 = vrot.slane %v4684, 5
      %v4687 = vor.u32 %v4683, %v4686
      %v4688 = vrot.slane %v4687, 4
      %v4690 = vshll.u32 %v4423, 16
      %v4692 = vrot.slane %v4690, 5
      %v4693 = vsel %vm336, %v4688, %v4692
      %v4694 = vshrl.u32 %v4423, 16
      %v4696 = vrot.slane %v4694, 4
      %v4697 = vor.u32 %v4696, %v4692
      %v4698 = vrot.slane %v4697, 4
      %v4700 = vshll.u32 %v4424, 16
      %v4702 = vrot.slane %v4700, 5
      %v4703 = vsel %vm336, %v4698, %v4702
      %v4705 = vshrl.u32 %v4425, 16
      %v4707 = vrot.slane %v4705, 4
      %v4708 = vshll.u32 %v4425, 16
      %v4710 = vrot.slane %v4708, 5
      %v4711 = vor.u32 %v4707, %v4710
      %v4712 = vrot.slane %v4711, 4
      %v4714 = vshll.u32 %v4426, 16
      %v4716 = vrot.slane %v4714, 5
      %v4717 = vsel %vm336, %v4712, %v4716
      %v4718 = vshrl.u32 %v4426, 16
      %v4720 = vrot.slane %v4718, 4
      %v4721 = vor.u32 %v4720, %v4716
      %v4722 = vrot.slane %v4721, 4
      %v4724 = vshll.u32 %v4427, 16
      %v4726 = vrot.slane %v4724, 5
      %v4727 = vsel %vm336, %v4722, %v4726
      %v4729 = vshrl.u32 %v4428, 16
      %v4731 = vrot.slane %v4729, 4
      %v4732 = vshll.u32 %v4428, 16
      %v4734 = vrot.slane %v4732, 5
      %v4735 = vor.u32 %v4731, %v4734
      %v4736 = vrot.slane %v4735, 4
      %v4738 = vshll.u32 %v4429, 16
      %v4740 = vrot.slane %v4738, 5
      %v4741 = vsel %vm336, %v4736, %v4740
      %v4742 = vshrl.u32 %v4429, 16
      %v4744 = vrot.slane %v4742, 4
      %v4745 = vor.u32 %v4744, %v4740
      %v4746 = vrot.slane %v4745, 4
      %v4748 = vshll.u32 %v4430, 16
      %v4750 = vrot.slane %v4748, 5
      %v4751 = vsel %vm336, %v4746, %v4750
      %v4753 = vshrl.u32 %v4431, 16
      %v4755 = vrot.slane %v4753, 4
      %v4756 = vshll.u32 %v4431, 16
      %v4758 = vrot.slane %v4756, 5
      %v4759 = vor.u32 %v4755, %v4758
      %v4760 = vrot.slane %v4759, 4
      %v4762 = vshll.u32 %v4432, 16
      %v4764 = vrot.slane %v4762, 5
      %v4765 = vsel %vm336, %v4760, %v4764
      %v4766 = vshrl.u32 %v4432, 16
      %v4768 = vrot.slane %v4766, 4
      %v4769 = vor.u32 %v4768, %v4764
      %v4770 = vrot.slane %v4769, 4
      %v4772 = vshll.u32 %v4433, 16
      %v4774 = vrot.slane %v4772, 5
      %v4775 = vsel %vm336, %v4770, %v4774
      %v4777 = vshrl.u32 %v4434, 16
      %v4779 = vrot.slane %v4777, 4
      %v4780 = vshll.u32 %v4434, 16
      %v4782 = vrot.slane %v4780, 5
      %v4783 = vor.u32 %v4779, %v4782
      %v4784 = vrot.slane %v4783, 4
      %v4786 = vshll.u32 %v4435, 16
      %v4788 = vrot.slane %v4786, 5
      %v4789 = vsel %vm336, %v4784, %v4788
      %v4790 = vshrl.u32 %v4435, 16
      %v4792 = vrot.slane %v4790, 4
      %v4793 = vor.u32 %v4792, %v4788
      %v4794 = vrot.slane %v4793, 4
      %v4796 = vshll.u32 %v4436, 16
      %v4798 = vrot.slane %v4796, 5
      %v4799 = vsel %vm336, %v4794, %v4798
      %v4801 = vshrl.u32 %v4437, 16
      %v4803 = vrot.slane %v4801, 4
      %v4804 = vshll.u32 %v4437, 16
      %v4806 = vrot.slane %v4804, 5
      %v4807 = vor.u32 %v4803, %v4806
      %v4808 = vrot.slane %v4807, 4
      %v4810 = vshll.u32 %v4438, 16
      %v4812 = vrot.slane %v4810, 5
      %v4813 = vsel %vm336, %v4808, %v4812
      %v4814 = vshrl.u32 %v4438, 16
      %v4816 = vrot.slane %v4814, 4
      %v4817 = vor.u32 %v4816, %v4812
      %v4818 = vrot.slane %v4817, 4
      %v4820 = vshll.u32 %v4439, 16
      %v4822 = vrot.slane %v4820, 5
      %v4823 = vsel %vm336, %v4818, %v4822
      %v4824 = vld [vmem:[%s2] sm:$0xf]
      %v4825 = vld [vmem:[%s2 + $0x4] sm:$0xf]
      %v4826 = vld [vmem:[%s2 + $0x8] sm:$0xf]
      %v4827 = vld [vmem:[%s2 + $0xc] sm:$0xf]
      %v4828 = vld [vmem:[%s2 + $0x10] sm:$0xf]
      %v4829 = vld [vmem:[%s2 + $0x14] sm:$0xf]
      %v4830 = vld [vmem:[%s2 + $0x18] sm:$0xf]
      %v4831 = vld [vmem:[%s2 + $0x1c] sm:$0xf]
      %v4832 = vld [vmem:[%s2 + $0x20] sm:$0xf]
      %v4833 = vld [vmem:[%s2 + $0x24] sm:$0xf]
      %v4834 = vld [vmem:[%s2 + $0x28] sm:$0xf]
      %v4835 = vld [vmem:[%s2 + $0x2c] sm:$0xf]
      %v4836 = vld [vmem:[%s2 + $0x30] sm:$0xf]
      %v4837 = vld [vmem:[%s2 + $0x34] sm:$0xf]
      %v4838 = vld [vmem:[%s2 + $0x38] sm:$0xf]
      %v4839 = vld [vmem:[%s2 + $0x3c] sm:$0xf]
      %v4840 = vunpack.c.l.b16 %v4453
      %v4841 = vunpack.c.l.b16 %v4463
      %v4842 = vunpack.c.l.b16 %v4477
      %v4843 = vunpack.c.l.b16 %v4487
      %v4844 = vunpack.c.l.b16 %v4501
      %v4845 = vunpack.c.l.b16 %v4511
      %v4846 = vunpack.c.l.b16 %v4525
      %v4847 = vunpack.c.l.b16 %v4535
      %v4848 = vunpack.c.l.b16 %v4549
      %v4849 = vunpack.c.l.b16 %v4559
      %v4850 = vunpack.c.l.b16 %v4573
      %v4851 = vunpack.c.l.b16 %v4583
      %v4852 = vunpack.c.l.b16 %v4597
      %v4853 = vunpack.c.l.b16 %v4607
      %v4854 = vunpack.c.l.b16 %v4621
      %v4855 = vunpack.c.l.b16 %v4631
      %v4856 = vunpack.c.l.b16 %v4645
      %v4857 = vunpack.c.l.b16 %v4655
      %v4858 = vunpack.c.l.b16 %v4669
      %v4859 = vunpack.c.l.b16 %v4679
      %v4860 = vunpack.c.l.b16 %v4693
      %v4861 = vunpack.c.l.b16 %v4703
      %v4862 = vunpack.c.l.b16 %v4717
      %v4863 = vunpack.c.l.b16 %v4727
      %v4864 = vunpack.c.l.b16 %v4741
      %v4865 = vunpack.c.l.b16 %v4751
      %v4866 = vunpack.c.l.b16 %v4765
      %v4867 = vunpack.c.l.b16 %v4775
      %v4868 = vunpack.c.l.b16 %v4789
      %v4869 = vunpack.c.l.b16 %v4799
      %v4870 = vunpack.c.l.b16 %v4813
      %v4871 = vunpack.c.l.b16 %v4823
      %v4872 = vpack.c.b16 %v4841, %v4840
      %v4873 = vpack.c.b16 %v4843, %v4842
      %v4874 = vpack.c.b16 %v4845, %v4844
      %v4875 = vpack.c.b16 %v4847, %v4846
      %v4876 = vpack.c.b16 %v4849, %v4848
      %v4877 = vpack.c.b16 %v4851, %v4850
      %v4878 = vpack.c.b16 %v4853, %v4852
      %v4879 = vpack.c.b16 %v4855, %v4854
      %v4880 = vpack.c.b16 %v4857, %v4856
      %v4881 = vpack.c.b16 %v4859, %v4858
      %v4882 = vpack.c.b16 %v4861, %v4860
      %v4883 = vpack.c.b16 %v4863, %v4862
      %v4884 = vpack.c.b16 %v4865, %v4864
      %v4885 = vpack.c.b16 %v4867, %v4866
      %v4886 = vpack.c.b16 %v4869, %v4868
      %v4887 = vpack.c.b16 %v4871, %v4870
      %v4920 = vunpack.c.l.b16 %v4824
      %v4921 = vunpack.c.l.b16 %v4825
      %v4922 = vunpack.c.l.b16 %v4826
      %v4923 = vunpack.c.l.b16 %v4827
      %v4924 = vunpack.c.l.b16 %v4828
      %v4925 = vunpack.c.l.b16 %v4829
      %v4926 = vunpack.c.l.b16 %v4830
      %v4927 = vunpack.c.l.b16 %v4831
      %v4928 = vunpack.c.l.b16 %v4832
      %v4929 = vunpack.c.l.b16 %v4833
      %v4930 = vunpack.c.l.b16 %v4834
      %v4931 = vunpack.c.l.b16 %v4835
      %v4932 = vunpack.c.l.b16 %v4836
      %v4933 = vunpack.c.l.b16 %v4837
      %v4934 = vunpack.c.l.b16 %v4838
      %v4935 = vunpack.c.l.b16 %v4839
      %v4936 = vpack.c.b16 %v4921, %v4920
      %v4937 = vpack.c.b16 %v4923, %v4922
      %v4938 = vpack.c.b16 %v4925, %v4924
      %v4939 = vpack.c.b16 %v4927, %v4926
      %v4940 = vpack.c.b16 %v4929, %v4928
      %v4941 = vpack.c.b16 %v4931, %v4930
      %v4942 = vpack.c.b16 %v4933, %v4932
      %v4943 = vpack.c.b16 %v4935, %v4934
      %4952 = vmatprep.subr.bf16.mxu0 0
      %4953 = vmatpush1.bf16.msra.mxu0 %v4943
      %4954 = vmatprep.subr.bf16.mxu0 0
      %4955 = vmatpush1.bf16.msra.mxu0 %v4942
      %4956 = vmatprep.subr.bf16.mxu0 0
      %4957 = vmatpush1.bf16.msra.mxu0 %v4941
      %4958 = vmatprep.subr.bf16.mxu0 0
      %4959 = vmatpush1.bf16.msra.mxu0 %v4940
      %4960 = vmatprep.subr.bf16.mxu0 0
      %4961 = vmatpush1.bf16.msra.mxu0 %v4939
      %4962 = vmatprep.subr.bf16.mxu0 0
      %4963 = vmatpush1.bf16.msra.mxu0 %v4938
      %4964 = vmatprep.subr.bf16.mxu0 0
      %4965 = vmatpush1.bf16.msra.mxu0 %v4937
      %4966 = vmatprep.subr.bf16.mxu0 0
      %4967 = vmatpush1.bf16.msra.mxu0 %v4936
      %4968 = vmatprep.subr.bf16.mxu0 0
      %4969 = vmatpush2.bf16.msra.mxu0 0
      %4970 = vmatprep.subr.bf16.mxu0 0
      %4971 = vmatpush2.bf16.msra.mxu0 0
      %4972 = vmatprep.subr.bf16.mxu0 0
      %4973 = vmatpush2.bf16.msra.mxu0 0
      %4974 = vmatprep.subr.bf16.mxu0 0
      %4975 = vmatpush2.bf16.msra.mxu0 0
      %4976 = vmatprep.subr.bf16.mxu0 0
      %4977 = vmatpush2.bf16.msra.mxu0 0
      %4978 = vmatprep.subr.bf16.mxu0 0
      %4979 = vmatpush2.bf16.msra.mxu0 0
      %4980 = vmatprep.subr.bf16.mxu0 0
      %4981 = vmatpush2.bf16.msra.mxu0 0
      %4982 = vmatprep.subr.bf16.mxu0 0
      %4983 = vmatpush2.bf16.msra.mxu0 0
      %4984 = vmatprep.mubr.bf16.mxu0 0
      %4985 = vmatmul.mubr.bf16.gmra.mxu0 %v4872
      %v4986 = vpop.f32.mrf.mxu0
      %v4987 = vadd.f32 0.0, %v4986
      %v4988 = vpop.f32.mrf.mxu0
      %v4989 = vpop.f32.mrf.mxu0
      %v4990 = vadd.f32 0.0, %v4989
      %v4991 = vpop.f32.mrf.mxu0
      %4992 = vmatprep.mubr.bf16.mxu0 0
      %4993 = vmatmul.mubr.bf16.gmra.mxu0 %v4873
      %v4994 = vpop.f32.mrf.mxu0
      %v4995 = vadd.f32 0.0, %v4994
      %v4996 = vpop.f32.mrf.mxu0
      %v4997 = vpop.f32.mrf.mxu0
      %v4998 = vadd.f32 0.0, %v4997
      %v4999 = vpop.f32.mrf.mxu0
      %5000 = vmatprep.mubr.bf16.mxu0 0
      %5001 = vmatmul.mubr.bf16.gmra.mxu0 %v4874
      %v5002 = vpop.f32.mrf.mxu0
      %v5003 = vadd.f32 0.0, %v5002
      %v5004 = vpop.f32.mrf.mxu0
      %v5005 = vpop.f32.mrf.mxu0
      %v5006 = vadd.f32 0.0, %v5005
      %v5007 = vpop.f32.mrf.mxu0
      %5008 = vmatprep.mubr.bf16.mxu0 0
      %5009 = vmatmul.mubr.bf16.gmra.mxu0 %v4875
      %v5010 = vpop.f32.mrf.mxu0
      %v5011 = vadd.f32 0.0, %v5010
      %v5012 = vpop.f32.mrf.mxu0
      %v5013 = vpop.f32.mrf.mxu0
      %v5014 = vadd.f32 0.0, %v5013
      %v5015 = vpop.f32.mrf.mxu0
      %5016 = vmatprep.mubr.bf16.mxu0 0
      %5017 = vmatmul.mubr.bf16.gmra.mxu0 %v4876
      %v5018 = vpop.f32.mrf.mxu0
      %v5019 = vadd.f32 0.0, %v5018
      %v5020 = vpop.f32.mrf.mxu0
      %v5021 = vpop.f32.mrf.mxu0
      %v5022 = vadd.f32 0.0, %v5021
      %v5023 = vpop.f32.mrf.mxu0
      %5024 = vmatprep.mubr.bf16.mxu0 0
      %5025 = vmatmul.mubr.bf16.gmra.mxu0 %v4877
      %v5026 = vpop.f32.mrf.mxu0
      %v5027 = vadd.f32 0.0, %v5026
      %v5028 = vpop.f32.mrf.mxu0
      %v5029 = vpop.f32.mrf.mxu0
      %v5030 = vadd.f32 0.0, %v5029
      %v5031 = vpop.f32.mrf.mxu0
      %5032 = vmatprep.mubr.bf16.mxu0 0
      %5033 = vmatmul.mubr.bf16.gmra.mxu0 %v4878
      %v5034 = vpop.f32.mrf.mxu0
      %v5035 = vadd.f32 0.0, %v5034
      %v5036 = vpop.f32.mrf.mxu0
      %v5037 = vpop.f32.mrf.mxu0
      %v5038 = vadd.f32 0.0, %v5037
      %v5039 = vpop.f32.mrf.mxu0
      %5040 = vmatprep.mubr.bf16.mxu0 0
      %5041 = vmatmul.mubr.bf16.gmra.mxu0 %v4879
      %v5042 = vpop.f32.mrf.mxu0
      %v5043 = vadd.f32 0.0, %v5042
      %v5044 = vpop.f32.mrf.mxu0
      %v5045 = vpop.f32.mrf.mxu0
      %v5046 = vadd.f32 0.0, %v5045
      %v5047 = vpop.f32.mrf.mxu0
      %5048 = vmatprep.mubr.bf16.mxu0 0
      %5049 = vmatmul.mubr.bf16.gmra.mxu0 %v4880
      %v5050 = vpop.f32.mrf.mxu0
      %v5051 = vadd.f32 0.0, %v5050
      %v5052 = vpop.f32.mrf.mxu0
      %v5053 = vpop.f32.mrf.mxu0
      %v5054 = vadd.f32 0.0, %v5053
      %v5055 = vpop.f32.mrf.mxu0
      %5056 = vmatprep.mubr.bf16.mxu0 0
      %5057 = vmatmul.mubr.bf16.gmra.mxu0 %v4881
      %v5058 = vpop.f32.mrf.mxu0
      %v5059 = vadd.f32 0.0, %v5058
      %v5060 = vpop.f32.mrf.mxu0
      %v5061 = vpop.f32.mrf.mxu0
      %v5062 = vadd.f32 0.0, %v5061
      %v5063 = vpop.f32.mrf.mxu0
      %5064 = vmatprep.mubr.bf16.mxu0 0
      %5065 = vmatmul.mubr.bf16.gmra.mxu0 %v4882
      %v5066 = vpop.f32.mrf.mxu0
      %v5067 = vadd.f32 0.0, %v5066
      %v5068 = vpop.f32.mrf.mxu0
      %v5069 = vpop.f32.mrf.mxu0
      %v5070 = vadd.f32 0.0, %v5069
      %v5071 = vpop.f32.mrf.mxu0
      %5072 = vmatprep.mubr.bf16.mxu0 0
      %5073 = vmatmul.mubr.bf16.gmra.mxu0 %v4883
      %v5074 = vpop.f32.mrf.mxu0
      %v5075 = vadd.f32 0.0, %v5074
      %v5076 = vpop.f32.mrf.mxu0
      %v5077 = vpop.f32.mrf.mxu0
      %v5078 = vadd.f32 0.0, %v5077
      %v5079 = vpop.f32.mrf.mxu0
      %5080 = vmatprep.mubr.bf16.mxu0 0
      %5081 = vmatmul.mubr.bf16.gmra.mxu0 %v4884
      %v5082 = vpop.f32.mrf.mxu0
      %v5083 = vadd.f32 0.0, %v5082
      %v5084 = vpop.f32.mrf.mxu0
      %v5085 = vpop.f32.mrf.mxu0
      %v5086 = vadd.f32 0.0, %v5085
      %v5087 = vpop.f32.mrf.mxu0
      %5088 = vmatprep.mubr.bf16.mxu0 0
      %5089 = vmatmul.mubr.bf16.gmra.mxu0 %v4885
      %v5090 = vpop.f32.mrf.mxu0
      %v5091 = vadd.f32 0.0, %v5090
      %v5092 = vpop.f32.mrf.mxu0
      %v5093 = vpop.f32.mrf.mxu0
      %v5094 = vadd.f32 0.0, %v5093
      %v5095 = vpop.f32.mrf.mxu0
      %5096 = vmatprep.mubr.bf16.mxu0 0
      %5097 = vmatmul.mubr.bf16.gmra.mxu0 %v4886
      %v5098 = vpop.f32.mrf.mxu0
      %v5099 = vadd.f32 0.0, %v5098
      %v5100 = vpop.f32.mrf.mxu0
      %v5101 = vpop.f32.mrf.mxu0
      %v5102 = vadd.f32 0.0, %v5101
      %v5103 = vpop.f32.mrf.mxu0
      %5104 = vmatprep.mubr.bf16.mxu0 0
      %5105 = vmatmul.mubr.bf16.gmra.mxu0 %v4887
      %v5106 = vpop.f32.mrf.mxu0
      %v5107 = vadd.f32 0.0, %v5106
      %v5108 = vpop.f32.mrf.mxu0
      %v5109 = vpop.f32.mrf.mxu0
      %v5110 = vadd.f32 0.0, %v5109
      %v5111 = vpop.f32.mrf.mxu0
      %5112 = vdwg.mxu0
      %v5113 = vpack.c.bf16 %v4990, %v4987
      %v5114 = vpack.c.bf16 %v4998, %v4995
      %v5115 = vpack.c.bf16 %v5006, %v5003
      %v5116 = vpack.c.bf16 %v5014, %v5011
      %v5117 = vpack.c.bf16 %v5022, %v5019
      %v5118 = vpack.c.bf16 %v5030, %v5027
      %v5119 = vpack.c.bf16 %v5038, %v5035
      %v5120 = vpack.c.bf16 %v5046, %v5043
      %v5121 = vpack.c.bf16 %v5054, %v5051
      %v5122 = vpack.c.bf16 %v5062, %v5059
      %v5123 = vpack.c.bf16 %v5070, %v5067
      %v5124 = vpack.c.bf16 %v5078, %v5075
      %v5125 = vpack.c.bf16 %v5086, %v5083
      %v5126 = vpack.c.bf16 %v5094, %v5091
      %v5127 = vpack.c.bf16 %v5102, %v5099
      %v5128 = vpack.c.bf16 %v5110, %v5107
      %v5145 = vunpack.c.l.b16 %v5113
      %v5146 = vunpack.c.h.b16 %v5113
      %v5147 = vunpack.c.l.b16 %v5114
      %v5148 = vunpack.c.h.b16 %v5114
      %v5149 = vunpack.c.l.b16 %v5115
      %v5150 = vunpack.c.h.b16 %v5115
      %v5151 = vunpack.c.l.b16 %v5116
      %v5152 = vunpack.c.h.b16 %v5116
      %v5153 = vunpack.c.l.b16 %v5117
      %v5154 = vunpack.c.h.b16 %v5117
      %v5155 = vunpack.c.l.b16 %v5118
      %v5156 = vunpack.c.h.b16 %v5118
      %v5157 = vunpack.c.l.b16 %v5119
      %v5158 = vunpack.c.h.b16 %v5119
      %v5159 = vunpack.c.l.b16 %v5120
      %v5160 = vunpack.c.h.b16 %v5120
      %v5161 = vunpack.c.l.b16 %v5121
      %v5162 = vunpack.c.h.b16 %v5121
      %v5163 = vunpack.c.l.b16 %v5122
      %v5164 = vunpack.c.h.b16 %v5122
      %v5165 = vunpack.c.l.b16 %v5123
      %v5166 = vunpack.c.h.b16 %v5123
      %v5167 = vunpack.c.l.b16 %v5124
      %v5168 = vunpack.c.h.b16 %v5124
      %v5169 = vunpack.c.l.b16 %v5125
      %v5170 = vunpack.c.h.b16 %v5125
      %v5171 = vunpack.c.l.b16 %v5126
      %v5172 = vunpack.c.h.b16 %v5126
      %v5173 = vunpack.c.l.b16 %v5127
      %v5174 = vunpack.c.h.b16 %v5127
      %v5175 = vunpack.c.l.b16 %v5128
      %v5176 = vunpack.c.h.b16 %v5128
      %v5177 = vpack.c.b16 %v5145, %v5145
      %v5178 = vpack.c.b16 %v5146, %v5146
      %v5179 = vpack.c.b16 %v5147, %v5147
      %v5180 = vpack.c.b16 %v5148, %v5148
      %v5181 = vpack.c.b16 %v5149, %v5149
      %v5182 = vpack.c.b16 %v5150, %v5150
      %v5183 = vpack.c.b16 %v5151, %v5151
      %v5184 = vpack.c.b16 %v5152, %v5152
      %v5185 = vpack.c.b16 %v5153, %v5153
      %v5186 = vpack.c.b16 %v5154, %v5154
      %v5187 = vpack.c.b16 %v5155, %v5155
      %v5188 = vpack.c.b16 %v5156, %v5156
      %v5189 = vpack.c.b16 %v5157, %v5157
      %v5190 = vpack.c.b16 %v5158, %v5158
      %v5191 = vpack.c.b16 %v5159, %v5159
      %v5192 = vpack.c.b16 %v5160, %v5160
      %v5193 = vpack.c.b16 %v5161, %v5161
      %v5194 = vpack.c.b16 %v5162, %v5162
      %v5195 = vpack.c.b16 %v5163, %v5163
      %v5196 = vpack.c.b16 %v5164, %v5164
      %v5197 = vpack.c.b16 %v5165, %v5165
      %v5198 = vpack.c.b16 %v5166, %v5166
      %v5199 = vpack.c.b16 %v5167, %v5167
      %v5200 = vpack.c.b16 %v5168, %v5168
      %v5201 = vpack.c.b16 %v5169, %v5169
      %v5202 = vpack.c.b16 %v5170, %v5170
      %v5203 = vpack.c.b16 %v5171, %v5171
      %v5204 = vpack.c.b16 %v5172, %v5172
      %v5205 = vpack.c.b16 %v5173, %v5173
      %v5206 = vpack.c.b16 %v5174, %v5174
      %v5207 = vpack.c.b16 %v5175, %v5175
      %v5208 = vpack.c.b16 %v5176, %v5176
      %5241 = vst [vmem:[%s280] sm:$0xf] %v5177
      %5242 = vst [vmem:[%s280 + $0x4] sm:$0xf] %v5178
      %5243 = vst [vmem:[%s280 + $0x8] sm:$0xf] %v5179
      %5244 = vst [vmem:[%s280 + $0xc] sm:$0xf] %v5180
      %5245 = vst [vmem:[%s280 + $0x10] sm:$0xf] %v5181
      %5246 = vst [vmem:[%s280 + $0x14] sm:$0xf] %v5182
      %5247 = vst [vmem:[%s280 + $0x18] sm:$0xf] %v5183
      %5248 = vst [vmem:[%s280 + $0x1c] sm:$0xf] %v5184
      %5249 = vst [vmem:[%s280 + $0x20] sm:$0xf] %v5185
      %5250 = vst [vmem:[%s280 + $0x24] sm:$0xf] %v5186
      %5251 = vst [vmem:[%s280 + $0x28] sm:$0xf] %v5187
      %5252 = vst [vmem:[%s280 + $0x2c] sm:$0xf] %v5188
      %5253 = vst [vmem:[%s280 + $0x30] sm:$0xf] %v5189
      %5254 = vst [vmem:[%s280 + $0x34] sm:$0xf] %v5190
      %5255 = vst [vmem:[%s280 + $0x38] sm:$0xf] %v5191
      %5256 = vst [vmem:[%s280 + $0x3c] sm:$0xf] %v5192
      %5257 = vst [vmem:[%s280 + $0x40] sm:$0xf] %v5193
      %5258 = vst [vmem:[%s280 + $0x44] sm:$0xf] %v5194
      %5259 = vst [vmem:[%s280 + $0x48] sm:$0xf] %v5195
      %5260 = vst [vmem:[%s280 + $0x4c] sm:$0xf] %v5196
      %5261 = vst [vmem:[%s280 + $0x50] sm:$0xf] %v5197
      %5262 = vst [vmem:[%s280 + $0x54] sm:$0xf] %v5198
      %5263 = vst [vmem:[%s280 + $0x58] sm:$0xf] %v5199
      %5264 = vst [vmem:[%s280 + $0x5c] sm:$0xf] %v5200
      %5265 = vst [vmem:[%s280 + $0x60] sm:$0xf] %v5201
      %5266 = vst [vmem:[%s280 + $0x64] sm:$0xf] %v5202
      %5267 = vst [vmem:[%s280 + $0x68] sm:$0xf] %v5203
      %5268 = vst [vmem:[%s280 + $0x6c] sm:$0xf] %v5204
      %5269 = vst [vmem:[%s280 + $0x70] sm:$0xf] %v5205
      %5270 = vst [vmem:[%s280 + $0x74] sm:$0xf] %v5206
      %5271 = vst [vmem:[%s280 + $0x78] sm:$0xf] %v5207
      %5272 = vst [vmem:[%s280 + $0x7c] sm:$0xf] %v5208
      %v5273 = vadd.f32 %v4987, %v4990
      %v5274 = vadd.f32 %v5273, %v4995
      %v5275 = vadd.f32 %v5274, %v4998
      %v5276 = vadd.f32 %v5275, %v5003
      %v5277 = vadd.f32 %v5276, %v5006
      %v5278 = vadd.f32 %v5277, %v5011
      %v5279 = vadd.f32 %v5278, %v5014
      %v5280 = vadd.f32 %v5279, %v5019
      %v5281 = vadd.f32 %v5280, %v5022
      %v5282 = vadd.f32 %v5281, %v5027
      %v5283 = vadd.f32 %v5282, %v5030
      %v5284 = vadd.f32 %v5283, %v5035
      %v5285 = vadd.f32 %v5284, %v5038
      %v5286 = vadd.f32 %v5285, %v5043
      %v5287 = vadd.f32 %v5286, %v5046
      %v5288 = vadd.f32 %v5287, %v5051
      %v5289 = vadd.f32 %v5288, %v5054
      %v5290 = vadd.f32 %v5289, %v5059
      %v5291 = vadd.f32 %v5290, %v5062
      %v5292 = vadd.f32 %v5291, %v5067
      %v5293 = vadd.f32 %v5292, %v5070
      %v5294 = vadd.f32 %v5293, %v5075
      %v5295 = vadd.f32 %v5294, %v5078
      %v5296 = vadd.f32 %v5295, %v5083
      %v5297 = vadd.f32 %v5296, %v5086
      %v5298 = vadd.f32 %v5297, %v5091
      %v5299 = vadd.f32 %v5298, %v5094
      %v5300 = vadd.f32 %v5299, %v5099
      %v5301 = vadd.f32 %v5300, %v5102
      %v5302 = vadd.f32 %v5301, %v5107
      %v5303 = vadd.f32 %v5302, %v5110
      %v5304 = vrot.slane %v5303, 4
      %v5305 = vadd.f32 %v5303, %v5304
      %v5306 = vrot.slane %v5305, 2
      %v5307 = vadd.f32 %v5305, %v5306
      %v5308 = vrot.slane %v5307, 1
      %v5309 = vadd.f32 %v5307, %v5308
      %v5310 = vmul.f32 %v4987, %v4987
      %v5311 = vmul.f32 %v4990, %v4990
      %v5312 = vmul.f32 %v4995, %v4995
      %v5313 = vmul.f32 %v4998, %v4998
      %v5314 = vmul.f32 %v5003, %v5003
      %v5315 = vmul.f32 %v5006, %v5006
      %v5316 = vmul.f32 %v5011, %v5011
      %v5317 = vmul.f32 %v5014, %v5014
      %v5318 = vmul.f32 %v5019, %v5019
      %v5319 = vmul.f32 %v5022, %v5022
      %v5320 = vmul.f32 %v5027, %v5027
      %v5321 = vmul.f32 %v5030, %v5030
      %v5322 = vmul.f32 %v5035, %v5035
      %v5323 = vmul.f32 %v5038, %v5038
      %v5324 = vmul.f32 %v5043, %v5043
      %v5325 = vmul.f32 %v5046, %v5046
      %v5326 = vmul.f32 %v5051, %v5051
      %v5327 = vmul.f32 %v5054, %v5054
      %v5328 = vmul.f32 %v5059, %v5059
      %v5329 = vmul.f32 %v5062, %v5062
      %v5330 = vmul.f32 %v5067, %v5067
      %v5331 = vmul.f32 %v5070, %v5070
      %v5332 = vmul.f32 %v5075, %v5075
      %v5333 = vmul.f32 %v5078, %v5078
      %v5334 = vmul.f32 %v5083, %v5083
      %v5335 = vmul.f32 %v5086, %v5086
      %v5336 = vmul.f32 %v5091, %v5091
      %v5337 = vmul.f32 %v5094, %v5094
      %v5338 = vmul.f32 %v5099, %v5099
      %v5339 = vmul.f32 %v5102, %v5102
      %v5340 = vmul.f32 %v5107, %v5107
      %v5341 = vmul.f32 %v5110, %v5110
      %v5342 = vadd.f32 %v5310, %v5311
      %v5343 = vadd.f32 %v5342, %v5312
      %v5344 = vadd.f32 %v5343, %v5313
      %v5345 = vadd.f32 %v5344, %v5314
      %v5346 = vadd.f32 %v5345, %v5315
      %v5347 = vadd.f32 %v5346, %v5316
      %v5348 = vadd.f32 %v5347, %v5317
      %v5349 = vadd.f32 %v5348, %v5318
      %v5350 = vadd.f32 %v5349, %v5319
      %v5351 = vadd.f32 %v5350, %v5320
      %v5352 = vadd.f32 %v5351, %v5321
      %v5353 = vadd.f32 %v5352, %v5322
      %v5354 = vadd.f32 %v5353, %v5323
      %v5355 = vadd.f32 %v5354, %v5324
      %v5356 = vadd.f32 %v5355, %v5325
      %v5357 = vadd.f32 %v5356, %v5326
      %v5358 = vadd.f32 %v5357, %v5327
      %v5359 = vadd.f32 %v5358, %v5328
      %v5360 = vadd.f32 %v5359, %v5329
      %v5361 = vadd.f32 %v5360, %v5330
      %v5362 = vadd.f32 %v5361, %v5331
      %v5363 = vadd.f32 %v5362, %v5332
      %v5364 = vadd.f32 %v5363, %v5333
      %v5365 = vadd.f32 %v5364, %v5334
      %v5366 = vadd.f32 %v5365, %v5335
      %v5367 = vadd.f32 %v5366, %v5336
      %v5368 = vadd.f32 %v5367, %v5337
      %v5369 = vadd.f32 %v5368, %v5338
      %v5370 = vadd.f32 %v5369, %v5339
      %v5371 = vadd.f32 %v5370, %v5340
      %v5372 = vadd.f32 %v5371, %v5341
      %v5373 = vrot.slane %v5372, 4
      %v5374 = vadd.f32 %v5372, %v5373
      %v5375 = vrot.slane %v5374, 2
      %v5376 = vadd.f32 %v5374, %v5375
      %v5377 = vrot.slane %v5376, 1
      %v5378 = vadd.f32 %v5376, %v5377
      %v5379 = vsel %vm4389, %v5309, %v5378
      %5380 = vst [vmem:[%s284] sm:$0x3] %v5379
      %p5381 = scmp.lt.s32.totalorder %s18, 1
      %s5382 = scalar_select %p5381, %s18, 1
      %s5383 = smul.addr %s5382, 32
      %s5384 = smul.addr %s5383, 4
      %s5385 = scalar_lea.vmem %s3, %s5384
      %p5386 = scmp.lt.s32.totalorder %s18, 1
      %s5387 = scalar_select %p5386, %s18, 1
      %s5388 = smul.addr %s5387, 2
      %s5389 = scalar_lea.vmem %s4, %s5388
      %p5390 = scmp.lt.s32.totalorder %s18, 1
      %s5391 = scalar_select %p5390, %s18, 1
      %s5392 = smul.addr %s5391, 32
      %s5393 = smul.addr %s5392, 4
      %s5394 = scalar_lea.vmem %s5, %s5393
      %p5395 = scmp.lt.s32.totalorder %s18, 1
      %s5396 = scalar_select %p5395, %s18, 1
      %s5397 = smul.addr %s5396, 2
      %s5398 = scalar_lea.vmem %s6, %s5397
      // Predicated region
      $region33: #{block_forward.3} parent=31 // pred_check
        %p5399 = pneg %p104
      $region34: #{block_forward.3} parent=31 // pred_check_branch
        %5401 = sbr.rel (%p5399) target = $region36
      $region35: #{block_forward.3} parent=31 // pred_region
        _
      $region36: #{block_forward.3} parent=31 // pred_fallthru
        _
      // Predicated region
      $region37: #{block_forward.3} parent=31 // pred_check
        %p5402 = pneg %p130
      $region38: #{block_forward.3} parent=31 // pred_check_branch
        %5404 = sbr.rel (%p5402) target = $region40
      $region39: #{block_forward.3} parent=31 // pred_region
        _
      $region40: #{block_forward.3} parent=31 // pred_fallthru
        _
      // Predicated region
      $region41: #{block_forward.3} parent=31 // pred_check
        %p5405 = pneg %p156
      $region42: #{block_forward.3} parent=31 // pred_check_branch
        %5407 = sbr.rel (%p5405) target = $region44
      $region43: #{block_forward.3} parent=31 // pred_region
        _
      $region44: #{block_forward.3} parent=31 // pred_fallthru
        _
      // Predicated region
      $region45: #{block_forward.3} parent=31 // pred_check
        %p5408 = pneg %p182
      $region46: #{block_forward.3} parent=31 // pred_check_branch
        %5410 = sbr.rel (%p5408) target = $region48
      $region47: #{block_forward.3} parent=31 // pred_region
        _
      $region48: #{block_forward.3} parent=31 // pred_fallthru
        _
    $region32: #{block_forward.3} parent=5 // pred_fallthru
      _
    %p5411 = scmp.le.s32.totalorder 2, %s13
    // Predicated region
    $region49: #{block_forward.3} parent=5 // pred_check
      %p5412 = pneg %p5411
    $region50: #{block_forward.3} parent=5 // pred_check_branch
      %5414 = sbr.rel (%p5412) target = $region52
    $region51: #{block_forward.3} parent=5 // pred_region
      %s5415 = ssub.s32 %s13, 2
      // Predicated region
      $region53: #{block_forward.3} parent=51 // pred_check
        %p5416 = pneg %p110
      $region54: #{block_forward.3} parent=51 // pred_check_branch
        %5418 = sbr.rel (%p5416) target = $region56
      $region55: #{block_forward.3} parent=51 // pred_region
        %p5419 = scmp.lt.s32.totalorder %s19, 1
        %s5420 = scalar_select %p5419, %s19, 1
        %s5421 = smul.addr %s5420, 32
        %s5422 = smul.addr %s5421, 4
        %s5423 = scalar_lea.vmem %s3, %s5422
      $region56: #{block_forward.3} parent=51 // pred_fallthru
        _
      // Predicated region
      $region57: #{block_forward.3} parent=51 // pred_check
        %p5424 = pneg %p136
      $region58: #{block_forward.3} parent=51 // pred_check_branch
        %5426 = sbr.rel (%p5424) target = $region60
      $region59: #{block_forward.3} parent=51 // pred_region
        %p5427 = scmp.lt.s32.totalorder %s19, 1
        %s5428 = scalar_select %p5427, %s19, 1
        %s5429 = smul.addr %s5428, 2
        %s5430 = scalar_lea.vmem %s4, %s5429
      $region60: #{block_forward.3} parent=51 // pred_fallthru
        _
      // Predicated region
      $region61: #{block_forward.3} parent=51 // pred_check
        %p5431 = pneg %p162
      $region62: #{block_forward.3} parent=51 // pred_check_branch
        %5433 = sbr.rel (%p5431) target = $region64
      $region63: #{block_forward.3} parent=51 // pred_region
        %p5434 = scmp.lt.s32.totalorder %s19, 1
        %s5435 = scalar_select %p5434, %s19, 1
        %s5436 = smul.addr %s5435, 32
        %s5437 = smul.addr %s5436, 4
        %s5438 = scalar_lea.vmem %s5, %s5437
      $region64: #{block_forward.3} parent=51 // pred_fallthru
        _
      // Predicated region
      $region65: #{block_forward.3} parent=51 // pred_check
        %p5439 = pneg %p188
      $region66: #{block_forward.3} parent=51 // pred_check_branch
        %5441 = sbr.rel (%p5439) target = $region68
      $region67: #{block_forward.3} parent=51 // pred_region
        %p5442 = scmp.lt.s32.totalorder %s19, 1
        %s5443 = scalar_select %p5442, %s19, 1
        %s5444 = smul.addr %s5443, 2
        %s5445 = scalar_lea.vmem %s6, %s5444
      $region68: #{block_forward.3} parent=51 // pred_fallthru
        _
    $region52: #{block_forward.3} parent=5 // pred_fallthru
      _
  $region6: #{block_forward.3} parent=0 // loop_footer
    %s17 = sadd.s32 1, %s13
  $region7: #{block_forward.3} parent=0 // loop_footer_branch
    %12 = sbr.rel target = $region3
  $region8: #{block_forward.3} parent=0 // loop_exit
    _

</llo_original>
